<compile_context>
chip_gen: v5e
topology: v5e:2x2
jax: 0.10.0
libtpu: 0.0.40
codegen_flags: <defaults>
</compile_context>

<pallas_src>
import functools

import jax
import jax.numpy as jnp
import numpy as np
from jax.experimental import pallas as pl
from jax.experimental.pallas import tpu as pltpu


def _round_up(value, multiple):
    return ((value + multiple - 1) // multiple) * multiple


# ---------------------------------------------------------------------------
# Fused encoder kernel: one grid step == one batch element.
# ---------------------------------------------------------------------------
def _encoder_fused_kernel(x_ref, w1_ref, b1_ref, w2_ref, b2_ref, o_ref, patch_ref,
                          *, cin, ksize, wp, q, slope):
    """
    x_ref     : (1, cin, Lpad)   f32   zero-padded, row-flattened input image
    w1_ref    : (cout, kpad)     bf16  conv weight, OIHW-flattened, K padded to kpad
    b1_ref    : (cout, 1)        f32   conv bias
    w2_ref    : (cout, q, n_out) bf16  FC weight re-laid-out to padded-spatial order
    b2_ref    : (1, n_out)       f32   FC bias
    o_ref     : (1, 1, n_out)    f32   output row for this batch element
    patch_ref : (kpad, q)        f32   VMEM scratch holding the im2col patch matrix
    """
    xv = x_ref[0]                                     # (cin, Lpad) f32

    # ---- fused im2col: static shifted slices -> rows of the patch matrix ----
    t = 0
    for c in range(cin):
        for ky in range(ksize):
            for kx in range(ksize):
                shift = ky * wp + kx
                patch_ref[t, :] = xv[c, shift:shift + q]
                t += 1
    kpad = patch_ref.shape[0]
    for tz in range(t, kpad):                          # zero the K-padding rows
        patch_ref[tz, :] = jnp.zeros((q,), patch_ref.dtype)

    # ---- conv as one MXU matmul; output (cout, q) with the spatial axis lane-dense ----
    p = patch_ref[...].astype(jnp.bfloat16)            # (kpad, q)
    a = jnp.dot(w1_ref[...], p, preferred_element_type=jnp.float32)   # (cout, q) f32
    a = a + b1_ref[...]                                # (cout, 1) broadcast over lanes
    a = jnp.where(a >= 0, a, slope * a)                # LeakyReLU(0.01)

    # ---- fully connected: contract (cout, q) against (cout, q, n_out) ----
    cout = a.shape[0]
    n_out = o_ref.shape[-1]
    acc = jnp.zeros((1, n_out), jnp.float32)
    for c in range(cout):                              # 16 small MXU matmuls, K = q
        a_c = a[c:c + 1, :].astype(jnp.bfloat16)       # (1, q)
        acc = acc + jnp.dot(a_c, w2_ref[c], preferred_element_type=jnp.float32)
    out = acc + b2_ref[...]
    out = jnp.where(out >= 0, out, slope * out)        # LeakyReLU(0.01)
    o_ref[...] = out[None].astype(o_ref.dtype)         # (1, 1, n_out)


# ---------------------------------------------------------------------------
# One-time parameter re-layout (zero runtime cost inside the forward pass).
# ---------------------------------------------------------------------------
def prepare_params(params, input_dim):
    w1, b1, w2, b2 = params["W1"], params["b1"], params["W2"], params["b2"]
    cout, cin, ks, _ = w1.shape
    pad = ks // 2
    hp = input_dim + 2 * pad
    wp = input_dim + 2 * pad
    q = hp * wp
    k = cin * ks * ks
    kpad = _round_up(k, 8)                             # 25 -> 32: MXU-friendly contraction

    w1m = jnp.pad(w1.reshape(cout, k), ((0, 0), (0, kpad - k))).astype(jnp.bfloat16)
    b1c = b1.reshape(cout, 1).astype(jnp.float32)

    n_out = w2.shape[0]
    # PyTorch flattens the conv activation as (cout, y, x) with stride W.  Permute W2's
    # input axis once into the kernel's padded (cout, y*wp + x) order and zero the rows
    # that hit spatial-padding positions -> in-kernel flatten / NCHW transpose are free.
    w2r = w2.reshape(n_out, cout, input_dim, input_dim)
    w2r = jnp.pad(w2r, ((0, 0), (0, 0), (0, hp - input_dim), (0, wp - input_dim)))
    w2r = w2r.reshape(n_out, cout, q).transpose(1, 2, 0).astype(jnp.bfloat16)  # (cout,q,n_out)
    b2c = b2.reshape(1, n_out).astype(jnp.float32)
    return dict(w1m=w1m, b1=b1c, w2r=w2r, b2=b2c)


# ---------------------------------------------------------------------------
# Forward pass (single fused pallas_call).
# ---------------------------------------------------------------------------
def encoder_forward(x_nchw, prep, *, ksize=5, slope=0.01):
    b, cin, h, w = x_nchw.shape
    cout, kpad = prep["w1m"].shape
    _, q, n_out = prep["w2r"].shape
    pad = ksize // 2
    hp, wp = h + 2 * pad, w + 2 * pad
    assert q == hp * wp

    # zero-pad ('same') and flatten each channel into a single lane-aligned row,
    # with extra zero tail so every shifted in-kernel slice stays in bounds.
    max_shift = (ksize - 1) * wp + (ksize - 1)
    lpad = _round_up(q + max_shift, 128)
    xp = jnp.pad(x_nchw, ((0, 0), (0, 0), (pad, pad), (pad, pad))).reshape(b, cin, q)
    xp = jnp.pad(xp, ((0, 0), (0, 0), (0, lpad - q))).astype(jnp.float32)

    kernel = functools.partial(_encoder_fused_kernel, cin=cin, ksize=ksize, wp=wp, q=q,
                               slope=slope)
    flops = b * (2 * cout * kpad * q + 2 * cout * q * n_out)
    bytes_accessed = (b * cin * lpad * 4 + cout * kpad * 2 + cout * q * n_out * 2
                      + cout * 4 + n_out * 4 + b * n_out * 4)

    out3 = pl.pallas_call(
        kernel,
        out_shape=jax.ShapeDtypeStruct((b, 1, n_out), jnp.float32),
        grid=(b,),
        in_specs=[
            pl.BlockSpec((1, cin, lpad), lambda i: (i, 0, 0)),      # padded input row
            pl.BlockSpec((cout, kpad), lambda i: (0, 0)),           # conv weight (resident)
            pl.BlockSpec((cout, 1), lambda i: (0, 0)),              # conv bias
            pl.BlockSpec((cout, q, n_out), lambda i: (0, 0, 0)),    # FC weight (resident)
            pl.BlockSpec((1, n_out), lambda i: (0, 0)),             # FC bias
        ],
        out_specs=pl.BlockSpec((1, 1, n_out), lambda i: (i, 0, 0)),
        scratch_shapes=[pltpu.VMEM((kpad, q), jnp.float32)],        # im2col patch matrix
        compiler_params=pltpu.CompilerParams(dimension_semantics=("parallel",)),
        cost_estimate=pl.CostEstimate(flops=flops, transcendentals=0,
                                      bytes_accessed=bytes_accessed),
    )(xp, prep["w1m"], prep["b1"], prep["w2r"], prep["b2"])
    return out3.reshape(b, n_out)


# ---------------------------------------------------------------------------
# Deterministic parameter init (mirrors PyTorch default U(-1/sqrt(fan_in), ..)).
# ---------------------------------------------------------------------------
def init_params(key, input_dim, latent_dim, channels):
    k1, k2, k3, k4 = jax.random.split(key, 4)
    fan_in1 = channels * 5 * 5
    bd1 = 1.0 / np.sqrt(fan_in1)
    w1 = jax.random.uniform(k1, (16, channels, 5, 5), jnp.float32, -bd1, bd1)
    b1 = jax.random.uniform(k2, (16,), jnp.float32, -bd1, bd1)
    fan_in2 = 16 * input_dim * input_dim
    bd2 = 1.0 / np.sqrt(fan_in2)
    w2 = jax.random.uniform(k3, (2 * latent_dim, fan_in2), jnp.float32, -bd2, bd2)
    b2 = jax.random.uniform(k4, (2 * latent_dim,), jnp.float32, -bd2, bd2)
    return dict(W1=w1, b1=b1, W2=w2, b2=b2)


# Pure-JAX reference (numerical verification only).
def reference_forward(x, params):
    w1, b1, w2, b2 = params["W1"], params["b1"], params["W2"], params["b2"]
    y = jax.lax.conv_general_dilated(
        x, w1, (1, 1), "SAME", dimension_numbers=("NCHW", "OIHW", "NCHW"))
    y = y + b1[None, :, None, None]
    y = jnp.where(y >= 0, y, 0.01 * y)
    y = y.reshape(x.shape[0], -1)
    y = y @ w2.T + b2
    y = jnp.where(y >= 0, y, 0.01 * y)
    return y


if __name__ == "__main__":
    channels, input_dim, latent_dim = 1, 28, 4
    batch = 2

    key = jax.random.PRNGKey(0)
    kx, kp = jax.random.split(key)
    x = jax.random.normal(kx, (batch, channels, input_dim, input_dim), jnp.float32)
    params = init_params(kp, input_dim, latent_dim, channels)

    prep = prepare_params(params, input_dim)          # one-time weight re-layout

    fwd = jax.jit(functools.partial(encoder_forward, ksize=5))
    out = jax.block_until_ready(fwd(x, prep))
    assert out.shape == (batch, 2 * latent_dim)

    ref = reference_forward(x, params)
    np.testing.assert_allclose(np.asarray(out), np.asarray(ref), rtol=5e-2, atol=5e-2)

    print("KERNEL_OK")
</pallas_src>

<mosaic_0001>
module attributes {stable_mosaic.version = 11 : i64} {
  func.func @_encoder_fused_kernel(%arg0: i32, %arg1: memref<1x1x1280xf32, #tpu.memory_space<vmem>>, %arg2: memref<16x32xbf16, #tpu.memory_space<vmem>>, %arg3: memref<16x1xf32, #tpu.memory_space<vmem>>, %arg4: memref<16x1024x8xbf16, #tpu.memory_space<vmem>>, %arg5: memref<1x8xf32, #tpu.memory_space<vmem>>, %arg6: memref<1x1x8xf32, #tpu.memory_space<vmem>>, %arg7: memref<32x1024xf32, #tpu.memory_space<vmem>>) attributes {dimension_semantics = [#tpu.dimension_semantics<parallel>], iteration_bounds = array<i64: 2>, scalar_prefetch = 0 : i64, scratch_operands = 1 : i64, tpu.core_type = #tpu.core_type<tc>, window_params = [{transform_indices = @transform_0, window_bounds = array<i64: 1, 1, 1280>}, {pipeline_mode = #tpu.pipeline_mode<synchronous>, transform_indices = @transform_1, window_bounds = array<i64: 16, 32>}, {pipeline_mode = #tpu.pipeline_mode<synchronous>, transform_indices = @transform_2, window_bounds = array<i64: 16, 1>}, {pipeline_mode = #tpu.pipeline_mode<synchronous>, transform_indices = @transform_3, window_bounds = array<i64: 16, 1024, 8>}, {pipeline_mode = #tpu.pipeline_mode<synchronous>, transform_indices = @transform_4, window_bounds = array<i64: 1, 8>}, {transform_indices = @transform_5, window_bounds = array<i64: 1, 1, 8>}]} {
    %c0 = arith.constant 0 : index
    %c0_0 = arith.constant 0 : index
    %c0_1 = arith.constant 0 : index
    %0 = vector.load %arg1[%c0, %c0_0, %c0_1] : memref<1x1x1280xf32, #tpu.memory_space<vmem>>, vector<1x1x1280xf32>
    %1 = vector.shape_cast %0 : vector<1x1x1280xf32> to vector<1x1280xf32>
    %2 = vector.extract_strided_slice %1 {offsets = [0, 0], sizes = [1, 1024], strides = [1, 1]} : vector<1x1280xf32> to vector<1x1024xf32>
    %3 = vector.shape_cast %2 : vector<1x1024xf32> to vector<1024xf32>
    %c0_2 = arith.constant 0 : index
    %c0_3 = arith.constant 0 : index
    %4 = vector.load %arg7[%c0_2, %c0_3] : memref<32x1024xf32, #tpu.memory_space<vmem>>, vector<1x1024xf32>
    %5 = vector.shape_cast %4 : vector<1x1024xf32> to vector<1024xf32>
    %6 = vector.shape_cast %3 : vector<1024xf32> to vector<1x1024xf32>
    tpu.vector_store %arg7[%c0_2, %c0_3], %6 {strides = array<i32>} : memref<32x1024xf32, #tpu.memory_space<vmem>>, vector<1x1024xf32>,
    %7 = vector.extract_strided_slice %1 {offsets = [0, 1], sizes = [1, 1024], strides = [1, 1]} : vector<1x1280xf32> to vector<1x1024xf32>
    %8 = vector.shape_cast %7 : vector<1x1024xf32> to vector<1024xf32>
    %c1 = arith.constant 1 : index
    %c0_4 = arith.constant 0 : index
    %9 = vector.load %arg7[%c1, %c0_4] : memref<32x1024xf32, #tpu.memory_space<vmem>>, vector<1x1024xf32>
    %10 = vector.shape_cast %9 : vector<1x1024xf32> to vector<1024xf32>
    %11 = vector.shape_cast %8 : vector<1024xf32> to vector<1x1024xf32>
    tpu.vector_store %arg7[%c1, %c0_4], %11 {strides = array<i32>} : memref<32x1024xf32, #tpu.memory_space<vmem>>, vector<1x1024xf32>,
    %12 = vector.extract_strided_slice %1 {offsets = [0, 2], sizes = [1, 1024], strides = [1, 1]} : vector<1x1280xf32> to vector<1x1024xf32>
    %13 = vector.shape_cast %12 : vector<1x1024xf32> to vector<1024xf32>
    %c2 = arith.constant 2 : index
    %c0_5 = arith.constant 0 : index
    %14 = vector.load %arg7[%c2, %c0_5] : memref<32x1024xf32, #tpu.memory_space<vmem>>, vector<1x1024xf32>
    %15 = vector.shape_cast %14 : vector<1x1024xf32> to vector<1024xf32>
    %16 = vector.shape_cast %13 : vector<1024xf32> to vector<1x1024xf32>
    tpu.vector_store %arg7[%c2, %c0_5], %16 {strides = array<i32>} : memref<32x1024xf32, #tpu.memory_space<vmem>>, vector<1x1024xf32>,
    %17 = vector.extract_strided_slice %1 {offsets = [0, 3], sizes = [1, 1024], strides = [1, 1]} : vector<1x1280xf32> to vector<1x1024xf32>
    %18 = vector.shape_cast %17 : vector<1x1024xf32> to vector<1024xf32>
    %c3 = arith.constant 3 : index
    %c0_6 = arith.constant 0 : index
    %19 = vector.load %arg7[%c3, %c0_6] : memref<32x1024xf32, #tpu.memory_space<vmem>>, vector<1x1024xf32>
    %20 = vector.shape_cast %19 : vector<1x1024xf32> to vector<1024xf32>
    %21 = vector.shape_cast %18 : vector<1024xf32> to vector<1x1024xf32>
    tpu.vector_store %arg7[%c3, %c0_6], %21 {strides = array<i32>} : memref<32x1024xf32, #tpu.memory_space<vmem>>, vector<1x1024xf32>,
    %22 = vector.extract_strided_slice %1 {offsets = [0, 4], sizes = [1, 1024], strides = [1, 1]} : vector<1x1280xf32> to vector<1x1024xf32>
    %23 = vector.shape_cast %22 : vector<1x1024xf32> to vector<1024xf32>
    %c4 = arith.constant 4 : index
    %c0_7 = arith.constant 0 : index
    %24 = vector.load %arg7[%c4, %c0_7] : memref<32x1024xf32, #tpu.memory_space<vmem>>, vector<1x1024xf32>
    %25 = vector.shape_cast %24 : vector<1x1024xf32> to vector<1024xf32>
    %26 = vector.shape_cast %23 : vector<1024xf32> to vector<1x1024xf32>
    tpu.vector_store %arg7[%c4, %c0_7], %26 {strides = array<i32>} : memref<32x1024xf32, #tpu.memory_space<vmem>>, vector<1x1024xf32>,
    %27 = vector.extract_strided_slice %1 {offsets = [0, 32], sizes = [1, 1024], strides = [1, 1]} : vector<1x1280xf32> to vector<1x1024xf32>
    %28 = vector.shape_cast %27 : vector<1x1024xf32> to vector<1024xf32>
    %c5 = arith.constant 5 : index
    %c0_8 = arith.constant 0 : index
    %29 = vector.load %arg7[%c5, %c0_8] : memref<32x1024xf32, #tpu.memory_space<vmem>>, vector<1x1024xf32>
    %30 = vector.shape_cast %29 : vector<1x1024xf32> to vector<1024xf32>
    %31 = vector.shape_cast %28 : vector<1024xf32> to vector<1x1024xf32>
    tpu.vector_store %arg7[%c5, %c0_8], %31 {strides = array<i32>} : memref<32x1024xf32, #tpu.memory_space<vmem>>, vector<1x1024xf32>,
    %32 = vector.extract_strided_slice %1 {offsets = [0, 33], sizes = [1, 1024], strides = [1, 1]} : vector<1x1280xf32> to vector<1x1024xf32>
    %33 = vector.shape_cast %32 : vector<1x1024xf32> to vector<1024xf32>
    %c6 = arith.constant 6 : index
    %c0_9 = arith.constant 0 : index
    %34 = vector.load %arg7[%c6, %c0_9] : memref<32x1024xf32, #tpu.memory_space<vmem>>, vector<1x1024xf32>
    %35 = vector.shape_cast %34 : vector<1x1024xf32> to vector<1024xf32>
    %36 = vector.shape_cast %33 : vector<1024xf32> to vector<1x1024xf32>
    tpu.vector_store %arg7[%c6, %c0_9], %36 {strides = array<i32>} : memref<32x1024xf32, #tpu.memory_space<vmem>>, vector<1x1024xf32>,
    %37 = vector.extract_strided_slice %1 {offsets = [0, 34], sizes = [1, 1024], strides = [1, 1]} : vector<1x1280xf32> to vector<1x1024xf32>
    %38 = vector.shape_cast %37 : vector<1x1024xf32> to vector<1024xf32>
    %c7 = arith.constant 7 : index
    %c0_10 = arith.constant 0 : index
    %39 = vector.load %arg7[%c7, %c0_10] : memref<32x1024xf32, #tpu.memory_space<vmem>>, vector<1x1024xf32>
    %40 = vector.shape_cast %39 : vector<1x1024xf32> to vector<1024xf32>
    %41 = vector.shape_cast %38 : vector<1024xf32> to vector<1x1024xf32>
    tpu.vector_store %arg7[%c7, %c0_10], %41 {strides = array<i32>} : memref<32x1024xf32, #tpu.memory_space<vmem>>, vector<1x1024xf32>,
    %42 = vector.extract_strided_slice %1 {offsets = [0, 35], sizes = [1, 1024], strides = [1, 1]} : vector<1x1280xf32> to vector<1x1024xf32>
    %43 = vector.shape_cast %42 : vector<1x1024xf32> to vector<1024xf32>
    %c8 = arith.constant 8 : index
    %c0_11 = arith.constant 0 : index
    %44 = vector.load %arg7[%c8, %c0_11] : memref<32x1024xf32, #tpu.memory_space<vmem>>, vector<1x1024xf32>
    %45 = vector.shape_cast %44 : vector<1x1024xf32> to vector<1024xf32>
    %46 = vector.shape_cast %43 : vector<1024xf32> to vector<1x1024xf32>
    tpu.vector_store %arg7[%c8, %c0_11], %46 {strides = array<i32>} : memref<32x1024xf32, #tpu.memory_space<vmem>>, vector<1x1024xf32>,
    %47 = vector.extract_strided_slice %1 {offsets = [0, 36], sizes = [1, 1024], strides = [1, 1]} : vector<1x1280xf32> to vector<1x1024xf32>
    %48 = vector.shape_cast %47 : vector<1x1024xf32> to vector<1024xf32>
    %c9 = arith.constant 9 : index
    %c0_12 = arith.constant 0 : index
    %49 = vector.load %arg7[%c9, %c0_12] : memref<32x1024xf32, #tpu.memory_space<vmem>>, vector<1x1024xf32>
    %50 = vector.shape_cast %49 : vector<1x1024xf32> to vector<1024xf32>
    %51 = vector.shape_cast %48 : vector<1024xf32> to vector<1x1024xf32>
    tpu.vector_store %arg7[%c9, %c0_12], %51 {strides = array<i32>} : memref<32x1024xf32, #tpu.memory_space<vmem>>, vector<1x1024xf32>,
    %52 = vector.extract_strided_slice %1 {offsets = [0, 64], sizes = [1, 1024], strides = [1, 1]} : vector<1x1280xf32> to vector<1x1024xf32>
    %53 = vector.shape_cast %52 : vector<1x1024xf32> to vector<1024xf32>
    %c10 = arith.constant 10 : index
    %c0_13 = arith.constant 0 : index
    %54 = vector.load %arg7[%c10, %c0_13] : memref<32x1024xf32, #tpu.memory_space<vmem>>, vector<1x1024xf32>
    %55 = vector.shape_cast %54 : vector<1x1024xf32> to vector<1024xf32>
    %56 = vector.shape_cast %53 : vector<1024xf32> to vector<1x1024xf32>
    tpu.vector_store %arg7[%c10, %c0_13], %56 {strides = array<i32>} : memref<32x1024xf32, #tpu.memory_space<vmem>>, vector<1x1024xf32>,
    %57 = vector.extract_strided_slice %1 {offsets = [0, 65], sizes = [1, 1024], strides = [1, 1]} : vector<1x1280xf32> to vector<1x1024xf32>
    %58 = vector.shape_cast %57 : vector<1x1024xf32> to vector<1024xf32>
    %c11 = arith.constant 11 : index
    %c0_14 = arith.constant 0 : index
    %59 = vector.load %arg7[%c11, %c0_14] : memref<32x1024xf32, #tpu.memory_space<vmem>>, vector<1x1024xf32>
    %60 = vector.shape_cast %59 : vector<1x1024xf32> to vector<1024xf32>
    %61 = vector.shape_cast %58 : vector<1024xf32> to vector<1x1024xf32>
    tpu.vector_store %arg7[%c11, %c0_14], %61 {strides = array<i32>} : memref<32x1024xf32, #tpu.memory_space<vmem>>, vector<1x1024xf32>,
    %62 = vector.extract_strided_slice %1 {offsets = [0, 66], sizes = [1, 1024], strides = [1, 1]} : vector<1x1280xf32> to vector<1x1024xf32>
    %63 = vector.shape_cast %62 : vector<1x1024xf32> to vector<1024xf32>
    %c12 = arith.constant 12 : index
    %c0_15 = arith.constant 0 : index
    %64 = vector.load %arg7[%c12, %c0_15] : memref<32x1024xf32, #tpu.memory_space<vmem>>, vector<1x1024xf32>
    %65 = vector.shape_cast %64 : vector<1x1024xf32> to vector<1024xf32>
    %66 = vector.shape_cast %63 : vector<1024xf32> to vector<1x1024xf32>
    tpu.vector_store %arg7[%c12, %c0_15], %66 {strides = array<i32>} : memref<32x1024xf32, #tpu.memory_space<vmem>>, vector<1x1024xf32>,
    %67 = vector.extract_strided_slice %1 {offsets = [0, 67], sizes = [1, 1024], strides = [1, 1]} : vector<1x1280xf32> to vector<1x1024xf32>
    %68 = vector.shape_cast %67 : vector<1x1024xf32> to vector<1024xf32>
    %c13 = arith.constant 13 : index
    %c0_16 = arith.constant 0 : index
    %69 = vector.load %arg7[%c13, %c0_16] : memref<32x1024xf32, #tpu.memory_space<vmem>>, vector<1x1024xf32>
    %70 = vector.shape_cast %69 : vector<1x1024xf32> to vector<1024xf32>
    %71 = vector.shape_cast %68 : vector<1024xf32> to vector<1x1024xf32>
    tpu.vector_store %arg7[%c13, %c0_16], %71 {strides = array<i32>} : memref<32x1024xf32, #tpu.memory_space<vmem>>, vector<1x1024xf32>,
    %72 = vector.extract_strided_slice %1 {offsets = [0, 68], sizes = [1, 1024], strides = [1, 1]} : vector<1x1280xf32> to vector<1x1024xf32>
    %73 = vector.shape_cast %72 : vector<1x1024xf32> to vector<1024xf32>
    %c14 = arith.constant 14 : index
    %c0_17 = arith.constant 0 : index
    %74 = vector.load %arg7[%c14, %c0_17] : memref<32x1024xf32, #tpu.memory_space<vmem>>, vector<1x1024xf32>
    %75 = vector.shape_cast %74 : vector<1x1024xf32> to vector<1024xf32>
    %76 = vector.shape_cast %73 : vector<1024xf32> to vector<1x1024xf32>
    tpu.vector_store %arg7[%c14, %c0_17], %76 {strides = array<i32>} : memref<32x1024xf32, #tpu.memory_space<vmem>>, vector<1x1024xf32>,
    %77 = vector.extract_strided_slice %1 {offsets = [0, 96], sizes = [1, 1024], strides = [1, 1]} : vector<1x1280xf32> to vector<1x1024xf32>
    %78 = vector.shape_cast %77 : vector<1x1024xf32> to vector<1024xf32>
    %c15 = arith.constant 15 : index
    %c0_18 = arith.constant 0 : index
    %79 = vector.load %arg7[%c15, %c0_18] : memref<32x1024xf32, #tpu.memory_space<vmem>>, vector<1x1024xf32>
    %80 = vector.shape_cast %79 : vector<1x1024xf32> to vector<1024xf32>
    %81 = vector.shape_cast %78 : vector<1024xf32> to vector<1x1024xf32>
    tpu.vector_store %arg7[%c15, %c0_18], %81 {strides = array<i32>} : memref<32x1024xf32, #tpu.memory_space<vmem>>, vector<1x1024xf32>,
    %82 = vector.extract_strided_slice %1 {offsets = [0, 97], sizes = [1, 1024], strides = [1, 1]} : vector<1x1280xf32> to vector<1x1024xf32>
    %83 = vector.shape_cast %82 : vector<1x1024xf32> to vector<1024xf32>
    %c16 = arith.constant 16 : index
    %c0_19 = arith.constant 0 : index
    %84 = vector.load %arg7[%c16, %c0_19] : memref<32x1024xf32, #tpu.memory_space<vmem>>, vector<1x1024xf32>
    %85 = vector.shape_cast %84 : vector<1x1024xf32> to vector<1024xf32>
    %86 = vector.shape_cast %83 : vector<1024xf32> to vector<1x1024xf32>
    tpu.vector_store %arg7[%c16, %c0_19], %86 {strides = array<i32>} : memref<32x1024xf32, #tpu.memory_space<vmem>>, vector<1x1024xf32>,
    %87 = vector.extract_strided_slice %1 {offsets = [0, 98], sizes = [1, 1024], strides = [1, 1]} : vector<1x1280xf32> to vector<1x1024xf32>
    %88 = vector.shape_cast %87 : vector<1x1024xf32> to vector<1024xf32>
    %c17 = arith.constant 17 : index
    %c0_20 = arith.constant 0 : index
    %89 = vector.load %arg7[%c17, %c0_20] : memref<32x1024xf32, #tpu.memory_space<vmem>>, vector<1x1024xf32>
    %90 = vector.shape_cast %89 : vector<1x1024xf32> to vector<1024xf32>
    %91 = vector.shape_cast %88 : vector<1024xf32> to vector<1x1024xf32>
    tpu.vector_store %arg7[%c17, %c0_20], %91 {strides = array<i32>} : memref<32x1024xf32, #tpu.memory_space<vmem>>, vector<1x1024xf32>,
    %92 = vector.extract_strided_slice %1 {offsets = [0, 99], sizes = [1, 1024], strides = [1, 1]} : vector<1x1280xf32> to vector<1x1024xf32>
    %93 = vector.shape_cast %92 : vector<1x1024xf32> to vector<1024xf32>
    %c18 = arith.constant 18 : index
    %c0_21 = arith.constant 0 : index
    %94 = vector.load %arg7[%c18, %c0_21] : memref<32x1024xf32, #tpu.memory_space<vmem>>, vector<1x1024xf32>
    %95 = vector.shape_cast %94 : vector<1x1024xf32> to vector<1024xf32>
    %96 = vector.shape_cast %93 : vector<1024xf32> to vector<1x1024xf32>
    tpu.vector_store %arg7[%c18, %c0_21], %96 {strides = array<i32>} : memref<32x1024xf32, #tpu.memory_space<vmem>>, vector<1x1024xf32>,
    %97 = vector.extract_strided_slice %1 {offsets = [0, 100], sizes = [1, 1024], strides = [1, 1]} : vector<1x1280xf32> to vector<1x1024xf32>
    %98 = vector.shape_cast %97 : vector<1x1024xf32> to vector<1024xf32>
    %c19 = arith.constant 19 : index
    %c0_22 = arith.constant 0 : index
    %99 = vector.load %arg7[%c19, %c0_22] : memref<32x1024xf32, #tpu.memory_space<vmem>>, vector<1x1024xf32>
    %100 = vector.shape_cast %99 : vector<1x1024xf32> to vector<1024xf32>
    %101 = vector.shape_cast %98 : vector<1024xf32> to vector<1x1024xf32>
    tpu.vector_store %arg7[%c19, %c0_22], %101 {strides = array<i32>} : memref<32x1024xf32, #tpu.memory_space<vmem>>, vector<1x1024xf32>,
    %102 = vector.extract_strided_slice %1 {offsets = [0, 128], sizes = [1, 1024], strides = [1, 1]} : vector<1x1280xf32> to vector<1x1024xf32>
    %103 = vector.shape_cast %102 : vector<1x1024xf32> to vector<1024xf32>
    %c20 = arith.constant 20 : index
    %c0_23 = arith.constant 0 : index
    %104 = vector.load %arg7[%c20, %c0_23] : memref<32x1024xf32, #tpu.memory_space<vmem>>, vector<1x1024xf32>
    %105 = vector.shape_cast %104 : vector<1x1024xf32> to vector<1024xf32>
    %106 = vector.shape_cast %103 : vector<1024xf32> to vector<1x1024xf32>
    tpu.vector_store %arg7[%c20, %c0_23], %106 {strides = array<i32>} : memref<32x1024xf32, #tpu.memory_space<vmem>>, vector<1x1024xf32>,
    %107 = vector.extract_strided_slice %1 {offsets = [0, 129], sizes = [1, 1024], strides = [1, 1]} : vector<1x1280xf32> to vector<1x1024xf32>
    %108 = vector.shape_cast %107 : vector<1x1024xf32> to vector<1024xf32>
    %c21 = arith.constant 21 : index
    %c0_24 = arith.constant 0 : index
    %109 = vector.load %arg7[%c21, %c0_24] : memref<32x1024xf32, #tpu.memory_space<vmem>>, vector<1x1024xf32>
    %110 = vector.shape_cast %109 : vector<1x1024xf32> to vector<1024xf32>
    %111 = vector.shape_cast %108 : vector<1024xf32> to vector<1x1024xf32>
    tpu.vector_store %arg7[%c21, %c0_24], %111 {strides = array<i32>} : memref<32x1024xf32, #tpu.memory_space<vmem>>, vector<1x1024xf32>,
    %112 = vector.extract_strided_slice %1 {offsets = [0, 130], sizes = [1, 1024], strides = [1, 1]} : vector<1x1280xf32> to vector<1x1024xf32>
    %113 = vector.shape_cast %112 : vector<1x1024xf32> to vector<1024xf32>
    %c22 = arith.constant 22 : index
    %c0_25 = arith.constant 0 : index
    %114 = vector.load %arg7[%c22, %c0_25] : memref<32x1024xf32, #tpu.memory_space<vmem>>, vector<1x1024xf32>
    %115 = vector.shape_cast %114 : vector<1x1024xf32> to vector<1024xf32>
    %116 = vector.shape_cast %113 : vector<1024xf32> to vector<1x1024xf32>
    tpu.vector_store %arg7[%c22, %c0_25], %116 {strides = array<i32>} : memref<32x1024xf32, #tpu.memory_space<vmem>>, vector<1x1024xf32>,
    %117 = vector.extract_strided_slice %1 {offsets = [0, 131], sizes = [1, 1024], strides = [1, 1]} : vector<1x1280xf32> to vector<1x1024xf32>
    %118 = vector.shape_cast %117 : vector<1x1024xf32> to vector<1024xf32>
    %c23 = arith.constant 23 : index
    %c0_26 = arith.constant 0 : index
    %119 = vector.load %arg7[%c23, %c0_26] : memref<32x1024xf32, #tpu.memory_space<vmem>>, vector<1x1024xf32>
    %120 = vector.shape_cast %119 : vector<1x1024xf32> to vector<1024xf32>
    %121 = vector.shape_cast %118 : vector<1024xf32> to vector<1x1024xf32>
    tpu.vector_store %arg7[%c23, %c0_26], %121 {strides = array<i32>} : memref<32x1024xf32, #tpu.memory_space<vmem>>, vector<1x1024xf32>,
    %122 = vector.extract_strided_slice %1 {offsets = [0, 132], sizes = [1, 1024], strides = [1, 1]} : vector<1x1280xf32> to vector<1x1024xf32>
    %123 = vector.shape_cast %122 : vector<1x1024xf32> to vector<1024xf32>
    %c24 = arith.constant 24 : index
    %c0_27 = arith.constant 0 : index
    %124 = vector.load %arg7[%c24, %c0_27] : memref<32x1024xf32, #tpu.memory_space<vmem>>, vector<1x1024xf32>
    %125 = vector.shape_cast %124 : vector<1x1024xf32> to vector<1024xf32>
    %126 = vector.shape_cast %123 : vector<1024xf32> to vector<1x1024xf32>
    tpu.vector_store %arg7[%c24, %c0_27], %126 {strides = array<i32>} : memref<32x1024xf32, #tpu.memory_space<vmem>>, vector<1x1024xf32>,
    %cst = arith.constant 0.000000e+00 : f32
    %127 = vector.broadcast %cst : f32 to vector<1024xf32>
    %c25 = arith.constant 25 : index
    %c0_28 = arith.constant 0 : index
    %128 = vector.load %arg7[%c25, %c0_28] : memref<32x1024xf32, #tpu.memory_space<vmem>>, vector<1x1024xf32>
    %129 = vector.shape_cast %128 : vector<1x1024xf32> to vector<1024xf32>
    %130 = vector.shape_cast %127 : vector<1024xf32> to vector<1x1024xf32>
    tpu.vector_store %arg7[%c25, %c0_28], %130 {strides = array<i32>} : memref<32x1024xf32, #tpu.memory_space<vmem>>, vector<1x1024xf32>,
    %cst_29 = arith.constant 0.000000e+00 : f32
    %131 = vector.broadcast %cst_29 : f32 to vector<1024xf32>
    %c26 = arith.constant 26 : index
    %c0_30 = arith.constant 0 : index
    %132 = vector.load %arg7[%c26, %c0_30] : memref<32x1024xf32, #tpu.memory_space<vmem>>, vector<1x1024xf32>
    %133 = vector.shape_cast %132 : vector<1x1024xf32> to vector<1024xf32>
    %134 = vector.shape_cast %131 : vector<1024xf32> to vector<1x1024xf32>
    tpu.vector_store %arg7[%c26, %c0_30], %134 {strides = array<i32>} : memref<32x1024xf32, #tpu.memory_space<vmem>>, vector<1x1024xf32>,
    %cst_31 = arith.constant 0.000000e+00 : f32
    %135 = vector.broadcast %cst_31 : f32 to vector<1024xf32>
    %c27 = arith.constant 27 : index
    %c0_32 = arith.constant 0 : index
    %136 = vector.load %arg7[%c27, %c0_32] : memref<32x1024xf32, #tpu.memory_space<vmem>>, vector<1x1024xf32>
    %137 = vector.shape_cast %136 : vector<1x1024xf32> to vector<1024xf32>
    %138 = vector.shape_cast %135 : vector<1024xf32> to vector<1x1024xf32>
    tpu.vector_store %arg7[%c27, %c0_32], %138 {strides = array<i32>} : memref<32x1024xf32, #tpu.memory_space<vmem>>, vector<1x1024xf32>,
    %cst_33 = arith.constant 0.000000e+00 : f32
    %139 = vector.broadcast %cst_33 : f32 to vector<1024xf32>
    %c28 = arith.constant 28 : index
    %c0_34 = arith.constant 0 : index
    %140 = vector.load %arg7[%c28, %c0_34] : memref<32x1024xf32, #tpu.memory_space<vmem>>, vector<1x1024xf32>
    %141 = vector.shape_cast %140 : vector<1x1024xf32> to vector<1024xf32>
    %142 = vector.shape_cast %139 : vector<1024xf32> to vector<1x1024xf32>
    tpu.vector_store %arg7[%c28, %c0_34], %142 {strides = array<i32>} : memref<32x1024xf32, #tpu.memory_space<vmem>>, vector<1x1024xf32>,
    %cst_35 = arith.constant 0.000000e+00 : f32
    %143 = vector.broadcast %cst_35 : f32 to vector<1024xf32>
    %c29 = arith.constant 29 : index
    %c0_36 = arith.constant 0 : index
    %144 = vector.load %arg7[%c29, %c0_36] : memref<32x1024xf32, #tpu.memory_space<vmem>>, vector<1x1024xf32>
    %145 = vector.shape_cast %144 : vector<1x1024xf32> to vector<1024xf32>
    %146 = vector.shape_cast %143 : vector<1024xf32> to vector<1x1024xf32>
    tpu.vector_store %arg7[%c29, %c0_36], %146 {strides = array<i32>} : memref<32x1024xf32, #tpu.memory_space<vmem>>, vector<1x1024xf32>,
    %cst_37 = arith.constant 0.000000e+00 : f32
    %147 = vector.broadcast %cst_37 : f32 to vector<1024xf32>
    %c30 = arith.constant 30 : index
    %c0_38 = arith.constant 0 : index
    %148 = vector.load %arg7[%c30, %c0_38] : memref<32x1024xf32, #tpu.memory_space<vmem>>, vector<1x1024xf32>
    %149 = vector.shape_cast %148 : vector<1x1024xf32> to vector<1024xf32>
    %150 = vector.shape_cast %147 : vector<1024xf32> to vector<1x1024xf32>
    tpu.vector_store %arg7[%c30, %c0_38], %150 {strides = array<i32>} : memref<32x1024xf32, #tpu.memory_space<vmem>>, vector<1x1024xf32>,
    %cst_39 = arith.constant 0.000000e+00 : f32
    %151 = vector.broadcast %cst_39 : f32 to vector<1024xf32>
    %c31 = arith.constant 31 : index
    %c0_40 = arith.constant 0 : index
    %152 = vector.load %arg7[%c31, %c0_40] : memref<32x1024xf32, #tpu.memory_space<vmem>>, vector<1x1024xf32>
    %153 = vector.shape_cast %152 : vector<1x1024xf32> to vector<1024xf32>
    %154 = vector.shape_cast %151 : vector<1024xf32> to vector<1x1024xf32>
    tpu.vector_store %arg7[%c31, %c0_40], %154 {strides = array<i32>} : memref<32x1024xf32, #tpu.memory_space<vmem>>, vector<1x1024xf32>,
    %c0_41 = arith.constant 0 : index
    %c0_42 = arith.constant 0 : index
    %155 = vector.load %arg7[%c0_41, %c0_42] : memref<32x1024xf32, #tpu.memory_space<vmem>>, vector<32x1024xf32>
    %156 = arith.truncf %155 : vector<32x1024xf32> to vector<32x1024xbf16>
    %c0_43 = arith.constant 0 : index
    %c0_44 = arith.constant 0 : index
    %157 = vector.load %arg2[%c0_43, %c0_44] : memref<16x32xbf16, #tpu.memory_space<vmem>>, vector<16x32xbf16>
    %cst_45 = arith.constant dense<0.000000e+00> : vector<16x1024xf32>
    %158 = tpu.matmul %157, %156, %cst_45 {dimension_numbers = #tpu.dot_dimension_numbers<[1], [0], [0], [1], [0, 0, 1, 1], [], []>} : vector<16x32xbf16>, vector<32x1024xbf16>, vector<16x1024xf32> -> vector<16x1024xf32>
    %c0_46 = arith.constant 0 : index
    %c0_47 = arith.constant 0 : index
    %159 = vector.load %arg3[%c0_46, %c0_47] : memref<16x1xf32, #tpu.memory_space<vmem>>, vector<16x1xf32>
    %160 = vector.broadcast %159 : vector<16x1xf32> to vector<16x1024xf32>
    %161 = arith.addf %158, %160 : vector<16x1024xf32>
    %cst_48 = arith.constant 0.000000e+00 : f32
    %162 = vector.broadcast %cst_48 : f32 to vector<16x1024xf32>
    %163 = arith.cmpf oge, %161, %162 : vector<16x1024xf32>
    %cst_49 = arith.constant 0.00999999977 : f32
    %164 = vector.broadcast %cst_49 : f32 to vector<16x1024xf32>
    %165 = arith.mulf %164, %161 : vector<16x1024xf32>
    %166 = arith.select %163, %161, %165 : vector<16x1024xi1>, vector<16x1024xf32>
    %cst_50 = arith.constant 0.000000e+00 : f32
    %167 = vector.broadcast %cst_50 : f32 to vector<1x8xf32>
    %168 = vector.extract_strided_slice %166 {offsets = [0, 0], sizes = [1, 1024], strides = [1, 1]} : vector<16x1024xf32> to vector<1x1024xf32>
    %169 = arith.truncf %168 : vector<1x1024xf32> to vector<1x1024xbf16>
    %c0_51 = arith.constant 0 : index
    %c0_52 = arith.constant 0 : index
    %c0_53 = arith.constant 0 : index
    %170 = vector.load %arg4[%c0_51, %c0_52, %c0_53] : memref<16x1024x8xbf16, #tpu.memory_space<vmem>>, vector<1x1024x8xbf16>
    %171 = vector.shape_cast %170 : vector<1x1024x8xbf16> to vector<1024x8xbf16>
    %cst_54 = arith.constant dense<0.000000e+00> : vector<1x8xf32>
    %172 = tpu.matmul %169, %171, %cst_54 {dimension_numbers = #tpu.dot_dimension_numbers<[1], [0], [0], [1], [0, 0, 1, 1], [], []>} : vector<1x1024xbf16>, vector<1024x8xbf16>, vector<1x8xf32> -> vector<1x8xf32>
    %173 = arith.addf %167, %172 : vector<1x8xf32>
    %174 = vector.extract_strided_slice %166 {offsets = [1, 0], sizes = [1, 1024], strides = [1, 1]} : vector<16x1024xf32> to vector<1x1024xf32>
    %175 = arith.truncf %174 : vector<1x1024xf32> to vector<1x1024xbf16>
    %c1_55 = arith.constant 1 : index
    %c0_56 = arith.constant 0 : index
    %c0_57 = arith.constant 0 : index
    %176 = vector.load %arg4[%c1_55, %c0_56, %c0_57] : memref<16x1024x8xbf16, #tpu.memory_space<vmem>>, vector<1x1024x8xbf16>
    %177 = vector.shape_cast %176 : vector<1x1024x8xbf16> to vector<1024x8xbf16>
    %cst_58 = arith.constant dense<0.000000e+00> : vector<1x8xf32>
    %178 = tpu.matmul %175, %177, %cst_58 {dimension_numbers = #tpu.dot_dimension_numbers<[1], [0], [0], [1], [0, 0, 1, 1], [], []>} : vector<1x1024xbf16>, vector<1024x8xbf16>, vector<1x8xf32> -> vector<1x8xf32>
    %179 = arith.addf %173, %178 : vector<1x8xf32>
    %180 = vector.extract_strided_slice %166 {offsets = [2, 0], sizes = [1, 1024], strides = [1, 1]} : vector<16x1024xf32> to vector<1x1024xf32>
    %181 = arith.truncf %180 : vector<1x1024xf32> to vector<1x1024xbf16>
    %c2_59 = arith.constant 2 : index
    %c0_60 = arith.constant 0 : index
    %c0_61 = arith.constant 0 : index
    %182 = vector.load %arg4[%c2_59, %c0_60, %c0_61] : memref<16x1024x8xbf16, #tpu.memory_space<vmem>>, vector<1x1024x8xbf16>
    %183 = vector.shape_cast %182 : vector<1x1024x8xbf16> to vector<1024x8xbf16>
    %cst_62 = arith.constant dense<0.000000e+00> : vector<1x8xf32>
    %184 = tpu.matmul %181, %183, %cst_62 {dimension_numbers = #tpu.dot_dimension_numbers<[1], [0], [0], [1], [0, 0, 1, 1], [], []>} : vector<1x1024xbf16>, vector<1024x8xbf16>, vector<1x8xf32> -> vector<1x8xf32>
    %185 = arith.addf %179, %184 : vector<1x8xf32>
    %186 = vector.extract_strided_slice %166 {offsets = [3, 0], sizes = [1, 1024], strides = [1, 1]} : vector<16x1024xf32> to vector<1x1024xf32>
    %187 = arith.truncf %186 : vector<1x1024xf32> to vector<1x1024xbf16>
    %c3_63 = arith.constant 3 : index
    %c0_64 = arith.constant 0 : index
    %c0_65 = arith.constant 0 : index
    %188 = vector.load %arg4[%c3_63, %c0_64, %c0_65] : memref<16x1024x8xbf16, #tpu.memory_space<vmem>>, vector<1x1024x8xbf16>
    %189 = vector.shape_cast %188 : vector<1x1024x8xbf16> to vector<1024x8xbf16>
    %cst_66 = arith.constant dense<0.000000e+00> : vector<1x8xf32>
    %190 = tpu.matmul %187, %189, %cst_66 {dimension_numbers = #tpu.dot_dimension_numbers<[1], [0], [0], [1], [0, 0, 1, 1], [], []>} : vector<1x1024xbf16>, vector<1024x8xbf16>, vector<1x8xf32> -> vector<1x8xf32>
    %191 = arith.addf %185, %190 : vector<1x8xf32>
    %192 = vector.extract_strided_slice %166 {offsets = [4, 0], sizes = [1, 1024], strides = [1, 1]} : vector<16x1024xf32> to vector<1x1024xf32>
    %193 = arith.truncf %192 : vector<1x1024xf32> to vector<1x1024xbf16>
    %c4_67 = arith.constant 4 : index
    %c0_68 = arith.constant 0 : index
    %c0_69 = arith.constant 0 : index
    %194 = vector.load %arg4[%c4_67, %c0_68, %c0_69] : memref<16x1024x8xbf16, #tpu.memory_space<vmem>>, vector<1x1024x8xbf16>
    %195 = vector.shape_cast %194 : vector<1x1024x8xbf16> to vector<1024x8xbf16>
    %cst_70 = arith.constant dense<0.000000e+00> : vector<1x8xf32>
    %196 = tpu.matmul %193, %195, %cst_70 {dimension_numbers = #tpu.dot_dimension_numbers<[1], [0], [0], [1], [0, 0, 1, 1], [], []>} : vector<1x1024xbf16>, vector<1024x8xbf16>, vector<1x8xf32> -> vector<1x8xf32>
    %197 = arith.addf %191, %196 : vector<1x8xf32>
    %198 = vector.extract_strided_slice %166 {offsets = [5, 0], sizes = [1, 1024], strides = [1, 1]} : vector<16x1024xf32> to vector<1x1024xf32>
    %199 = arith.truncf %198 : vector<1x1024xf32> to vector<1x1024xbf16>
    %c5_71 = arith.constant 5 : index
    %c0_72 = arith.constant 0 : index
    %c0_73 = arith.constant 0 : index
    %200 = vector.load %arg4[%c5_71, %c0_72, %c0_73] : memref<16x1024x8xbf16, #tpu.memory_space<vmem>>, vector<1x1024x8xbf16>
    %201 = vector.shape_cast %200 : vector<1x1024x8xbf16> to vector<1024x8xbf16>
    %cst_74 = arith.constant dense<0.000000e+00> : vector<1x8xf32>
    %202 = tpu.matmul %199, %201, %cst_74 {dimension_numbers = #tpu.dot_dimension_numbers<[1], [0], [0], [1], [0, 0, 1, 1], [], []>} : vector<1x1024xbf16>, vector<1024x8xbf16>, vector<1x8xf32> -> vector<1x8xf32>
    %203 = arith.addf %197, %202 : vector<1x8xf32>
    %204 = vector.extract_strided_slice %166 {offsets = [6, 0], sizes = [1, 1024], strides = [1, 1]} : vector<16x1024xf32> to vector<1x1024xf32>
    %205 = arith.truncf %204 : vector<1x1024xf32> to vector<1x1024xbf16>
    %c6_75 = arith.constant 6 : index
    %c0_76 = arith.constant 0 : index
    %c0_77 = arith.constant 0 : index
    %206 = vector.load %arg4[%c6_75, %c0_76, %c0_77] : memref<16x1024x8xbf16, #tpu.memory_space<vmem>>, vector<1x1024x8xbf16>
    %207 = vector.shape_cast %206 : vector<1x1024x8xbf16> to vector<1024x8xbf16>
    %cst_78 = arith.constant dense<0.000000e+00> : vector<1x8xf32>
    %208 = tpu.matmul %205, %207, %cst_78 {dimension_numbers = #tpu.dot_dimension_numbers<[1], [0], [0], [1], [0, 0, 1, 1], [], []>} : vector<1x1024xbf16>, vector<1024x8xbf16>, vector<1x8xf32> -> vector<1x8xf32>
    %209 = arith.addf %203, %208 : vector<1x8xf32>
    %210 = vector.extract_strided_slice %166 {offsets = [7, 0], sizes = [1, 1024], strides = [1, 1]} : vector<16x1024xf32> to vector<1x1024xf32>
    %211 = arith.truncf %210 : vector<1x1024xf32> to vector<1x1024xbf16>
    %c7_79 = arith.constant 7 : index
    %c0_80 = arith.constant 0 : index
    %c0_81 = arith.constant 0 : index
    %212 = vector.load %arg4[%c7_79, %c0_80, %c0_81] : memref<16x1024x8xbf16, #tpu.memory_space<vmem>>, vector<1x1024x8xbf16>
    %213 = vector.shape_cast %212 : vector<1x1024x8xbf16> to vector<1024x8xbf16>
    %cst_82 = arith.constant dense<0.000000e+00> : vector<1x8xf32>
    %214 = tpu.matmul %211, %213, %cst_82 {dimension_numbers = #tpu.dot_dimension_numbers<[1], [0], [0], [1], [0, 0, 1, 1], [], []>} : vector<1x1024xbf16>, vector<1024x8xbf16>, vector<1x8xf32> -> vector<1x8xf32>
    %215 = arith.addf %209, %214 : vector<1x8xf32>
    %216 = vector.extract_strided_slice %166 {offsets = [8, 0], sizes = [1, 1024], strides = [1, 1]} : vector<16x1024xf32> to vector<1x1024xf32>
    %217 = arith.truncf %216 : vector<1x1024xf32> to vector<1x1024xbf16>
    %c8_83 = arith.constant 8 : index
    %c0_84 = arith.constant 0 : index
    %c0_85 = arith.constant 0 : index
    %218 = vector.load %arg4[%c8_83, %c0_84, %c0_85] : memref<16x1024x8xbf16, #tpu.memory_space<vmem>>, vector<1x1024x8xbf16>
    %219 = vector.shape_cast %218 : vector<1x1024x8xbf16> to vector<1024x8xbf16>
    %cst_86 = arith.constant dense<0.000000e+00> : vector<1x8xf32>
    %220 = tpu.matmul %217, %219, %cst_86 {dimension_numbers = #tpu.dot_dimension_numbers<[1], [0], [0], [1], [0, 0, 1, 1], [], []>} : vector<1x1024xbf16>, vector<1024x8xbf16>, vector<1x8xf32> -> vector<1x8xf32>
    %221 = arith.addf %215, %220 : vector<1x8xf32>
    %222 = vector.extract_strided_slice %166 {offsets = [9, 0], sizes = [1, 1024], strides = [1, 1]} : vector<16x1024xf32> to vector<1x1024xf32>
    %223 = arith.truncf %222 : vector<1x1024xf32> to vector<1x1024xbf16>
    %c9_87 = arith.constant 9 : index
    %c0_88 = arith.constant 0 : index
    %c0_89 = arith.constant 0 : index
    %224 = vector.load %arg4[%c9_87, %c0_88, %c0_89] : memref<16x1024x8xbf16, #tpu.memory_space<vmem>>, vector<1x1024x8xbf16>
    %225 = vector.shape_cast %224 : vector<1x1024x8xbf16> to vector<1024x8xbf16>
    %cst_90 = arith.constant dense<0.000000e+00> : vector<1x8xf32>
    %226 = tpu.matmul %223, %225, %cst_90 {dimension_numbers = #tpu.dot_dimension_numbers<[1], [0], [0], [1], [0, 0, 1, 1], [], []>} : vector<1x1024xbf16>, vector<1024x8xbf16>, vector<1x8xf32> -> vector<1x8xf32>
    %227 = arith.addf %221, %226 : vector<1x8xf32>
    %228 = vector.extract_strided_slice %166 {offsets = [10, 0], sizes = [1, 1024], strides = [1, 1]} : vector<16x1024xf32> to vector<1x1024xf32>
    %229 = arith.truncf %228 : vector<1x1024xf32> to vector<1x1024xbf16>
    %c10_91 = arith.constant 10 : index
    %c0_92 = arith.constant 0 : index
    %c0_93 = arith.constant 0 : index
    %230 = vector.load %arg4[%c10_91, %c0_92, %c0_93] : memref<16x1024x8xbf16, #tpu.memory_space<vmem>>, vector<1x1024x8xbf16>
    %231 = vector.shape_cast %230 : vector<1x1024x8xbf16> to vector<1024x8xbf16>
    %cst_94 = arith.constant dense<0.000000e+00> : vector<1x8xf32>
    %232 = tpu.matmul %229, %231, %cst_94 {dimension_numbers = #tpu.dot_dimension_numbers<[1], [0], [0], [1], [0, 0, 1, 1], [], []>} : vector<1x1024xbf16>, vector<1024x8xbf16>, vector<1x8xf32> -> vector<1x8xf32>
    %233 = arith.addf %227, %232 : vector<1x8xf32>
    %234 = vector.extract_strided_slice %166 {offsets = [11, 0], sizes = [1, 1024], strides = [1, 1]} : vector<16x1024xf32> to vector<1x1024xf32>
    %235 = arith.truncf %234 : vector<1x1024xf32> to vector<1x1024xbf16>
    %c11_95 = arith.constant 11 : index
    %c0_96 = arith.constant 0 : index
    %c0_97 = arith.constant 0 : index
    %236 = vector.load %arg4[%c11_95, %c0_96, %c0_97] : memref<16x1024x8xbf16, #tpu.memory_space<vmem>>, vector<1x1024x8xbf16>
    %237 = vector.shape_cast %236 : vector<1x1024x8xbf16> to vector<1024x8xbf16>
    %cst_98 = arith.constant dense<0.000000e+00> : vector<1x8xf32>
    %238 = tpu.matmul %235, %237, %cst_98 {dimension_numbers = #tpu.dot_dimension_numbers<[1], [0], [0], [1], [0, 0, 1, 1], [], []>} : vector<1x1024xbf16>, vector<1024x8xbf16>, vector<1x8xf32> -> vector<1x8xf32>
    %239 = arith.addf %233, %238 : vector<1x8xf32>
    %240 = vector.extract_strided_slice %166 {offsets = [12, 0], sizes = [1, 1024], strides = [1, 1]} : vector<16x1024xf32> to vector<1x1024xf32>
    %241 = arith.truncf %240 : vector<1x1024xf32> to vector<1x1024xbf16>
    %c12_99 = arith.constant 12 : index
    %c0_100 = arith.constant 0 : index
    %c0_101 = arith.constant 0 : index
    %242 = vector.load %arg4[%c12_99, %c0_100, %c0_101] : memref<16x1024x8xbf16, #tpu.memory_space<vmem>>, vector<1x1024x8xbf16>
    %243 = vector.shape_cast %242 : vector<1x1024x8xbf16> to vector<1024x8xbf16>
    %cst_102 = arith.constant dense<0.000000e+00> : vector<1x8xf32>
    %244 = tpu.matmul %241, %243, %cst_102 {dimension_numbers = #tpu.dot_dimension_numbers<[1], [0], [0], [1], [0, 0, 1, 1], [], []>} : vector<1x1024xbf16>, vector<1024x8xbf16>, vector<1x8xf32> -> vector<1x8xf32>
    %245 = arith.addf %239, %244 : vector<1x8xf32>
    %246 = vector.extract_strided_slice %166 {offsets = [13, 0], sizes = [1, 1024], strides = [1, 1]} : vector<16x1024xf32> to vector<1x1024xf32>
    %247 = arith.truncf %246 : vector<1x1024xf32> to vector<1x1024xbf16>
    %c13_103 = arith.constant 13 : index
    %c0_104 = arith.constant 0 : index
    %c0_105 = arith.constant 0 : index
    %248 = vector.load %arg4[%c13_103, %c0_104, %c0_105] : memref<16x1024x8xbf16, #tpu.memory_space<vmem>>, vector<1x1024x8xbf16>
    %249 = vector.shape_cast %248 : vector<1x1024x8xbf16> to vector<1024x8xbf16>
    %cst_106 = arith.constant dense<0.000000e+00> : vector<1x8xf32>
    %250 = tpu.matmul %247, %249, %cst_106 {dimension_numbers = #tpu.dot_dimension_numbers<[1], [0], [0], [1], [0, 0, 1, 1], [], []>} : vector<1x1024xbf16>, vector<1024x8xbf16>, vector<1x8xf32> -> vector<1x8xf32>
    %251 = arith.addf %245, %250 : vector<1x8xf32>
    %252 = vector.extract_strided_slice %166 {offsets = [14, 0], sizes = [1, 1024], strides = [1, 1]} : vector<16x1024xf32> to vector<1x1024xf32>
    %253 = arith.truncf %252 : vector<1x1024xf32> to vector<1x1024xbf16>
    %c14_107 = arith.constant 14 : index
    %c0_108 = arith.constant 0 : index
    %c0_109 = arith.constant 0 : index
    %254 = vector.load %arg4[%c14_107, %c0_108, %c0_109] : memref<16x1024x8xbf16, #tpu.memory_space<vmem>>, vector<1x1024x8xbf16>
    %255 = vector.shape_cast %254 : vector<1x1024x8xbf16> to vector<1024x8xbf16>
    %cst_110 = arith.constant dense<0.000000e+00> : vector<1x8xf32>
    %256 = tpu.matmul %253, %255, %cst_110 {dimension_numbers = #tpu.dot_dimension_numbers<[1], [0], [0], [1], [0, 0, 1, 1], [], []>} : vector<1x1024xbf16>, vector<1024x8xbf16>, vector<1x8xf32> -> vector<1x8xf32>
    %257 = arith.addf %251, %256 : vector<1x8xf32>
    %258 = vector.extract_strided_slice %166 {offsets = [15, 0], sizes = [1, 1024], strides = [1, 1]} : vector<16x1024xf32> to vector<1x1024xf32>
    %259 = arith.truncf %258 : vector<1x1024xf32> to vector<1x1024xbf16>
    %c15_111 = arith.constant 15 : index
    %c0_112 = arith.constant 0 : index
    %c0_113 = arith.constant 0 : index
    %260 = vector.load %arg4[%c15_111, %c0_112, %c0_113] : memref<16x1024x8xbf16, #tpu.memory_space<vmem>>, vector<1x1024x8xbf16>
    %261 = vector.shape_cast %260 : vector<1x1024x8xbf16> to vector<1024x8xbf16>
    %cst_114 = arith.constant dense<0.000000e+00> : vector<1x8xf32>
    %262 = tpu.matmul %259, %261, %cst_114 {dimension_numbers = #tpu.dot_dimension_numbers<[1], [0], [0], [1], [0, 0, 1, 1], [], []>} : vector<1x1024xbf16>, vector<1024x8xbf16>, vector<1x8xf32> -> vector<1x8xf32>
    %263 = arith.addf %257, %262 : vector<1x8xf32>
    %c0_115 = arith.constant 0 : index
    %c0_116 = arith.constant 0 : index
    %264 = vector.load %arg5[%c0_115, %c0_116] : memref<1x8xf32, #tpu.memory_space<vmem>>, vector<1x8xf32>
    %265 = arith.addf %263, %264 : vector<1x8xf32>
    %cst_117 = arith.constant 0.000000e+00 : f32
    %266 = vector.broadcast %cst_117 : f32 to vector<1x8xf32>
    %267 = arith.cmpf oge, %265, %266 : vector<1x8xf32>
    %cst_118 = arith.constant 0.00999999977 : f32
    %268 = vector.broadcast %cst_118 : f32 to vector<1x8xf32>
    %269 = arith.mulf %268, %265 : vector<1x8xf32>
    %270 = arith.select %267, %265, %269 : vector<1x8xi1>, vector<1x8xf32>
    %271 = vector.shape_cast %270 : vector<1x8xf32> to vector<1x1x8xf32>
    %c0_119 = arith.constant 0 : index
    %c0_120 = arith.constant 0 : index
    %c0_121 = arith.constant 0 : index
    %272 = vector.load %arg6[%c0_119, %c0_120, %c0_121] : memref<1x1x8xf32, #tpu.memory_space<vmem>>, vector<1x1x8xf32>
    tpu.vector_store %arg6[%c0_119, %c0_120, %c0_121], %271 {strides = array<i32>} : memref<1x1x8xf32, #tpu.memory_space<vmem>>, vector<1x1x8xf32>,
    return
  }
  func.func @transform_0(%arg0: i32) -> (i32, i32, i32) {
    %c0_i32 = arith.constant 0 : i32
    %c0_i32_0 = arith.constant 0 : i32
    %c0_i32_1 = arith.constant 0 : i32
    return %arg0, %c0_i32, %c0_i32_0 : i32, i32, i32
  }
  func.func @transform_1(%arg0: i32) -> (i32, i32) {
    %c0_i32 = arith.constant 0 : i32
    %c0_i32_0 = arith.constant 0 : i32
    %c0_i32_1 = arith.constant 0 : i32
    return %c0_i32, %c0_i32_0 : i32, i32
  }
  func.func @transform_2(%arg0: i32) -> (i32, i32) {
    %c0_i32 = arith.constant 0 : i32
    %c0_i32_0 = arith.constant 0 : i32
    %c0_i32_1 = arith.constant 0 : i32
    return %c0_i32, %c0_i32_0 : i32, i32
  }
  func.func @transform_3(%arg0: i32) -> (i32, i32, i32) {
    %c0_i32 = arith.constant 0 : i32
    %c0_i32_0 = arith.constant 0 : i32
    %c0_i32_1 = arith.constant 0 : i32
    %c0_i32_2 = arith.constant 0 : i32
    return %c0_i32, %c0_i32_0, %c0_i32_1 : i32, i32, i32
  }
  func.func @transform_4(%arg0: i32) -> (i32, i32) {
    %c0_i32 = arith.constant 0 : i32
    %c0_i32_0 = arith.constant 0 : i32
    %c0_i32_1 = arith.constant 0 : i32
    return %c0_i32, %c0_i32_0 : i32, i32
  }
  func.func @transform_5(%arg0: i32) -> (i32, i32, i32) {
    %c0_i32 = arith.constant 0 : i32
    %c0_i32_0 = arith.constant 0 : i32
    %c0_i32_1 = arith.constant 0 : i32
    return %arg0, %c0_i32, %c0_i32_0 : i32, i32, i32
  }
}

</mosaic_0001>

<llo_original>
// kernel: encoder_forward.1
$region0: #{encoder_forward.1}
  #allocation0 [shape = 'u32[]', space=smem, size = 0x4, offset = 0x4, fixed_abs, tag = 'smem constant byte address 0x4 - core index']
  #allocation1 [shape = 'u32[72,128]{1,0:T(1,128)}', space=vmem, size = 0x9000, scoped, tag = 'internal scratch']
  #allocation2 [shape = 'f32[32,1024]{1,0:T(8,128)}', space=vmem, size = 0x20000, scoped, tag = 'scratch operand']
  %s0 = inlined_call_operand.vmem [shape: f32[2,1,1280], index: 0, kind: input, shape index: {}]
  %s1 = inlined_call_operand.vmem [shape: bf16[16,32], index: 1, kind: input, shape index: {}]
  %s2 = inlined_call_operand.vmem [shape: f32[16,1], index: 2, kind: input, shape index: {}]
  %s3 = inlined_call_operand.vmem [shape: bf16[16,1024,8], index: 3, kind: input, shape index: {}]
  %s4 = inlined_call_operand.vmem [shape: f32[1,8], index: 4, kind: input, shape index: {}]
  %s5 = inlined_call_operand.hbm [shape: f32[2,1,8], index: 5, kind: output, shape index: {}]
  %s6 = sld [smem:[#allocation0]]
  $region53: #{encoder_forward.1} parent=0
    _
  %s8 = ssub.s32 1, %s6
  %s9 = scalar_select 0, %s8, %s6
  $region1: #{encoder_forward.1} parent=0
    #allocation3 [shape = 'u8[1024]{0}', space=vmem, size = 0x400, scoped, tag = 'output window, operand 0']
    #allocation4 [shape = 's32[2]{0}', space=sflag, size = 0x8, scoped, tag = 'scoped memory for encoder_forward.1']
    %10 = vsyncpa [#allocation4], 0
    %s11 = scalar_lea.sflag [#allocation4], 1
    %12 = vsyncpa %s11, 0
    loop: start=0, step=1, limit=4
    $region2: #{encoder_forward.1} parent=1 // loop_pre_header
      _
    $region3: #{encoder_forward.1} parent=1 // loop_header
      %s14 = sphi 0, %s18
      %p15 = scmp.ge.s32.totalorder %s14, 4
      %s24 = sphi 0, %s26
      %s27 = sphi 0, %s24
      %s28 = sphi 0, %s27
      %s44 = sphi 0, %s28
      %s48 = sphi 0, %s48
      %s50 = sphi 0, %s48
      %s51 = sphi 0, %s50
      %s65 = sphi 0, %s51
      %s69 = sphi 0, %s69
      %s71 = sphi 0, %s69
      %s72 = sphi 0, %s71
      %s86 = sphi 0, %s72
      %s90 = sphi 0, %s90
      %s92 = sphi 0, %s90
      %s93 = sphi 0, %s92
      %s107 = sphi 0, %s93
      %s111 = sphi 0, %s111
      %s113 = sphi 0, %s111
      %s114 = sphi 0, %s113
      %s128 = sphi 0, %s114
      %s134 = sphi 0, %s136
      %s137 = sphi 0, %s134
      %s138 = sphi 0, %s137
      %s154 = sphi 0, %s138
    $region4: #{encoder_forward.1} parent=1 // loop_header_branch
      %17 = sbr.rel (%p15) target = $region8
    $region5: #{encoder_forward.1} parent=1 // loop_body
      %s19 = ssub.s32 %s14, 1
      %s20 = ssub.s32 %s14, 2
      %s21 = sadd.s32 %s14, 1
      %s22 = ssub.s32 %s14, %s21
      %p23 = scmp.eq.s32.totalorder %s22, 0
      %s25 = sadd.s32 %s24, 1
      %s26 = scalar_select %p23, %s24, %s25
      %p29 = pneg %p23
      %p30 = scmp.eq.s32.totalorder %s14, 1
      %p31 = por %p29, %p30
      %p32 = scmp.ne.s32.totalorder %s24, %s27
      %p33 = scmp.eq.s32.totalorder %s14, 0
      %p34 = por %p32, %p33
      %p35 = scmp.ne.s32.totalorder %s24, %s27
      %p36 = scmp.eq.s32.totalorder %s19, 1
      %p37 = por %p35, %p36
      %p38 = scmp.ne.s32.totalorder %s27, %s28
      %p39 = scmp.eq.s32.totalorder %s19, 0
      %p40 = por %p38, %p39
      %p41 = scmp.ne.s32.totalorder %s27, %s28
      %p42 = scmp.eq.s32.totalorder %s20, 1
      %p43 = por %p41, %p42
      %p45 = scmp.ne.s32.totalorder %s28, %s44
      %p46 = scmp.eq.s32.totalorder %s20, 0
      %p47 = por %p45, %p46
      %s49 = sadd.s32 %s48, 1
      %p52 = scmp.eq.s32.totalorder %s14, 1
      %p53 = scmp.ne.s32.totalorder %s48, %s50
      %p54 = scmp.eq.s32.totalorder %s14, 0
      %p55 = por %p53, %p54
      %p56 = scmp.ne.s32.totalorder %s48, %s50
      %p57 = scmp.eq.s32.totalorder %s19, 1
      %p58 = por %p56, %p57
      %p59 = scmp.ne.s32.totalorder %s50, %s51
      %p60 = scmp.eq.s32.totalorder %s19, 0
      %p61 = por %p59, %p60
      %p62 = scmp.ne.s32.totalorder %s50, %s51
      %p63 = scmp.eq.s32.totalorder %s20, 1
      %p64 = por %p62, %p63
      %p66 = scmp.ne.s32.totalorder %s51, %s65
      %p67 = scmp.eq.s32.totalorder %s20, 0
      %p68 = por %p66, %p67
      %s70 = sadd.s32 %s69, 1
      %p73 = scmp.eq.s32.totalorder %s14, 1
      %p74 = scmp.ne.s32.totalorder %s69, %s71
      %p75 = scmp.eq.s32.totalorder %s14, 0
      %p76 = por %p74, %p75
      %p77 = scmp.ne.s32.totalorder %s69, %s71
      %p78 = scmp.eq.s32.totalorder %s19, 1
      %p79 = por %p77, %p78
      %p80 = scmp.ne.s32.totalorder %s71, %s72
      %p81 = scmp.eq.s32.totalorder %s19, 0
      %p82 = por %p80, %p81
      %p83 = scmp.ne.s32.totalorder %s71, %s72
      %p84 = scmp.eq.s32.totalorder %s20, 1
      %p85 = por %p83, %p84
      %p87 = scmp.ne.s32.totalorder %s72, %s86
      %p88 = scmp.eq.s32.totalorder %s20, 0
      %p89 = por %p87, %p88
      %s91 = sadd.s32 %s90, 1
      %p94 = scmp.eq.s32.totalorder %s14, 1
      %p95 = scmp.ne.s32.totalorder %s90, %s92
      %p96 = scmp.eq.s32.totalorder %s14, 0
      %p97 = por %p95, %p96
      %p98 = scmp.ne.s32.totalorder %s90, %s92
      %p99 = scmp.eq.s32.totalorder %s19, 1
      %p100 = por %p98, %p99
      %p101 = scmp.ne.s32.totalorder %s92, %s93
      %p102 = scmp.eq.s32.totalorder %s19, 0
      %p103 = por %p101, %p102
      %p104 = scmp.ne.s32.totalorder %s92, %s93
      %p105 = scmp.eq.s32.totalorder %s20, 1
      %p106 = por %p104, %p105
      %p108 = scmp.ne.s32.totalorder %s93, %s107
      %p109 = scmp.eq.s32.totalorder %s20, 0
      %p110 = por %p108, %p109
      %s112 = sadd.s32 %s111, 1
      %p115 = scmp.eq.s32.totalorder %s14, 1
      %p116 = scmp.ne.s32.totalorder %s111, %s113
      %p117 = scmp.eq.s32.totalorder %s14, 0
      %p118 = por %p116, %p117
      %p119 = scmp.ne.s32.totalorder %s111, %s113
      %p120 = scmp.eq.s32.totalorder %s19, 1
      %p121 = por %p119, %p120
      %p122 = scmp.ne.s32.totalorder %s113, %s114
      %p123 = scmp.eq.s32.totalorder %s19, 0
      %p124 = por %p122, %p123
      %p125 = scmp.ne.s32.totalorder %s113, %s114
      %p126 = scmp.eq.s32.totalorder %s20, 1
      %p127 = por %p125, %p126
      %p129 = scmp.ne.s32.totalorder %s114, %s128
      %p130 = scmp.eq.s32.totalorder %s20, 0
      %p131 = por %p129, %p130
      %s132 = ssub.s32 %s14, %s21
      %p133 = scmp.eq.s32.totalorder %s132, 0
      %s135 = sadd.s32 %s134, 1
      %s136 = scalar_select %p133, %s134, %s135
      %p139 = pneg %p133
      %p140 = scmp.eq.s32.totalorder %s14, 1
      %p141 = por %p139, %p140
      %p142 = scmp.ne.s32.totalorder %s134, %s137
      %p143 = scmp.eq.s32.totalorder %s14, 0
      %p144 = por %p142, %p143
      %p145 = scmp.ne.s32.totalorder %s134, %s137
      %p146 = scmp.eq.s32.totalorder %s19, 1
      %p147 = por %p145, %p146
      %p148 = scmp.ne.s32.totalorder %s137, %s138
      %p149 = scmp.eq.s32.totalorder %s19, 0
      %p150 = por %p148, %p149
      %p151 = scmp.ne.s32.totalorder %s137, %s138
      %p152 = scmp.eq.s32.totalorder %s20, 1
      %p153 = por %p151, %p152
      %p155 = scmp.ne.s32.totalorder %s138, %s154
      %p156 = scmp.eq.s32.totalorder %s20, 0
      %p157 = por %p155, %p156
      %p158 = scmp.le.s32.totalorder 1, %s14
      %p159 = scmp.lt.s32.totalorder %s14, 3
      %p160 = pnand %p158, %p159
      %p161 = pneg %p160
      // Predicated region
      $region9: #{encoder_forward.1} parent=5 // pred_check
        _
      $region10: #{encoder_forward.1} parent=5 // pred_check_branch
        %163 = sbr.rel (%p160) target = $region12
      $region11: #{encoder_forward.1} parent=5 // pred_region
        %s164 = ssub.s32 %s14, 1
        // Predicated region
        $region13: #{encoder_forward.1} parent=11 // pred_check
          %p165 = pneg %p61
        $region14: #{encoder_forward.1} parent=11 // pred_check_branch
          %167 = sbr.rel (%p165) target = $region16
        $region15: #{encoder_forward.1} parent=11 // pred_region
          _
        $region16: #{encoder_forward.1} parent=11 // pred_fallthru
          _
        // Predicated region
        $region17: #{encoder_forward.1} parent=11 // pred_check
          %p168 = pneg %p82
        $region18: #{encoder_forward.1} parent=11 // pred_check_branch
          %170 = sbr.rel (%p168) target = $region20
        $region19: #{encoder_forward.1} parent=11 // pred_region
          _
        $region20: #{encoder_forward.1} parent=11 // pred_fallthru
          _
        // Predicated region
        $region21: #{encoder_forward.1} parent=11 // pred_check
          %p171 = pneg %p103
        $region22: #{encoder_forward.1} parent=11 // pred_check_branch
          %173 = sbr.rel (%p171) target = $region24
        $region23: #{encoder_forward.1} parent=11 // pred_region
          _
        $region24: #{encoder_forward.1} parent=11 // pred_fallthru
          _
        // Predicated region
        $region25: #{encoder_forward.1} parent=11 // pred_check
          %p174 = pneg %p124
        $region26: #{encoder_forward.1} parent=11 // pred_check_branch
          %176 = sbr.rel (%p174) target = $region28
        $region27: #{encoder_forward.1} parent=11 // pred_region
          _
        $region28: #{encoder_forward.1} parent=11 // pred_fallthru
          _
      $region12: #{encoder_forward.1} parent=5 // pred_fallthru
        _
      %p177 = scmp.lt.s32.totalorder %s14, 2
      // Predicated region
      $region29: #{encoder_forward.1} parent=5 // pred_check
        %p178 = pneg %p177
      $region30: #{encoder_forward.1} parent=5 // pred_check_branch
        %180 = sbr.rel (%p178) target = $region32
      $region31: #{encoder_forward.1} parent=5 // pred_region
        // Predicated region
        $region33: #{encoder_forward.1} parent=31 // pred_check
          %p181 = pneg %p34
        $region34: #{encoder_forward.1} parent=31 // pred_check_branch
          %183 = sbr.rel (%p181) target = $region36
        $region35: #{encoder_forward.1} parent=31 // pred_region
          %p184 = scmp.lt.s32.totalorder %s14, 1
          %s185 = scalar_select %p184, %s14, 1
          %s186 = smul.addr %s185, 10
          %s187 = scalar_lea.vmem %s0, %s186
        $region36: #{encoder_forward.1} parent=31 // pred_fallthru
          _
      $region32: #{encoder_forward.1} parent=5 // pred_fallthru
        _
      %p188 = scmp.le.s32.totalorder 1, %s14
      %p189 = scmp.lt.s32.totalorder %s14, 3
      %p190 = pnand %p188, %p189
      %p191 = pneg %p190
      // Predicated region
      $region37: #{encoder_forward.1} parent=5 // pred_check
        _
      $region38: #{encoder_forward.1} parent=5 // pred_check_branch
        %193 = sbr.rel (%p190) target = $region40
      $region39: #{encoder_forward.1} parent=5 // pred_region
        %s194 = ssub.s32 %s14, 1
        %p195 = scmp.lt.s32.totalorder %s19, 1
        %s196 = scalar_select %p195, %s19, 1
        %s197 = smul.addr %s196, 10
        %s198 = scalar_lea.vmem %s0, %s197
        %p199 = pneg %p40
        %p200 = pneg %p37
        %p201 = pneg %p61
        %p202 = pneg %p58
        %p203 = pneg %p82
        %p204 = pneg %p79
        %p205 = pneg %p103
        %p206 = pneg %p100
        %p207 = pneg %p124
        %p208 = pneg %p121
        %p209 = pneg %p150
        %p210 = pneg %p147
        %s211 = sand.u32 %s137, 1
        %s212 = scalar_lea.sflag [#allocation4], %s211
        %s213 = sand.u32 %s137, 1
        %s214 = scalar_lea.vmem [#allocation3], %s213
        %p215 = scmp.lt.s32.totalorder %s19, 1
        %s216 = scalar_select %p215, %s19, 1
        %s217 = smul.addr %s216, 10
        %s218 = scalar_lea.vmem %s0, %s217
        %v220 = vld [vmem:[%s218] sm:$0xff]
        %v221 = vld [vmem:[%s218 + $0x8] sm:$0x3]
        %222 = vst [vmem:[#allocation2] ss:$8 sm:$0xf] %v220
        %223 = vst [vmem:[#allocation2] ss:$8 sm:$0xf0] %v220
        %226 = vrot.lane.b32.xlu0 %v220, 127
        %v227 = vpop.permute.xlu0 %226
        %228 = vrot.lane.b32.xlu0 %v221, 127
        %v229 = vpop.permute.xlu0 %228
        %v230 = vrot.slane %v227, 1
        %v231 = vrot.slane %v229, 1
        %vm232 = vcmask 1046528
        %v233 = vsel %vm232, %v230, %v231
        %vm234 = vcmask 1039360
        %v235 = vsel %vm234, %v227, %v233
        %s237 = scalar_lea.vmem [#allocation2], 1
        %238 = vst [vmem:[%s237] ss:$8 sm:$0xf] %v235
        %239 = vst [vmem:[%s237] ss:$8 sm:$0xf0] %v235
        %240 = vrot.lane.b32.xlu0 %v220, 126
        %v241 = vpop.permute.xlu0 %240
        %242 = vrot.lane.b32.xlu0 %v221, 126
        %v243 = vpop.permute.xlu0 %242
        %v244 = vrot.slane %v241, 1
        %v245 = vrot.slane %v243, 1
        %v246 = vsel %vm232, %v244, %v245
        %vm247 = vcmask 1031168
        %v248 = vsel %vm247, %v241, %v246
        %s250 = scalar_lea.vmem [#allocation2], 2
        %251 = vst [vmem:[%s250] ss:$8 sm:$0xf] %v248
        %252 = vst [vmem:[%s250] ss:$8 sm:$0xf0] %v248
        %253 = vrot.lane.b32.xlu0 %v220, 125
        %v254 = vpop.permute.xlu0 %253
        %255 = vrot.lane.b32.xlu0 %v221, 125
        %v256 = vpop.permute.xlu0 %255
        %v257 = vrot.slane %v254, 1
        %v258 = vrot.slane %v256, 1
        %v259 = vsel %vm232, %v257, %v258
        %vm260 = vcmask 1022976
        %v261 = vsel %vm260, %v254, %v259
        %s263 = scalar_lea.vmem [#allocation2], 3
        %264 = vst [vmem:[%s263] ss:$8 sm:$0xf] %v261
        %265 = vst [vmem:[%s263] ss:$8 sm:$0xf0] %v261
        %266 = vrot.lane.b32.xlu0 %v220, 124
        %v267 = vpop.permute.xlu0 %266
        %268 = vrot.lane.b32.xlu0 %v221, 124
        %v269 = vpop.permute.xlu0 %268
        %v270 = vrot.slane %v267, 1
        %v271 = vrot.slane %v269, 1
        %v272 = vsel %vm232, %v270, %v271
        %vm273 = vcmask 1014784
        %v274 = vsel %vm273, %v267, %v272
        %s276 = scalar_lea.vmem [#allocation2], 4
        %277 = vst [vmem:[%s276] ss:$8 sm:$0xf] %v274
        %278 = vst [vmem:[%s276] ss:$8 sm:$0xf0] %v274
        %279 = vrot.lane.b32.xlu0 %v220, 96
        %v280 = vpop.permute.xlu0 %279
        %281 = vrot.lane.b32.xlu0 %v221, 96
        %v282 = vpop.permute.xlu0 %281
        %v283 = vrot.slane %v280, 1
        %v284 = vrot.slane %v282, 1
        %v285 = vsel %vm232, %v283, %v284
        %vm286 = vcmask 785408
        %v287 = vsel %vm286, %v280, %v285
        %s289 = scalar_lea.vmem [#allocation2], 5
        %290 = vst [vmem:[%s289] ss:$8 sm:$0xf] %v287
        %291 = vst [vmem:[%s289] ss:$8 sm:$0xf0] %v287
        %292 = vrot.lane.b32.xlu0 %v220, 95
        %v293 = vpop.permute.xlu0 %292
        %294 = vrot.lane.b32.xlu0 %v221, 95
        %v295 = vpop.permute.xlu0 %294
        %v296 = vrot.slane %v293, 1
        %v297 = vrot.slane %v295, 1
        %v298 = vsel %vm232, %v296, %v297
        %vm299 = vcmask 777216
        %v300 = vsel %vm299, %v293, %v298
        %s302 = scalar_lea.vmem [#allocation2], 6
        %303 = vst [vmem:[%s302] ss:$8 sm:$0xf] %v300
        %304 = vst [vmem:[%s302] ss:$8 sm:$0xf0] %v300
        %305 = vrot.lane.b32.xlu0 %v220, 94
        %v306 = vpop.permute.xlu0 %305
        %307 = vrot.lane.b32.xlu0 %v221, 94
        %v308 = vpop.permute.xlu0 %307
        %v309 = vrot.slane %v306, 1
        %v310 = vrot.slane %v308, 1
        %v311 = vsel %vm232, %v309, %v310
        %vm312 = vcmask 769024
        %v313 = vsel %vm312, %v306, %v311
        %s315 = scalar_lea.vmem [#allocation2], 7
        %316 = vst [vmem:[%s315] ss:$8 sm:$0xf] %v313
        %317 = vst [vmem:[%s315] ss:$8 sm:$0xf0] %v313
        %318 = vrot.lane.b32.xlu0 %v220, 93
        %v319 = vpop.permute.xlu0 %318
        %320 = vrot.lane.b32.xlu0 %v221, 93
        %v321 = vpop.permute.xlu0 %320
        %v322 = vrot.slane %v319, 1
        %v323 = vrot.slane %v321, 1
        %v324 = vsel %vm232, %v322, %v323
        %vm325 = vcmask 760832
        %v326 = vsel %vm325, %v319, %v324
        %s328 = scalar_lea.vmem [#allocation2], 64
        %329 = vst [vmem:[%s328] ss:$8 sm:$0xf] %v326
        %330 = vst [vmem:[%s328] ss:$8 sm:$0xf0] %v326
        %331 = vrot.lane.b32.xlu0 %v220, 92
        %v332 = vpop.permute.xlu0 %331
        %333 = vrot.lane.b32.xlu0 %v221, 92
        %v334 = vpop.permute.xlu0 %333
        %v335 = vrot.slane %v332, 1
        %v336 = vrot.slane %v334, 1
        %v337 = vsel %vm232, %v335, %v336
        %vm338 = vcmask 752640
        %v339 = vsel %vm338, %v332, %v337
        %s341 = scalar_lea.vmem [#allocation2], 65
        %342 = vst [vmem:[%s341] ss:$8 sm:$0xf] %v339
        %343 = vst [vmem:[%s341] ss:$8 sm:$0xf0] %v339
        %344 = vrot.lane.b32.xlu0 %v220, 64
        %v345 = vpop.permute.xlu0 %344
        %346 = vrot.lane.b32.xlu0 %v221, 64
        %v347 = vpop.permute.xlu0 %346
        %v348 = vrot.slane %v345, 1
        %v349 = vrot.slane %v347, 1
        %v350 = vsel %vm232, %v348, %v349
        %vm351 = vcmask 523264
        %v352 = vsel %vm351, %v345, %v350
        %s354 = scalar_lea.vmem [#allocation2], 66
        %355 = vst [vmem:[%s354] ss:$8 sm:$0xf] %v352
        %356 = vst [vmem:[%s354] ss:$8 sm:$0xf0] %v352
        %357 = vrot.lane.b32.xlu0 %v220, 63
        %v358 = vpop.permute.xlu0 %357
        %359 = vrot.lane.b32.xlu0 %v221, 63
        %v360 = vpop.permute.xlu0 %359
        %v361 = vrot.slane %v358, 1
        %v362 = vrot.slane %v360, 1
        %v363 = vsel %vm232, %v361, %v362
        %vm364 = vcmask 515072
        %v365 = vsel %vm364, %v358, %v363
        %s367 = scalar_lea.vmem [#allocation2], 67
        %368 = vst [vmem:[%s367] ss:$8 sm:$0xf] %v365
        %369 = vst [vmem:[%s367] ss:$8 sm:$0xf0] %v365
        %370 = vrot.lane.b32.xlu0 %v220, 62
        %v371 = vpop.permute.xlu0 %370
        %372 = vrot.lane.b32.xlu0 %v221, 62
        %v373 = vpop.permute.xlu0 %372
        %v374 = vrot.slane %v371, 1
        %v375 = vrot.slane %v373, 1
        %v376 = vsel %vm232, %v374, %v375
        %vm377 = vcmask 506880
        %v378 = vsel %vm377, %v371, %v376
        %s380 = scalar_lea.vmem [#allocation2], 68
        %381 = vst [vmem:[%s380] ss:$8 sm:$0xf] %v378
        %382 = vst [vmem:[%s380] ss:$8 sm:$0xf0] %v378
        %383 = vrot.lane.b32.xlu0 %v220, 61
        %v384 = vpop.permute.xlu0 %383
        %385 = vrot.lane.b32.xlu0 %v221, 61
        %v386 = vpop.permute.xlu0 %385
        %v387 = vrot.slane %v384, 1
        %v388 = vrot.slane %v386, 1
        %v389 = vsel %vm232, %v387, %v388
        %vm390 = vcmask 498688
        %v391 = vsel %vm390, %v384, %v389
        %s393 = scalar_lea.vmem [#allocation2], 69
        %394 = vst [vmem:[%s393] ss:$8 sm:$0xf] %v391
        %395 = vst [vmem:[%s393] ss:$8 sm:$0xf0] %v391
        %396 = vrot.lane.b32.xlu0 %v220, 60
        %v397 = vpop.permute.xlu0 %396
        %398 = vrot.lane.b32.xlu0 %v221, 60
        %v399 = vpop.permute.xlu0 %398
        %v400 = vrot.slane %v397, 1
        %v401 = vrot.slane %v399, 1
        %v402 = vsel %vm232, %v400, %v401
        %vm403 = vcmask 490496
        %v404 = vsel %vm403, %v397, %v402
        %s406 = scalar_lea.vmem [#allocation2], 70
        %407 = vst [vmem:[%s406] ss:$8 sm:$0xf] %v404
        %408 = vst [vmem:[%s406] ss:$8 sm:$0xf0] %v404
        %409 = vrot.lane.b32.xlu0 %v220, 32
        %v410 = vpop.permute.xlu0 %409
        %411 = vrot.lane.b32.xlu0 %v221, 32
        %v412 = vpop.permute.xlu0 %411
        %v413 = vrot.slane %v410, 1
        %v414 = vrot.slane %v412, 1
        %v415 = vsel %vm232, %v413, %v414
        %vm416 = vcmask 261120
        %v417 = vsel %vm416, %v410, %v415
        %s419 = scalar_lea.vmem [#allocation2], 71
        %420 = vst [vmem:[%s419] ss:$8 sm:$0xf] %v417
        %421 = vst [vmem:[%s419] ss:$8 sm:$0xf0] %v417
        %422 = vrot.lane.b32.xlu0 %v220, 31
        %v423 = vpop.permute.xlu0 %422
        %424 = vrot.lane.b32.xlu0 %v221, 31
        %v425 = vpop.permute.xlu0 %424
        %v426 = vrot.slane %v423, 1
        %v427 = vrot.slane %v425, 1
        %v428 = vsel %vm232, %v426, %v427
        %vm429 = vcmask 252928
        %v430 = vsel %vm429, %v423, %v428
        %s432 = scalar_lea.vmem [#allocation2], 128
        %433 = vst [vmem:[%s432] ss:$8 sm:$0xf] %v430
        %434 = vst [vmem:[%s432] ss:$8 sm:$0xf0] %v430
        %435 = vrot.lane.b32.xlu0 %v220, 30
        %v436 = vpop.permute.xlu0 %435
        %437 = vrot.lane.b32.xlu0 %v221, 30
        %v438 = vpop.permute.xlu0 %437
        %v439 = vrot.slane %v436, 1
        %v440 = vrot.slane %v438, 1
        %v441 = vsel %vm232, %v439, %v440
        %vm442 = vcmask 244736
        %v443 = vsel %vm442, %v436, %v441
        %s445 = scalar_lea.vmem [#allocation2], 129
        %446 = vst [vmem:[%s445] ss:$8 sm:$0xf] %v443
        %447 = vst [vmem:[%s445] ss:$8 sm:$0xf0] %v443
        %448 = vrot.lane.b32.xlu0 %v220, 29
        %v449 = vpop.permute.xlu0 %448
        %450 = vrot.lane.b32.xlu0 %v221, 29
        %v451 = vpop.permute.xlu0 %450
        %v452 = vrot.slane %v449, 1
        %v453 = vrot.slane %v451, 1
        %v454 = vsel %vm232, %v452, %v453
        %vm455 = vcmask 236544
        %v456 = vsel %vm455, %v449, %v454
        %s458 = scalar_lea.vmem [#allocation2], 130
        %459 = vst [vmem:[%s458] ss:$8 sm:$0xf] %v456
        %460 = vst [vmem:[%s458] ss:$8 sm:$0xf0] %v456
        %461 = vrot.lane.b32.xlu0 %v220, 28
        %v462 = vpop.permute.xlu0 %461
        %463 = vrot.lane.b32.xlu0 %v221, 28
        %v464 = vpop.permute.xlu0 %463
        %v465 = vrot.slane %v462, 1
        %v466 = vrot.slane %v464, 1
        %v467 = vsel %vm232, %v465, %v466
        %vm468 = vcmask 228352
        %v469 = vsel %vm468, %v462, %v467
        %s471 = scalar_lea.vmem [#allocation2], 131
        %472 = vst [vmem:[%s471] ss:$8 sm:$0xf] %v469
        %473 = vst [vmem:[%s471] ss:$8 sm:$0xf0] %v469
        %v474 = vrot.slane %v220, 1
        %v475 = vrot.slane %v221, 1
        %v476 = vsel %vm232, %v474, %v475
        %s478 = scalar_lea.vmem [#allocation2], 132
        %479 = vst [vmem:[%s478] ss:$8 sm:$0xf] %v476
        %480 = vst [vmem:[%s478] ss:$8 sm:$0xf0] %v476
        %v481 = vrot.slane %v227, 2
        %v482 = vrot.slane %v229, 2
        %vm483 = vcmask 1045504
        %v484 = vsel %vm483, %v481, %v482
        %v485 = vsel %vm234, %v233, %v484
        %s487 = scalar_lea.vmem [#allocation2], 133
        %488 = vst [vmem:[%s487] ss:$8 sm:$0xf] %v485
        %489 = vst [vmem:[%s487] ss:$8 sm:$0xf0] %v485
        %v490 = vrot.slane %v241, 2
        %v491 = vrot.slane %v243, 2
        %v492 = vsel %vm483, %v490, %v491
        %v493 = vsel %vm247, %v246, %v492
        %s495 = scalar_lea.vmem [#allocation2], 134
        %496 = vst [vmem:[%s495] ss:$8 sm:$0xf] %v493
        %497 = vst [vmem:[%s495] ss:$8 sm:$0xf0] %v493
        %v498 = vrot.slane %v254, 2
        %v499 = vrot.slane %v256, 2
        %v500 = vsel %vm483, %v498, %v499
        %v501 = vsel %vm260, %v259, %v500
        %s503 = scalar_lea.vmem [#allocation2], 135
        %504 = vst [vmem:[%s503] ss:$8 sm:$0xf] %v501
        %505 = vst [vmem:[%s503] ss:$8 sm:$0xf0] %v501
        %v506 = vrot.slane %v267, 2
        %v507 = vrot.slane %v269, 2
        %v508 = vsel %vm483, %v506, %v507
        %v509 = vsel %vm273, %v272, %v508
        %s511 = scalar_lea.vmem [#allocation2], 192
        %512 = vst [vmem:[%s511] ss:$8 sm:$0xf] %v509
        %513 = vst [vmem:[%s511] ss:$8 sm:$0xf0] %v509
        %s514 = scalar_lea.vmem [#allocation2], 193
        %515 = vst [vmem:[%s514] ss:$8 sm:$0xf] 0.0
        %516 = vst [vmem:[%s514] ss:$8 sm:$0xf0] 0.0
        %s517 = scalar_lea.vmem [#allocation2], 194
        %518 = vst [vmem:[%s517] ss:$8 sm:$0xf] 0.0
        %519 = vst [vmem:[%s517] ss:$8 sm:$0xf0] 0.0
        %s520 = scalar_lea.vmem [#allocation2], 195
        %521 = vst [vmem:[%s520] ss:$8 sm:$0xf] 0.0
        %522 = vst [vmem:[%s520] ss:$8 sm:$0xf0] 0.0
        %s523 = scalar_lea.vmem [#allocation2], 196
        %524 = vst [vmem:[%s523] ss:$8 sm:$0xf] 0.0
        %525 = vst [vmem:[%s523] ss:$8 sm:$0xf0] 0.0
        %s526 = scalar_lea.vmem [#allocation2], 197
        %527 = vst [vmem:[%s526] ss:$8 sm:$0xf] 0.0
        %528 = vst [vmem:[%s526] ss:$8 sm:$0xf0] 0.0
        %s529 = scalar_lea.vmem [#allocation2], 198
        %530 = vst [vmem:[%s529] ss:$8 sm:$0xf] 0.0
        %531 = vst [vmem:[%s529] ss:$8 sm:$0xf0] 0.0
        %s532 = scalar_lea.vmem [#allocation2], 199
        %533 = vst [vmem:[%s532] ss:$8 sm:$0xf] 0.0
        %534 = vst [vmem:[%s532] ss:$8 sm:$0xf0] 0.0
        %v535 = vld [vmem:[#allocation2] sm:$0xff]
        %v536 = vld [vmem:[#allocation2 + $0x8] sm:$0xff]
        %v537 = vld [vmem:[#allocation2 + $0x10] sm:$0xff]
        %v538 = vld [vmem:[#allocation2 + $0x18] sm:$0xff]
        %v539 = vld [vmem:[#allocation2 + $0x20] sm:$0xff]
        %v540 = vld [vmem:[#allocation2 + $0x28] sm:$0xff]
        %v541 = vld [vmem:[#allocation2 + $0x30] sm:$0xff]
        %v542 = vld [vmem:[#allocation2 + $0x38] sm:$0xff]
        %v543 = vld [vmem:[#allocation2 + $0x40] sm:$0xff]
        %v544 = vld [vmem:[#allocation2 + $0x48] sm:$0xff]
        %v545 = vld [vmem:[#allocation2 + $0x50] sm:$0xff]
        %v546 = vld [vmem:[#allocation2 + $0x58] sm:$0xff]
        %v547 = vld [vmem:[#allocation2 + $0x60] sm:$0xff]
        %v548 = vld [vmem:[#allocation2 + $0x68] sm:$0xff]
        %v549 = vld [vmem:[#allocation2 + $0x70] sm:$0xff]
        %v550 = vld [vmem:[#allocation2 + $0x78] sm:$0xff]
        %v551 = vld [vmem:[#allocation2 + $0x80] sm:$0xff]
        %v552 = vld [vmem:[#allocation2 + $0x88] sm:$0xff]
        %v553 = vld [vmem:[#allocation2 + $0x90] sm:$0xff]
        %v554 = vld [vmem:[#allocation2 + $0x98] sm:$0xff]
        %v555 = vld [vmem:[#allocation2 + $0xa0] sm:$0xff]
        %v556 = vld [vmem:[#allocation2 + $0xa8] sm:$0xff]
        %v557 = vld [vmem:[#allocation2 + $0xb0] sm:$0xff]
        %v558 = vld [vmem:[#allocation2 + $0xb8] sm:$0xff]
        %v559 = vld [vmem:[#allocation2 + $0xc0] sm:$0xff]
        %v560 = vld [vmem:[#allocation2 + $0xc8] sm:$0xff]
        %v561 = vld [vmem:[#allocation2 + $0xd0] sm:$0xff]
        %v562 = vld [vmem:[#allocation2 + $0xd8] sm:$0xff]
        %v563 = vld [vmem:[#allocation2 + $0xe0] sm:$0xff]
        %v564 = vld [vmem:[#allocation2 + $0xe8] sm:$0xff]
        %v565 = vld [vmem:[#allocation2 + $0xf0] sm:$0xff]
        %v566 = vld [vmem:[#allocation2 + $0xf8] sm:$0xff]
        %v567 = vpack.c.bf16 %v543, %v535
        %v568 = vpack.c.bf16 %v544, %v536
        %v569 = vpack.c.bf16 %v545, %v537
        %v570 = vpack.c.bf16 %v546, %v538
        %v571 = vpack.c.bf16 %v547, %v539
        %v572 = vpack.c.bf16 %v548, %v540
        %v573 = vpack.c.bf16 %v549, %v541
        %v574 = vpack.c.bf16 %v550, %v542
        %v575 = vpack.c.bf16 %v559, %v551
        %v576 = vpack.c.bf16 %v560, %v552
        %v577 = vpack.c.bf16 %v561, %v553
        %v578 = vpack.c.bf16 %v562, %v554
        %v579 = vpack.c.bf16 %v563, %v555
        %v580 = vpack.c.bf16 %v564, %v556
        %v581 = vpack.c.bf16 %v565, %v557
        %v582 = vpack.c.bf16 %v566, %v558
        %v583 = vld [vmem:[%s1] sm:$0xf]
        %v584 = vld [vmem:[%s1 + $0x4] sm:$0xf]
        %v585 = vld [vmem:[%s2] sm:$0xff]
        %v586 = vld [vmem:[%s2 + $0x8] sm:$0xff]
        %588 = vset.pattern.permute.xlu0 0
        %589 = vperm.xlu0 %588, %v585
        %v590 = vpop.permute.xlu0 %589
        %593 = vset.pattern.permute.xlu0 0
        %594 = vperm.xlu0 %593, %v586
        %v595 = vpop.permute.xlu0 %594
        %v599 = vunpack.c.l.b16 %v583
        %v600 = vunpack.c.l.b16 %v584
        %v601 = vpack.c.b16 %v600, %v599
        %v603 = vsel %vm416, %v601, 0
        %605 = vmatpush.bf16.msra.mxu0 0
        %606 = vmatpush.bf16.msra.mxu0 0
        %607 = vmatpush.bf16.msra.mxu0 0
        %608 = vmatpush.bf16.msra.mxu0 0
        %609 = vmatpush.bf16.msra.mxu0 0
        %610 = vmatpush.bf16.msra.mxu0 0
        %611 = vmatpush.bf16.msra.mxu0 %v575
        %612 = vmatpush.bf16.msra.mxu0 %v567
        %613 = vmatmul.bf16.gmra.mxu0 %v603
        %v614 = vpop.f32.mrf.mxu0
        %v615 = vadd.f32 %v590, %v614
        %v616 = vpop.f32.mrf.mxu0
        %v617 = vadd.f32 %v595, %v616
        %618 = vdwg.mxu0
        %619 = vmatpush.bf16.msra.mxu0 0
        %620 = vmatpush.bf16.msra.mxu0 0
        %621 = vmatpush.bf16.msra.mxu0 0
        %622 = vmatpush.bf16.msra.mxu0 0
        %623 = vmatpush.bf16.msra.mxu0 0
        %624 = vmatpush.bf16.msra.mxu0 0
        %625 = vmatpush.bf16.msra.mxu0 %v576
        %626 = vmatpush.bf16.msra.mxu0 %v568
        %627 = vmatmul.bf16.gmra.mxu0 %v603
        %v628 = vpop.f32.mrf.mxu0
        %v629 = vadd.f32 %v590, %v628
        %v630 = vpop.f32.mrf.mxu0
        %v631 = vadd.f32 %v595, %v630
        %632 = vdwg.mxu0
        %633 = vmatpush.bf16.msra.mxu0 0
        %634 = vmatpush.bf16.msra.mxu0 0
        %635 = vmatpush.bf16.msra.mxu0 0
        %636 = vmatpush.bf16.msra.mxu0 0
        %637 = vmatpush.bf16.msra.mxu0 0
        %638 = vmatpush.bf16.msra.mxu0 0
        %639 = vmatpush.bf16.msra.mxu0 %v577
        %640 = vmatpush.bf16.msra.mxu0 %v569
        %641 = vmatmul.bf16.gmra.mxu0 %v603
        %v642 = vpop.f32.mrf.mxu0
        %v643 = vadd.f32 %v590, %v642
        %v644 = vpop.f32.mrf.mxu0
        %v645 = vadd.f32 %v595, %v644
        %646 = vdwg.mxu0
        %647 = vmatpush.bf16.msra.mxu0 0
        %648 = vmatpush.bf16.msra.mxu0 0
        %649 = vmatpush.bf16.msra.mxu0 0
        %650 = vmatpush.bf16.msra.mxu0 0
        %651 = vmatpush.bf16.msra.mxu0 0
        %652 = vmatpush.bf16.msra.mxu0 0
        %653 = vmatpush.bf16.msra.mxu0 %v578
        %654 = vmatpush.bf16.msra.mxu0 %v570
        %655 = vmatmul.bf16.gmra.mxu0 %v603
        %v656 = vpop.f32.mrf.mxu0
        %v657 = vadd.f32 %v590, %v656
        %v658 = vpop.f32.mrf.mxu0
        %v659 = vadd.f32 %v595, %v658
        %660 = vdwg.mxu0
        %661 = vmatpush.bf16.msra.mxu0 0
        %662 = vmatpush.bf16.msra.mxu0 0
        %663 = vmatpush.bf16.msra.mxu0 0
        %664 = vmatpush.bf16.msra.mxu0 0
        %665 = vmatpush.bf16.msra.mxu0 0
        %666 = vmatpush.bf16.msra.mxu0 0
        %667 = vmatpush.bf16.msra.mxu0 %v579
        %668 = vmatpush.bf16.msra.mxu0 %v571
        %669 = vmatmul.bf16.gmra.mxu0 %v603
        %v670 = vpop.f32.mrf.mxu0
        %v671 = vadd.f32 %v590, %v670
        %v672 = vpop.f32.mrf.mxu0
        %v673 = vadd.f32 %v595, %v672
        %674 = vdwg.mxu0
        %675 = vmatpush.bf16.msra.mxu0 0
        %676 = vmatpush.bf16.msra.mxu0 0
        %677 = vmatpush.bf16.msra.mxu0 0
        %678 = vmatpush.bf16.msra.mxu0 0
        %679 = vmatpush.bf16.msra.mxu0 0
        %680 = vmatpush.bf16.msra.mxu0 0
        %681 = vmatpush.bf16.msra.mxu0 %v580
        %682 = vmatpush.bf16.msra.mxu0 %v572
        %683 = vmatmul.bf16.gmra.mxu0 %v603
        %v684 = vpop.f32.mrf.mxu0
        %v685 = vadd.f32 %v590, %v684
        %v686 = vpop.f32.mrf.mxu0
        %v687 = vadd.f32 %v595, %v686
        %688 = vdwg.mxu0
        %689 = vmatpush.bf16.msra.mxu0 0
        %690 = vmatpush.bf16.msra.mxu0 0
        %691 = vmatpush.bf16.msra.mxu0 0
        %692 = vmatpush.bf16.msra.mxu0 0
        %693 = vmatpush.bf16.msra.mxu0 0
        %694 = vmatpush.bf16.msra.mxu0 0
        %695 = vmatpush.bf16.msra.mxu0 %v581
        %696 = vmatpush.bf16.msra.mxu0 %v573
        %697 = vmatmul.bf16.gmra.mxu0 %v603
        %v698 = vpop.f32.mrf.mxu0
        %v699 = vadd.f32 %v590, %v698
        %v700 = vpop.f32.mrf.mxu0
        %v701 = vadd.f32 %v595, %v700
        %702 = vdwg.mxu0
        %703 = vmatpush.bf16.msra.mxu0 0
        %704 = vmatpush.bf16.msra.mxu0 0
        %705 = vmatpush.bf16.msra.mxu0 0
        %706 = vmatpush.bf16.msra.mxu0 0
        %707 = vmatpush.bf16.msra.mxu0 0
        %708 = vmatpush.bf16.msra.mxu0 0
        %709 = vmatpush.bf16.msra.mxu0 %v582
        %710 = vmatpush.bf16.msra.mxu0 %v574
        %711 = vmatmul.bf16.gmra.mxu0 %v603
        %v712 = vpop.f32.mrf.mxu0
        %v713 = vadd.f32 %v590, %v712
        %v714 = vpop.f32.mrf.mxu0
        %v715 = vadd.f32 %v595, %v714
        %716 = vdwg.mxu0
        %vm717 = vcmp.ge.f32.partialorder %v615, 0.0
        %vm718 = vcmp.ge.f32.partialorder %v629, 0.0
        %vm719 = vcmp.ge.f32.partialorder %v643, 0.0
        %vm720 = vcmp.ge.f32.partialorder %v657, 0.0
        %vm721 = vcmp.ge.f32.partialorder %v671, 0.0
        %vm722 = vcmp.ge.f32.partialorder %v685, 0.0
        %vm723 = vcmp.ge.f32.partialorder %v699, 0.0
        %vm724 = vcmp.ge.f32.partialorder %v713, 0.0
        %vm725 = vcmp.ge.f32.partialorder %v617, 0.0
        %vm726 = vcmp.ge.f32.partialorder %v631, 0.0
        %vm727 = vcmp.ge.f32.partialorder %v645, 0.0
        %vm728 = vcmp.ge.f32.partialorder %v659, 0.0
        %vm729 = vcmp.ge.f32.partialorder %v673, 0.0
        %vm730 = vcmp.ge.f32.partialorder %v687, 0.0
        %vm731 = vcmp.ge.f32.partialorder %v701, 0.0
        %vm732 = vcmp.ge.f32.partialorder %v715, 0.0
        %v733 = vmul.f32 %v615, 0.01
        %v734 = vmul.f32 %v629, 0.01
        %v735 = vmul.f32 %v643, 0.01
        %v736 = vmul.f32 %v657, 0.01
        %v737 = vmul.f32 %v671, 0.01
        %v738 = vmul.f32 %v685, 0.01
        %v739 = vmul.f32 %v699, 0.01
        %v740 = vmul.f32 %v713, 0.01
        %v741 = vmul.f32 %v617, 0.01
        %v742 = vmul.f32 %v631, 0.01
        %v743 = vmul.f32 %v645, 0.01
        %v744 = vmul.f32 %v659, 0.01
        %v745 = vmul.f32 %v673, 0.01
        %v746 = vmul.f32 %v687, 0.01
        %v747 = vmul.f32 %v701, 0.01
        %v748 = vmul.f32 %v715, 0.01
        %v749 = vsel %vm717, %v615, %v733
        %v750 = vsel %vm718, %v629, %v734
        %v751 = vsel %vm719, %v643, %v735
        %v752 = vsel %vm720, %v657, %v736
        %v753 = vsel %vm721, %v671, %v737
        %v754 = vsel %vm722, %v685, %v738
        %v755 = vsel %vm723, %v699, %v739
        %v756 = vsel %vm724, %v713, %v740
        %v757 = vsel %vm725, %v617, %v741
        %v758 = vsel %vm726, %v631, %v742
        %v759 = vsel %vm727, %v645, %v743
        %v760 = vsel %vm728, %v659, %v744
        %v761 = vsel %vm729, %v673, %v745
        %v762 = vsel %vm730, %v687, %v746
        %v763 = vsel %vm731, %v701, %v747
        %v764 = vsel %vm732, %v715, %v748
        %v765 = vpack.c.bf16 %v749, %v749
        %v766 = vpack.c.bf16 %v750, %v750
        %v767 = vpack.c.bf16 %v751, %v751
        %v768 = vpack.c.bf16 %v752, %v752
        %v769 = vpack.c.bf16 %v753, %v753
        %v770 = vpack.c.bf16 %v754, %v754
        %v771 = vpack.c.bf16 %v755, %v755
        %v772 = vpack.c.bf16 %v756, %v756
        %v773 = vld [vmem:[%s3] sm:$0xf]
        %v774 = vld [vmem:[%s3 + $0x4] sm:$0xf]
        %v775 = vld [vmem:[%s3 + $0x8] sm:$0xf]
        %v776 = vld [vmem:[%s3 + $0xc] sm:$0xf]
        %v777 = vld [vmem:[%s3 + $0x10] sm:$0xf]
        %v778 = vld [vmem:[%s3 + $0x14] sm:$0xf]
        %v779 = vld [vmem:[%s3 + $0x18] sm:$0xf]
        %v780 = vld [vmem:[%s3 + $0x1c] sm:$0xf]
        %v781 = vld [vmem:[%s3 + $0x20] sm:$0xf]
        %v782 = vld [vmem:[%s3 + $0x24] sm:$0xf]
        %v783 = vld [vmem:[%s3 + $0x28] sm:$0xf]
        %v784 = vld [vmem:[%s3 + $0x2c] sm:$0xf]
        %v785 = vld [vmem:[%s3 + $0x30] sm:$0xf]
        %v786 = vld [vmem:[%s3 + $0x34] sm:$0xf]
        %v787 = vld [vmem:[%s3 + $0x38] sm:$0xf]
        %v788 = vld [vmem:[%s3 + $0x3c] sm:$0xf]
        %v789 = vld [vmem:[%s3 + $0x40] sm:$0xf]
        %v790 = vld [vmem:[%s3 + $0x44] sm:$0xf]
        %v791 = vld [vmem:[%s3 + $0x48] sm:$0xf]
        %v792 = vld [vmem:[%s3 + $0x4c] sm:$0xf]
        %v793 = vld [vmem:[%s3 + $0x50] sm:$0xf]
        %v794 = vld [vmem:[%s3 + $0x54] sm:$0xf]
        %v795 = vld [vmem:[%s3 + $0x58] sm:$0xf]
        %v796 = vld [vmem:[%s3 + $0x5c] sm:$0xf]
        %v797 = vld [vmem:[%s3 + $0x60] sm:$0xf]
        %v798 = vld [vmem:[%s3 + $0x64] sm:$0xf]
        %v799 = vld [vmem:[%s3 + $0x68] sm:$0xf]
        %v800 = vld [vmem:[%s3 + $0x6c] sm:$0xf]
        %v801 = vld [vmem:[%s3 + $0x70] sm:$0xf]
        %v802 = vld [vmem:[%s3 + $0x74] sm:$0xf]
        %v803 = vld [vmem:[%s3 + $0x78] sm:$0xf]
        %v804 = vld [vmem:[%s3 + $0x7c] sm:$0xf]
        %v805 = vld [vmem:[%s3 + $0x80] sm:$0xf]
        %v806 = vld [vmem:[%s3 + $0x84] sm:$0xf]
        %v807 = vld [vmem:[%s3 + $0x88] sm:$0xf]
        %v808 = vld [vmem:[%s3 + $0x8c] sm:$0xf]
        %v809 = vld [vmem:[%s3 + $0x90] sm:$0xf]
        %v810 = vld [vmem:[%s3 + $0x94] sm:$0xf]
        %v811 = vld [vmem:[%s3 + $0x98] sm:$0xf]
        %v812 = vld [vmem:[%s3 + $0x9c] sm:$0xf]
        %v813 = vld [vmem:[%s3 + $0xa0] sm:$0xf]
        %v814 = vld [vmem:[%s3 + $0xa4] sm:$0xf]
        %v815 = vld [vmem:[%s3 + $0xa8] sm:$0xf]
        %v816 = vld [vmem:[%s3 + $0xac] sm:$0xf]
        %v817 = vld [vmem:[%s3 + $0xb0] sm:$0xf]
        %v818 = vld [vmem:[%s3 + $0xb4] sm:$0xf]
        %v819 = vld [vmem:[%s3 + $0xb8] sm:$0xf]
        %v820 = vld [vmem:[%s3 + $0xbc] sm:$0xf]
        %v821 = vld [vmem:[%s3 + $0xc0] sm:$0xf]
        %v822 = vld [vmem:[%s3 + $0xc4] sm:$0xf]
        %v823 = vld [vmem:[%s3 + $0xc8] sm:$0xf]
        %v824 = vld [vmem:[%s3 + $0xcc] sm:$0xf]
        %v825 = vld [vmem:[%s3 + $0xd0] sm:$0xf]
        %v826 = vld [vmem:[%s3 + $0xd4] sm:$0xf]
        %v827 = vld [vmem:[%s3 + $0xd8] sm:$0xf]
        %v828 = vld [vmem:[%s3 + $0xdc] sm:$0xf]
        %v829 = vld [vmem:[%s3 + $0xe0] sm:$0xf]
        %v830 = vld [vmem:[%s3 + $0xe4] sm:$0xf]
        %v831 = vld [vmem:[%s3 + $0xe8] sm:$0xf]
        %v832 = vld [vmem:[%s3 + $0xec] sm:$0xf]
        %v833 = vld [vmem:[%s3 + $0xf0] sm:$0xf]
        %v834 = vld [vmem:[%s3 + $0xf4] sm:$0xf]
        %v835 = vld [vmem:[%s3 + $0xf8] sm:$0xf]
        %v836 = vld [vmem:[%s3 + $0xfc] sm:$0xf]
        %v837 = vld [vmem:[%s3 + $0x100] sm:$0xf]
        %v838 = vld [vmem:[%s3 + $0x104] sm:$0xf]
        %v839 = vld [vmem:[%s3 + $0x108] sm:$0xf]
        %v840 = vld [vmem:[%s3 + $0x10c] sm:$0xf]
        %v841 = vld [vmem:[%s3 + $0x110] sm:$0xf]
        %v842 = vld [vmem:[%s3 + $0x114] sm:$0xf]
        %v843 = vld [vmem:[%s3 + $0x118] sm:$0xf]
        %v844 = vld [vmem:[%s3 + $0x11c] sm:$0xf]
        %v845 = vld [vmem:[%s3 + $0x120] sm:$0xf]
        %v846 = vld [vmem:[%s3 + $0x124] sm:$0xf]
        %v847 = vld [vmem:[%s3 + $0x128] sm:$0xf]
        %v848 = vld [vmem:[%s3 + $0x12c] sm:$0xf]
        %v849 = vld [vmem:[%s3 + $0x130] sm:$0xf]
        %v850 = vld [vmem:[%s3 + $0x134] sm:$0xf]
        %v851 = vld [vmem:[%s3 + $0x138] sm:$0xf]
        %v852 = vld [vmem:[%s3 + $0x13c] sm:$0xf]
        %v853 = vld [vmem:[%s3 + $0x140] sm:$0xf]
        %v854 = vld [vmem:[%s3 + $0x144] sm:$0xf]
        %v855 = vld [vmem:[%s3 + $0x148] sm:$0xf]
        %v856 = vld [vmem:[%s3 + $0x14c] sm:$0xf]
        %v857 = vld [vmem:[%s3 + $0x150] sm:$0xf]
        %v858 = vld [vmem:[%s3 + $0x154] sm:$0xf]
        %v859 = vld [vmem:[%s3 + $0x158] sm:$0xf]
        %v860 = vld [vmem:[%s3 + $0x15c] sm:$0xf]
        %v861 = vld [vmem:[%s3 + $0x160] sm:$0xf]
        %v862 = vld [vmem:[%s3 + $0x164] sm:$0xf]
        %v863 = vld [vmem:[%s3 + $0x168] sm:$0xf]
        %v864 = vld [vmem:[%s3 + $0x16c] sm:$0xf]
        %v865 = vld [vmem:[%s3 + $0x170] sm:$0xf]
        %v866 = vld [vmem:[%s3 + $0x174] sm:$0xf]
        %v867 = vld [vmem:[%s3 + $0x178] sm:$0xf]
        %v868 = vld [vmem:[%s3 + $0x17c] sm:$0xf]
        %v869 = vld [vmem:[%s3 + $0x180] sm:$0xf]
        %v870 = vld [vmem:[%s3 + $0x184] sm:$0xf]
        %v871 = vld [vmem:[%s3 + $0x188] sm:$0xf]
        %v872 = vld [vmem:[%s3 + $0x18c] sm:$0xf]
        %v873 = vld [vmem:[%s3 + $0x190] sm:$0xf]
        %v874 = vld [vmem:[%s3 + $0x194] sm:$0xf]
        %v875 = vld [vmem:[%s3 + $0x198] sm:$0xf]
        %v876 = vld [vmem:[%s3 + $0x19c] sm:$0xf]
        %v877 = vld [vmem:[%s3 + $0x1a0] sm:$0xf]
        %v878 = vld [vmem:[%s3 + $0x1a4] sm:$0xf]
        %v879 = vld [vmem:[%s3 + $0x1a8] sm:$0xf]
        %v880 = vld [vmem:[%s3 + $0x1ac] sm:$0xf]
        %v881 = vld [vmem:[%s3 + $0x1b0] sm:$0xf]
        %v882 = vld [vmem:[%s3 + $0x1b4] sm:$0xf]
        %v883 = vld [vmem:[%s3 + $0x1b8] sm:$0xf]
        %v884 = vld [vmem:[%s3 + $0x1bc] sm:$0xf]
        %v885 = vld [vmem:[%s3 + $0x1c0] sm:$0xf]
        %v886 = vld [vmem:[%s3 + $0x1c4] sm:$0xf]
        %v887 = vld [vmem:[%s3 + $0x1c8] sm:$0xf]
        %v888 = vld [vmem:[%s3 + $0x1cc] sm:$0xf]
        %v889 = vld [vmem:[%s3 + $0x1d0] sm:$0xf]
        %v890 = vld [vmem:[%s3 + $0x1d4] sm:$0xf]
        %v891 = vld [vmem:[%s3 + $0x1d8] sm:$0xf]
        %v892 = vld [vmem:[%s3 + $0x1dc] sm:$0xf]
        %v893 = vld [vmem:[%s3 + $0x1e0] sm:$0xf]
        %v894 = vld [vmem:[%s3 + $0x1e4] sm:$0xf]
        %v895 = vld [vmem:[%s3 + $0x1e8] sm:$0xf]
        %v896 = vld [vmem:[%s3 + $0x1ec] sm:$0xf]
        %v897 = vld [vmem:[%s3 + $0x1f0] sm:$0xf]
        %v898 = vld [vmem:[%s3 + $0x1f4] sm:$0xf]
        %v899 = vld [vmem:[%s3 + $0x1f8] sm:$0xf]
        %v900 = vld [vmem:[%s3 + $0x1fc] sm:$0xf]
        %s901 = scalar_lea.vmem %s3, 512
        %v902 = vld [vmem:[%s901] sm:$0xf]
        %v903 = vld [vmem:[%s901 + $0x4] sm:$0xf]
        %v904 = vld [vmem:[%s901 + $0x8] sm:$0xf]
        %v905 = vld [vmem:[%s901 + $0xc] sm:$0xf]
        %v906 = vld [vmem:[%s901 + $0x10] sm:$0xf]
        %v907 = vld [vmem:[%s901 + $0x14] sm:$0xf]
        %v908 = vld [vmem:[%s901 + $0x18] sm:$0xf]
        %v909 = vld [vmem:[%s901 + $0x1c] sm:$0xf]
        %v910 = vld [vmem:[%s901 + $0x20] sm:$0xf]
        %v911 = vld [vmem:[%s901 + $0x24] sm:$0xf]
        %v912 = vld [vmem:[%s901 + $0x28] sm:$0xf]
        %v913 = vld [vmem:[%s901 + $0x2c] sm:$0xf]
        %v914 = vld [vmem:[%s901 + $0x30] sm:$0xf]
        %v915 = vld [vmem:[%s901 + $0x34] sm:$0xf]
        %v916 = vld [vmem:[%s901 + $0x38] sm:$0xf]
        %v917 = vld [vmem:[%s901 + $0x3c] sm:$0xf]
        %v918 = vld [vmem:[%s901 + $0x40] sm:$0xf]
        %v919 = vld [vmem:[%s901 + $0x44] sm:$0xf]
        %v920 = vld [vmem:[%s901 + $0x48] sm:$0xf]
        %v921 = vld [vmem:[%s901 + $0x4c] sm:$0xf]
        %v922 = vld [vmem:[%s901 + $0x50] sm:$0xf]
        %v923 = vld [vmem:[%s901 + $0x54] sm:$0xf]
        %v924 = vld [vmem:[%s901 + $0x58] sm:$0xf]
        %v925 = vld [vmem:[%s901 + $0x5c] sm:$0xf]
        %v926 = vld [vmem:[%s901 + $0x60] sm:$0xf]
        %v927 = vld [vmem:[%s901 + $0x64] sm:$0xf]
        %v928 = vld [vmem:[%s901 + $0x68] sm:$0xf]
        %v929 = vld [vmem:[%s901 + $0x6c] sm:$0xf]
        %v930 = vld [vmem:[%s901 + $0x70] sm:$0xf]
        %v931 = vld [vmem:[%s901 + $0x74] sm:$0xf]
        %v932 = vld [vmem:[%s901 + $0x78] sm:$0xf]
        %v933 = vld [vmem:[%s901 + $0x7c] sm:$0xf]
        %v934 = vld [vmem:[%s901 + $0x80] sm:$0xf]
        %v935 = vld [vmem:[%s901 + $0x84] sm:$0xf]
        %v936 = vld [vmem:[%s901 + $0x88] sm:$0xf]
        %v937 = vld [vmem:[%s901 + $0x8c] sm:$0xf]
        %v938 = vld [vmem:[%s901 + $0x90] sm:$0xf]
        %v939 = vld [vmem:[%s901 + $0x94] sm:$0xf]
        %v940 = vld [vmem:[%s901 + $0x98] sm:$0xf]
        %v941 = vld [vmem:[%s901 + $0x9c] sm:$0xf]
        %v942 = vld [vmem:[%s901 + $0xa0] sm:$0xf]
        %v943 = vld [vmem:[%s901 + $0xa4] sm:$0xf]
        %v944 = vld [vmem:[%s901 + $0xa8] sm:$0xf]
        %v945 = vld [vmem:[%s901 + $0xac] sm:$0xf]
        %v946 = vld [vmem:[%s901 + $0xb0] sm:$0xf]
        %v947 = vld [vmem:[%s901 + $0xb4] sm:$0xf]
        %v948 = vld [vmem:[%s901 + $0xb8] sm:$0xf]
        %v949 = vld [vmem:[%s901 + $0xbc] sm:$0xf]
        %v950 = vld [vmem:[%s901 + $0xc0] sm:$0xf]
        %v951 = vld [vmem:[%s901 + $0xc4] sm:$0xf]
        %v952 = vld [vmem:[%s901 + $0xc8] sm:$0xf]
        %v953 = vld [vmem:[%s901 + $0xcc] sm:$0xf]
        %v954 = vld [vmem:[%s901 + $0xd0] sm:$0xf]
        %v955 = vld [vmem:[%s901 + $0xd4] sm:$0xf]
        %v956 = vld [vmem:[%s901 + $0xd8] sm:$0xf]
        %v957 = vld [vmem:[%s901 + $0xdc] sm:$0xf]
        %v958 = vld [vmem:[%s901 + $0xe0] sm:$0xf]
        %v959 = vld [vmem:[%s901 + $0xe4] sm:$0xf]
        %v960 = vld [vmem:[%s901 + $0xe8] sm:$0xf]
        %v961 = vld [vmem:[%s901 + $0xec] sm:$0xf]
        %v962 = vld [vmem:[%s901 + $0xf0] sm:$0xf]
        %v963 = vld [vmem:[%s901 + $0xf4] sm:$0xf]
        %v964 = vld [vmem:[%s901 + $0xf8] sm:$0xf]
        %v965 = vld [vmem:[%s901 + $0xfc] sm:$0xf]
        %v966 = vld [vmem:[%s901 + $0x100] sm:$0xf]
        %v967 = vld [vmem:[%s901 + $0x104] sm:$0xf]
        %v968 = vld [vmem:[%s901 + $0x108] sm:$0xf]
        %v969 = vld [vmem:[%s901 + $0x10c] sm:$0xf]
        %v970 = vld [vmem:[%s901 + $0x110] sm:$0xf]
        %v971 = vld [vmem:[%s901 + $0x114] sm:$0xf]
        %v972 = vld [vmem:[%s901 + $0x118] sm:$0xf]
        %v973 = vld [vmem:[%s901 + $0x11c] sm:$0xf]
        %v974 = vld [vmem:[%s901 + $0x120] sm:$0xf]
        %v975 = vld [vmem:[%s901 + $0x124] sm:$0xf]
        %v976 = vld [vmem:[%s901 + $0x128] sm:$0xf]
        %v977 = vld [vmem:[%s901 + $0x12c] sm:$0xf]
        %v978 = vld [vmem:[%s901 + $0x130] sm:$0xf]
        %v979 = vld [vmem:[%s901 + $0x134] sm:$0xf]
        %v980 = vld [vmem:[%s901 + $0x138] sm:$0xf]
        %v981 = vld [vmem:[%s901 + $0x13c] sm:$0xf]
        %v982 = vld [vmem:[%s901 + $0x140] sm:$0xf]
        %v983 = vld [vmem:[%s901 + $0x144] sm:$0xf]
        %v984 = vld [vmem:[%s901 + $0x148] sm:$0xf]
        %v985 = vld [vmem:[%s901 + $0x14c] sm:$0xf]
        %v986 = vld [vmem:[%s901 + $0x150] sm:$0xf]
        %v987 = vld [vmem:[%s901 + $0x154] sm:$0xf]
        %v988 = vld [vmem:[%s901 + $0x158] sm:$0xf]
        %v989 = vld [vmem:[%s901 + $0x15c] sm:$0xf]
        %v990 = vld [vmem:[%s901 + $0x160] sm:$0xf]
        %v991 = vld [vmem:[%s901 + $0x164] sm:$0xf]
        %v992 = vld [vmem:[%s901 + $0x168] sm:$0xf]
        %v993 = vld [vmem:[%s901 + $0x16c] sm:$0xf]
        %v994 = vld [vmem:[%s901 + $0x170] sm:$0xf]
        %v995 = vld [vmem:[%s901 + $0x174] sm:$0xf]
        %v996 = vld [vmem:[%s901 + $0x178] sm:$0xf]
        %v997 = vld [vmem:[%s901 + $0x17c] sm:$0xf]
        %v998 = vld [vmem:[%s901 + $0x180] sm:$0xf]
        %v999 = vld [vmem:[%s901 + $0x184] sm:$0xf]
        %v1000 = vld [vmem:[%s901 + $0x188] sm:$0xf]
        %v1001 = vld [vmem:[%s901 + $0x18c] sm:$0xf]
        %v1002 = vld [vmem:[%s901 + $0x190] sm:$0xf]
        %v1003 = vld [vmem:[%s901 + $0x194] sm:$0xf]
        %v1004 = vld [vmem:[%s901 + $0x198] sm:$0xf]
        %v1005 = vld [vmem:[%s901 + $0x19c] sm:$0xf]
        %v1006 = vld [vmem:[%s901 + $0x1a0] sm:$0xf]
        %v1007 = vld [vmem:[%s901 + $0x1a4] sm:$0xf]
        %v1008 = vld [vmem:[%s901 + $0x1a8] sm:$0xf]
        %v1009 = vld [vmem:[%s901 + $0x1ac] sm:$0xf]
        %v1010 = vld [vmem:[%s901 + $0x1b0] sm:$0xf]
        %v1011 = vld [vmem:[%s901 + $0x1b4] sm:$0xf]
        %v1012 = vld [vmem:[%s901 + $0x1b8] sm:$0xf]
        %v1013 = vld [vmem:[%s901 + $0x1bc] sm:$0xf]
        %v1014 = vld [vmem:[%s901 + $0x1c0] sm:$0xf]
        %v1015 = vld [vmem:[%s901 + $0x1c4] sm:$0xf]
        %v1016 = vld [vmem:[%s901 + $0x1c8] sm:$0xf]
        %v1017 = vld [vmem:[%s901 + $0x1cc] sm:$0xf]
        %v1018 = vld [vmem:[%s901 + $0x1d0] sm:$0xf]
        %v1019 = vld [vmem:[%s901 + $0x1d4] sm:$0xf]
        %v1020 = vld [vmem:[%s901 + $0x1d8] sm:$0xf]
        %v1021 = vld [vmem:[%s901 + $0x1dc] sm:$0xf]
        %v1022 = vld [vmem:[%s901 + $0x1e0] sm:$0xf]
        %v1023 = vld [vmem:[%s901 + $0x1e4] sm:$0xf]
        %v1024 = vld [vmem:[%s901 + $0x1e8] sm:$0xf]
        %v1025 = vld [vmem:[%s901 + $0x1ec] sm:$0xf]
        %v1026 = vld [vmem:[%s901 + $0x1f0] sm:$0xf]
        %v1027 = vld [vmem:[%s901 + $0x1f4] sm:$0xf]
        %v1028 = vld [vmem:[%s901 + $0x1f8] sm:$0xf]
        %v1029 = vld [vmem:[%s901 + $0x1fc] sm:$0xf]
        %v1031 = vshrl.u32 %v765, 16
        %v1034 = vshrl.u32 %v766, 16
        %v1037 = vshrl.u32 %v767, 16
        %v1040 = vshrl.u32 %v768, 16
        %v1043 = vshrl.u32 %v769, 16
        %v1046 = vshrl.u32 %v770, 16
        %v1049 = vshrl.u32 %v771, 16
        %v1052 = vshrl.u32 %v772, 16
        %v1190 = vunpack.c.l.b16 %v902
        %v1191 = vunpack.c.l.b16 %v903
        %v1192 = vunpack.c.l.b16 %v904
        %v1193 = vunpack.c.l.b16 %v905
        %v1194 = vunpack.c.l.b16 %v906
        %v1195 = vunpack.c.l.b16 %v907
        %v1196 = vunpack.c.l.b16 %v908
        %v1197 = vunpack.c.l.b16 %v909
        %v1198 = vunpack.c.l.b16 %v910
        %v1199 = vunpack.c.l.b16 %v911
        %v1200 = vunpack.c.l.b16 %v912
        %v1201 = vunpack.c.l.b16 %v913
        %v1202 = vunpack.c.l.b16 %v914
        %v1203 = vunpack.c.l.b16 %v915
        %v1204 = vunpack.c.l.b16 %v916
        %v1205 = vunpack.c.l.b16 %v917
        %v1206 = vunpack.c.l.b16 %v918
        %v1207 = vunpack.c.l.b16 %v919
        %v1208 = vunpack.c.l.b16 %v920
        %v1209 = vunpack.c.l.b16 %v921
        %v1210 = vunpack.c.l.b16 %v922
        %v1211 = vunpack.c.l.b16 %v923
        %v1212 = vunpack.c.l.b16 %v924
        %v1213 = vunpack.c.l.b16 %v925
        %v1214 = vunpack.c.l.b16 %v926
        %v1215 = vunpack.c.l.b16 %v927
        %v1216 = vunpack.c.l.b16 %v928
        %v1217 = vunpack.c.l.b16 %v929
        %v1218 = vunpack.c.l.b16 %v930
        %v1219 = vunpack.c.l.b16 %v931
        %v1220 = vunpack.c.l.b16 %v932
        %v1221 = vunpack.c.l.b16 %v933
        %v1222 = vunpack.c.l.b16 %v934
        %v1223 = vunpack.c.l.b16 %v935
        %v1224 = vunpack.c.l.b16 %v936
        %v1225 = vunpack.c.l.b16 %v937
        %v1226 = vunpack.c.l.b16 %v938
        %v1227 = vunpack.c.l.b16 %v939
        %v1228 = vunpack.c.l.b16 %v940
        %v1229 = vunpack.c.l.b16 %v941
        %v1230 = vunpack.c.l.b16 %v942
        %v1231 = vunpack.c.l.b16 %v943
        %v1232 = vunpack.c.l.b16 %v944
        %v1233 = vunpack.c.l.b16 %v945
        %v1234 = vunpack.c.l.b16 %v946
        %v1235 = vunpack.c.l.b16 %v947
        %v1236 = vunpack.c.l.b16 %v948
        %v1237 = vunpack.c.l.b16 %v949
        %v1238 = vunpack.c.l.b16 %v950
        %v1239 = vunpack.c.l.b16 %v951
        %v1240 = vunpack.c.l.b16 %v952
        %v1241 = vunpack.c.l.b16 %v953
        %v1242 = vunpack.c.l.b16 %v954
        %v1243 = vunpack.c.l.b16 %v955
        %v1244 = vunpack.c.l.b16 %v956
        %v1245 = vunpack.c.l.b16 %v957
        %v1246 = vunpack.c.l.b16 %v958
        %v1247 = vunpack.c.l.b16 %v959
        %v1248 = vunpack.c.l.b16 %v960
        %v1249 = vunpack.c.l.b16 %v961
        %v1250 = vunpack.c.l.b16 %v962
        %v1251 = vunpack.c.l.b16 %v963
        %v1252 = vunpack.c.l.b16 %v964
        %v1253 = vunpack.c.l.b16 %v965
        %v1254 = vunpack.c.l.b16 %v966
        %v1255 = vunpack.c.l.b16 %v967
        %v1256 = vunpack.c.l.b16 %v968
        %v1257 = vunpack.c.l.b16 %v969
        %v1258 = vunpack.c.l.b16 %v970
        %v1259 = vunpack.c.l.b16 %v971
        %v1260 = vunpack.c.l.b16 %v972
        %v1261 = vunpack.c.l.b16 %v973
        %v1262 = vunpack.c.l.b16 %v974
        %v1263 = vunpack.c.l.b16 %v975
        %v1264 = vunpack.c.l.b16 %v976
        %v1265 = vunpack.c.l.b16 %v977
        %v1266 = vunpack.c.l.b16 %v978
        %v1267 = vunpack.c.l.b16 %v979
        %v1268 = vunpack.c.l.b16 %v980
        %v1269 = vunpack.c.l.b16 %v981
        %v1270 = vunpack.c.l.b16 %v982
        %v1271 = vunpack.c.l.b16 %v983
        %v1272 = vunpack.c.l.b16 %v984
        %v1273 = vunpack.c.l.b16 %v985
        %v1274 = vunpack.c.l.b16 %v986
        %v1275 = vunpack.c.l.b16 %v987
        %v1276 = vunpack.c.l.b16 %v988
        %v1277 = vunpack.c.l.b16 %v989
        %v1278 = vunpack.c.l.b16 %v990
        %v1279 = vunpack.c.l.b16 %v991
        %v1280 = vunpack.c.l.b16 %v992
        %v1281 = vunpack.c.l.b16 %v993
        %v1282 = vunpack.c.l.b16 %v994
        %v1283 = vunpack.c.l.b16 %v995
        %v1284 = vunpack.c.l.b16 %v996
        %v1285 = vunpack.c.l.b16 %v997
        %v1286 = vunpack.c.l.b16 %v998
        %v1287 = vunpack.c.l.b16 %v999
        %v1288 = vunpack.c.l.b16 %v1000
        %v1289 = vunpack.c.l.b16 %v1001
        %v1290 = vunpack.c.l.b16 %v1002
        %v1291 = vunpack.c.l.b16 %v1003
        %v1292 = vunpack.c.l.b16 %v1004
        %v1293 = vunpack.c.l.b16 %v1005
        %v1294 = vunpack.c.l.b16 %v1006
        %v1295 = vunpack.c.l.b16 %v1007
        %v1296 = vunpack.c.l.b16 %v1008
        %v1297 = vunpack.c.l.b16 %v1009
        %v1298 = vunpack.c.l.b16 %v1010
        %v1299 = vunpack.c.l.b16 %v1011
        %v1300 = vunpack.c.l.b16 %v1012
        %v1301 = vunpack.c.l.b16 %v1013
        %v1302 = vunpack.c.l.b16 %v1014
        %v1303 = vunpack.c.l.b16 %v1015
        %v1304 = vunpack.c.l.b16 %v1016
        %v1305 = vunpack.c.l.b16 %v1017
        %v1306 = vunpack.c.l.b16 %v1018
        %v1307 = vunpack.c.l.b16 %v1019
        %v1308 = vunpack.c.l.b16 %v1020
        %v1309 = vunpack.c.l.b16 %v1021
        %v1310 = vunpack.c.l.b16 %v1022
        %v1311 = vunpack.c.l.b16 %v1023
        %v1312 = vunpack.c.l.b16 %v1024
        %v1313 = vunpack.c.l.b16 %v1025
        %v1314 = vunpack.c.l.b16 %v1026
        %v1315 = vunpack.c.l.b16 %v1027
        %v1316 = vunpack.c.l.b16 %v1028
        %v1317 = vunpack.c.l.b16 %v1029
        %v1318 = vpack.c.b16 %v1191, %v1190
        %v1319 = vpack.c.b16 %v1193, %v1192
        %v1320 = vpack.c.b16 %v1195, %v1194
        %v1321 = vpack.c.b16 %v1197, %v1196
        %v1322 = vpack.c.b16 %v1199, %v1198
        %v1323 = vpack.c.b16 %v1201, %v1200
        %v1324 = vpack.c.b16 %v1203, %v1202
        %v1325 = vpack.c.b16 %v1205, %v1204
        %v1326 = vpack.c.b16 %v1207, %v1206
        %v1327 = vpack.c.b16 %v1209, %v1208
        %v1328 = vpack.c.b16 %v1211, %v1210
        %v1329 = vpack.c.b16 %v1213, %v1212
        %v1330 = vpack.c.b16 %v1215, %v1214
        %v1331 = vpack.c.b16 %v1217, %v1216
        %v1332 = vpack.c.b16 %v1219, %v1218
        %v1333 = vpack.c.b16 %v1221, %v1220
        %v1334 = vpack.c.b16 %v1223, %v1222
        %v1335 = vpack.c.b16 %v1225, %v1224
        %v1336 = vpack.c.b16 %v1227, %v1226
        %v1337 = vpack.c.b16 %v1229, %v1228
        %v1338 = vpack.c.b16 %v1231, %v1230
        %v1339 = vpack.c.b16 %v1233, %v1232
        %v1340 = vpack.c.b16 %v1235, %v1234
        %v1341 = vpack.c.b16 %v1237, %v1236
        %v1342 = vpack.c.b16 %v1239, %v1238
        %v1343 = vpack.c.b16 %v1241, %v1240
        %v1344 = vpack.c.b16 %v1243, %v1242
        %v1345 = vpack.c.b16 %v1245, %v1244
        %v1346 = vpack.c.b16 %v1247, %v1246
        %v1347 = vpack.c.b16 %v1249, %v1248
        %v1348 = vpack.c.b16 %v1251, %v1250
        %v1349 = vpack.c.b16 %v1253, %v1252
        %v1350 = vpack.c.b16 %v1255, %v1254
        %v1351 = vpack.c.b16 %v1257, %v1256
        %v1352 = vpack.c.b16 %v1259, %v1258
        %v1353 = vpack.c.b16 %v1261, %v1260
        %v1354 = vpack.c.b16 %v1263, %v1262
        %v1355 = vpack.c.b16 %v1265, %v1264
        %v1356 = vpack.c.b16 %v1267, %v1266
        %v1357 = vpack.c.b16 %v1269, %v1268
        %v1358 = vpack.c.b16 %v1271, %v1270
        %v1359 = vpack.c.b16 %v1273, %v1272
        %v1360 = vpack.c.b16 %v1275, %v1274
        %v1361 = vpack.c.b16 %v1277, %v1276
        %v1362 = vpack.c.b16 %v1279, %v1278
        %v1363 = vpack.c.b16 %v1281, %v1280
        %v1364 = vpack.c.b16 %v1283, %v1282
        %v1365 = vpack.c.b16 %v1285, %v1284
        %v1366 = vpack.c.b16 %v1287, %v1286
        %v1367 = vpack.c.b16 %v1289, %v1288
        %v1368 = vpack.c.b16 %v1291, %v1290
        %v1369 = vpack.c.b16 %v1293, %v1292
        %v1370 = vpack.c.b16 %v1295, %v1294
        %v1371 = vpack.c.b16 %v1297, %v1296
        %v1372 = vpack.c.b16 %v1299, %v1298
        %v1373 = vpack.c.b16 %v1301, %v1300
        %v1374 = vpack.c.b16 %v1303, %v1302
        %v1375 = vpack.c.b16 %v1305, %v1304
        %v1376 = vpack.c.b16 %v1307, %v1306
        %v1377 = vpack.c.b16 %v1309, %v1308
        %v1378 = vpack.c.b16 %v1311, %v1310
        %v1379 = vpack.c.b16 %v1313, %v1312
        %v1380 = vpack.c.b16 %v1315, %v1314
        %v1381 = vpack.c.b16 %v1317, %v1316
        %1446 = vmatpush.bf16.msra.mxu0 %v1325
        %1447 = vmatpush.bf16.msra.mxu0 %v1324
        %1448 = vmatpush.bf16.msra.mxu0 %v1323
        %1449 = vmatpush.bf16.msra.mxu0 %v1322
        %1450 = vmatpush.bf16.msra.mxu0 %v1321
        %1451 = vmatpush.bf16.msra.mxu0 %v1320
        %1452 = vmatpush.bf16.msra.mxu0 %v1319
        %1453 = vmatpush.bf16.msra.mxu0 %v1318
        %1454 = vmatmul.bf16.gmra.mxu0 %v1031
        %v1455 = vpop.f32.mrf.mxu0
        %v1456 = vadd.f32 0.0, %v1455
        %v1457 = vpop.f32.mrf.mxu0
        %1458 = vdwg.mxu0
        %1459 = vmatpush.bf16.msra.mxu0 %v1333
        %1460 = vmatpush.bf16.msra.mxu0 %v1332
        %1461 = vmatpush.bf16.msra.mxu0 %v1331
        %1462 = vmatpush.bf16.msra.mxu0 %v1330
        %1463 = vmatpush.bf16.msra.mxu0 %v1329
        %1464 = vmatpush.bf16.msra.mxu0 %v1328
        %1465 = vmatpush.bf16.msra.mxu0 %v1327
        %1466 = vmatpush.bf16.msra.mxu0 %v1326
        %1467 = vmatmul.bf16.gmra.mxu0 %v1034
        %v1468 = vpop.f32.mrf.mxu0
        %v1469 = vadd.f32 %v1456, %v1468
        %v1470 = vpop.f32.mrf.mxu0
        %1471 = vdwg.mxu0
        %1472 = vmatpush.bf16.msra.mxu0 %v1341
        %1473 = vmatpush.bf16.msra.mxu0 %v1340
        %1474 = vmatpush.bf16.msra.mxu0 %v1339
        %1475 = vmatpush.bf16.msra.mxu0 %v1338
        %1476 = vmatpush.bf16.msra.mxu0 %v1337
        %1477 = vmatpush.bf16.msra.mxu0 %v1336
        %1478 = vmatpush.bf16.msra.mxu0 %v1335
        %1479 = vmatpush.bf16.msra.mxu0 %v1334
        %1480 = vmatmul.bf16.gmra.mxu0 %v1037
        %v1481 = vpop.f32.mrf.mxu0
        %v1482 = vadd.f32 %v1469, %v1481
        %v1483 = vpop.f32.mrf.mxu0
        %1484 = vdwg.mxu0
        %1485 = vmatpush.bf16.msra.mxu0 %v1349
        %1486 = vmatpush.bf16.msra.mxu0 %v1348
        %1487 = vmatpush.bf16.msra.mxu0 %v1347
        %1488 = vmatpush.bf16.msra.mxu0 %v1346
        %1489 = vmatpush.bf16.msra.mxu0 %v1345
        %1490 = vmatpush.bf16.msra.mxu0 %v1344
        %1491 = vmatpush.bf16.msra.mxu0 %v1343
        %1492 = vmatpush.bf16.msra.mxu0 %v1342
        %1493 = vmatmul.bf16.gmra.mxu0 %v1040
        %v1494 = vpop.f32.mrf.mxu0
        %v1495 = vadd.f32 %v1482, %v1494
        %v1496 = vpop.f32.mrf.mxu0
        %1497 = vdwg.mxu0
        %1498 = vmatpush.bf16.msra.mxu0 %v1357
        %1499 = vmatpush.bf16.msra.mxu0 %v1356
        %1500 = vmatpush.bf16.msra.mxu0 %v1355
        %1501 = vmatpush.bf16.msra.mxu0 %v1354
        %1502 = vmatpush.bf16.msra.mxu0 %v1353
        %1503 = vmatpush.bf16.msra.mxu0 %v1352
        %1504 = vmatpush.bf16.msra.mxu0 %v1351
        %1505 = vmatpush.bf16.msra.mxu0 %v1350
        %1506 = vmatmul.bf16.gmra.mxu0 %v1043
        %v1507 = vpop.f32.mrf.mxu0
        %v1508 = vadd.f32 %v1495, %v1507
        %v1509 = vpop.f32.mrf.mxu0
        %1510 = vdwg.mxu0
        %1511 = vmatpush.bf16.msra.mxu0 %v1365
        %1512 = vmatpush.bf16.msra.mxu0 %v1364
        %1513 = vmatpush.bf16.msra.mxu0 %v1363
        %1514 = vmatpush.bf16.msra.mxu0 %v1362
        %1515 = vmatpush.bf16.msra.mxu0 %v1361
        %1516 = vmatpush.bf16.msra.mxu0 %v1360
        %1517 = vmatpush.bf16.msra.mxu0 %v1359
        %1518 = vmatpush.bf16.msra.mxu0 %v1358
        %1519 = vmatmul.bf16.gmra.mxu0 %v1046
        %v1520 = vpop.f32.mrf.mxu0
        %v1521 = vadd.f32 %v1508, %v1520
        %v1522 = vpop.f32.mrf.mxu0
        %1523 = vdwg.mxu0
        %1524 = vmatpush.bf16.msra.mxu0 %v1373
        %1525 = vmatpush.bf16.msra.mxu0 %v1372
        %1526 = vmatpush.bf16.msra.mxu0 %v1371
        %1527 = vmatpush.bf16.msra.mxu0 %v1370
        %1528 = vmatpush.bf16.msra.mxu0 %v1369
        %1529 = vmatpush.bf16.msra.mxu0 %v1368
        %1530 = vmatpush.bf16.msra.mxu0 %v1367
        %1531 = vmatpush.bf16.msra.mxu0 %v1366
        %1532 = vmatmul.bf16.gmra.mxu0 %v1049
        %v1533 = vpop.f32.mrf.mxu0
        %v1534 = vadd.f32 %v1521, %v1533
        %v1535 = vpop.f32.mrf.mxu0
        %1536 = vdwg.mxu0
        %1537 = vmatpush.bf16.msra.mxu0 %v1381
        %1538 = vmatpush.bf16.msra.mxu0 %v1380
        %1539 = vmatpush.bf16.msra.mxu0 %v1379
        %1540 = vmatpush.bf16.msra.mxu0 %v1378
        %1541 = vmatpush.bf16.msra.mxu0 %v1377
        %1542 = vmatpush.bf16.msra.mxu0 %v1376
        %1543 = vmatpush.bf16.msra.mxu0 %v1375
        %1544 = vmatpush.bf16.msra.mxu0 %v1374
        %1545 = vmatmul.bf16.gmra.mxu0 %v1052
        %v1546 = vpop.f32.mrf.mxu0
        %v1547 = vadd.f32 %v1534, %v1546
        %v1548 = vpop.f32.mrf.mxu0
        %1549 = vdwg.mxu0
        %v1678 = vunpack.c.l.b16 %v773
        %v1679 = vunpack.c.l.b16 %v774
        %v1680 = vunpack.c.l.b16 %v775
        %v1681 = vunpack.c.l.b16 %v776
        %v1682 = vunpack.c.l.b16 %v777
        %v1683 = vunpack.c.l.b16 %v778
        %v1684 = vunpack.c.l.b16 %v779
        %v1685 = vunpack.c.l.b16 %v780
        %v1686 = vunpack.c.l.b16 %v781
        %v1687 = vunpack.c.l.b16 %v782
        %v1688 = vunpack.c.l.b16 %v783
        %v1689 = vunpack.c.l.b16 %v784
        %v1690 = vunpack.c.l.b16 %v785
        %v1691 = vunpack.c.l.b16 %v786
        %v1692 = vunpack.c.l.b16 %v787
        %v1693 = vunpack.c.l.b16 %v788
        %v1694 = vunpack.c.l.b16 %v789
        %v1695 = vunpack.c.l.b16 %v790
        %v1696 = vunpack.c.l.b16 %v791
        %v1697 = vunpack.c.l.b16 %v792
        %v1698 = vunpack.c.l.b16 %v793
        %v1699 = vunpack.c.l.b16 %v794
        %v1700 = vunpack.c.l.b16 %v795
        %v1701 = vunpack.c.l.b16 %v796
        %v1702 = vunpack.c.l.b16 %v797
        %v1703 = vunpack.c.l.b16 %v798
        %v1704 = vunpack.c.l.b16 %v799
        %v1705 = vunpack.c.l.b16 %v800
        %v1706 = vunpack.c.l.b16 %v801
        %v1707 = vunpack.c.l.b16 %v802
        %v1708 = vunpack.c.l.b16 %v803
        %v1709 = vunpack.c.l.b16 %v804
        %v1710 = vunpack.c.l.b16 %v805
        %v1711 = vunpack.c.l.b16 %v806
        %v1712 = vunpack.c.l.b16 %v807
        %v1713 = vunpack.c.l.b16 %v808
        %v1714 = vunpack.c.l.b16 %v809
        %v1715 = vunpack.c.l.b16 %v810
        %v1716 = vunpack.c.l.b16 %v811
        %v1717 = vunpack.c.l.b16 %v812
        %v1718 = vunpack.c.l.b16 %v813
        %v1719 = vunpack.c.l.b16 %v814
        %v1720 = vunpack.c.l.b16 %v815
        %v1721 = vunpack.c.l.b16 %v816
        %v1722 = vunpack.c.l.b16 %v817
        %v1723 = vunpack.c.l.b16 %v818
        %v1724 = vunpack.c.l.b16 %v819
        %v1725 = vunpack.c.l.b16 %v820
        %v1726 = vunpack.c.l.b16 %v821
        %v1727 = vunpack.c.l.b16 %v822
        %v1728 = vunpack.c.l.b16 %v823
        %v1729 = vunpack.c.l.b16 %v824
        %v1730 = vunpack.c.l.b16 %v825
        %v1731 = vunpack.c.l.b16 %v826
        %v1732 = vunpack.c.l.b16 %v827
        %v1733 = vunpack.c.l.b16 %v828
        %v1734 = vunpack.c.l.b16 %v829
        %v1735 = vunpack.c.l.b16 %v830
        %v1736 = vunpack.c.l.b16 %v831
        %v1737 = vunpack.c.l.b16 %v832
        %v1738 = vunpack.c.l.b16 %v833
        %v1739 = vunpack.c.l.b16 %v834
        %v1740 = vunpack.c.l.b16 %v835
        %v1741 = vunpack.c.l.b16 %v836
        %v1742 = vunpack.c.l.b16 %v837
        %v1743 = vunpack.c.l.b16 %v838
        %v1744 = vunpack.c.l.b16 %v839
        %v1745 = vunpack.c.l.b16 %v840
        %v1746 = vunpack.c.l.b16 %v841
        %v1747 = vunpack.c.l.b16 %v842
        %v1748 = vunpack.c.l.b16 %v843
        %v1749 = vunpack.c.l.b16 %v844
        %v1750 = vunpack.c.l.b16 %v845
        %v1751 = vunpack.c.l.b16 %v846
        %v1752 = vunpack.c.l.b16 %v847
        %v1753 = vunpack.c.l.b16 %v848
        %v1754 = vunpack.c.l.b16 %v849
        %v1755 = vunpack.c.l.b16 %v850
        %v1756 = vunpack.c.l.b16 %v851
        %v1757 = vunpack.c.l.b16 %v852
        %v1758 = vunpack.c.l.b16 %v853
        %v1759 = vunpack.c.l.b16 %v854
        %v1760 = vunpack.c.l.b16 %v855
        %v1761 = vunpack.c.l.b16 %v856
        %v1762 = vunpack.c.l.b16 %v857
        %v1763 = vunpack.c.l.b16 %v858
        %v1764 = vunpack.c.l.b16 %v859
        %v1765 = vunpack.c.l.b16 %v860
        %v1766 = vunpack.c.l.b16 %v861
        %v1767 = vunpack.c.l.b16 %v862
        %v1768 = vunpack.c.l.b16 %v863
        %v1769 = vunpack.c.l.b16 %v864
        %v1770 = vunpack.c.l.b16 %v865
        %v1771 = vunpack.c.l.b16 %v866
        %v1772 = vunpack.c.l.b16 %v867
        %v1773 = vunpack.c.l.b16 %v868
        %v1774 = vunpack.c.l.b16 %v869
        %v1775 = vunpack.c.l.b16 %v870
        %v1776 = vunpack.c.l.b16 %v871
        %v1777 = vunpack.c.l.b16 %v872
        %v1778 = vunpack.c.l.b16 %v873
        %v1779 = vunpack.c.l.b16 %v874
        %v1780 = vunpack.c.l.b16 %v875
        %v1781 = vunpack.c.l.b16 %v876
        %v1782 = vunpack.c.l.b16 %v877
        %v1783 = vunpack.c.l.b16 %v878
        %v1784 = vunpack.c.l.b16 %v879
        %v1785 = vunpack.c.l.b16 %v880
        %v1786 = vunpack.c.l.b16 %v881
        %v1787 = vunpack.c.l.b16 %v882
        %v1788 = vunpack.c.l.b16 %v883
        %v1789 = vunpack.c.l.b16 %v884
        %v1790 = vunpack.c.l.b16 %v885
        %v1791 = vunpack.c.l.b16 %v886
        %v1792 = vunpack.c.l.b16 %v887
        %v1793 = vunpack.c.l.b16 %v888
        %v1794 = vunpack.c.l.b16 %v889
        %v1795 = vunpack.c.l.b16 %v890
        %v1796 = vunpack.c.l.b16 %v891
        %v1797 = vunpack.c.l.b16 %v892
        %v1798 = vunpack.c.l.b16 %v893
        %v1799 = vunpack.c.l.b16 %v894
        %v1800 = vunpack.c.l.b16 %v895
        %v1801 = vunpack.c.l.b16 %v896
        %v1802 = vunpack.c.l.b16 %v897
        %v1803 = vunpack.c.l.b16 %v898
        %v1804 = vunpack.c.l.b16 %v899
        %v1805 = vunpack.c.l.b16 %v900
        %v1806 = vpack.c.b16 %v1679, %v1678
        %v1807 = vpack.c.b16 %v1681, %v1680
        %v1808 = vpack.c.b16 %v1683, %v1682
        %v1809 = vpack.c.b16 %v1685, %v1684
        %v1810 = vpack.c.b16 %v1687, %v1686
        %v1811 = vpack.c.b16 %v1689, %v1688
        %v1812 = vpack.c.b16 %v1691, %v1690
        %v1813 = vpack.c.b16 %v1693, %v1692
        %v1814 = vpack.c.b16 %v1695, %v1694
        %v1815 = vpack.c.b16 %v1697, %v1696
        %v1816 = vpack.c.b16 %v1699, %v1698
        %v1817 = vpack.c.b16 %v1701, %v1700
        %v1818 = vpack.c.b16 %v1703, %v1702
        %v1819 = vpack.c.b16 %v1705, %v1704
        %v1820 = vpack.c.b16 %v1707, %v1706
        %v1821 = vpack.c.b16 %v1709, %v1708
        %v1822 = vpack.c.b16 %v1711, %v1710
        %v1823 = vpack.c.b16 %v1713, %v1712
        %v1824 = vpack.c.b16 %v1715, %v1714
        %v1825 = vpack.c.b16 %v1717, %v1716
        %v1826 = vpack.c.b16 %v1719, %v1718
        %v1827 = vpack.c.b16 %v1721, %v1720
        %v1828 = vpack.c.b16 %v1723, %v1722
        %v1829 = vpack.c.b16 %v1725, %v1724
        %v1830 = vpack.c.b16 %v1727, %v1726
        %v1831 = vpack.c.b16 %v1729, %v1728
        %v1832 = vpack.c.b16 %v1731, %v1730
        %v1833 = vpack.c.b16 %v1733, %v1732
        %v1834 = vpack.c.b16 %v1735, %v1734
        %v1835 = vpack.c.b16 %v1737, %v1736
        %v1836 = vpack.c.b16 %v1739, %v1738
        %v1837 = vpack.c.b16 %v1741, %v1740
        %v1838 = vpack.c.b16 %v1743, %v1742
        %v1839 = vpack.c.b16 %v1745, %v1744
        %v1840 = vpack.c.b16 %v1747, %v1746
        %v1841 = vpack.c.b16 %v1749, %v1748
        %v1842 = vpack.c.b16 %v1751, %v1750
        %v1843 = vpack.c.b16 %v1753, %v1752
        %v1844 = vpack.c.b16 %v1755, %v1754
        %v1845 = vpack.c.b16 %v1757, %v1756
        %v1846 = vpack.c.b16 %v1759, %v1758
        %v1847 = vpack.c.b16 %v1761, %v1760
        %v1848 = vpack.c.b16 %v1763, %v1762
        %v1849 = vpack.c.b16 %v1765, %v1764
        %v1850 = vpack.c.b16 %v1767, %v1766
        %v1851 = vpack.c.b16 %v1769, %v1768
        %v1852 = vpack.c.b16 %v1771, %v1770
        %v1853 = vpack.c.b16 %v1773, %v1772
        %v1854 = vpack.c.b16 %v1775, %v1774
        %v1855 = vpack.c.b16 %v1777, %v1776
        %v1856 = vpack.c.b16 %v1779, %v1778
        %v1857 = vpack.c.b16 %v1781, %v1780
        %v1858 = vpack.c.b16 %v1783, %v1782
        %v1859 = vpack.c.b16 %v1785, %v1784
        %v1860 = vpack.c.b16 %v1787, %v1786
        %v1861 = vpack.c.b16 %v1789, %v1788
        %v1862 = vpack.c.b16 %v1791, %v1790
        %v1863 = vpack.c.b16 %v1793, %v1792
        %v1864 = vpack.c.b16 %v1795, %v1794
        %v1865 = vpack.c.b16 %v1797, %v1796
        %v1866 = vpack.c.b16 %v1799, %v1798
        %v1867 = vpack.c.b16 %v1801, %v1800
        %v1868 = vpack.c.b16 %v1803, %v1802
        %v1869 = vpack.c.b16 %v1805, %v1804
        %1934 = vmatpush.bf16.msra.mxu0 %v1813
        %1935 = vmatpush.bf16.msra.mxu0 %v1812
        %1936 = vmatpush.bf16.msra.mxu0 %v1811
        %1937 = vmatpush.bf16.msra.mxu0 %v1810
        %1938 = vmatpush.bf16.msra.mxu0 %v1809
        %1939 = vmatpush.bf16.msra.mxu0 %v1808
        %1940 = vmatpush.bf16.msra.mxu0 %v1807
        %1941 = vmatpush.bf16.msra.mxu0 %v1806
        %1942 = vmatmul.bf16.gmra.mxu0 %v765
        %v1943 = vpop.f32.mrf.mxu0
        %v1944 = vadd.f32 %v1547, %v1943
        %v1945 = vpop.f32.mrf.mxu0
        %1946 = vdwg.mxu0
        %1947 = vmatpush.bf16.msra.mxu0 %v1821
        %1948 = vmatpush.bf16.msra.mxu0 %v1820
        %1949 = vmatpush.bf16.msra.mxu0 %v1819
        %1950 = vmatpush.bf16.msra.mxu0 %v1818
        %1951 = vmatpush.bf16.msra.mxu0 %v1817
        %1952 = vmatpush.bf16.msra.mxu0 %v1816
        %1953 = vmatpush.bf16.msra.mxu0 %v1815
        %1954 = vmatpush.bf16.msra.mxu0 %v1814
        %1955 = vmatmul.bf16.gmra.mxu0 %v766
        %v1956 = vpop.f32.mrf.mxu0
        %v1957 = vadd.f32 %v1944, %v1956
        %v1958 = vpop.f32.mrf.mxu0
        %1959 = vdwg.mxu0
        %1960 = vmatpush.bf16.msra.mxu0 %v1829
        %1961 = vmatpush.bf16.msra.mxu0 %v1828
        %1962 = vmatpush.bf16.msra.mxu0 %v1827
        %1963 = vmatpush.bf16.msra.mxu0 %v1826
        %1964 = vmatpush.bf16.msra.mxu0 %v1825
        %1965 = vmatpush.bf16.msra.mxu0 %v1824
        %1966 = vmatpush.bf16.msra.mxu0 %v1823
        %1967 = vmatpush.bf16.msra.mxu0 %v1822
        %1968 = vmatmul.bf16.gmra.mxu0 %v767
        %v1969 = vpop.f32.mrf.mxu0
        %v1970 = vadd.f32 %v1957, %v1969
        %v1971 = vpop.f32.mrf.mxu0
        %1972 = vdwg.mxu0
        %1973 = vmatpush.bf16.msra.mxu0 %v1837
        %1974 = vmatpush.bf16.msra.mxu0 %v1836
        %1975 = vmatpush.bf16.msra.mxu0 %v1835
        %1976 = vmatpush.bf16.msra.mxu0 %v1834
        %1977 = vmatpush.bf16.msra.mxu0 %v1833
        %1978 = vmatpush.bf16.msra.mxu0 %v1832
        %1979 = vmatpush.bf16.msra.mxu0 %v1831
        %1980 = vmatpush.bf16.msra.mxu0 %v1830
        %1981 = vmatmul.bf16.gmra.mxu0 %v768
        %v1982 = vpop.f32.mrf.mxu0
        %v1983 = vadd.f32 %v1970, %v1982
        %v1984 = vpop.f32.mrf.mxu0
        %1985 = vdwg.mxu0
        %1986 = vmatpush.bf16.msra.mxu0 %v1845
        %1987 = vmatpush.bf16.msra.mxu0 %v1844
        %1988 = vmatpush.bf16.msra.mxu0 %v1843
        %1989 = vmatpush.bf16.msra.mxu0 %v1842
        %1990 = vmatpush.bf16.msra.mxu0 %v1841
        %1991 = vmatpush.bf16.msra.mxu0 %v1840
        %1992 = vmatpush.bf16.msra.mxu0 %v1839
        %1993 = vmatpush.bf16.msra.mxu0 %v1838
        %1994 = vmatmul.bf16.gmra.mxu0 %v769
        %v1995 = vpop.f32.mrf.mxu0
        %v1996 = vadd.f32 %v1983, %v1995
        %v1997 = vpop.f32.mrf.mxu0
        %1998 = vdwg.mxu0
        %1999 = vmatpush.bf16.msra.mxu0 %v1853
        %2000 = vmatpush.bf16.msra.mxu0 %v1852
        %2001 = vmatpush.bf16.msra.mxu0 %v1851
        %2002 = vmatpush.bf16.msra.mxu0 %v1850
        %2003 = vmatpush.bf16.msra.mxu0 %v1849
        %2004 = vmatpush.bf16.msra.mxu0 %v1848
        %2005 = vmatpush.bf16.msra.mxu0 %v1847
        %2006 = vmatpush.bf16.msra.mxu0 %v1846
        %2007 = vmatmul.bf16.gmra.mxu0 %v770
        %v2008 = vpop.f32.mrf.mxu0
        %v2009 = vadd.f32 %v1996, %v2008
        %v2010 = vpop.f32.mrf.mxu0
        %2011 = vdwg.mxu0
        %2012 = vmatpush.bf16.msra.mxu0 %v1861
        %2013 = vmatpush.bf16.msra.mxu0 %v1860
        %2014 = vmatpush.bf16.msra.mxu0 %v1859
        %2015 = vmatpush.bf16.msra.mxu0 %v1858
        %2016 = vmatpush.bf16.msra.mxu0 %v1857
        %2017 = vmatpush.bf16.msra.mxu0 %v1856
        %2018 = vmatpush.bf16.msra.mxu0 %v1855
        %2019 = vmatpush.bf16.msra.mxu0 %v1854
        %2020 = vmatmul.bf16.gmra.mxu0 %v771
        %v2021 = vpop.f32.mrf.mxu0
        %v2022 = vadd.f32 %v2009, %v2021
        %v2023 = vpop.f32.mrf.mxu0
        %2024 = vdwg.mxu0
        %2025 = vmatpush.bf16.msra.mxu0 %v1869
        %2026 = vmatpush.bf16.msra.mxu0 %v1868
        %2027 = vmatpush.bf16.msra.mxu0 %v1867
        %2028 = vmatpush.bf16.msra.mxu0 %v1866
        %2029 = vmatpush.bf16.msra.mxu0 %v1865
        %2030 = vmatpush.bf16.msra.mxu0 %v1864
        %2031 = vmatpush.bf16.msra.mxu0 %v1863
        %2032 = vmatpush.bf16.msra.mxu0 %v1862
        %2033 = vmatmul.bf16.gmra.mxu0 %v772
        %v2034 = vpop.f32.mrf.mxu0
        %v2035 = vadd.f32 %v2022, %v2034
        %v2036 = vpop.f32.mrf.mxu0
        %2037 = vdwg.mxu0
        %s2038 = scalar_lea.vmem %s3, 1024
        %v2039 = vld [vmem:[%s2038] sm:$0xf]
        %v2040 = vld [vmem:[%s2038 + $0x4] sm:$0xf]
        %v2041 = vld [vmem:[%s2038 + $0x8] sm:$0xf]
        %v2042 = vld [vmem:[%s2038 + $0xc] sm:$0xf]
        %v2043 = vld [vmem:[%s2038 + $0x10] sm:$0xf]
        %v2044 = vld [vmem:[%s2038 + $0x14] sm:$0xf]
        %v2045 = vld [vmem:[%s2038 + $0x18] sm:$0xf]
        %v2046 = vld [vmem:[%s2038 + $0x1c] sm:$0xf]
        %v2047 = vld [vmem:[%s2038 + $0x20] sm:$0xf]
        %v2048 = vld [vmem:[%s2038 + $0x24] sm:$0xf]
        %v2049 = vld [vmem:[%s2038 + $0x28] sm:$0xf]
        %v2050 = vld [vmem:[%s2038 + $0x2c] sm:$0xf]
        %v2051 = vld [vmem:[%s2038 + $0x30] sm:$0xf]
        %v2052 = vld [vmem:[%s2038 + $0x34] sm:$0xf]
        %v2053 = vld [vmem:[%s2038 + $0x38] sm:$0xf]
        %v2054 = vld [vmem:[%s2038 + $0x3c] sm:$0xf]
        %v2055 = vld [vmem:[%s2038 + $0x40] sm:$0xf]
        %v2056 = vld [vmem:[%s2038 + $0x44] sm:$0xf]
        %v2057 = vld [vmem:[%s2038 + $0x48] sm:$0xf]
        %v2058 = vld [vmem:[%s2038 + $0x4c] sm:$0xf]
        %v2059 = vld [vmem:[%s2038 + $0x50] sm:$0xf]
        %v2060 = vld [vmem:[%s2038 + $0x54] sm:$0xf]
        %v2061 = vld [vmem:[%s2038 + $0x58] sm:$0xf]
        %v2062 = vld [vmem:[%s2038 + $0x5c] sm:$0xf]
        %v2063 = vld [vmem:[%s2038 + $0x60] sm:$0xf]
        %v2064 = vld [vmem:[%s2038 + $0x64] sm:$0xf]
        %v2065 = vld [vmem:[%s2038 + $0x68] sm:$0xf]
        %v2066 = vld [vmem:[%s2038 + $0x6c] sm:$0xf]
        %v2067 = vld [vmem:[%s2038 + $0x70] sm:$0xf]
        %v2068 = vld [vmem:[%s2038 + $0x74] sm:$0xf]
        %v2069 = vld [vmem:[%s2038 + $0x78] sm:$0xf]
        %v2070 = vld [vmem:[%s2038 + $0x7c] sm:$0xf]
        %v2071 = vld [vmem:[%s2038 + $0x80] sm:$0xf]
        %v2072 = vld [vmem:[%s2038 + $0x84] sm:$0xf]
        %v2073 = vld [vmem:[%s2038 + $0x88] sm:$0xf]
        %v2074 = vld [vmem:[%s2038 + $0x8c] sm:$0xf]
        %v2075 = vld [vmem:[%s2038 + $0x90] sm:$0xf]
        %v2076 = vld [vmem:[%s2038 + $0x94] sm:$0xf]
        %v2077 = vld [vmem:[%s2038 + $0x98] sm:$0xf]
        %v2078 = vld [vmem:[%s2038 + $0x9c] sm:$0xf]
        %v2079 = vld [vmem:[%s2038 + $0xa0] sm:$0xf]
        %v2080 = vld [vmem:[%s2038 + $0xa4] sm:$0xf]
        %v2081 = vld [vmem:[%s2038 + $0xa8] sm:$0xf]
        %v2082 = vld [vmem:[%s2038 + $0xac] sm:$0xf]
        %v2083 = vld [vmem:[%s2038 + $0xb0] sm:$0xf]
        %v2084 = vld [vmem:[%s2038 + $0xb4] sm:$0xf]
        %v2085 = vld [vmem:[%s2038 + $0xb8] sm:$0xf]
        %v2086 = vld [vmem:[%s2038 + $0xbc] sm:$0xf]
        %v2087 = vld [vmem:[%s2038 + $0xc0] sm:$0xf]
        %v2088 = vld [vmem:[%s2038 + $0xc4] sm:$0xf]
        %v2089 = vld [vmem:[%s2038 + $0xc8] sm:$0xf]
        %v2090 = vld [vmem:[%s2038 + $0xcc] sm:$0xf]
        %v2091 = vld [vmem:[%s2038 + $0xd0] sm:$0xf]
        %v2092 = vld [vmem:[%s2038 + $0xd4] sm:$0xf]
        %v2093 = vld [vmem:[%s2038 + $0xd8] sm:$0xf]
        %v2094 = vld [vmem:[%s2038 + $0xdc] sm:$0xf]
        %v2095 = vld [vmem:[%s2038 + $0xe0] sm:$0xf]
        %v2096 = vld [vmem:[%s2038 + $0xe4] sm:$0xf]
        %v2097 = vld [vmem:[%s2038 + $0xe8] sm:$0xf]
        %v2098 = vld [vmem:[%s2038 + $0xec] sm:$0xf]
        %v2099 = vld [vmem:[%s2038 + $0xf0] sm:$0xf]
        %v2100 = vld [vmem:[%s2038 + $0xf4] sm:$0xf]
        %v2101 = vld [vmem:[%s2038 + $0xf8] sm:$0xf]
        %v2102 = vld [vmem:[%s2038 + $0xfc] sm:$0xf]
        %v2103 = vld [vmem:[%s2038 + $0x100] sm:$0xf]
        %v2104 = vld [vmem:[%s2038 + $0x104] sm:$0xf]
        %v2105 = vld [vmem:[%s2038 + $0x108] sm:$0xf]
        %v2106 = vld [vmem:[%s2038 + $0x10c] sm:$0xf]
        %v2107 = vld [vmem:[%s2038 + $0x110] sm:$0xf]
        %v2108 = vld [vmem:[%s2038 + $0x114] sm:$0xf]
        %v2109 = vld [vmem:[%s2038 + $0x118] sm:$0xf]
        %v2110 = vld [vmem:[%s2038 + $0x11c] sm:$0xf]
        %v2111 = vld [vmem:[%s2038 + $0x120] sm:$0xf]
        %v2112 = vld [vmem:[%s2038 + $0x124] sm:$0xf]
        %v2113 = vld [vmem:[%s2038 + $0x128] sm:$0xf]
        %v2114 = vld [vmem:[%s2038 + $0x12c] sm:$0xf]
        %v2115 = vld [vmem:[%s2038 + $0x130] sm:$0xf]
        %v2116 = vld [vmem:[%s2038 + $0x134] sm:$0xf]
        %v2117 = vld [vmem:[%s2038 + $0x138] sm:$0xf]
        %v2118 = vld [vmem:[%s2038 + $0x13c] sm:$0xf]
        %v2119 = vld [vmem:[%s2038 + $0x140] sm:$0xf]
        %v2120 = vld [vmem:[%s2038 + $0x144] sm:$0xf]
        %v2121 = vld [vmem:[%s2038 + $0x148] sm:$0xf]
        %v2122 = vld [vmem:[%s2038 + $0x14c] sm:$0xf]
        %v2123 = vld [vmem:[%s2038 + $0x150] sm:$0xf]
        %v2124 = vld [vmem:[%s2038 + $0x154] sm:$0xf]
        %v2125 = vld [vmem:[%s2038 + $0x158] sm:$0xf]
        %v2126 = vld [vmem:[%s2038 + $0x15c] sm:$0xf]
        %v2127 = vld [vmem:[%s2038 + $0x160] sm:$0xf]
        %v2128 = vld [vmem:[%s2038 + $0x164] sm:$0xf]
        %v2129 = vld [vmem:[%s2038 + $0x168] sm:$0xf]
        %v2130 = vld [vmem:[%s2038 + $0x16c] sm:$0xf]
        %v2131 = vld [vmem:[%s2038 + $0x170] sm:$0xf]
        %v2132 = vld [vmem:[%s2038 + $0x174] sm:$0xf]
        %v2133 = vld [vmem:[%s2038 + $0x178] sm:$0xf]
        %v2134 = vld [vmem:[%s2038 + $0x17c] sm:$0xf]
        %v2135 = vld [vmem:[%s2038 + $0x180] sm:$0xf]
        %v2136 = vld [vmem:[%s2038 + $0x184] sm:$0xf]
        %v2137 = vld [vmem:[%s2038 + $0x188] sm:$0xf]
        %v2138 = vld [vmem:[%s2038 + $0x18c] sm:$0xf]
        %v2139 = vld [vmem:[%s2038 + $0x190] sm:$0xf]
        %v2140 = vld [vmem:[%s2038 + $0x194] sm:$0xf]
        %v2141 = vld [vmem:[%s2038 + $0x198] sm:$0xf]
        %v2142 = vld [vmem:[%s2038 + $0x19c] sm:$0xf]
        %v2143 = vld [vmem:[%s2038 + $0x1a0] sm:$0xf]
        %v2144 = vld [vmem:[%s2038 + $0x1a4] sm:$0xf]
        %v2145 = vld [vmem:[%s2038 + $0x1a8] sm:$0xf]
        %v2146 = vld [vmem:[%s2038 + $0x1ac] sm:$0xf]
        %v2147 = vld [vmem:[%s2038 + $0x1b0] sm:$0xf]
        %v2148 = vld [vmem:[%s2038 + $0x1b4] sm:$0xf]
        %v2149 = vld [vmem:[%s2038 + $0x1b8] sm:$0xf]
        %v2150 = vld [vmem:[%s2038 + $0x1bc] sm:$0xf]
        %v2151 = vld [vmem:[%s2038 + $0x1c0] sm:$0xf]
        %v2152 = vld [vmem:[%s2038 + $0x1c4] sm:$0xf]
        %v2153 = vld [vmem:[%s2038 + $0x1c8] sm:$0xf]
        %v2154 = vld [vmem:[%s2038 + $0x1cc] sm:$0xf]
        %v2155 = vld [vmem:[%s2038 + $0x1d0] sm:$0xf]
        %v2156 = vld [vmem:[%s2038 + $0x1d4] sm:$0xf]
        %v2157 = vld [vmem:[%s2038 + $0x1d8] sm:$0xf]
        %v2158 = vld [vmem:[%s2038 + $0x1dc] sm:$0xf]
        %v2159 = vld [vmem:[%s2038 + $0x1e0] sm:$0xf]
        %v2160 = vld [vmem:[%s2038 + $0x1e4] sm:$0xf]
        %v2161 = vld [vmem:[%s2038 + $0x1e8] sm:$0xf]
        %v2162 = vld [vmem:[%s2038 + $0x1ec] sm:$0xf]
        %v2163 = vld [vmem:[%s2038 + $0x1f0] sm:$0xf]
        %v2164 = vld [vmem:[%s2038 + $0x1f4] sm:$0xf]
        %v2165 = vld [vmem:[%s2038 + $0x1f8] sm:$0xf]
        %v2166 = vld [vmem:[%s2038 + $0x1fc] sm:$0xf]
        %v2175 = vrot.slane %v765, 1
        %v2176 = vrot.slane %v766, 1
        %v2177 = vrot.slane %v767, 1
        %v2178 = vrot.slane %v768, 1
        %v2179 = vrot.slane %v769, 1
        %v2180 = vrot.slane %v770, 1
        %v2181 = vrot.slane %v771, 1
        %v2182 = vrot.slane %v772, 1
        %v2319 = vunpack.c.l.b16 %v2039
        %v2320 = vunpack.c.l.b16 %v2040
        %v2321 = vunpack.c.l.b16 %v2041
        %v2322 = vunpack.c.l.b16 %v2042
        %v2323 = vunpack.c.l.b16 %v2043
        %v2324 = vunpack.c.l.b16 %v2044
        %v2325 = vunpack.c.l.b16 %v2045
        %v2326 = vunpack.c.l.b16 %v2046
        %v2327 = vunpack.c.l.b16 %v2047
        %v2328 = vunpack.c.l.b16 %v2048
        %v2329 = vunpack.c.l.b16 %v2049
        %v2330 = vunpack.c.l.b16 %v2050
        %v2331 = vunpack.c.l.b16 %v2051
        %v2332 = vunpack.c.l.b16 %v2052
        %v2333 = vunpack.c.l.b16 %v2053
        %v2334 = vunpack.c.l.b16 %v2054
        %v2335 = vunpack.c.l.b16 %v2055
        %v2336 = vunpack.c.l.b16 %v2056
        %v2337 = vunpack.c.l.b16 %v2057
        %v2338 = vunpack.c.l.b16 %v2058
        %v2339 = vunpack.c.l.b16 %v2059
        %v2340 = vunpack.c.l.b16 %v2060
        %v2341 = vunpack.c.l.b16 %v2061
        %v2342 = vunpack.c.l.b16 %v2062
        %v2343 = vunpack.c.l.b16 %v2063
        %v2344 = vunpack.c.l.b16 %v2064
        %v2345 = vunpack.c.l.b16 %v2065
        %v2346 = vunpack.c.l.b16 %v2066
        %v2347 = vunpack.c.l.b16 %v2067
        %v2348 = vunpack.c.l.b16 %v2068
        %v2349 = vunpack.c.l.b16 %v2069
        %v2350 = vunpack.c.l.b16 %v2070
        %v2351 = vunpack.c.l.b16 %v2071
        %v2352 = vunpack.c.l.b16 %v2072
        %v2353 = vunpack.c.l.b16 %v2073
        %v2354 = vunpack.c.l.b16 %v2074
        %v2355 = vunpack.c.l.b16 %v2075
        %v2356 = vunpack.c.l.b16 %v2076
        %v2357 = vunpack.c.l.b16 %v2077
        %v2358 = vunpack.c.l.b16 %v2078
        %v2359 = vunpack.c.l.b16 %v2079
        %v2360 = vunpack.c.l.b16 %v2080
        %v2361 = vunpack.c.l.b16 %v2081
        %v2362 = vunpack.c.l.b16 %v2082
        %v2363 = vunpack.c.l.b16 %v2083
        %v2364 = vunpack.c.l.b16 %v2084
        %v2365 = vunpack.c.l.b16 %v2085
        %v2366 = vunpack.c.l.b16 %v2086
        %v2367 = vunpack.c.l.b16 %v2087
        %v2368 = vunpack.c.l.b16 %v2088
        %v2369 = vunpack.c.l.b16 %v2089
        %v2370 = vunpack.c.l.b16 %v2090
        %v2371 = vunpack.c.l.b16 %v2091
        %v2372 = vunpack.c.l.b16 %v2092
        %v2373 = vunpack.c.l.b16 %v2093
        %v2374 = vunpack.c.l.b16 %v2094
        %v2375 = vunpack.c.l.b16 %v2095
        %v2376 = vunpack.c.l.b16 %v2096
        %v2377 = vunpack.c.l.b16 %v2097
        %v2378 = vunpack.c.l.b16 %v2098
        %v2379 = vunpack.c.l.b16 %v2099
        %v2380 = vunpack.c.l.b16 %v2100
        %v2381 = vunpack.c.l.b16 %v2101
        %v2382 = vunpack.c.l.b16 %v2102
        %v2383 = vunpack.c.l.b16 %v2103
        %v2384 = vunpack.c.l.b16 %v2104
        %v2385 = vunpack.c.l.b16 %v2105
        %v2386 = vunpack.c.l.b16 %v2106
        %v2387 = vunpack.c.l.b16 %v2107
        %v2388 = vunpack.c.l.b16 %v2108
        %v2389 = vunpack.c.l.b16 %v2109
        %v2390 = vunpack.c.l.b16 %v2110
        %v2391 = vunpack.c.l.b16 %v2111
        %v2392 = vunpack.c.l.b16 %v2112
        %v2393 = vunpack.c.l.b16 %v2113
        %v2394 = vunpack.c.l.b16 %v2114
        %v2395 = vunpack.c.l.b16 %v2115
        %v2396 = vunpack.c.l.b16 %v2116
        %v2397 = vunpack.c.l.b16 %v2117
        %v2398 = vunpack.c.l.b16 %v2118
        %v2399 = vunpack.c.l.b16 %v2119
        %v2400 = vunpack.c.l.b16 %v2120
        %v2401 = vunpack.c.l.b16 %v2121
        %v2402 = vunpack.c.l.b16 %v2122
        %v2403 = vunpack.c.l.b16 %v2123
        %v2404 = vunpack.c.l.b16 %v2124
        %v2405 = vunpack.c.l.b16 %v2125
        %v2406 = vunpack.c.l.b16 %v2126
        %v2407 = vunpack.c.l.b16 %v2127
        %v2408 = vunpack.c.l.b16 %v2128
        %v2409 = vunpack.c.l.b16 %v2129
        %v2410 = vunpack.c.l.b16 %v2130
        %v2411 = vunpack.c.l.b16 %v2131
        %v2412 = vunpack.c.l.b16 %v2132
        %v2413 = vunpack.c.l.b16 %v2133
        %v2414 = vunpack.c.l.b16 %v2134
        %v2415 = vunpack.c.l.b16 %v2135
        %v2416 = vunpack.c.l.b16 %v2136
        %v2417 = vunpack.c.l.b16 %v2137
        %v2418 = vunpack.c.l.b16 %v2138
        %v2419 = vunpack.c.l.b16 %v2139
        %v2420 = vunpack.c.l.b16 %v2140
        %v2421 = vunpack.c.l.b16 %v2141
        %v2422 = vunpack.c.l.b16 %v2142
        %v2423 = vunpack.c.l.b16 %v2143
        %v2424 = vunpack.c.l.b16 %v2144
        %v2425 = vunpack.c.l.b16 %v2145
        %v2426 = vunpack.c.l.b16 %v2146
        %v2427 = vunpack.c.l.b16 %v2147
        %v2428 = vunpack.c.l.b16 %v2148
        %v2429 = vunpack.c.l.b16 %v2149
        %v2430 = vunpack.c.l.b16 %v2150
        %v2431 = vunpack.c.l.b16 %v2151
        %v2432 = vunpack.c.l.b16 %v2152
        %v2433 = vunpack.c.l.b16 %v2153
        %v2434 = vunpack.c.l.b16 %v2154
        %v2435 = vunpack.c.l.b16 %v2155
        %v2436 = vunpack.c.l.b16 %v2156
        %v2437 = vunpack.c.l.b16 %v2157
        %v2438 = vunpack.c.l.b16 %v2158
        %v2439 = vunpack.c.l.b16 %v2159
        %v2440 = vunpack.c.l.b16 %v2160
        %v2441 = vunpack.c.l.b16 %v2161
        %v2442 = vunpack.c.l.b16 %v2162
        %v2443 = vunpack.c.l.b16 %v2163
        %v2444 = vunpack.c.l.b16 %v2164
        %v2445 = vunpack.c.l.b16 %v2165
        %v2446 = vunpack.c.l.b16 %v2166
        %v2447 = vpack.c.b16 %v2320, %v2319
        %v2448 = vpack.c.b16 %v2322, %v2321
        %v2449 = vpack.c.b16 %v2324, %v2323
        %v2450 = vpack.c.b16 %v2326, %v2325
        %v2451 = vpack.c.b16 %v2328, %v2327
        %v2452 = vpack.c.b16 %v2330, %v2329
        %v2453 = vpack.c.b16 %v2332, %v2331
        %v2454 = vpack.c.b16 %v2334, %v2333
        %v2455 = vpack.c.b16 %v2336, %v2335
        %v2456 = vpack.c.b16 %v2338, %v2337
        %v2457 = vpack.c.b16 %v2340, %v2339
        %v2458 = vpack.c.b16 %v2342, %v2341
        %v2459 = vpack.c.b16 %v2344, %v2343
        %v2460 = vpack.c.b16 %v2346, %v2345
        %v2461 = vpack.c.b16 %v2348, %v2347
        %v2462 = vpack.c.b16 %v2350, %v2349
        %v2463 = vpack.c.b16 %v2352, %v2351
        %v2464 = vpack.c.b16 %v2354, %v2353
        %v2465 = vpack.c.b16 %v2356, %v2355
        %v2466 = vpack.c.b16 %v2358, %v2357
        %v2467 = vpack.c.b16 %v2360, %v2359
        %v2468 = vpack.c.b16 %v2362, %v2361
        %v2469 = vpack.c.b16 %v2364, %v2363
        %v2470 = vpack.c.b16 %v2366, %v2365
        %v2471 = vpack.c.b16 %v2368, %v2367
        %v2472 = vpack.c.b16 %v2370, %v2369
        %v2473 = vpack.c.b16 %v2372, %v2371
        %v2474 = vpack.c.b16 %v2374, %v2373
        %v2475 = vpack.c.b16 %v2376, %v2375
        %v2476 = vpack.c.b16 %v2378, %v2377
        %v2477 = vpack.c.b16 %v2380, %v2379
        %v2478 = vpack.c.b16 %v2382, %v2381
        %v2479 = vpack.c.b16 %v2384, %v2383
        %v2480 = vpack.c.b16 %v2386, %v2385
        %v2481 = vpack.c.b16 %v2388, %v2387
        %v2482 = vpack.c.b16 %v2390, %v2389
        %v2483 = vpack.c.b16 %v2392, %v2391
        %v2484 = vpack.c.b16 %v2394, %v2393
        %v2485 = vpack.c.b16 %v2396, %v2395
        %v2486 = vpack.c.b16 %v2398, %v2397
        %v2487 = vpack.c.b16 %v2400, %v2399
        %v2488 = vpack.c.b16 %v2402, %v2401
        %v2489 = vpack.c.b16 %v2404, %v2403
        %v2490 = vpack.c.b16 %v2406, %v2405
        %v2491 = vpack.c.b16 %v2408, %v2407
        %v2492 = vpack.c.b16 %v2410, %v2409
        %v2493 = vpack.c.b16 %v2412, %v2411
        %v2494 = vpack.c.b16 %v2414, %v2413
        %v2495 = vpack.c.b16 %v2416, %v2415
        %v2496 = vpack.c.b16 %v2418, %v2417
        %v2497 = vpack.c.b16 %v2420, %v2419
        %v2498 = vpack.c.b16 %v2422, %v2421
        %v2499 = vpack.c.b16 %v2424, %v2423
        %v2500 = vpack.c.b16 %v2426, %v2425
        %v2501 = vpack.c.b16 %v2428, %v2427
        %v2502 = vpack.c.b16 %v2430, %v2429
        %v2503 = vpack.c.b16 %v2432, %v2431
        %v2504 = vpack.c.b16 %v2434, %v2433
        %v2505 = vpack.c.b16 %v2436, %v2435
        %v2506 = vpack.c.b16 %v2438, %v2437
        %v2507 = vpack.c.b16 %v2440, %v2439
        %v2508 = vpack.c.b16 %v2442, %v2441
        %v2509 = vpack.c.b16 %v2444, %v2443
        %v2510 = vpack.c.b16 %v2446, %v2445
        %2575 = vmatpush.bf16.msra.mxu0 %v2454
        %2576 = vmatpush.bf16.msra.mxu0 %v2453
        %2577 = vmatpush.bf16.msra.mxu0 %v2452
        %2578 = vmatpush.bf16.msra.mxu0 %v2451
        %2579 = vmatpush.bf16.msra.mxu0 %v2450
        %2580 = vmatpush.bf16.msra.mxu0 %v2449
        %2581 = vmatpush.bf16.msra.mxu0 %v2448
        %2582 = vmatpush.bf16.msra.mxu0 %v2447
        %2583 = vmatmul.bf16.gmra.mxu0 %v2175
        %v2584 = vpop.f32.mrf.mxu0
        %v2585 = vadd.f32 0.0, %v2584
        %v2586 = vpop.f32.mrf.mxu0
        %2587 = vdwg.mxu0
        %2588 = vmatpush.bf16.msra.mxu0 %v2462
        %2589 = vmatpush.bf16.msra.mxu0 %v2461
        %2590 = vmatpush.bf16.msra.mxu0 %v2460
        %2591 = vmatpush.bf16.msra.mxu0 %v2459
        %2592 = vmatpush.bf16.msra.mxu0 %v2458
        %2593 = vmatpush.bf16.msra.mxu0 %v2457
        %2594 = vmatpush.bf16.msra.mxu0 %v2456
        %2595 = vmatpush.bf16.msra.mxu0 %v2455
        %2596 = vmatmul.bf16.gmra.mxu0 %v2176
        %v2597 = vpop.f32.mrf.mxu0
        %v2598 = vadd.f32 %v2585, %v2597
        %v2599 = vpop.f32.mrf.mxu0
        %2600 = vdwg.mxu0
        %2601 = vmatpush.bf16.msra.mxu0 %v2470
        %2602 = vmatpush.bf16.msra.mxu0 %v2469
        %2603 = vmatpush.bf16.msra.mxu0 %v2468
        %2604 = vmatpush.bf16.msra.mxu0 %v2467
        %2605 = vmatpush.bf16.msra.mxu0 %v2466
        %2606 = vmatpush.bf16.msra.mxu0 %v2465
        %2607 = vmatpush.bf16.msra.mxu0 %v2464
        %2608 = vmatpush.bf16.msra.mxu0 %v2463
        %2609 = vmatmul.bf16.gmra.mxu0 %v2177
        %v2610 = vpop.f32.mrf.mxu0
        %v2611 = vadd.f32 %v2598, %v2610
        %v2612 = vpop.f32.mrf.mxu0
        %2613 = vdwg.mxu0
        %2614 = vmatpush.bf16.msra.mxu0 %v2478
        %2615 = vmatpush.bf16.msra.mxu0 %v2477
        %2616 = vmatpush.bf16.msra.mxu0 %v2476
        %2617 = vmatpush.bf16.msra.mxu0 %v2475
        %2618 = vmatpush.bf16.msra.mxu0 %v2474
        %2619 = vmatpush.bf16.msra.mxu0 %v2473
        %2620 = vmatpush.bf16.msra.mxu0 %v2472
        %2621 = vmatpush.bf16.msra.mxu0 %v2471
        %2622 = vmatmul.bf16.gmra.mxu0 %v2178
        %v2623 = vpop.f32.mrf.mxu0
        %v2624 = vadd.f32 %v2611, %v2623
        %v2625 = vpop.f32.mrf.mxu0
        %2626 = vdwg.mxu0
        %2627 = vmatpush.bf16.msra.mxu0 %v2486
        %2628 = vmatpush.bf16.msra.mxu0 %v2485
        %2629 = vmatpush.bf16.msra.mxu0 %v2484
        %2630 = vmatpush.bf16.msra.mxu0 %v2483
        %2631 = vmatpush.bf16.msra.mxu0 %v2482
        %2632 = vmatpush.bf16.msra.mxu0 %v2481
        %2633 = vmatpush.bf16.msra.mxu0 %v2480
        %2634 = vmatpush.bf16.msra.mxu0 %v2479
        %2635 = vmatmul.bf16.gmra.mxu0 %v2179
        %v2636 = vpop.f32.mrf.mxu0
        %v2637 = vadd.f32 %v2624, %v2636
        %v2638 = vpop.f32.mrf.mxu0
        %2639 = vdwg.mxu0
        %2640 = vmatpush.bf16.msra.mxu0 %v2494
        %2641 = vmatpush.bf16.msra.mxu0 %v2493
        %2642 = vmatpush.bf16.msra.mxu0 %v2492
        %2643 = vmatpush.bf16.msra.mxu0 %v2491
        %2644 = vmatpush.bf16.msra.mxu0 %v2490
        %2645 = vmatpush.bf16.msra.mxu0 %v2489
        %2646 = vmatpush.bf16.msra.mxu0 %v2488
        %2647 = vmatpush.bf16.msra.mxu0 %v2487
        %2648 = vmatmul.bf16.gmra.mxu0 %v2180
        %v2649 = vpop.f32.mrf.mxu0
        %v2650 = vadd.f32 %v2637, %v2649
        %v2651 = vpop.f32.mrf.mxu0
        %2652 = vdwg.mxu0
        %2653 = vmatpush.bf16.msra.mxu0 %v2502
        %2654 = vmatpush.bf16.msra.mxu0 %v2501
        %2655 = vmatpush.bf16.msra.mxu0 %v2500
        %2656 = vmatpush.bf16.msra.mxu0 %v2499
        %2657 = vmatpush.bf16.msra.mxu0 %v2498
        %2658 = vmatpush.bf16.msra.mxu0 %v2497
        %2659 = vmatpush.bf16.msra.mxu0 %v2496
        %2660 = vmatpush.bf16.msra.mxu0 %v2495
        %2661 = vmatmul.bf16.gmra.mxu0 %v2181
        %v2662 = vpop.f32.mrf.mxu0
        %v2663 = vadd.f32 %v2650, %v2662
        %v2664 = vpop.f32.mrf.mxu0
        %2665 = vdwg.mxu0
        %2666 = vmatpush.bf16.msra.mxu0 %v2510
        %2667 = vmatpush.bf16.msra.mxu0 %v2509
        %2668 = vmatpush.bf16.msra.mxu0 %v2508
        %2669 = vmatpush.bf16.msra.mxu0 %v2507
        %2670 = vmatpush.bf16.msra.mxu0 %v2506
        %2671 = vmatpush.bf16.msra.mxu0 %v2505
        %2672 = vmatpush.bf16.msra.mxu0 %v2504
        %2673 = vmatpush.bf16.msra.mxu0 %v2503
        %2674 = vmatmul.bf16.gmra.mxu0 %v2182
        %v2675 = vpop.f32.mrf.mxu0
        %v2676 = vadd.f32 %v2663, %v2675
        %v2677 = vpop.f32.mrf.mxu0
        %2678 = vdwg.mxu0
        %v2679 = vadd.f32 %v2035, %v2676
        %s2680 = scalar_lea.vmem %s3, 1536
        %v2681 = vld [vmem:[%s2680] sm:$0xf]
        %v2682 = vld [vmem:[%s2680 + $0x4] sm:$0xf]
        %v2683 = vld [vmem:[%s2680 + $0x8] sm:$0xf]
        %v2684 = vld [vmem:[%s2680 + $0xc] sm:$0xf]
        %v2685 = vld [vmem:[%s2680 + $0x10] sm:$0xf]
        %v2686 = vld [vmem:[%s2680 + $0x14] sm:$0xf]
        %v2687 = vld [vmem:[%s2680 + $0x18] sm:$0xf]
        %v2688 = vld [vmem:[%s2680 + $0x1c] sm:$0xf]
        %v2689 = vld [vmem:[%s2680 + $0x20] sm:$0xf]
        %v2690 = vld [vmem:[%s2680 + $0x24] sm:$0xf]
        %v2691 = vld [vmem:[%s2680 + $0x28] sm:$0xf]
        %v2692 = vld [vmem:[%s2680 + $0x2c] sm:$0xf]
        %v2693 = vld [vmem:[%s2680 + $0x30] sm:$0xf]
        %v2694 = vld [vmem:[%s2680 + $0x34] sm:$0xf]
        %v2695 = vld [vmem:[%s2680 + $0x38] sm:$0xf]
        %v2696 = vld [vmem:[%s2680 + $0x3c] sm:$0xf]
        %v2697 = vld [vmem:[%s2680 + $0x40] sm:$0xf]
        %v2698 = vld [vmem:[%s2680 + $0x44] sm:$0xf]
        %v2699 = vld [vmem:[%s2680 + $0x48] sm:$0xf]
        %v2700 = vld [vmem:[%s2680 + $0x4c] sm:$0xf]
        %v2701 = vld [vmem:[%s2680 + $0x50] sm:$0xf]
        %v2702 = vld [vmem:[%s2680 + $0x54] sm:$0xf]
        %v2703 = vld [vmem:[%s2680 + $0x58] sm:$0xf]
        %v2704 = vld [vmem:[%s2680 + $0x5c] sm:$0xf]
        %v2705 = vld [vmem:[%s2680 + $0x60] sm:$0xf]
        %v2706 = vld [vmem:[%s2680 + $0x64] sm:$0xf]
        %v2707 = vld [vmem:[%s2680 + $0x68] sm:$0xf]
        %v2708 = vld [vmem:[%s2680 + $0x6c] sm:$0xf]
        %v2709 = vld [vmem:[%s2680 + $0x70] sm:$0xf]
        %v2710 = vld [vmem:[%s2680 + $0x74] sm:$0xf]
        %v2711 = vld [vmem:[%s2680 + $0x78] sm:$0xf]
        %v2712 = vld [vmem:[%s2680 + $0x7c] sm:$0xf]
        %v2713 = vld [vmem:[%s2680 + $0x80] sm:$0xf]
        %v2714 = vld [vmem:[%s2680 + $0x84] sm:$0xf]
        %v2715 = vld [vmem:[%s2680 + $0x88] sm:$0xf]
        %v2716 = vld [vmem:[%s2680 + $0x8c] sm:$0xf]
        %v2717 = vld [vmem:[%s2680 + $0x90] sm:$0xf]
        %v2718 = vld [vmem:[%s2680 + $0x94] sm:$0xf]
        %v2719 = vld [vmem:[%s2680 + $0x98] sm:$0xf]
        %v2720 = vld [vmem:[%s2680 + $0x9c] sm:$0xf]
        %v2721 = vld [vmem:[%s2680 + $0xa0] sm:$0xf]
        %v2722 = vld [vmem:[%s2680 + $0xa4] sm:$0xf]
        %v2723 = vld [vmem:[%s2680 + $0xa8] sm:$0xf]
        %v2724 = vld [vmem:[%s2680 + $0xac] sm:$0xf]
        %v2725 = vld [vmem:[%s2680 + $0xb0] sm:$0xf]
        %v2726 = vld [vmem:[%s2680 + $0xb4] sm:$0xf]
        %v2727 = vld [vmem:[%s2680 + $0xb8] sm:$0xf]
        %v2728 = vld [vmem:[%s2680 + $0xbc] sm:$0xf]
        %v2729 = vld [vmem:[%s2680 + $0xc0] sm:$0xf]
        %v2730 = vld [vmem:[%s2680 + $0xc4] sm:$0xf]
        %v2731 = vld [vmem:[%s2680 + $0xc8] sm:$0xf]
        %v2732 = vld [vmem:[%s2680 + $0xcc] sm:$0xf]
        %v2733 = vld [vmem:[%s2680 + $0xd0] sm:$0xf]
        %v2734 = vld [vmem:[%s2680 + $0xd4] sm:$0xf]
        %v2735 = vld [vmem:[%s2680 + $0xd8] sm:$0xf]
        %v2736 = vld [vmem:[%s2680 + $0xdc] sm:$0xf]
        %v2737 = vld [vmem:[%s2680 + $0xe0] sm:$0xf]
        %v2738 = vld [vmem:[%s2680 + $0xe4] sm:$0xf]
        %v2739 = vld [vmem:[%s2680 + $0xe8] sm:$0xf]
        %v2740 = vld [vmem:[%s2680 + $0xec] sm:$0xf]
        %v2741 = vld [vmem:[%s2680 + $0xf0] sm:$0xf]
        %v2742 = vld [vmem:[%s2680 + $0xf4] sm:$0xf]
        %v2743 = vld [vmem:[%s2680 + $0xf8] sm:$0xf]
        %v2744 = vld [vmem:[%s2680 + $0xfc] sm:$0xf]
        %v2745 = vld [vmem:[%s2680 + $0x100] sm:$0xf]
        %v2746 = vld [vmem:[%s2680 + $0x104] sm:$0xf]
        %v2747 = vld [vmem:[%s2680 + $0x108] sm:$0xf]
        %v2748 = vld [vmem:[%s2680 + $0x10c] sm:$0xf]
        %v2749 = vld [vmem:[%s2680 + $0x110] sm:$0xf]
        %v2750 = vld [vmem:[%s2680 + $0x114] sm:$0xf]
        %v2751 = vld [vmem:[%s2680 + $0x118] sm:$0xf]
        %v2752 = vld [vmem:[%s2680 + $0x11c] sm:$0xf]
        %v2753 = vld [vmem:[%s2680 + $0x120] sm:$0xf]
        %v2754 = vld [vmem:[%s2680 + $0x124] sm:$0xf]
        %v2755 = vld [vmem:[%s2680 + $0x128] sm:$0xf]
        %v2756 = vld [vmem:[%s2680 + $0x12c] sm:$0xf]
        %v2757 = vld [vmem:[%s2680 + $0x130] sm:$0xf]
        %v2758 = vld [vmem:[%s2680 + $0x134] sm:$0xf]
        %v2759 = vld [vmem:[%s2680 + $0x138] sm:$0xf]
        %v2760 = vld [vmem:[%s2680 + $0x13c] sm:$0xf]
        %v2761 = vld [vmem:[%s2680 + $0x140] sm:$0xf]
        %v2762 = vld [vmem:[%s2680 + $0x144] sm:$0xf]
        %v2763 = vld [vmem:[%s2680 + $0x148] sm:$0xf]
        %v2764 = vld [vmem:[%s2680 + $0x14c] sm:$0xf]
        %v2765 = vld [vmem:[%s2680 + $0x150] sm:$0xf]
        %v2766 = vld [vmem:[%s2680 + $0x154] sm:$0xf]
        %v2767 = vld [vmem:[%s2680 + $0x158] sm:$0xf]
        %v2768 = vld [vmem:[%s2680 + $0x15c] sm:$0xf]
        %v2769 = vld [vmem:[%s2680 + $0x160] sm:$0xf]
        %v2770 = vld [vmem:[%s2680 + $0x164] sm:$0xf]
        %v2771 = vld [vmem:[%s2680 + $0x168] sm:$0xf]
        %v2772 = vld [vmem:[%s2680 + $0x16c] sm:$0xf]
        %v2773 = vld [vmem:[%s2680 + $0x170] sm:$0xf]
        %v2774 = vld [vmem:[%s2680 + $0x174] sm:$0xf]
        %v2775 = vld [vmem:[%s2680 + $0x178] sm:$0xf]
        %v2776 = vld [vmem:[%s2680 + $0x17c] sm:$0xf]
        %v2777 = vld [vmem:[%s2680 + $0x180] sm:$0xf]
        %v2778 = vld [vmem:[%s2680 + $0x184] sm:$0xf]
        %v2779 = vld [vmem:[%s2680 + $0x188] sm:$0xf]
        %v2780 = vld [vmem:[%s2680 + $0x18c] sm:$0xf]
        %v2781 = vld [vmem:[%s2680 + $0x190] sm:$0xf]
        %v2782 = vld [vmem:[%s2680 + $0x194] sm:$0xf]
        %v2783 = vld [vmem:[%s2680 + $0x198] sm:$0xf]
        %v2784 = vld [vmem:[%s2680 + $0x19c] sm:$0xf]
        %v2785 = vld [vmem:[%s2680 + $0x1a0] sm:$0xf]
        %v2786 = vld [vmem:[%s2680 + $0x1a4] sm:$0xf]
        %v2787 = vld [vmem:[%s2680 + $0x1a8] sm:$0xf]
        %v2788 = vld [vmem:[%s2680 + $0x1ac] sm:$0xf]
        %v2789 = vld [vmem:[%s2680 + $0x1b0] sm:$0xf]
        %v2790 = vld [vmem:[%s2680 + $0x1b4] sm:$0xf]
        %v2791 = vld [vmem:[%s2680 + $0x1b8] sm:$0xf]
        %v2792 = vld [vmem:[%s2680 + $0x1bc] sm:$0xf]
        %v2793 = vld [vmem:[%s2680 + $0x1c0] sm:$0xf]
        %v2794 = vld [vmem:[%s2680 + $0x1c4] sm:$0xf]
        %v2795 = vld [vmem:[%s2680 + $0x1c8] sm:$0xf]
        %v2796 = vld [vmem:[%s2680 + $0x1cc] sm:$0xf]
        %v2797 = vld [vmem:[%s2680 + $0x1d0] sm:$0xf]
        %v2798 = vld [vmem:[%s2680 + $0x1d4] sm:$0xf]
        %v2799 = vld [vmem:[%s2680 + $0x1d8] sm:$0xf]
        %v2800 = vld [vmem:[%s2680 + $0x1dc] sm:$0xf]
        %v2801 = vld [vmem:[%s2680 + $0x1e0] sm:$0xf]
        %v2802 = vld [vmem:[%s2680 + $0x1e4] sm:$0xf]
        %v2803 = vld [vmem:[%s2680 + $0x1e8] sm:$0xf]
        %v2804 = vld [vmem:[%s2680 + $0x1ec] sm:$0xf]
        %v2805 = vld [vmem:[%s2680 + $0x1f0] sm:$0xf]
        %v2806 = vld [vmem:[%s2680 + $0x1f4] sm:$0xf]
        %v2807 = vld [vmem:[%s2680 + $0x1f8] sm:$0xf]
        %v2808 = vld [vmem:[%s2680 + $0x1fc] sm:$0xf]
        %v2809 = vrot.slane %v1031, 1
        %v2810 = vrot.slane %v1034, 1
        %v2811 = vrot.slane %v1037, 1
        %v2812 = vrot.slane %v1040, 1
        %v2813 = vrot.slane %v1043, 1
        %v2814 = vrot.slane %v1046, 1
        %v2815 = vrot.slane %v1049, 1
        %v2816 = vrot.slane %v1052, 1
        %v2953 = vunpack.c.l.b16 %v2681
        %v2954 = vunpack.c.l.b16 %v2682
        %v2955 = vunpack.c.l.b16 %v2683
        %v2956 = vunpack.c.l.b16 %v2684
        %v2957 = vunpack.c.l.b16 %v2685
        %v2958 = vunpack.c.l.b16 %v2686
        %v2959 = vunpack.c.l.b16 %v2687
        %v2960 = vunpack.c.l.b16 %v2688
        %v2961 = vunpack.c.l.b16 %v2689
        %v2962 = vunpack.c.l.b16 %v2690
        %v2963 = vunpack.c.l.b16 %v2691
        %v2964 = vunpack.c.l.b16 %v2692
        %v2965 = vunpack.c.l.b16 %v2693
        %v2966 = vunpack.c.l.b16 %v2694
        %v2967 = vunpack.c.l.b16 %v2695
        %v2968 = vunpack.c.l.b16 %v2696
        %v2969 = vunpack.c.l.b16 %v2697
        %v2970 = vunpack.c.l.b16 %v2698
        %v2971 = vunpack.c.l.b16 %v2699
        %v2972 = vunpack.c.l.b16 %v2700
        %v2973 = vunpack.c.l.b16 %v2701
        %v2974 = vunpack.c.l.b16 %v2702
        %v2975 = vunpack.c.l.b16 %v2703
        %v2976 = vunpack.c.l.b16 %v2704
        %v2977 = vunpack.c.l.b16 %v2705
        %v2978 = vunpack.c.l.b16 %v2706
        %v2979 = vunpack.c.l.b16 %v2707
        %v2980 = vunpack.c.l.b16 %v2708
        %v2981 = vunpack.c.l.b16 %v2709
        %v2982 = vunpack.c.l.b16 %v2710
        %v2983 = vunpack.c.l.b16 %v2711
        %v2984 = vunpack.c.l.b16 %v2712
        %v2985 = vunpack.c.l.b16 %v2713
        %v2986 = vunpack.c.l.b16 %v2714
        %v2987 = vunpack.c.l.b16 %v2715
        %v2988 = vunpack.c.l.b16 %v2716
        %v2989 = vunpack.c.l.b16 %v2717
        %v2990 = vunpack.c.l.b16 %v2718
        %v2991 = vunpack.c.l.b16 %v2719
        %v2992 = vunpack.c.l.b16 %v2720
        %v2993 = vunpack.c.l.b16 %v2721
        %v2994 = vunpack.c.l.b16 %v2722
        %v2995 = vunpack.c.l.b16 %v2723
        %v2996 = vunpack.c.l.b16 %v2724
        %v2997 = vunpack.c.l.b16 %v2725
        %v2998 = vunpack.c.l.b16 %v2726
        %v2999 = vunpack.c.l.b16 %v2727
        %v3000 = vunpack.c.l.b16 %v2728
        %v3001 = vunpack.c.l.b16 %v2729
        %v3002 = vunpack.c.l.b16 %v2730
        %v3003 = vunpack.c.l.b16 %v2731
        %v3004 = vunpack.c.l.b16 %v2732
        %v3005 = vunpack.c.l.b16 %v2733
        %v3006 = vunpack.c.l.b16 %v2734
        %v3007 = vunpack.c.l.b16 %v2735
        %v3008 = vunpack.c.l.b16 %v2736
        %v3009 = vunpack.c.l.b16 %v2737
        %v3010 = vunpack.c.l.b16 %v2738
        %v3011 = vunpack.c.l.b16 %v2739
        %v3012 = vunpack.c.l.b16 %v2740
        %v3013 = vunpack.c.l.b16 %v2741
        %v3014 = vunpack.c.l.b16 %v2742
        %v3015 = vunpack.c.l.b16 %v2743
        %v3016 = vunpack.c.l.b16 %v2744
        %v3017 = vunpack.c.l.b16 %v2745
        %v3018 = vunpack.c.l.b16 %v2746
        %v3019 = vunpack.c.l.b16 %v2747
        %v3020 = vunpack.c.l.b16 %v2748
        %v3021 = vunpack.c.l.b16 %v2749
        %v3022 = vunpack.c.l.b16 %v2750
        %v3023 = vunpack.c.l.b16 %v2751
        %v3024 = vunpack.c.l.b16 %v2752
        %v3025 = vunpack.c.l.b16 %v2753
        %v3026 = vunpack.c.l.b16 %v2754
        %v3027 = vunpack.c.l.b16 %v2755
        %v3028 = vunpack.c.l.b16 %v2756
        %v3029 = vunpack.c.l.b16 %v2757
        %v3030 = vunpack.c.l.b16 %v2758
        %v3031 = vunpack.c.l.b16 %v2759
        %v3032 = vunpack.c.l.b16 %v2760
        %v3033 = vunpack.c.l.b16 %v2761
        %v3034 = vunpack.c.l.b16 %v2762
        %v3035 = vunpack.c.l.b16 %v2763
        %v3036 = vunpack.c.l.b16 %v2764
        %v3037 = vunpack.c.l.b16 %v2765
        %v3038 = vunpack.c.l.b16 %v2766
        %v3039 = vunpack.c.l.b16 %v2767
        %v3040 = vunpack.c.l.b16 %v2768
        %v3041 = vunpack.c.l.b16 %v2769
        %v3042 = vunpack.c.l.b16 %v2770
        %v3043 = vunpack.c.l.b16 %v2771
        %v3044 = vunpack.c.l.b16 %v2772
        %v3045 = vunpack.c.l.b16 %v2773
        %v3046 = vunpack.c.l.b16 %v2774
        %v3047 = vunpack.c.l.b16 %v2775
        %v3048 = vunpack.c.l.b16 %v2776
        %v3049 = vunpack.c.l.b16 %v2777
        %v3050 = vunpack.c.l.b16 %v2778
        %v3051 = vunpack.c.l.b16 %v2779
        %v3052 = vunpack.c.l.b16 %v2780
        %v3053 = vunpack.c.l.b16 %v2781
        %v3054 = vunpack.c.l.b16 %v2782
        %v3055 = vunpack.c.l.b16 %v2783
        %v3056 = vunpack.c.l.b16 %v2784
        %v3057 = vunpack.c.l.b16 %v2785
        %v3058 = vunpack.c.l.b16 %v2786
        %v3059 = vunpack.c.l.b16 %v2787
        %v3060 = vunpack.c.l.b16 %v2788
        %v3061 = vunpack.c.l.b16 %v2789
        %v3062 = vunpack.c.l.b16 %v2790
        %v3063 = vunpack.c.l.b16 %v2791
        %v3064 = vunpack.c.l.b16 %v2792
        %v3065 = vunpack.c.l.b16 %v2793
        %v3066 = vunpack.c.l.b16 %v2794
        %v3067 = vunpack.c.l.b16 %v2795
        %v3068 = vunpack.c.l.b16 %v2796
        %v3069 = vunpack.c.l.b16 %v2797
        %v3070 = vunpack.c.l.b16 %v2798
        %v3071 = vunpack.c.l.b16 %v2799
        %v3072 = vunpack.c.l.b16 %v2800
        %v3073 = vunpack.c.l.b16 %v2801
        %v3074 = vunpack.c.l.b16 %v2802
        %v3075 = vunpack.c.l.b16 %v2803
        %v3076 = vunpack.c.l.b16 %v2804
        %v3077 = vunpack.c.l.b16 %v2805
        %v3078 = vunpack.c.l.b16 %v2806
        %v3079 = vunpack.c.l.b16 %v2807
        %v3080 = vunpack.c.l.b16 %v2808
        %v3081 = vpack.c.b16 %v2954, %v2953
        %v3082 = vpack.c.b16 %v2956, %v2955
        %v3083 = vpack.c.b16 %v2958, %v2957
        %v3084 = vpack.c.b16 %v2960, %v2959
        %v3085 = vpack.c.b16 %v2962, %v2961
        %v3086 = vpack.c.b16 %v2964, %v2963
        %v3087 = vpack.c.b16 %v2966, %v2965
        %v3088 = vpack.c.b16 %v2968, %v2967
        %v3089 = vpack.c.b16 %v2970, %v2969
        %v3090 = vpack.c.b16 %v2972, %v2971
        %v3091 = vpack.c.b16 %v2974, %v2973
        %v3092 = vpack.c.b16 %v2976, %v2975
        %v3093 = vpack.c.b16 %v2978, %v2977
        %v3094 = vpack.c.b16 %v2980, %v2979
        %v3095 = vpack.c.b16 %v2982, %v2981
        %v3096 = vpack.c.b16 %v2984, %v2983
        %v3097 = vpack.c.b16 %v2986, %v2985
        %v3098 = vpack.c.b16 %v2988, %v2987
        %v3099 = vpack.c.b16 %v2990, %v2989
        %v3100 = vpack.c.b16 %v2992, %v2991
        %v3101 = vpack.c.b16 %v2994, %v2993
        %v3102 = vpack.c.b16 %v2996, %v2995
        %v3103 = vpack.c.b16 %v2998, %v2997
        %v3104 = vpack.c.b16 %v3000, %v2999
        %v3105 = vpack.c.b16 %v3002, %v3001
        %v3106 = vpack.c.b16 %v3004, %v3003
        %v3107 = vpack.c.b16 %v3006, %v3005
        %v3108 = vpack.c.b16 %v3008, %v3007
        %v3109 = vpack.c.b16 %v3010, %v3009
        %v3110 = vpack.c.b16 %v3012, %v3011
        %v3111 = vpack.c.b16 %v3014, %v3013
        %v3112 = vpack.c.b16 %v3016, %v3015
        %v3113 = vpack.c.b16 %v3018, %v3017
        %v3114 = vpack.c.b16 %v3020, %v3019
        %v3115 = vpack.c.b16 %v3022, %v3021
        %v3116 = vpack.c.b16 %v3024, %v3023
        %v3117 = vpack.c.b16 %v3026, %v3025
        %v3118 = vpack.c.b16 %v3028, %v3027
        %v3119 = vpack.c.b16 %v3030, %v3029
        %v3120 = vpack.c.b16 %v3032, %v3031
        %v3121 = vpack.c.b16 %v3034, %v3033
        %v3122 = vpack.c.b16 %v3036, %v3035
        %v3123 = vpack.c.b16 %v3038, %v3037
        %v3124 = vpack.c.b16 %v3040, %v3039
        %v3125 = vpack.c.b16 %v3042, %v3041
        %v3126 = vpack.c.b16 %v3044, %v3043
        %v3127 = vpack.c.b16 %v3046, %v3045
        %v3128 = vpack.c.b16 %v3048, %v3047
        %v3129 = vpack.c.b16 %v3050, %v3049
        %v3130 = vpack.c.b16 %v3052, %v3051
        %v3131 = vpack.c.b16 %v3054, %v3053
        %v3132 = vpack.c.b16 %v3056, %v3055
        %v3133 = vpack.c.b16 %v3058, %v3057
        %v3134 = vpack.c.b16 %v3060, %v3059
        %v3135 = vpack.c.b16 %v3062, %v3061
        %v3136 = vpack.c.b16 %v3064, %v3063
        %v3137 = vpack.c.b16 %v3066, %v3065
        %v3138 = vpack.c.b16 %v3068, %v3067
        %v3139 = vpack.c.b16 %v3070, %v3069
        %v3140 = vpack.c.b16 %v3072, %v3071
        %v3141 = vpack.c.b16 %v3074, %v3073
        %v3142 = vpack.c.b16 %v3076, %v3075
        %v3143 = vpack.c.b16 %v3078, %v3077
        %v3144 = vpack.c.b16 %v3080, %v3079
        %3209 = vmatpush.bf16.msra.mxu0 %v3088
        %3210 = vmatpush.bf16.msra.mxu0 %v3087
        %3211 = vmatpush.bf16.msra.mxu0 %v3086
        %3212 = vmatpush.bf16.msra.mxu0 %v3085
        %3213 = vmatpush.bf16.msra.mxu0 %v3084
        %3214 = vmatpush.bf16.msra.mxu0 %v3083
        %3215 = vmatpush.bf16.msra.mxu0 %v3082
        %3216 = vmatpush.bf16.msra.mxu0 %v3081
        %3217 = vmatmul.bf16.gmra.mxu0 %v2809
        %v3218 = vpop.f32.mrf.mxu0
        %v3219 = vadd.f32 0.0, %v3218
        %v3220 = vpop.f32.mrf.mxu0
        %3221 = vdwg.mxu0
        %3222 = vmatpush.bf16.msra.mxu0 %v3096
        %3223 = vmatpush.bf16.msra.mxu0 %v3095
        %3224 = vmatpush.bf16.msra.mxu0 %v3094
        %3225 = vmatpush.bf16.msra.mxu0 %v3093
        %3226 = vmatpush.bf16.msra.mxu0 %v3092
        %3227 = vmatpush.bf16.msra.mxu0 %v3091
        %3228 = vmatpush.bf16.msra.mxu0 %v3090
        %3229 = vmatpush.bf16.msra.mxu0 %v3089
        %3230 = vmatmul.bf16.gmra.mxu0 %v2810
        %v3231 = vpop.f32.mrf.mxu0
        %v3232 = vadd.f32 %v3219, %v3231
        %v3233 = vpop.f32.mrf.mxu0
        %3234 = vdwg.mxu0
        %3235 = vmatpush.bf16.msra.mxu0 %v3104
        %3236 = vmatpush.bf16.msra.mxu0 %v3103
        %3237 = vmatpush.bf16.msra.mxu0 %v3102
        %3238 = vmatpush.bf16.msra.mxu0 %v3101
        %3239 = vmatpush.bf16.msra.mxu0 %v3100
        %3240 = vmatpush.bf16.msra.mxu0 %v3099
        %3241 = vmatpush.bf16.msra.mxu0 %v3098
        %3242 = vmatpush.bf16.msra.mxu0 %v3097
        %3243 = vmatmul.bf16.gmra.mxu0 %v2811
        %v3244 = vpop.f32.mrf.mxu0
        %v3245 = vadd.f32 %v3232, %v3244
        %v3246 = vpop.f32.mrf.mxu0
        %3247 = vdwg.mxu0
        %3248 = vmatpush.bf16.msra.mxu0 %v3112
        %3249 = vmatpush.bf16.msra.mxu0 %v3111
        %3250 = vmatpush.bf16.msra.mxu0 %v3110
        %3251 = vmatpush.bf16.msra.mxu0 %v3109
        %3252 = vmatpush.bf16.msra.mxu0 %v3108
        %3253 = vmatpush.bf16.msra.mxu0 %v3107
        %3254 = vmatpush.bf16.msra.mxu0 %v3106
        %3255 = vmatpush.bf16.msra.mxu0 %v3105
        %3256 = vmatmul.bf16.gmra.mxu0 %v2812
        %v3257 = vpop.f32.mrf.mxu0
        %v3258 = vadd.f32 %v3245, %v3257
        %v3259 = vpop.f32.mrf.mxu0
        %3260 = vdwg.mxu0
        %3261 = vmatpush.bf16.msra.mxu0 %v3120
        %3262 = vmatpush.bf16.msra.mxu0 %v3119
        %3263 = vmatpush.bf16.msra.mxu0 %v3118
        %3264 = vmatpush.bf16.msra.mxu0 %v3117
        %3265 = vmatpush.bf16.msra.mxu0 %v3116
        %3266 = vmatpush.bf16.msra.mxu0 %v3115
        %3267 = vmatpush.bf16.msra.mxu0 %v3114
        %3268 = vmatpush.bf16.msra.mxu0 %v3113
        %3269 = vmatmul.bf16.gmra.mxu0 %v2813
        %v3270 = vpop.f32.mrf.mxu0
        %v3271 = vadd.f32 %v3258, %v3270
        %v3272 = vpop.f32.mrf.mxu0
        %3273 = vdwg.mxu0
        %3274 = vmatpush.bf16.msra.mxu0 %v3128
        %3275 = vmatpush.bf16.msra.mxu0 %v3127
        %3276 = vmatpush.bf16.msra.mxu0 %v3126
        %3277 = vmatpush.bf16.msra.mxu0 %v3125
        %3278 = vmatpush.bf16.msra.mxu0 %v3124
        %3279 = vmatpush.bf16.msra.mxu0 %v3123
        %3280 = vmatpush.bf16.msra.mxu0 %v3122
        %3281 = vmatpush.bf16.msra.mxu0 %v3121
        %3282 = vmatmul.bf16.gmra.mxu0 %v2814
        %v3283 = vpop.f32.mrf.mxu0
        %v3284 = vadd.f32 %v3271, %v3283
        %v3285 = vpop.f32.mrf.mxu0
        %3286 = vdwg.mxu0
        %3287 = vmatpush.bf16.msra.mxu0 %v3136
        %3288 = vmatpush.bf16.msra.mxu0 %v3135
        %3289 = vmatpush.bf16.msra.mxu0 %v3134
        %3290 = vmatpush.bf16.msra.mxu0 %v3133
        %3291 = vmatpush.bf16.msra.mxu0 %v3132
        %3292 = vmatpush.bf16.msra.mxu0 %v3131
        %3293 = vmatpush.bf16.msra.mxu0 %v3130
        %3294 = vmatpush.bf16.msra.mxu0 %v3129
        %3295 = vmatmul.bf16.gmra.mxu0 %v2815
        %v3296 = vpop.f32.mrf.mxu0
        %v3297 = vadd.f32 %v3284, %v3296
        %v3298 = vpop.f32.mrf.mxu0
        %3299 = vdwg.mxu0
        %3300 = vmatpush.bf16.msra.mxu0 %v3144
        %3301 = vmatpush.bf16.msra.mxu0 %v3143
        %3302 = vmatpush.bf16.msra.mxu0 %v3142
        %3303 = vmatpush.bf16.msra.mxu0 %v3141
        %3304 = vmatpush.bf16.msra.mxu0 %v3140
        %3305 = vmatpush.bf16.msra.mxu0 %v3139
        %3306 = vmatpush.bf16.msra.mxu0 %v3138
        %3307 = vmatpush.bf16.msra.mxu0 %v3137
        %3308 = vmatmul.bf16.gmra.mxu0 %v2816
        %v3309 = vpop.f32.mrf.mxu0
        %v3310 = vadd.f32 %v3297, %v3309
        %v3311 = vpop.f32.mrf.mxu0
        %3312 = vdwg.mxu0
        %v3313 = vadd.f32 %v2679, %v3310
        %s3314 = scalar_lea.vmem %s3, 2048
        %v3315 = vld [vmem:[%s3314] sm:$0xf]
        %v3316 = vld [vmem:[%s3314 + $0x4] sm:$0xf]
        %v3317 = vld [vmem:[%s3314 + $0x8] sm:$0xf]
        %v3318 = vld [vmem:[%s3314 + $0xc] sm:$0xf]
        %v3319 = vld [vmem:[%s3314 + $0x10] sm:$0xf]
        %v3320 = vld [vmem:[%s3314 + $0x14] sm:$0xf]
        %v3321 = vld [vmem:[%s3314 + $0x18] sm:$0xf]
        %v3322 = vld [vmem:[%s3314 + $0x1c] sm:$0xf]
        %v3323 = vld [vmem:[%s3314 + $0x20] sm:$0xf]
        %v3324 = vld [vmem:[%s3314 + $0x24] sm:$0xf]
        %v3325 = vld [vmem:[%s3314 + $0x28] sm:$0xf]
        %v3326 = vld [vmem:[%s3314 + $0x2c] sm:$0xf]
        %v3327 = vld [vmem:[%s3314 + $0x30] sm:$0xf]
        %v3328 = vld [vmem:[%s3314 + $0x34] sm:$0xf]
        %v3329 = vld [vmem:[%s3314 + $0x38] sm:$0xf]
        %v3330 = vld [vmem:[%s3314 + $0x3c] sm:$0xf]
        %v3331 = vld [vmem:[%s3314 + $0x40] sm:$0xf]
        %v3332 = vld [vmem:[%s3314 + $0x44] sm:$0xf]
        %v3333 = vld [vmem:[%s3314 + $0x48] sm:$0xf]
        %v3334 = vld [vmem:[%s3314 + $0x4c] sm:$0xf]
        %v3335 = vld [vmem:[%s3314 + $0x50] sm:$0xf]
        %v3336 = vld [vmem:[%s3314 + $0x54] sm:$0xf]
        %v3337 = vld [vmem:[%s3314 + $0x58] sm:$0xf]
        %v3338 = vld [vmem:[%s3314 + $0x5c] sm:$0xf]
        %v3339 = vld [vmem:[%s3314 + $0x60] sm:$0xf]
        %v3340 = vld [vmem:[%s3314 + $0x64] sm:$0xf]
        %v3341 = vld [vmem:[%s3314 + $0x68] sm:$0xf]
        %v3342 = vld [vmem:[%s3314 + $0x6c] sm:$0xf]
        %v3343 = vld [vmem:[%s3314 + $0x70] sm:$0xf]
        %v3344 = vld [vmem:[%s3314 + $0x74] sm:$0xf]
        %v3345 = vld [vmem:[%s3314 + $0x78] sm:$0xf]
        %v3346 = vld [vmem:[%s3314 + $0x7c] sm:$0xf]
        %v3347 = vld [vmem:[%s3314 + $0x80] sm:$0xf]
        %v3348 = vld [vmem:[%s3314 + $0x84] sm:$0xf]
        %v3349 = vld [vmem:[%s3314 + $0x88] sm:$0xf]
        %v3350 = vld [vmem:[%s3314 + $0x8c] sm:$0xf]
        %v3351 = vld [vmem:[%s3314 + $0x90] sm:$0xf]
        %v3352 = vld [vmem:[%s3314 + $0x94] sm:$0xf]
        %v3353 = vld [vmem:[%s3314 + $0x98] sm:$0xf]
        %v3354 = vld [vmem:[%s3314 + $0x9c] sm:$0xf]
        %v3355 = vld [vmem:[%s3314 + $0xa0] sm:$0xf]
        %v3356 = vld [vmem:[%s3314 + $0xa4] sm:$0xf]
        %v3357 = vld [vmem:[%s3314 + $0xa8] sm:$0xf]
        %v3358 = vld [vmem:[%s3314 + $0xac] sm:$0xf]
        %v3359 = vld [vmem:[%s3314 + $0xb0] sm:$0xf]
        %v3360 = vld [vmem:[%s3314 + $0xb4] sm:$0xf]
        %v3361 = vld [vmem:[%s3314 + $0xb8] sm:$0xf]
        %v3362 = vld [vmem:[%s3314 + $0xbc] sm:$0xf]
        %v3363 = vld [vmem:[%s3314 + $0xc0] sm:$0xf]
        %v3364 = vld [vmem:[%s3314 + $0xc4] sm:$0xf]
        %v3365 = vld [vmem:[%s3314 + $0xc8] sm:$0xf]
        %v3366 = vld [vmem:[%s3314 + $0xcc] sm:$0xf]
        %v3367 = vld [vmem:[%s3314 + $0xd0] sm:$0xf]
        %v3368 = vld [vmem:[%s3314 + $0xd4] sm:$0xf]
        %v3369 = vld [vmem:[%s3314 + $0xd8] sm:$0xf]
        %v3370 = vld [vmem:[%s3314 + $0xdc] sm:$0xf]
        %v3371 = vld [vmem:[%s3314 + $0xe0] sm:$0xf]
        %v3372 = vld [vmem:[%s3314 + $0xe4] sm:$0xf]
        %v3373 = vld [vmem:[%s3314 + $0xe8] sm:$0xf]
        %v3374 = vld [vmem:[%s3314 + $0xec] sm:$0xf]
        %v3375 = vld [vmem:[%s3314 + $0xf0] sm:$0xf]
        %v3376 = vld [vmem:[%s3314 + $0xf4] sm:$0xf]
        %v3377 = vld [vmem:[%s3314 + $0xf8] sm:$0xf]
        %v3378 = vld [vmem:[%s3314 + $0xfc] sm:$0xf]
        %v3379 = vld [vmem:[%s3314 + $0x100] sm:$0xf]
        %v3380 = vld [vmem:[%s3314 + $0x104] sm:$0xf]
        %v3381 = vld [vmem:[%s3314 + $0x108] sm:$0xf]
        %v3382 = vld [vmem:[%s3314 + $0x10c] sm:$0xf]
        %v3383 = vld [vmem:[%s3314 + $0x110] sm:$0xf]
        %v3384 = vld [vmem:[%s3314 + $0x114] sm:$0xf]
        %v3385 = vld [vmem:[%s3314 + $0x118] sm:$0xf]
        %v3386 = vld [vmem:[%s3314 + $0x11c] sm:$0xf]
        %v3387 = vld [vmem:[%s3314 + $0x120] sm:$0xf]
        %v3388 = vld [vmem:[%s3314 + $0x124] sm:$0xf]
        %v3389 = vld [vmem:[%s3314 + $0x128] sm:$0xf]
        %v3390 = vld [vmem:[%s3314 + $0x12c] sm:$0xf]
        %v3391 = vld [vmem:[%s3314 + $0x130] sm:$0xf]
        %v3392 = vld [vmem:[%s3314 + $0x134] sm:$0xf]
        %v3393 = vld [vmem:[%s3314 + $0x138] sm:$0xf]
        %v3394 = vld [vmem:[%s3314 + $0x13c] sm:$0xf]
        %v3395 = vld [vmem:[%s3314 + $0x140] sm:$0xf]
        %v3396 = vld [vmem:[%s3314 + $0x144] sm:$0xf]
        %v3397 = vld [vmem:[%s3314 + $0x148] sm:$0xf]
        %v3398 = vld [vmem:[%s3314 + $0x14c] sm:$0xf]
        %v3399 = vld [vmem:[%s3314 + $0x150] sm:$0xf]
        %v3400 = vld [vmem:[%s3314 + $0x154] sm:$0xf]
        %v3401 = vld [vmem:[%s3314 + $0x158] sm:$0xf]
        %v3402 = vld [vmem:[%s3314 + $0x15c] sm:$0xf]
        %v3403 = vld [vmem:[%s3314 + $0x160] sm:$0xf]
        %v3404 = vld [vmem:[%s3314 + $0x164] sm:$0xf]
        %v3405 = vld [vmem:[%s3314 + $0x168] sm:$0xf]
        %v3406 = vld [vmem:[%s3314 + $0x16c] sm:$0xf]
        %v3407 = vld [vmem:[%s3314 + $0x170] sm:$0xf]
        %v3408 = vld [vmem:[%s3314 + $0x174] sm:$0xf]
        %v3409 = vld [vmem:[%s3314 + $0x178] sm:$0xf]
        %v3410 = vld [vmem:[%s3314 + $0x17c] sm:$0xf]
        %v3411 = vld [vmem:[%s3314 + $0x180] sm:$0xf]
        %v3412 = vld [vmem:[%s3314 + $0x184] sm:$0xf]
        %v3413 = vld [vmem:[%s3314 + $0x188] sm:$0xf]
        %v3414 = vld [vmem:[%s3314 + $0x18c] sm:$0xf]
        %v3415 = vld [vmem:[%s3314 + $0x190] sm:$0xf]
        %v3416 = vld [vmem:[%s3314 + $0x194] sm:$0xf]
        %v3417 = vld [vmem:[%s3314 + $0x198] sm:$0xf]
        %v3418 = vld [vmem:[%s3314 + $0x19c] sm:$0xf]
        %v3419 = vld [vmem:[%s3314 + $0x1a0] sm:$0xf]
        %v3420 = vld [vmem:[%s3314 + $0x1a4] sm:$0xf]
        %v3421 = vld [vmem:[%s3314 + $0x1a8] sm:$0xf]
        %v3422 = vld [vmem:[%s3314 + $0x1ac] sm:$0xf]
        %v3423 = vld [vmem:[%s3314 + $0x1b0] sm:$0xf]
        %v3424 = vld [vmem:[%s3314 + $0x1b4] sm:$0xf]
        %v3425 = vld [vmem:[%s3314 + $0x1b8] sm:$0xf]
        %v3426 = vld [vmem:[%s3314 + $0x1bc] sm:$0xf]
        %v3427 = vld [vmem:[%s3314 + $0x1c0] sm:$0xf]
        %v3428 = vld [vmem:[%s3314 + $0x1c4] sm:$0xf]
        %v3429 = vld [vmem:[%s3314 + $0x1c8] sm:$0xf]
        %v3430 = vld [vmem:[%s3314 + $0x1cc] sm:$0xf]
        %v3431 = vld [vmem:[%s3314 + $0x1d0] sm:$0xf]
        %v3432 = vld [vmem:[%s3314 + $0x1d4] sm:$0xf]
        %v3433 = vld [vmem:[%s3314 + $0x1d8] sm:$0xf]
        %v3434 = vld [vmem:[%s3314 + $0x1dc] sm:$0xf]
        %v3435 = vld [vmem:[%s3314 + $0x1e0] sm:$0xf]
        %v3436 = vld [vmem:[%s3314 + $0x1e4] sm:$0xf]
        %v3437 = vld [vmem:[%s3314 + $0x1e8] sm:$0xf]
        %v3438 = vld [vmem:[%s3314 + $0x1ec] sm:$0xf]
        %v3439 = vld [vmem:[%s3314 + $0x1f0] sm:$0xf]
        %v3440 = vld [vmem:[%s3314 + $0x1f4] sm:$0xf]
        %v3441 = vld [vmem:[%s3314 + $0x1f8] sm:$0xf]
        %v3442 = vld [vmem:[%s3314 + $0x1fc] sm:$0xf]
        %v3443 = vrot.slane %v765, 2
        %v3444 = vrot.slane %v766, 2
        %v3445 = vrot.slane %v767, 2
        %v3446 = vrot.slane %v768, 2
        %v3447 = vrot.slane %v769, 2
        %v3448 = vrot.slane %v770, 2
        %v3449 = vrot.slane %v771, 2
        %v3450 = vrot.slane %v772, 2
        %v3587 = vunpack.c.l.b16 %v3315
        %v3588 = vunpack.c.l.b16 %v3316
        %v3589 = vunpack.c.l.b16 %v3317
        %v3590 = vunpack.c.l.b16 %v3318
        %v3591 = vunpack.c.l.b16 %v3319
        %v3592 = vunpack.c.l.b16 %v3320
        %v3593 = vunpack.c.l.b16 %v3321
        %v3594 = vunpack.c.l.b16 %v3322
        %v3595 = vunpack.c.l.b16 %v3323
        %v3596 = vunpack.c.l.b16 %v3324
        %v3597 = vunpack.c.l.b16 %v3325
        %v3598 = vunpack.c.l.b16 %v3326
        %v3599 = vunpack.c.l.b16 %v3327
        %v3600 = vunpack.c.l.b16 %v3328
        %v3601 = vunpack.c.l.b16 %v3329
        %v3602 = vunpack.c.l.b16 %v3330
        %v3603 = vunpack.c.l.b16 %v3331
        %v3604 = vunpack.c.l.b16 %v3332
        %v3605 = vunpack.c.l.b16 %v3333
        %v3606 = vunpack.c.l.b16 %v3334
        %v3607 = vunpack.c.l.b16 %v3335
        %v3608 = vunpack.c.l.b16 %v3336
        %v3609 = vunpack.c.l.b16 %v3337
        %v3610 = vunpack.c.l.b16 %v3338
        %v3611 = vunpack.c.l.b16 %v3339
        %v3612 = vunpack.c.l.b16 %v3340
        %v3613 = vunpack.c.l.b16 %v3341
        %v3614 = vunpack.c.l.b16 %v3342
        %v3615 = vunpack.c.l.b16 %v3343
        %v3616 = vunpack.c.l.b16 %v3344
        %v3617 = vunpack.c.l.b16 %v3345
        %v3618 = vunpack.c.l.b16 %v3346
        %v3619 = vunpack.c.l.b16 %v3347
        %v3620 = vunpack.c.l.b16 %v3348
        %v3621 = vunpack.c.l.b16 %v3349
        %v3622 = vunpack.c.l.b16 %v3350
        %v3623 = vunpack.c.l.b16 %v3351
        %v3624 = vunpack.c.l.b16 %v3352
        %v3625 = vunpack.c.l.b16 %v3353
        %v3626 = vunpack.c.l.b16 %v3354
        %v3627 = vunpack.c.l.b16 %v3355
        %v3628 = vunpack.c.l.b16 %v3356
        %v3629 = vunpack.c.l.b16 %v3357
        %v3630 = vunpack.c.l.b16 %v3358
        %v3631 = vunpack.c.l.b16 %v3359
        %v3632 = vunpack.c.l.b16 %v3360
        %v3633 = vunpack.c.l.b16 %v3361
        %v3634 = vunpack.c.l.b16 %v3362
        %v3635 = vunpack.c.l.b16 %v3363
        %v3636 = vunpack.c.l.b16 %v3364
        %v3637 = vunpack.c.l.b16 %v3365
        %v3638 = vunpack.c.l.b16 %v3366
        %v3639 = vunpack.c.l.b16 %v3367
        %v3640 = vunpack.c.l.b16 %v3368
        %v3641 = vunpack.c.l.b16 %v3369
        %v3642 = vunpack.c.l.b16 %v3370
        %v3643 = vunpack.c.l.b16 %v3371
        %v3644 = vunpack.c.l.b16 %v3372
        %v3645 = vunpack.c.l.b16 %v3373
        %v3646 = vunpack.c.l.b16 %v3374
        %v3647 = vunpack.c.l.b16 %v3375
        %v3648 = vunpack.c.l.b16 %v3376
        %v3649 = vunpack.c.l.b16 %v3377
        %v3650 = vunpack.c.l.b16 %v3378
        %v3651 = vunpack.c.l.b16 %v3379
        %v3652 = vunpack.c.l.b16 %v3380
        %v3653 = vunpack.c.l.b16 %v3381
        %v3654 = vunpack.c.l.b16 %v3382
        %v3655 = vunpack.c.l.b16 %v3383
        %v3656 = vunpack.c.l.b16 %v3384
        %v3657 = vunpack.c.l.b16 %v3385
        %v3658 = vunpack.c.l.b16 %v3386
        %v3659 = vunpack.c.l.b16 %v3387
        %v3660 = vunpack.c.l.b16 %v3388
        %v3661 = vunpack.c.l.b16 %v3389
        %v3662 = vunpack.c.l.b16 %v3390
        %v3663 = vunpack.c.l.b16 %v3391
        %v3664 = vunpack.c.l.b16 %v3392
        %v3665 = vunpack.c.l.b16 %v3393
        %v3666 = vunpack.c.l.b16 %v3394
        %v3667 = vunpack.c.l.b16 %v3395
        %v3668 = vunpack.c.l.b16 %v3396
        %v3669 = vunpack.c.l.b16 %v3397
        %v3670 = vunpack.c.l.b16 %v3398
        %v3671 = vunpack.c.l.b16 %v3399
        %v3672 = vunpack.c.l.b16 %v3400
        %v3673 = vunpack.c.l.b16 %v3401
        %v3674 = vunpack.c.l.b16 %v3402
        %v3675 = vunpack.c.l.b16 %v3403
        %v3676 = vunpack.c.l.b16 %v3404
        %v3677 = vunpack.c.l.b16 %v3405
        %v3678 = vunpack.c.l.b16 %v3406
        %v3679 = vunpack.c.l.b16 %v3407
        %v3680 = vunpack.c.l.b16 %v3408
        %v3681 = vunpack.c.l.b16 %v3409
        %v3682 = vunpack.c.l.b16 %v3410
        %v3683 = vunpack.c.l.b16 %v3411
        %v3684 = vunpack.c.l.b16 %v3412
        %v3685 = vunpack.c.l.b16 %v3413
        %v3686 = vunpack.c.l.b16 %v3414
        %v3687 = vunpack.c.l.b16 %v3415
        %v3688 = vunpack.c.l.b16 %v3416
        %v3689 = vunpack.c.l.b16 %v3417
        %v3690 = vunpack.c.l.b16 %v3418
        %v3691 = vunpack.c.l.b16 %v3419
        %v3692 = vunpack.c.l.b16 %v3420
        %v3693 = vunpack.c.l.b16 %v3421
        %v3694 = vunpack.c.l.b16 %v3422
        %v3695 = vunpack.c.l.b16 %v3423
        %v3696 = vunpack.c.l.b16 %v3424
        %v3697 = vunpack.c.l.b16 %v3425
        %v3698 = vunpack.c.l.b16 %v3426
        %v3699 = vunpack.c.l.b16 %v3427
        %v3700 = vunpack.c.l.b16 %v3428
        %v3701 = vunpack.c.l.b16 %v3429
        %v3702 = vunpack.c.l.b16 %v3430
        %v3703 = vunpack.c.l.b16 %v3431
        %v3704 = vunpack.c.l.b16 %v3432
        %v3705 = vunpack.c.l.b16 %v3433
        %v3706 = vunpack.c.l.b16 %v3434
        %v3707 = vunpack.c.l.b16 %v3435
        %v3708 = vunpack.c.l.b16 %v3436
        %v3709 = vunpack.c.l.b16 %v3437
        %v3710 = vunpack.c.l.b16 %v3438
        %v3711 = vunpack.c.l.b16 %v3439
        %v3712 = vunpack.c.l.b16 %v3440
        %v3713 = vunpack.c.l.b16 %v3441
        %v3714 = vunpack.c.l.b16 %v3442
        %v3715 = vpack.c.b16 %v3588, %v3587
        %v3716 = vpack.c.b16 %v3590, %v3589
        %v3717 = vpack.c.b16 %v3592, %v3591
        %v3718 = vpack.c.b16 %v3594, %v3593
        %v3719 = vpack.c.b16 %v3596, %v3595
        %v3720 = vpack.c.b16 %v3598, %v3597
        %v3721 = vpack.c.b16 %v3600, %v3599
        %v3722 = vpack.c.b16 %v3602, %v3601
        %v3723 = vpack.c.b16 %v3604, %v3603
        %v3724 = vpack.c.b16 %v3606, %v3605
        %v3725 = vpack.c.b16 %v3608, %v3607
        %v3726 = vpack.c.b16 %v3610, %v3609
        %v3727 = vpack.c.b16 %v3612, %v3611
        %v3728 = vpack.c.b16 %v3614, %v3613
        %v3729 = vpack.c.b16 %v3616, %v3615
        %v3730 = vpack.c.b16 %v3618, %v3617
        %v3731 = vpack.c.b16 %v3620, %v3619
        %v3732 = vpack.c.b16 %v3622, %v3621
        %v3733 = vpack.c.b16 %v3624, %v3623
        %v3734 = vpack.c.b16 %v3626, %v3625
        %v3735 = vpack.c.b16 %v3628, %v3627
        %v3736 = vpack.c.b16 %v3630, %v3629
        %v3737 = vpack.c.b16 %v3632, %v3631
        %v3738 = vpack.c.b16 %v3634, %v3633
        %v3739 = vpack.c.b16 %v3636, %v3635
        %v3740 = vpack.c.b16 %v3638, %v3637
        %v3741 = vpack.c.b16 %v3640, %v3639
        %v3742 = vpack.c.b16 %v3642, %v3641
        %v3743 = vpack.c.b16 %v3644, %v3643
        %v3744 = vpack.c.b16 %v3646, %v3645
        %v3745 = vpack.c.b16 %v3648, %v3647
        %v3746 = vpack.c.b16 %v3650, %v3649
        %v3747 = vpack.c.b16 %v3652, %v3651
        %v3748 = vpack.c.b16 %v3654, %v3653
        %v3749 = vpack.c.b16 %v3656, %v3655
        %v3750 = vpack.c.b16 %v3658, %v3657
        %v3751 = vpack.c.b16 %v3660, %v3659
        %v3752 = vpack.c.b16 %v3662, %v3661
        %v3753 = vpack.c.b16 %v3664, %v3663
        %v3754 = vpack.c.b16 %v3666, %v3665
        %v3755 = vpack.c.b16 %v3668, %v3667
        %v3756 = vpack.c.b16 %v3670, %v3669
        %v3757 = vpack.c.b16 %v3672, %v3671
        %v3758 = vpack.c.b16 %v3674, %v3673
        %v3759 = vpack.c.b16 %v3676, %v3675
        %v3760 = vpack.c.b16 %v3678, %v3677
        %v3761 = vpack.c.b16 %v3680, %v3679
        %v3762 = vpack.c.b16 %v3682, %v3681
        %v3763 = vpack.c.b16 %v3684, %v3683
        %v3764 = vpack.c.b16 %v3686, %v3685
        %v3765 = vpack.c.b16 %v3688, %v3687
        %v3766 = vpack.c.b16 %v3690, %v3689
        %v3767 = vpack.c.b16 %v3692, %v3691
        %v3768 = vpack.c.b16 %v3694, %v3693
        %v3769 = vpack.c.b16 %v3696, %v3695
        %v3770 = vpack.c.b16 %v3698, %v3697
        %v3771 = vpack.c.b16 %v3700, %v3699
        %v3772 = vpack.c.b16 %v3702, %v3701
        %v3773 = vpack.c.b16 %v3704, %v3703
        %v3774 = vpack.c.b16 %v3706, %v3705
        %v3775 = vpack.c.b16 %v3708, %v3707
        %v3776 = vpack.c.b16 %v3710, %v3709
        %v3777 = vpack.c.b16 %v3712, %v3711
        %v3778 = vpack.c.b16 %v3714, %v3713
        %3843 = vmatpush.bf16.msra.mxu0 %v3722
        %3844 = vmatpush.bf16.msra.mxu0 %v3721
        %3845 = vmatpush.bf16.msra.mxu0 %v3720
        %3846 = vmatpush.bf16.msra.mxu0 %v3719
        %3847 = vmatpush.bf16.msra.mxu0 %v3718
        %3848 = vmatpush.bf16.msra.mxu0 %v3717
        %3849 = vmatpush.bf16.msra.mxu0 %v3716
        %3850 = vmatpush.bf16.msra.mxu0 %v3715
        %3851 = vmatmul.bf16.gmra.mxu0 %v3443
        %v3852 = vpop.f32.mrf.mxu0
        %v3853 = vadd.f32 0.0, %v3852
        %v3854 = vpop.f32.mrf.mxu0
        %3855 = vdwg.mxu0
        %3856 = vmatpush.bf16.msra.mxu0 %v3730
        %3857 = vmatpush.bf16.msra.mxu0 %v3729
        %3858 = vmatpush.bf16.msra.mxu0 %v3728
        %3859 = vmatpush.bf16.msra.mxu0 %v3727
        %3860 = vmatpush.bf16.msra.mxu0 %v3726
        %3861 = vmatpush.bf16.msra.mxu0 %v3725
        %3862 = vmatpush.bf16.msra.mxu0 %v3724
        %3863 = vmatpush.bf16.msra.mxu0 %v3723
        %3864 = vmatmul.bf16.gmra.mxu0 %v3444
        %v3865 = vpop.f32.mrf.mxu0
        %v3866 = vadd.f32 %v3853, %v3865
        %v3867 = vpop.f32.mrf.mxu0
        %3868 = vdwg.mxu0
        %3869 = vmatpush.bf16.msra.mxu0 %v3738
        %3870 = vmatpush.bf16.msra.mxu0 %v3737
        %3871 = vmatpush.bf16.msra.mxu0 %v3736
        %3872 = vmatpush.bf16.msra.mxu0 %v3735
        %3873 = vmatpush.bf16.msra.mxu0 %v3734
        %3874 = vmatpush.bf16.msra.mxu0 %v3733
        %3875 = vmatpush.bf16.msra.mxu0 %v3732
        %3876 = vmatpush.bf16.msra.mxu0 %v3731
        %3877 = vmatmul.bf16.gmra.mxu0 %v3445
        %v3878 = vpop.f32.mrf.mxu0
        %v3879 = vadd.f32 %v3866, %v3878
        %v3880 = vpop.f32.mrf.mxu0
        %3881 = vdwg.mxu0
        %3882 = vmatpush.bf16.msra.mxu0 %v3746
        %3883 = vmatpush.bf16.msra.mxu0 %v3745
        %3884 = vmatpush.bf16.msra.mxu0 %v3744
        %3885 = vmatpush.bf16.msra.mxu0 %v3743
        %3886 = vmatpush.bf16.msra.mxu0 %v3742
        %3887 = vmatpush.bf16.msra.mxu0 %v3741
        %3888 = vmatpush.bf16.msra.mxu0 %v3740
        %3889 = vmatpush.bf16.msra.mxu0 %v3739
        %3890 = vmatmul.bf16.gmra.mxu0 %v3446
        %v3891 = vpop.f32.mrf.mxu0
        %v3892 = vadd.f32 %v3879, %v3891
        %v3893 = vpop.f32.mrf.mxu0
        %3894 = vdwg.mxu0
        %3895 = vmatpush.bf16.msra.mxu0 %v3754
        %3896 = vmatpush.bf16.msra.mxu0 %v3753
        %3897 = vmatpush.bf16.msra.mxu0 %v3752
        %3898 = vmatpush.bf16.msra.mxu0 %v3751
        %3899 = vmatpush.bf16.msra.mxu0 %v3750
        %3900 = vmatpush.bf16.msra.mxu0 %v3749
        %3901 = vmatpush.bf16.msra.mxu0 %v3748
        %3902 = vmatpush.bf16.msra.mxu0 %v3747
        %3903 = vmatmul.bf16.gmra.mxu0 %v3447
        %v3904 = vpop.f32.mrf.mxu0
        %v3905 = vadd.f32 %v3892, %v3904
        %v3906 = vpop.f32.mrf.mxu0
        %3907 = vdwg.mxu0
        %3908 = vmatpush.bf16.msra.mxu0 %v3762
        %3909 = vmatpush.bf16.msra.mxu0 %v3761
        %3910 = vmatpush.bf16.msra.mxu0 %v3760
        %3911 = vmatpush.bf16.msra.mxu0 %v3759
        %3912 = vmatpush.bf16.msra.mxu0 %v3758
        %3913 = vmatpush.bf16.msra.mxu0 %v3757
        %3914 = vmatpush.bf16.msra.mxu0 %v3756
        %3915 = vmatpush.bf16.msra.mxu0 %v3755
        %3916 = vmatmul.bf16.gmra.mxu0 %v3448
        %v3917 = vpop.f32.mrf.mxu0
        %v3918 = vadd.f32 %v3905, %v3917
        %v3919 = vpop.f32.mrf.mxu0
        %3920 = vdwg.mxu0
        %3921 = vmatpush.bf16.msra.mxu0 %v3770
        %3922 = vmatpush.bf16.msra.mxu0 %v3769
        %3923 = vmatpush.bf16.msra.mxu0 %v3768
        %3924 = vmatpush.bf16.msra.mxu0 %v3767
        %3925 = vmatpush.bf16.msra.mxu0 %v3766
        %3926 = vmatpush.bf16.msra.mxu0 %v3765
        %3927 = vmatpush.bf16.msra.mxu0 %v3764
        %3928 = vmatpush.bf16.msra.mxu0 %v3763
        %3929 = vmatmul.bf16.gmra.mxu0 %v3449
        %v3930 = vpop.f32.mrf.mxu0
        %v3931 = vadd.f32 %v3918, %v3930
        %v3932 = vpop.f32.mrf.mxu0
        %3933 = vdwg.mxu0
        %3934 = vmatpush.bf16.msra.mxu0 %v3778
        %3935 = vmatpush.bf16.msra.mxu0 %v3777
        %3936 = vmatpush.bf16.msra.mxu0 %v3776
        %3937 = vmatpush.bf16.msra.mxu0 %v3775
        %3938 = vmatpush.bf16.msra.mxu0 %v3774
        %3939 = vmatpush.bf16.msra.mxu0 %v3773
        %3940 = vmatpush.bf16.msra.mxu0 %v3772
        %3941 = vmatpush.bf16.msra.mxu0 %v3771
        %3942 = vmatmul.bf16.gmra.mxu0 %v3450
        %v3943 = vpop.f32.mrf.mxu0
        %v3944 = vadd.f32 %v3931, %v3943
        %v3945 = vpop.f32.mrf.mxu0
        %3946 = vdwg.mxu0
        %v3947 = vadd.f32 %v3313, %v3944
        %s3948 = scalar_lea.vmem %s3, 2560
        %v3949 = vld [vmem:[%s3948] sm:$0xf]
        %v3950 = vld [vmem:[%s3948 + $0x4] sm:$0xf]
        %v3951 = vld [vmem:[%s3948 + $0x8] sm:$0xf]
        %v3952 = vld [vmem:[%s3948 + $0xc] sm:$0xf]
        %v3953 = vld [vmem:[%s3948 + $0x10] sm:$0xf]
        %v3954 = vld [vmem:[%s3948 + $0x14] sm:$0xf]
        %v3955 = vld [vmem:[%s3948 + $0x18] sm:$0xf]
        %v3956 = vld [vmem:[%s3948 + $0x1c] sm:$0xf]
        %v3957 = vld [vmem:[%s3948 + $0x20] sm:$0xf]
        %v3958 = vld [vmem:[%s3948 + $0x24] sm:$0xf]
        %v3959 = vld [vmem:[%s3948 + $0x28] sm:$0xf]
        %v3960 = vld [vmem:[%s3948 + $0x2c] sm:$0xf]
        %v3961 = vld [vmem:[%s3948 + $0x30] sm:$0xf]
        %v3962 = vld [vmem:[%s3948 + $0x34] sm:$0xf]
        %v3963 = vld [vmem:[%s3948 + $0x38] sm:$0xf]
        %v3964 = vld [vmem:[%s3948 + $0x3c] sm:$0xf]
        %v3965 = vld [vmem:[%s3948 + $0x40] sm:$0xf]
        %v3966 = vld [vmem:[%s3948 + $0x44] sm:$0xf]
        %v3967 = vld [vmem:[%s3948 + $0x48] sm:$0xf]
        %v3968 = vld [vmem:[%s3948 + $0x4c] sm:$0xf]
        %v3969 = vld [vmem:[%s3948 + $0x50] sm:$0xf]
        %v3970 = vld [vmem:[%s3948 + $0x54] sm:$0xf]
        %v3971 = vld [vmem:[%s3948 + $0x58] sm:$0xf]
        %v3972 = vld [vmem:[%s3948 + $0x5c] sm:$0xf]
        %v3973 = vld [vmem:[%s3948 + $0x60] sm:$0xf]
        %v3974 = vld [vmem:[%s3948 + $0x64] sm:$0xf]
        %v3975 = vld [vmem:[%s3948 + $0x68] sm:$0xf]
        %v3976 = vld [vmem:[%s3948 + $0x6c] sm:$0xf]
        %v3977 = vld [vmem:[%s3948 + $0x70] sm:$0xf]
        %v3978 = vld [vmem:[%s3948 + $0x74] sm:$0xf]
        %v3979 = vld [vmem:[%s3948 + $0x78] sm:$0xf]
        %v3980 = vld [vmem:[%s3948 + $0x7c] sm:$0xf]
        %v3981 = vld [vmem:[%s3948 + $0x80] sm:$0xf]
        %v3982 = vld [vmem:[%s3948 + $0x84] sm:$0xf]
        %v3983 = vld [vmem:[%s3948 + $0x88] sm:$0xf]
        %v3984 = vld [vmem:[%s3948 + $0x8c] sm:$0xf]
        %v3985 = vld [vmem:[%s3948 + $0x90] sm:$0xf]
        %v3986 = vld [vmem:[%s3948 + $0x94] sm:$0xf]
        %v3987 = vld [vmem:[%s3948 + $0x98] sm:$0xf]
        %v3988 = vld [vmem:[%s3948 + $0x9c] sm:$0xf]
        %v3989 = vld [vmem:[%s3948 + $0xa0] sm:$0xf]
        %v3990 = vld [vmem:[%s3948 + $0xa4] sm:$0xf]
        %v3991 = vld [vmem:[%s3948 + $0xa8] sm:$0xf]
        %v3992 = vld [vmem:[%s3948 + $0xac] sm:$0xf]
        %v3993 = vld [vmem:[%s3948 + $0xb0] sm:$0xf]
        %v3994 = vld [vmem:[%s3948 + $0xb4] sm:$0xf]
        %v3995 = vld [vmem:[%s3948 + $0xb8] sm:$0xf]
        %v3996 = vld [vmem:[%s3948 + $0xbc] sm:$0xf]
        %v3997 = vld [vmem:[%s3948 + $0xc0] sm:$0xf]
        %v3998 = vld [vmem:[%s3948 + $0xc4] sm:$0xf]
        %v3999 = vld [vmem:[%s3948 + $0xc8] sm:$0xf]
        %v4000 = vld [vmem:[%s3948 + $0xcc] sm:$0xf]
        %v4001 = vld [vmem:[%s3948 + $0xd0] sm:$0xf]
        %v4002 = vld [vmem:[%s3948 + $0xd4] sm:$0xf]
        %v4003 = vld [vmem:[%s3948 + $0xd8] sm:$0xf]
        %v4004 = vld [vmem:[%s3948 + $0xdc] sm:$0xf]
        %v4005 = vld [vmem:[%s3948 + $0xe0] sm:$0xf]
        %v4006 = vld [vmem:[%s3948 + $0xe4] sm:$0xf]
        %v4007 = vld [vmem:[%s3948 + $0xe8] sm:$0xf]
        %v4008 = vld [vmem:[%s3948 + $0xec] sm:$0xf]
        %v4009 = vld [vmem:[%s3948 + $0xf0] sm:$0xf]
        %v4010 = vld [vmem:[%s3948 + $0xf4] sm:$0xf]
        %v4011 = vld [vmem:[%s3948 + $0xf8] sm:$0xf]
        %v4012 = vld [vmem:[%s3948 + $0xfc] sm:$0xf]
        %v4013 = vld [vmem:[%s3948 + $0x100] sm:$0xf]
        %v4014 = vld [vmem:[%s3948 + $0x104] sm:$0xf]
        %v4015 = vld [vmem:[%s3948 + $0x108] sm:$0xf]
        %v4016 = vld [vmem:[%s3948 + $0x10c] sm:$0xf]
        %v4017 = vld [vmem:[%s3948 + $0x110] sm:$0xf]
        %v4018 = vld [vmem:[%s3948 + $0x114] sm:$0xf]
        %v4019 = vld [vmem:[%s3948 + $0x118] sm:$0xf]
        %v4020 = vld [vmem:[%s3948 + $0x11c] sm:$0xf]
        %v4021 = vld [vmem:[%s3948 + $0x120] sm:$0xf]
        %v4022 = vld [vmem:[%s3948 + $0x124] sm:$0xf]
        %v4023 = vld [vmem:[%s3948 + $0x128] sm:$0xf]
        %v4024 = vld [vmem:[%s3948 + $0x12c] sm:$0xf]
        %v4025 = vld [vmem:[%s3948 + $0x130] sm:$0xf]
        %v4026 = vld [vmem:[%s3948 + $0x134] sm:$0xf]
        %v4027 = vld [vmem:[%s3948 + $0x138] sm:$0xf]
        %v4028 = vld [vmem:[%s3948 + $0x13c] sm:$0xf]
        %v4029 = vld [vmem:[%s3948 + $0x140] sm:$0xf]
        %v4030 = vld [vmem:[%s3948 + $0x144] sm:$0xf]
        %v4031 = vld [vmem:[%s3948 + $0x148] sm:$0xf]
        %v4032 = vld [vmem:[%s3948 + $0x14c] sm:$0xf]
        %v4033 = vld [vmem:[%s3948 + $0x150] sm:$0xf]
        %v4034 = vld [vmem:[%s3948 + $0x154] sm:$0xf]
        %v4035 = vld [vmem:[%s3948 + $0x158] sm:$0xf]
        %v4036 = vld [vmem:[%s3948 + $0x15c] sm:$0xf]
        %v4037 = vld [vmem:[%s3948 + $0x160] sm:$0xf]
        %v4038 = vld [vmem:[%s3948 + $0x164] sm:$0xf]
        %v4039 = vld [vmem:[%s3948 + $0x168] sm:$0xf]
        %v4040 = vld [vmem:[%s3948 + $0x16c] sm:$0xf]
        %v4041 = vld [vmem:[%s3948 + $0x170] sm:$0xf]
        %v4042 = vld [vmem:[%s3948 + $0x174] sm:$0xf]
        %v4043 = vld [vmem:[%s3948 + $0x178] sm:$0xf]
        %v4044 = vld [vmem:[%s3948 + $0x17c] sm:$0xf]
        %v4045 = vld [vmem:[%s3948 + $0x180] sm:$0xf]
        %v4046 = vld [vmem:[%s3948 + $0x184] sm:$0xf]
        %v4047 = vld [vmem:[%s3948 + $0x188] sm:$0xf]
        %v4048 = vld [vmem:[%s3948 + $0x18c] sm:$0xf]
        %v4049 = vld [vmem:[%s3948 + $0x190] sm:$0xf]
        %v4050 = vld [vmem:[%s3948 + $0x194] sm:$0xf]
        %v4051 = vld [vmem:[%s3948 + $0x198] sm:$0xf]
        %v4052 = vld [vmem:[%s3948 + $0x19c] sm:$0xf]
        %v4053 = vld [vmem:[%s3948 + $0x1a0] sm:$0xf]
        %v4054 = vld [vmem:[%s3948 + $0x1a4] sm:$0xf]
        %v4055 = vld [vmem:[%s3948 + $0x1a8] sm:$0xf]
        %v4056 = vld [vmem:[%s3948 + $0x1ac] sm:$0xf]
        %v4057 = vld [vmem:[%s3948 + $0x1b0] sm:$0xf]
        %v4058 = vld [vmem:[%s3948 + $0x1b4] sm:$0xf]
        %v4059 = vld [vmem:[%s3948 + $0x1b8] sm:$0xf]
        %v4060 = vld [vmem:[%s3948 + $0x1bc] sm:$0xf]
        %v4061 = vld [vmem:[%s3948 + $0x1c0] sm:$0xf]
        %v4062 = vld [vmem:[%s3948 + $0x1c4] sm:$0xf]
        %v4063 = vld [vmem:[%s3948 + $0x1c8] sm:$0xf]
        %v4064 = vld [vmem:[%s3948 + $0x1cc] sm:$0xf]
        %v4065 = vld [vmem:[%s3948 + $0x1d0] sm:$0xf]
        %v4066 = vld [vmem:[%s3948 + $0x1d4] sm:$0xf]
        %v4067 = vld [vmem:[%s3948 + $0x1d8] sm:$0xf]
        %v4068 = vld [vmem:[%s3948 + $0x1dc] sm:$0xf]
        %v4069 = vld [vmem:[%s3948 + $0x1e0] sm:$0xf]
        %v4070 = vld [vmem:[%s3948 + $0x1e4] sm:$0xf]
        %v4071 = vld [vmem:[%s3948 + $0x1e8] sm:$0xf]
        %v4072 = vld [vmem:[%s3948 + $0x1ec] sm:$0xf]
        %v4073 = vld [vmem:[%s3948 + $0x1f0] sm:$0xf]
        %v4074 = vld [vmem:[%s3948 + $0x1f4] sm:$0xf]
        %v4075 = vld [vmem:[%s3948 + $0x1f8] sm:$0xf]
        %v4076 = vld [vmem:[%s3948 + $0x1fc] sm:$0xf]
        %v4077 = vrot.slane %v1031, 2
        %v4078 = vrot.slane %v1034, 2
        %v4079 = vrot.slane %v1037, 2
        %v4080 = vrot.slane %v1040, 2
        %v4081 = vrot.slane %v1043, 2
        %v4082 = vrot.slane %v1046, 2
        %v4083 = vrot.slane %v1049, 2
        %v4084 = vrot.slane %v1052, 2
        %v4221 = vunpack.c.l.b16 %v3949
        %v4222 = vunpack.c.l.b16 %v3950
        %v4223 = vunpack.c.l.b16 %v3951
        %v4224 = vunpack.c.l.b16 %v3952
        %v4225 = vunpack.c.l.b16 %v3953
        %v4226 = vunpack.c.l.b16 %v3954
        %v4227 = vunpack.c.l.b16 %v3955
        %v4228 = vunpack.c.l.b16 %v3956
        %v4229 = vunpack.c.l.b16 %v3957
        %v4230 = vunpack.c.l.b16 %v3958
        %v4231 = vunpack.c.l.b16 %v3959
        %v4232 = vunpack.c.l.b16 %v3960
        %v4233 = vunpack.c.l.b16 %v3961
        %v4234 = vunpack.c.l.b16 %v3962
        %v4235 = vunpack.c.l.b16 %v3963
        %v4236 = vunpack.c.l.b16 %v3964
        %v4237 = vunpack.c.l.b16 %v3965
        %v4238 = vunpack.c.l.b16 %v3966
        %v4239 = vunpack.c.l.b16 %v3967
        %v4240 = vunpack.c.l.b16 %v3968
        %v4241 = vunpack.c.l.b16 %v3969
        %v4242 = vunpack.c.l.b16 %v3970
        %v4243 = vunpack.c.l.b16 %v3971
        %v4244 = vunpack.c.l.b16 %v3972
        %v4245 = vunpack.c.l.b16 %v3973
        %v4246 = vunpack.c.l.b16 %v3974
        %v4247 = vunpack.c.l.b16 %v3975
        %v4248 = vunpack.c.l.b16 %v3976
        %v4249 = vunpack.c.l.b16 %v3977
        %v4250 = vunpack.c.l.b16 %v3978
        %v4251 = vunpack.c.l.b16 %v3979
        %v4252 = vunpack.c.l.b16 %v3980
        %v4253 = vunpack.c.l.b16 %v3981
        %v4254 = vunpack.c.l.b16 %v3982
        %v4255 = vunpack.c.l.b16 %v3983
        %v4256 = vunpack.c.l.b16 %v3984
        %v4257 = vunpack.c.l.b16 %v3985
        %v4258 = vunpack.c.l.b16 %v3986
        %v4259 = vunpack.c.l.b16 %v3987
        %v4260 = vunpack.c.l.b16 %v3988
        %v4261 = vunpack.c.l.b16 %v3989
        %v4262 = vunpack.c.l.b16 %v3990
        %v4263 = vunpack.c.l.b16 %v3991
        %v4264 = vunpack.c.l.b16 %v3992
        %v4265 = vunpack.c.l.b16 %v3993
        %v4266 = vunpack.c.l.b16 %v3994
        %v4267 = vunpack.c.l.b16 %v3995
        %v4268 = vunpack.c.l.b16 %v3996
        %v4269 = vunpack.c.l.b16 %v3997
        %v4270 = vunpack.c.l.b16 %v3998
        %v4271 = vunpack.c.l.b16 %v3999
        %v4272 = vunpack.c.l.b16 %v4000
        %v4273 = vunpack.c.l.b16 %v4001
        %v4274 = vunpack.c.l.b16 %v4002
        %v4275 = vunpack.c.l.b16 %v4003
        %v4276 = vunpack.c.l.b16 %v4004
        %v4277 = vunpack.c.l.b16 %v4005
        %v4278 = vunpack.c.l.b16 %v4006
        %v4279 = vunpack.c.l.b16 %v4007
        %v4280 = vunpack.c.l.b16 %v4008
        %v4281 = vunpack.c.l.b16 %v4009
        %v4282 = vunpack.c.l.b16 %v4010
        %v4283 = vunpack.c.l.b16 %v4011
        %v4284 = vunpack.c.l.b16 %v4012
        %v4285 = vunpack.c.l.b16 %v4013
        %v4286 = vunpack.c.l.b16 %v4014
        %v4287 = vunpack.c.l.b16 %v4015
        %v4288 = vunpack.c.l.b16 %v4016
        %v4289 = vunpack.c.l.b16 %v4017
        %v4290 = vunpack.c.l.b16 %v4018
        %v4291 = vunpack.c.l.b16 %v4019
        %v4292 = vunpack.c.l.b16 %v4020
        %v4293 = vunpack.c.l.b16 %v4021
        %v4294 = vunpack.c.l.b16 %v4022
        %v4295 = vunpack.c.l.b16 %v4023
        %v4296 = vunpack.c.l.b16 %v4024
        %v4297 = vunpack.c.l.b16 %v4025
        %v4298 = vunpack.c.l.b16 %v4026
        %v4299 = vunpack.c.l.b16 %v4027
        %v4300 = vunpack.c.l.b16 %v4028
        %v4301 = vunpack.c.l.b16 %v4029
        %v4302 = vunpack.c.l.b16 %v4030
        %v4303 = vunpack.c.l.b16 %v4031
        %v4304 = vunpack.c.l.b16 %v4032
        %v4305 = vunpack.c.l.b16 %v4033
        %v4306 = vunpack.c.l.b16 %v4034
        %v4307 = vunpack.c.l.b16 %v4035
        %v4308 = vunpack.c.l.b16 %v4036
        %v4309 = vunpack.c.l.b16 %v4037
        %v4310 = vunpack.c.l.b16 %v4038
        %v4311 = vunpack.c.l.b16 %v4039
        %v4312 = vunpack.c.l.b16 %v4040
        %v4313 = vunpack.c.l.b16 %v4041
        %v4314 = vunpack.c.l.b16 %v4042
        %v4315 = vunpack.c.l.b16 %v4043
        %v4316 = vunpack.c.l.b16 %v4044
        %v4317 = vunpack.c.l.b16 %v4045
        %v4318 = vunpack.c.l.b16 %v4046
        %v4319 = vunpack.c.l.b16 %v4047
        %v4320 = vunpack.c.l.b16 %v4048
        %v4321 = vunpack.c.l.b16 %v4049
        %v4322 = vunpack.c.l.b16 %v4050
        %v4323 = vunpack.c.l.b16 %v4051
        %v4324 = vunpack.c.l.b16 %v4052
        %v4325 = vunpack.c.l.b16 %v4053
        %v4326 = vunpack.c.l.b16 %v4054
        %v4327 = vunpack.c.l.b16 %v4055
        %v4328 = vunpack.c.l.b16 %v4056
        %v4329 = vunpack.c.l.b16 %v4057
        %v4330 = vunpack.c.l.b16 %v4058
        %v4331 = vunpack.c.l.b16 %v4059
        %v4332 = vunpack.c.l.b16 %v4060
        %v4333 = vunpack.c.l.b16 %v4061
        %v4334 = vunpack.c.l.b16 %v4062
        %v4335 = vunpack.c.l.b16 %v4063
        %v4336 = vunpack.c.l.b16 %v4064
        %v4337 = vunpack.c.l.b16 %v4065
        %v4338 = vunpack.c.l.b16 %v4066
        %v4339 = vunpack.c.l.b16 %v4067
        %v4340 = vunpack.c.l.b16 %v4068
        %v4341 = vunpack.c.l.b16 %v4069
        %v4342 = vunpack.c.l.b16 %v4070
        %v4343 = vunpack.c.l.b16 %v4071
        %v4344 = vunpack.c.l.b16 %v4072
        %v4345 = vunpack.c.l.b16 %v4073
        %v4346 = vunpack.c.l.b16 %v4074
        %v4347 = vunpack.c.l.b16 %v4075
        %v4348 = vunpack.c.l.b16 %v4076
        %v4349 = vpack.c.b16 %v4222, %v4221
        %v4350 = vpack.c.b16 %v4224, %v4223
        %v4351 = vpack.c.b16 %v4226, %v4225
        %v4352 = vpack.c.b16 %v4228, %v4227
        %v4353 = vpack.c.b16 %v4230, %v4229
        %v4354 = vpack.c.b16 %v4232, %v4231
        %v4355 = vpack.c.b16 %v4234, %v4233
        %v4356 = vpack.c.b16 %v4236, %v4235
        %v4357 = vpack.c.b16 %v4238, %v4237
        %v4358 = vpack.c.b16 %v4240, %v4239
        %v4359 = vpack.c.b16 %v4242, %v4241
        %v4360 = vpack.c.b16 %v4244, %v4243
        %v4361 = vpack.c.b16 %v4246, %v4245
        %v4362 = vpack.c.b16 %v4248, %v4247
        %v4363 = vpack.c.b16 %v4250, %v4249
        %v4364 = vpack.c.b16 %v4252, %v4251
        %v4365 = vpack.c.b16 %v4254, %v4253
        %v4366 = vpack.c.b16 %v4256, %v4255
        %v4367 = vpack.c.b16 %v4258, %v4257
        %v4368 = vpack.c.b16 %v4260, %v4259
        %v4369 = vpack.c.b16 %v4262, %v4261
        %v4370 = vpack.c.b16 %v4264, %v4263
        %v4371 = vpack.c.b16 %v4266, %v4265
        %v4372 = vpack.c.b16 %v4268, %v4267
        %v4373 = vpack.c.b16 %v4270, %v4269
        %v4374 = vpack.c.b16 %v4272, %v4271
        %v4375 = vpack.c.b16 %v4274, %v4273
        %v4376 = vpack.c.b16 %v4276, %v4275
        %v4377 = vpack.c.b16 %v4278, %v4277
        %v4378 = vpack.c.b16 %v4280, %v4279
        %v4379 = vpack.c.b16 %v4282, %v4281
        %v4380 = vpack.c.b16 %v4284, %v4283
        %v4381 = vpack.c.b16 %v4286, %v4285
        %v4382 = vpack.c.b16 %v4288, %v4287
        %v4383 = vpack.c.b16 %v4290, %v4289
        %v4384 = vpack.c.b16 %v4292, %v4291
        %v4385 = vpack.c.b16 %v4294, %v4293
        %v4386 = vpack.c.b16 %v4296, %v4295
        %v4387 = vpack.c.b16 %v4298, %v4297
        %v4388 = vpack.c.b16 %v4300, %v4299
        %v4389 = vpack.c.b16 %v4302, %v4301
        %v4390 = vpack.c.b16 %v4304, %v4303
        %v4391 = vpack.c.b16 %v4306, %v4305
        %v4392 = vpack.c.b16 %v4308, %v4307
        %v4393 = vpack.c.b16 %v4310, %v4309
        %v4394 = vpack.c.b16 %v4312, %v4311
        %v4395 = vpack.c.b16 %v4314, %v4313
        %v4396 = vpack.c.b16 %v4316, %v4315
        %v4397 = vpack.c.b16 %v4318, %v4317
        %v4398 = vpack.c.b16 %v4320, %v4319
        %v4399 = vpack.c.b16 %v4322, %v4321
        %v4400 = vpack.c.b16 %v4324, %v4323
        %v4401 = vpack.c.b16 %v4326, %v4325
        %v4402 = vpack.c.b16 %v4328, %v4327
        %v4403 = vpack.c.b16 %v4330, %v4329
        %v4404 = vpack.c.b16 %v4332, %v4331
        %v4405 = vpack.c.b16 %v4334, %v4333
        %v4406 = vpack.c.b16 %v4336, %v4335
        %v4407 = vpack.c.b16 %v4338, %v4337
        %v4408 = vpack.c.b16 %v4340, %v4339
        %v4409 = vpack.c.b16 %v4342, %v4341
        %v4410 = vpack.c.b16 %v4344, %v4343
        %v4411 = vpack.c.b16 %v4346, %v4345
        %v4412 = vpack.c.b16 %v4348, %v4347
        %4477 = vmatpush.bf16.msra.mxu0 %v4356
        %4478 = vmatpush.bf16.msra.mxu0 %v4355
        %4479 = vmatpush.bf16.msra.mxu0 %v4354
        %4480 = vmatpush.bf16.msra.mxu0 %v4353
        %4481 = vmatpush.bf16.msra.mxu0 %v4352
        %4482 = vmatpush.bf16.msra.mxu0 %v4351
        %4483 = vmatpush.bf16.msra.mxu0 %v4350
        %4484 = vmatpush.bf16.msra.mxu0 %v4349
        %4485 = vmatmul.bf16.gmra.mxu0 %v4077
        %v4486 = vpop.f32.mrf.mxu0
        %v4487 = vadd.f32 0.0, %v4486
        %v4488 = vpop.f32.mrf.mxu0
        %4489 = vdwg.mxu0
        %4490 = vmatpush.bf16.msra.mxu0 %v4364
        %4491 = vmatpush.bf16.msra.mxu0 %v4363
        %4492 = vmatpush.bf16.msra.mxu0 %v4362
        %4493 = vmatpush.bf16.msra.mxu0 %v4361
        %4494 = vmatpush.bf16.msra.mxu0 %v4360
        %4495 = vmatpush.bf16.msra.mxu0 %v4359
        %4496 = vmatpush.bf16.msra.mxu0 %v4358
        %4497 = vmatpush.bf16.msra.mxu0 %v4357
        %4498 = vmatmul.bf16.gmra.mxu0 %v4078
        %v4499 = vpop.f32.mrf.mxu0
        %v4500 = vadd.f32 %v4487, %v4499
        %v4501 = vpop.f32.mrf.mxu0
        %4502 = vdwg.mxu0
        %4503 = vmatpush.bf16.msra.mxu0 %v4372
        %4504 = vmatpush.bf16.msra.mxu0 %v4371
        %4505 = vmatpush.bf16.msra.mxu0 %v4370
        %4506 = vmatpush.bf16.msra.mxu0 %v4369
        %4507 = vmatpush.bf16.msra.mxu0 %v4368
        %4508 = vmatpush.bf16.msra.mxu0 %v4367
        %4509 = vmatpush.bf16.msra.mxu0 %v4366
        %4510 = vmatpush.bf16.msra.mxu0 %v4365
        %4511 = vmatmul.bf16.gmra.mxu0 %v4079
        %v4512 = vpop.f32.mrf.mxu0
        %v4513 = vadd.f32 %v4500, %v4512
        %v4514 = vpop.f32.mrf.mxu0
        %4515 = vdwg.mxu0
        %4516 = vmatpush.bf16.msra.mxu0 %v4380
        %4517 = vmatpush.bf16.msra.mxu0 %v4379
        %4518 = vmatpush.bf16.msra.mxu0 %v4378
        %4519 = vmatpush.bf16.msra.mxu0 %v4377
        %4520 = vmatpush.bf16.msra.mxu0 %v4376
        %4521 = vmatpush.bf16.msra.mxu0 %v4375
        %4522 = vmatpush.bf16.msra.mxu0 %v4374
        %4523 = vmatpush.bf16.msra.mxu0 %v4373
        %4524 = vmatmul.bf16.gmra.mxu0 %v4080
        %v4525 = vpop.f32.mrf.mxu0
        %v4526 = vadd.f32 %v4513, %v4525
        %v4527 = vpop.f32.mrf.mxu0
        %4528 = vdwg.mxu0
        %4529 = vmatpush.bf16.msra.mxu0 %v4388
        %4530 = vmatpush.bf16.msra.mxu0 %v4387
        %4531 = vmatpush.bf16.msra.mxu0 %v4386
        %4532 = vmatpush.bf16.msra.mxu0 %v4385
        %4533 = vmatpush.bf16.msra.mxu0 %v4384
        %4534 = vmatpush.bf16.msra.mxu0 %v4383
        %4535 = vmatpush.bf16.msra.mxu0 %v4382
        %4536 = vmatpush.bf16.msra.mxu0 %v4381
        %4537 = vmatmul.bf16.gmra.mxu0 %v4081
        %v4538 = vpop.f32.mrf.mxu0
        %v4539 = vadd.f32 %v4526, %v4538
        %v4540 = vpop.f32.mrf.mxu0
        %4541 = vdwg.mxu0
        %4542 = vmatpush.bf16.msra.mxu0 %v4396
        %4543 = vmatpush.bf16.msra.mxu0 %v4395
        %4544 = vmatpush.bf16.msra.mxu0 %v4394
        %4545 = vmatpush.bf16.msra.mxu0 %v4393
        %4546 = vmatpush.bf16.msra.mxu0 %v4392
        %4547 = vmatpush.bf16.msra.mxu0 %v4391
        %4548 = vmatpush.bf16.msra.mxu0 %v4390
        %4549 = vmatpush.bf16.msra.mxu0 %v4389
        %4550 = vmatmul.bf16.gmra.mxu0 %v4082
        %v4551 = vpop.f32.mrf.mxu0
        %v4552 = vadd.f32 %v4539, %v4551
        %v4553 = vpop.f32.mrf.mxu0
        %4554 = vdwg.mxu0
        %4555 = vmatpush.bf16.msra.mxu0 %v4404
        %4556 = vmatpush.bf16.msra.mxu0 %v4403
        %4557 = vmatpush.bf16.msra.mxu0 %v4402
        %4558 = vmatpush.bf16.msra.mxu0 %v4401
        %4559 = vmatpush.bf16.msra.mxu0 %v4400
        %4560 = vmatpush.bf16.msra.mxu0 %v4399
        %4561 = vmatpush.bf16.msra.mxu0 %v4398
        %4562 = vmatpush.bf16.msra.mxu0 %v4397
        %4563 = vmatmul.bf16.gmra.mxu0 %v4083
        %v4564 = vpop.f32.mrf.mxu0
        %v4565 = vadd.f32 %v4552, %v4564
        %v4566 = vpop.f32.mrf.mxu0
        %4567 = vdwg.mxu0
        %4568 = vmatpush.bf16.msra.mxu0 %v4412
        %4569 = vmatpush.bf16.msra.mxu0 %v4411
        %4570 = vmatpush.bf16.msra.mxu0 %v4410
        %4571 = vmatpush.bf16.msra.mxu0 %v4409
        %4572 = vmatpush.bf16.msra.mxu0 %v4408
        %4573 = vmatpush.bf16.msra.mxu0 %v4407
        %4574 = vmatpush.bf16.msra.mxu0 %v4406
        %4575 = vmatpush.bf16.msra.mxu0 %v4405
        %4576 = vmatmul.bf16.gmra.mxu0 %v4084
        %v4577 = vpop.f32.mrf.mxu0
        %v4578 = vadd.f32 %v4565, %v4577
        %v4579 = vpop.f32.mrf.mxu0
        %4580 = vdwg.mxu0
        %v4581 = vadd.f32 %v3947, %v4578
        %s4582 = scalar_lea.vmem %s3, 3072
        %v4583 = vld [vmem:[%s4582] sm:$0xf]
        %v4584 = vld [vmem:[%s4582 + $0x4] sm:$0xf]
        %v4585 = vld [vmem:[%s4582 + $0x8] sm:$0xf]
        %v4586 = vld [vmem:[%s4582 + $0xc] sm:$0xf]
        %v4587 = vld [vmem:[%s4582 + $0x10] sm:$0xf]
        %v4588 = vld [vmem:[%s4582 + $0x14] sm:$0xf]
        %v4589 = vld [vmem:[%s4582 + $0x18] sm:$0xf]
        %v4590 = vld [vmem:[%s4582 + $0x1c] sm:$0xf]
        %v4591 = vld [vmem:[%s4582 + $0x20] sm:$0xf]
        %v4592 = vld [vmem:[%s4582 + $0x24] sm:$0xf]
        %v4593 = vld [vmem:[%s4582 + $0x28] sm:$0xf]
        %v4594 = vld [vmem:[%s4582 + $0x2c] sm:$0xf]
        %v4595 = vld [vmem:[%s4582 + $0x30] sm:$0xf]
        %v4596 = vld [vmem:[%s4582 + $0x34] sm:$0xf]
        %v4597 = vld [vmem:[%s4582 + $0x38] sm:$0xf]
        %v4598 = vld [vmem:[%s4582 + $0x3c] sm:$0xf]
        %v4599 = vld [vmem:[%s4582 + $0x40] sm:$0xf]
        %v4600 = vld [vmem:[%s4582 + $0x44] sm:$0xf]
        %v4601 = vld [vmem:[%s4582 + $0x48] sm:$0xf]
        %v4602 = vld [vmem:[%s4582 + $0x4c] sm:$0xf]
        %v4603 = vld [vmem:[%s4582 + $0x50] sm:$0xf]
        %v4604 = vld [vmem:[%s4582 + $0x54] sm:$0xf]
        %v4605 = vld [vmem:[%s4582 + $0x58] sm:$0xf]
        %v4606 = vld [vmem:[%s4582 + $0x5c] sm:$0xf]
        %v4607 = vld [vmem:[%s4582 + $0x60] sm:$0xf]
        %v4608 = vld [vmem:[%s4582 + $0x64] sm:$0xf]
        %v4609 = vld [vmem:[%s4582 + $0x68] sm:$0xf]
        %v4610 = vld [vmem:[%s4582 + $0x6c] sm:$0xf]
        %v4611 = vld [vmem:[%s4582 + $0x70] sm:$0xf]
        %v4612 = vld [vmem:[%s4582 + $0x74] sm:$0xf]
        %v4613 = vld [vmem:[%s4582 + $0x78] sm:$0xf]
        %v4614 = vld [vmem:[%s4582 + $0x7c] sm:$0xf]
        %v4615 = vld [vmem:[%s4582 + $0x80] sm:$0xf]
        %v4616 = vld [vmem:[%s4582 + $0x84] sm:$0xf]
        %v4617 = vld [vmem:[%s4582 + $0x88] sm:$0xf]
        %v4618 = vld [vmem:[%s4582 + $0x8c] sm:$0xf]
        %v4619 = vld [vmem:[%s4582 + $0x90] sm:$0xf]
        %v4620 = vld [vmem:[%s4582 + $0x94] sm:$0xf]
        %v4621 = vld [vmem:[%s4582 + $0x98] sm:$0xf]
        %v4622 = vld [vmem:[%s4582 + $0x9c] sm:$0xf]
        %v4623 = vld [vmem:[%s4582 + $0xa0] sm:$0xf]
        %v4624 = vld [vmem:[%s4582 + $0xa4] sm:$0xf]
        %v4625 = vld [vmem:[%s4582 + $0xa8] sm:$0xf]
        %v4626 = vld [vmem:[%s4582 + $0xac] sm:$0xf]
        %v4627 = vld [vmem:[%s4582 + $0xb0] sm:$0xf]
        %v4628 = vld [vmem:[%s4582 + $0xb4] sm:$0xf]
        %v4629 = vld [vmem:[%s4582 + $0xb8] sm:$0xf]
        %v4630 = vld [vmem:[%s4582 + $0xbc] sm:$0xf]
        %v4631 = vld [vmem:[%s4582 + $0xc0] sm:$0xf]
        %v4632 = vld [vmem:[%s4582 + $0xc4] sm:$0xf]
        %v4633 = vld [vmem:[%s4582 + $0xc8] sm:$0xf]
        %v4634 = vld [vmem:[%s4582 + $0xcc] sm:$0xf]
        %v4635 = vld [vmem:[%s4582 + $0xd0] sm:$0xf]
        %v4636 = vld [vmem:[%s4582 + $0xd4] sm:$0xf]
        %v4637 = vld [vmem:[%s4582 + $0xd8] sm:$0xf]
        %v4638 = vld [vmem:[%s4582 + $0xdc] sm:$0xf]
        %v4639 = vld [vmem:[%s4582 + $0xe0] sm:$0xf]
        %v4640 = vld [vmem:[%s4582 + $0xe4] sm:$0xf]
        %v4641 = vld [vmem:[%s4582 + $0xe8] sm:$0xf]
        %v4642 = vld [vmem:[%s4582 + $0xec] sm:$0xf]
        %v4643 = vld [vmem:[%s4582 + $0xf0] sm:$0xf]
        %v4644 = vld [vmem:[%s4582 + $0xf4] sm:$0xf]
        %v4645 = vld [vmem:[%s4582 + $0xf8] sm:$0xf]
        %v4646 = vld [vmem:[%s4582 + $0xfc] sm:$0xf]
        %v4647 = vld [vmem:[%s4582 + $0x100] sm:$0xf]
        %v4648 = vld [vmem:[%s4582 + $0x104] sm:$0xf]
        %v4649 = vld [vmem:[%s4582 + $0x108] sm:$0xf]
        %v4650 = vld [vmem:[%s4582 + $0x10c] sm:$0xf]
        %v4651 = vld [vmem:[%s4582 + $0x110] sm:$0xf]
        %v4652 = vld [vmem:[%s4582 + $0x114] sm:$0xf]
        %v4653 = vld [vmem:[%s4582 + $0x118] sm:$0xf]
        %v4654 = vld [vmem:[%s4582 + $0x11c] sm:$0xf]
        %v4655 = vld [vmem:[%s4582 + $0x120] sm:$0xf]
        %v4656 = vld [vmem:[%s4582 + $0x124] sm:$0xf]
        %v4657 = vld [vmem:[%s4582 + $0x128] sm:$0xf]
        %v4658 = vld [vmem:[%s4582 + $0x12c] sm:$0xf]
        %v4659 = vld [vmem:[%s4582 + $0x130] sm:$0xf]
        %v4660 = vld [vmem:[%s4582 + $0x134] sm:$0xf]
        %v4661 = vld [vmem:[%s4582 + $0x138] sm:$0xf]
        %v4662 = vld [vmem:[%s4582 + $0x13c] sm:$0xf]
        %v4663 = vld [vmem:[%s4582 + $0x140] sm:$0xf]
        %v4664 = vld [vmem:[%s4582 + $0x144] sm:$0xf]
        %v4665 = vld [vmem:[%s4582 + $0x148] sm:$0xf]
        %v4666 = vld [vmem:[%s4582 + $0x14c] sm:$0xf]
        %v4667 = vld [vmem:[%s4582 + $0x150] sm:$0xf]
        %v4668 = vld [vmem:[%s4582 + $0x154] sm:$0xf]
        %v4669 = vld [vmem:[%s4582 + $0x158] sm:$0xf]
        %v4670 = vld [vmem:[%s4582 + $0x15c] sm:$0xf]
        %v4671 = vld [vmem:[%s4582 + $0x160] sm:$0xf]
        %v4672 = vld [vmem:[%s4582 + $0x164] sm:$0xf]
        %v4673 = vld [vmem:[%s4582 + $0x168] sm:$0xf]
        %v4674 = vld [vmem:[%s4582 + $0x16c] sm:$0xf]
        %v4675 = vld [vmem:[%s4582 + $0x170] sm:$0xf]
        %v4676 = vld [vmem:[%s4582 + $0x174] sm:$0xf]
        %v4677 = vld [vmem:[%s4582 + $0x178] sm:$0xf]
        %v4678 = vld [vmem:[%s4582 + $0x17c] sm:$0xf]
        %v4679 = vld [vmem:[%s4582 + $0x180] sm:$0xf]
        %v4680 = vld [vmem:[%s4582 + $0x184] sm:$0xf]
        %v4681 = vld [vmem:[%s4582 + $0x188] sm:$0xf]
        %v4682 = vld [vmem:[%s4582 + $0x18c] sm:$0xf]
        %v4683 = vld [vmem:[%s4582 + $0x190] sm:$0xf]
        %v4684 = vld [vmem:[%s4582 + $0x194] sm:$0xf]
        %v4685 = vld [vmem:[%s4582 + $0x198] sm:$0xf]
        %v4686 = vld [vmem:[%s4582 + $0x19c] sm:$0xf]
        %v4687 = vld [vmem:[%s4582 + $0x1a0] sm:$0xf]
        %v4688 = vld [vmem:[%s4582 + $0x1a4] sm:$0xf]
        %v4689 = vld [vmem:[%s4582 + $0x1a8] sm:$0xf]
        %v4690 = vld [vmem:[%s4582 + $0x1ac] sm:$0xf]
        %v4691 = vld [vmem:[%s4582 + $0x1b0] sm:$0xf]
        %v4692 = vld [vmem:[%s4582 + $0x1b4] sm:$0xf]
        %v4693 = vld [vmem:[%s4582 + $0x1b8] sm:$0xf]
        %v4694 = vld [vmem:[%s4582 + $0x1bc] sm:$0xf]
        %v4695 = vld [vmem:[%s4582 + $0x1c0] sm:$0xf]
        %v4696 = vld [vmem:[%s4582 + $0x1c4] sm:$0xf]
        %v4697 = vld [vmem:[%s4582 + $0x1c8] sm:$0xf]
        %v4698 = vld [vmem:[%s4582 + $0x1cc] sm:$0xf]
        %v4699 = vld [vmem:[%s4582 + $0x1d0] sm:$0xf]
        %v4700 = vld [vmem:[%s4582 + $0x1d4] sm:$0xf]
        %v4701 = vld [vmem:[%s4582 + $0x1d8] sm:$0xf]
        %v4702 = vld [vmem:[%s4582 + $0x1dc] sm:$0xf]
        %v4703 = vld [vmem:[%s4582 + $0x1e0] sm:$0xf]
        %v4704 = vld [vmem:[%s4582 + $0x1e4] sm:$0xf]
        %v4705 = vld [vmem:[%s4582 + $0x1e8] sm:$0xf]
        %v4706 = vld [vmem:[%s4582 + $0x1ec] sm:$0xf]
        %v4707 = vld [vmem:[%s4582 + $0x1f0] sm:$0xf]
        %v4708 = vld [vmem:[%s4582 + $0x1f4] sm:$0xf]
        %v4709 = vld [vmem:[%s4582 + $0x1f8] sm:$0xf]
        %v4710 = vld [vmem:[%s4582 + $0x1fc] sm:$0xf]
        %v4711 = vrot.slane %v765, 3
        %v4712 = vrot.slane %v766, 3
        %v4713 = vrot.slane %v767, 3
        %v4714 = vrot.slane %v768, 3
        %v4715 = vrot.slane %v769, 3
        %v4716 = vrot.slane %v770, 3
        %v4717 = vrot.slane %v771, 3
        %v4718 = vrot.slane %v772, 3
        %v4855 = vunpack.c.l.b16 %v4583
        %v4856 = vunpack.c.l.b16 %v4584
        %v4857 = vunpack.c.l.b16 %v4585
        %v4858 = vunpack.c.l.b16 %v4586
        %v4859 = vunpack.c.l.b16 %v4587
        %v4860 = vunpack.c.l.b16 %v4588
        %v4861 = vunpack.c.l.b16 %v4589
        %v4862 = vunpack.c.l.b16 %v4590
        %v4863 = vunpack.c.l.b16 %v4591
        %v4864 = vunpack.c.l.b16 %v4592
        %v4865 = vunpack.c.l.b16 %v4593
        %v4866 = vunpack.c.l.b16 %v4594
        %v4867 = vunpack.c.l.b16 %v4595
        %v4868 = vunpack.c.l.b16 %v4596
        %v4869 = vunpack.c.l.b16 %v4597
        %v4870 = vunpack.c.l.b16 %v4598
        %v4871 = vunpack.c.l.b16 %v4599
        %v4872 = vunpack.c.l.b16 %v4600
        %v4873 = vunpack.c.l.b16 %v4601
        %v4874 = vunpack.c.l.b16 %v4602
        %v4875 = vunpack.c.l.b16 %v4603
        %v4876 = vunpack.c.l.b16 %v4604
        %v4877 = vunpack.c.l.b16 %v4605
        %v4878 = vunpack.c.l.b16 %v4606
        %v4879 = vunpack.c.l.b16 %v4607
        %v4880 = vunpack.c.l.b16 %v4608
        %v4881 = vunpack.c.l.b16 %v4609
        %v4882 = vunpack.c.l.b16 %v4610
        %v4883 = vunpack.c.l.b16 %v4611
        %v4884 = vunpack.c.l.b16 %v4612
        %v4885 = vunpack.c.l.b16 %v4613
        %v4886 = vunpack.c.l.b16 %v4614
        %v4887 = vunpack.c.l.b16 %v4615
        %v4888 = vunpack.c.l.b16 %v4616
        %v4889 = vunpack.c.l.b16 %v4617
        %v4890 = vunpack.c.l.b16 %v4618
        %v4891 = vunpack.c.l.b16 %v4619
        %v4892 = vunpack.c.l.b16 %v4620
        %v4893 = vunpack.c.l.b16 %v4621
        %v4894 = vunpack.c.l.b16 %v4622
        %v4895 = vunpack.c.l.b16 %v4623
        %v4896 = vunpack.c.l.b16 %v4624
        %v4897 = vunpack.c.l.b16 %v4625
        %v4898 = vunpack.c.l.b16 %v4626
        %v4899 = vunpack.c.l.b16 %v4627
        %v4900 = vunpack.c.l.b16 %v4628
        %v4901 = vunpack.c.l.b16 %v4629
        %v4902 = vunpack.c.l.b16 %v4630
        %v4903 = vunpack.c.l.b16 %v4631
        %v4904 = vunpack.c.l.b16 %v4632
        %v4905 = vunpack.c.l.b16 %v4633
        %v4906 = vunpack.c.l.b16 %v4634
        %v4907 = vunpack.c.l.b16 %v4635
        %v4908 = vunpack.c.l.b16 %v4636
        %v4909 = vunpack.c.l.b16 %v4637
        %v4910 = vunpack.c.l.b16 %v4638
        %v4911 = vunpack.c.l.b16 %v4639
        %v4912 = vunpack.c.l.b16 %v4640
        %v4913 = vunpack.c.l.b16 %v4641
        %v4914 = vunpack.c.l.b16 %v4642
        %v4915 = vunpack.c.l.b16 %v4643
        %v4916 = vunpack.c.l.b16 %v4644
        %v4917 = vunpack.c.l.b16 %v4645
        %v4918 = vunpack.c.l.b16 %v4646
        %v4919 = vunpack.c.l.b16 %v4647
        %v4920 = vunpack.c.l.b16 %v4648
        %v4921 = vunpack.c.l.b16 %v4649
        %v4922 = vunpack.c.l.b16 %v4650
        %v4923 = vunpack.c.l.b16 %v4651
        %v4924 = vunpack.c.l.b16 %v4652
        %v4925 = vunpack.c.l.b16 %v4653
        %v4926 = vunpack.c.l.b16 %v4654
        %v4927 = vunpack.c.l.b16 %v4655
        %v4928 = vunpack.c.l.b16 %v4656
        %v4929 = vunpack.c.l.b16 %v4657
        %v4930 = vunpack.c.l.b16 %v4658
        %v4931 = vunpack.c.l.b16 %v4659
        %v4932 = vunpack.c.l.b16 %v4660
        %v4933 = vunpack.c.l.b16 %v4661
        %v4934 = vunpack.c.l.b16 %v4662
        %v4935 = vunpack.c.l.b16 %v4663
        %v4936 = vunpack.c.l.b16 %v4664
        %v4937 = vunpack.c.l.b16 %v4665
        %v4938 = vunpack.c.l.b16 %v4666
        %v4939 = vunpack.c.l.b16 %v4667
        %v4940 = vunpack.c.l.b16 %v4668
        %v4941 = vunpack.c.l.b16 %v4669
        %v4942 = vunpack.c.l.b16 %v4670
        %v4943 = vunpack.c.l.b16 %v4671
        %v4944 = vunpack.c.l.b16 %v4672
        %v4945 = vunpack.c.l.b16 %v4673
        %v4946 = vunpack.c.l.b16 %v4674
        %v4947 = vunpack.c.l.b16 %v4675
        %v4948 = vunpack.c.l.b16 %v4676
        %v4949 = vunpack.c.l.b16 %v4677
        %v4950 = vunpack.c.l.b16 %v4678
        %v4951 = vunpack.c.l.b16 %v4679
        %v4952 = vunpack.c.l.b16 %v4680
        %v4953 = vunpack.c.l.b16 %v4681
        %v4954 = vunpack.c.l.b16 %v4682
        %v4955 = vunpack.c.l.b16 %v4683
        %v4956 = vunpack.c.l.b16 %v4684
        %v4957 = vunpack.c.l.b16 %v4685
        %v4958 = vunpack.c.l.b16 %v4686
        %v4959 = vunpack.c.l.b16 %v4687
        %v4960 = vunpack.c.l.b16 %v4688
        %v4961 = vunpack.c.l.b16 %v4689
        %v4962 = vunpack.c.l.b16 %v4690
        %v4963 = vunpack.c.l.b16 %v4691
        %v4964 = vunpack.c.l.b16 %v4692
        %v4965 = vunpack.c.l.b16 %v4693
        %v4966 = vunpack.c.l.b16 %v4694
        %v4967 = vunpack.c.l.b16 %v4695
        %v4968 = vunpack.c.l.b16 %v4696
        %v4969 = vunpack.c.l.b16 %v4697
        %v4970 = vunpack.c.l.b16 %v4698
        %v4971 = vunpack.c.l.b16 %v4699
        %v4972 = vunpack.c.l.b16 %v4700
        %v4973 = vunpack.c.l.b16 %v4701
        %v4974 = vunpack.c.l.b16 %v4702
        %v4975 = vunpack.c.l.b16 %v4703
        %v4976 = vunpack.c.l.b16 %v4704
        %v4977 = vunpack.c.l.b16 %v4705
        %v4978 = vunpack.c.l.b16 %v4706
        %v4979 = vunpack.c.l.b16 %v4707
        %v4980 = vunpack.c.l.b16 %v4708
        %v4981 = vunpack.c.l.b16 %v4709
        %v4982 = vunpack.c.l.b16 %v4710
        %v4983 = vpack.c.b16 %v4856, %v4855
        %v4984 = vpack.c.b16 %v4858, %v4857
        %v4985 = vpack.c.b16 %v4860, %v4859
        %v4986 = vpack.c.b16 %v4862, %v4861
        %v4987 = vpack.c.b16 %v4864, %v4863
        %v4988 = vpack.c.b16 %v4866, %v4865
        %v4989 = vpack.c.b16 %v4868, %v4867
        %v4990 = vpack.c.b16 %v4870, %v4869
        %v4991 = vpack.c.b16 %v4872, %v4871
        %v4992 = vpack.c.b16 %v4874, %v4873
        %v4993 = vpack.c.b16 %v4876, %v4875
        %v4994 = vpack.c.b16 %v4878, %v4877
        %v4995 = vpack.c.b16 %v4880, %v4879
        %v4996 = vpack.c.b16 %v4882, %v4881
        %v4997 = vpack.c.b16 %v4884, %v4883
        %v4998 = vpack.c.b16 %v4886, %v4885
        %v4999 = vpack.c.b16 %v4888, %v4887
        %v5000 = vpack.c.b16 %v4890, %v4889
        %v5001 = vpack.c.b16 %v4892, %v4891
        %v5002 = vpack.c.b16 %v4894, %v4893
        %v5003 = vpack.c.b16 %v4896, %v4895
        %v5004 = vpack.c.b16 %v4898, %v4897
        %v5005 = vpack.c.b16 %v4900, %v4899
        %v5006 = vpack.c.b16 %v4902, %v4901
        %v5007 = vpack.c.b16 %v4904, %v4903
        %v5008 = vpack.c.b16 %v4906, %v4905
        %v5009 = vpack.c.b16 %v4908, %v4907
        %v5010 = vpack.c.b16 %v4910, %v4909
        %v5011 = vpack.c.b16 %v4912, %v4911
        %v5012 = vpack.c.b16 %v4914, %v4913
        %v5013 = vpack.c.b16 %v4916, %v4915
        %v5014 = vpack.c.b16 %v4918, %v4917
        %v5015 = vpack.c.b16 %v4920, %v4919
        %v5016 = vpack.c.b16 %v4922, %v4921
        %v5017 = vpack.c.b16 %v4924, %v4923
        %v5018 = vpack.c.b16 %v4926, %v4925
        %v5019 = vpack.c.b16 %v4928, %v4927
        %v5020 = vpack.c.b16 %v4930, %v4929
        %v5021 = vpack.c.b16 %v4932, %v4931
        %v5022 = vpack.c.b16 %v4934, %v4933
        %v5023 = vpack.c.b16 %v4936, %v4935
        %v5024 = vpack.c.b16 %v4938, %v4937
        %v5025 = vpack.c.b16 %v4940, %v4939
        %v5026 = vpack.c.b16 %v4942, %v4941
        %v5027 = vpack.c.b16 %v4944, %v4943
        %v5028 = vpack.c.b16 %v4946, %v4945
        %v5029 = vpack.c.b16 %v4948, %v4947
        %v5030 = vpack.c.b16 %v4950, %v4949
        %v5031 = vpack.c.b16 %v4952, %v4951
        %v5032 = vpack.c.b16 %v4954, %v4953
        %v5033 = vpack.c.b16 %v4956, %v4955
        %v5034 = vpack.c.b16 %v4958, %v4957
        %v5035 = vpack.c.b16 %v4960, %v4959
        %v5036 = vpack.c.b16 %v4962, %v4961
        %v5037 = vpack.c.b16 %v4964, %v4963
        %v5038 = vpack.c.b16 %v4966, %v4965
        %v5039 = vpack.c.b16 %v4968, %v4967
        %v5040 = vpack.c.b16 %v4970, %v4969
        %v5041 = vpack.c.b16 %v4972, %v4971
        %v5042 = vpack.c.b16 %v4974, %v4973
        %v5043 = vpack.c.b16 %v4976, %v4975
        %v5044 = vpack.c.b16 %v4978, %v4977
        %v5045 = vpack.c.b16 %v4980, %v4979
        %v5046 = vpack.c.b16 %v4982, %v4981
        %5111 = vmatpush.bf16.msra.mxu0 %v4990
        %5112 = vmatpush.bf16.msra.mxu0 %v4989
        %5113 = vmatpush.bf16.msra.mxu0 %v4988
        %5114 = vmatpush.bf16.msra.mxu0 %v4987
        %5115 = vmatpush.bf16.msra.mxu0 %v4986
        %5116 = vmatpush.bf16.msra.mxu0 %v4985
        %5117 = vmatpush.bf16.msra.mxu0 %v4984
        %5118 = vmatpush.bf16.msra.mxu0 %v4983
        %5119 = vmatmul.bf16.gmra.mxu0 %v4711
        %v5120 = vpop.f32.mrf.mxu0
        %v5121 = vadd.f32 0.0, %v5120
        %v5122 = vpop.f32.mrf.mxu0
        %5123 = vdwg.mxu0
        %5124 = vmatpush.bf16.msra.mxu0 %v4998
        %5125 = vmatpush.bf16.msra.mxu0 %v4997
        %5126 = vmatpush.bf16.msra.mxu0 %v4996
        %5127 = vmatpush.bf16.msra.mxu0 %v4995
        %5128 = vmatpush.bf16.msra.mxu0 %v4994
        %5129 = vmatpush.bf16.msra.mxu0 %v4993
        %5130 = vmatpush.bf16.msra.mxu0 %v4992
        %5131 = vmatpush.bf16.msra.mxu0 %v4991
        %5132 = vmatmul.bf16.gmra.mxu0 %v4712
        %v5133 = vpop.f32.mrf.mxu0
        %v5134 = vadd.f32 %v5121, %v5133
        %v5135 = vpop.f32.mrf.mxu0
        %5136 = vdwg.mxu0
        %5137 = vmatpush.bf16.msra.mxu0 %v5006
        %5138 = vmatpush.bf16.msra.mxu0 %v5005
        %5139 = vmatpush.bf16.msra.mxu0 %v5004
        %5140 = vmatpush.bf16.msra.mxu0 %v5003
        %5141 = vmatpush.bf16.msra.mxu0 %v5002
        %5142 = vmatpush.bf16.msra.mxu0 %v5001
        %5143 = vmatpush.bf16.msra.mxu0 %v5000
        %5144 = vmatpush.bf16.msra.mxu0 %v4999
        %5145 = vmatmul.bf16.gmra.mxu0 %v4713
        %v5146 = vpop.f32.mrf.mxu0
        %v5147 = vadd.f32 %v5134, %v5146
        %v5148 = vpop.f32.mrf.mxu0
        %5149 = vdwg.mxu0
        %5150 = vmatpush.bf16.msra.mxu0 %v5014
        %5151 = vmatpush.bf16.msra.mxu0 %v5013
        %5152 = vmatpush.bf16.msra.mxu0 %v5012
        %5153 = vmatpush.bf16.msra.mxu0 %v5011
        %5154 = vmatpush.bf16.msra.mxu0 %v5010
        %5155 = vmatpush.bf16.msra.mxu0 %v5009
        %5156 = vmatpush.bf16.msra.mxu0 %v5008
        %5157 = vmatpush.bf16.msra.mxu0 %v5007
        %5158 = vmatmul.bf16.gmra.mxu0 %v4714
        %v5159 = vpop.f32.mrf.mxu0
        %v5160 = vadd.f32 %v5147, %v5159
        %v5161 = vpop.f32.mrf.mxu0
        %5162 = vdwg.mxu0
        %5163 = vmatpush.bf16.msra.mxu0 %v5022
        %5164 = vmatpush.bf16.msra.mxu0 %v5021
        %5165 = vmatpush.bf16.msra.mxu0 %v5020
        %5166 = vmatpush.bf16.msra.mxu0 %v5019
        %5167 = vmatpush.bf16.msra.mxu0 %v5018
        %5168 = vmatpush.bf16.msra.mxu0 %v5017
        %5169 = vmatpush.bf16.msra.mxu0 %v5016
        %5170 = vmatpush.bf16.msra.mxu0 %v5015
        %5171 = vmatmul.bf16.gmra.mxu0 %v4715
        %v5172 = vpop.f32.mrf.mxu0
        %v5173 = vadd.f32 %v5160, %v5172
        %v5174 = vpop.f32.mrf.mxu0
        %5175 = vdwg.mxu0
        %5176 = vmatpush.bf16.msra.mxu0 %v5030
        %5177 = vmatpush.bf16.msra.mxu0 %v5029
        %5178 = vmatpush.bf16.msra.mxu0 %v5028
        %5179 = vmatpush.bf16.msra.mxu0 %v5027
        %5180 = vmatpush.bf16.msra.mxu0 %v5026
        %5181 = vmatpush.bf16.msra.mxu0 %v5025
        %5182 = vmatpush.bf16.msra.mxu0 %v5024
        %5183 = vmatpush.bf16.msra.mxu0 %v5023
        %5184 = vmatmul.bf16.gmra.mxu0 %v4716
        %v5185 = vpop.f32.mrf.mxu0
        %v5186 = vadd.f32 %v5173, %v5185
        %v5187 = vpop.f32.mrf.mxu0
        %5188 = vdwg.mxu0
        %5189 = vmatpush.bf16.msra.mxu0 %v5038
        %5190 = vmatpush.bf16.msra.mxu0 %v5037
        %5191 = vmatpush.bf16.msra.mxu0 %v5036
        %5192 = vmatpush.bf16.msra.mxu0 %v5035
        %5193 = vmatpush.bf16.msra.mxu0 %v5034
        %5194 = vmatpush.bf16.msra.mxu0 %v5033
        %5195 = vmatpush.bf16.msra.mxu0 %v5032
        %5196 = vmatpush.bf16.msra.mxu0 %v5031
        %5197 = vmatmul.bf16.gmra.mxu0 %v4717
        %v5198 = vpop.f32.mrf.mxu0
        %v5199 = vadd.f32 %v5186, %v5198
        %v5200 = vpop.f32.mrf.mxu0
        %5201 = vdwg.mxu0
        %5202 = vmatpush.bf16.msra.mxu0 %v5046
        %5203 = vmatpush.bf16.msra.mxu0 %v5045
        %5204 = vmatpush.bf16.msra.mxu0 %v5044
        %5205 = vmatpush.bf16.msra.mxu0 %v5043
        %5206 = vmatpush.bf16.msra.mxu0 %v5042
        %5207 = vmatpush.bf16.msra.mxu0 %v5041
        %5208 = vmatpush.bf16.msra.mxu0 %v5040
        %5209 = vmatpush.bf16.msra.mxu0 %v5039
        %5210 = vmatmul.bf16.gmra.mxu0 %v4718
        %v5211 = vpop.f32.mrf.mxu0
        %v5212 = vadd.f32 %v5199, %v5211
        %v5213 = vpop.f32.mrf.mxu0
        %5214 = vdwg.mxu0
        %v5215 = vadd.f32 %v4581, %v5212
        %s5216 = scalar_lea.vmem %s3, 3584
        %v5217 = vld [vmem:[%s5216] sm:$0xf]
        %v5218 = vld [vmem:[%s5216 + $0x4] sm:$0xf]
        %v5219 = vld [vmem:[%s5216 + $0x8] sm:$0xf]
        %v5220 = vld [vmem:[%s5216 + $0xc] sm:$0xf]
        %v5221 = vld [vmem:[%s5216 + $0x10] sm:$0xf]
        %v5222 = vld [vmem:[%s5216 + $0x14] sm:$0xf]
        %v5223 = vld [vmem:[%s5216 + $0x18] sm:$0xf]
        %v5224 = vld [vmem:[%s5216 + $0x1c] sm:$0xf]
        %v5225 = vld [vmem:[%s5216 + $0x20] sm:$0xf]
        %v5226 = vld [vmem:[%s5216 + $0x24] sm:$0xf]
        %v5227 = vld [vmem:[%s5216 + $0x28] sm:$0xf]
        %v5228 = vld [vmem:[%s5216 + $0x2c] sm:$0xf]
        %v5229 = vld [vmem:[%s5216 + $0x30] sm:$0xf]
        %v5230 = vld [vmem:[%s5216 + $0x34] sm:$0xf]
        %v5231 = vld [vmem:[%s5216 + $0x38] sm:$0xf]
        %v5232 = vld [vmem:[%s5216 + $0x3c] sm:$0xf]
        %v5233 = vld [vmem:[%s5216 + $0x40] sm:$0xf]
        %v5234 = vld [vmem:[%s5216 + $0x44] sm:$0xf]
        %v5235 = vld [vmem:[%s5216 + $0x48] sm:$0xf]
        %v5236 = vld [vmem:[%s5216 + $0x4c] sm:$0xf]
        %v5237 = vld [vmem:[%s5216 + $0x50] sm:$0xf]
        %v5238 = vld [vmem:[%s5216 + $0x54] sm:$0xf]
        %v5239 = vld [vmem:[%s5216 + $0x58] sm:$0xf]
        %v5240 = vld [vmem:[%s5216 + $0x5c] sm:$0xf]
        %v5241 = vld [vmem:[%s5216 + $0x60] sm:$0xf]
        %v5242 = vld [vmem:[%s5216 + $0x64] sm:$0xf]
        %v5243 = vld [vmem:[%s5216 + $0x68] sm:$0xf]
        %v5244 = vld [vmem:[%s5216 + $0x6c] sm:$0xf]
        %v5245 = vld [vmem:[%s5216 + $0x70] sm:$0xf]
        %v5246 = vld [vmem:[%s5216 + $0x74] sm:$0xf]
        %v5247 = vld [vmem:[%s5216 + $0x78] sm:$0xf]
        %v5248 = vld [vmem:[%s5216 + $0x7c] sm:$0xf]
        %v5249 = vld [vmem:[%s5216 + $0x80] sm:$0xf]
        %v5250 = vld [vmem:[%s5216 + $0x84] sm:$0xf]
        %v5251 = vld [vmem:[%s5216 + $0x88] sm:$0xf]
        %v5252 = vld [vmem:[%s5216 + $0x8c] sm:$0xf]
        %v5253 = vld [vmem:[%s5216 + $0x90] sm:$0xf]
        %v5254 = vld [vmem:[%s5216 + $0x94] sm:$0xf]
        %v5255 = vld [vmem:[%s5216 + $0x98] sm:$0xf]
        %v5256 = vld [vmem:[%s5216 + $0x9c] sm:$0xf]
        %v5257 = vld [vmem:[%s5216 + $0xa0] sm:$0xf]
        %v5258 = vld [vmem:[%s5216 + $0xa4] sm:$0xf]
        %v5259 = vld [vmem:[%s5216 + $0xa8] sm:$0xf]
        %v5260 = vld [vmem:[%s5216 + $0xac] sm:$0xf]
        %v5261 = vld [vmem:[%s5216 + $0xb0] sm:$0xf]
        %v5262 = vld [vmem:[%s5216 + $0xb4] sm:$0xf]
        %v5263 = vld [vmem:[%s5216 + $0xb8] sm:$0xf]
        %v5264 = vld [vmem:[%s5216 + $0xbc] sm:$0xf]
        %v5265 = vld [vmem:[%s5216 + $0xc0] sm:$0xf]
        %v5266 = vld [vmem:[%s5216 + $0xc4] sm:$0xf]
        %v5267 = vld [vmem:[%s5216 + $0xc8] sm:$0xf]
        %v5268 = vld [vmem:[%s5216 + $0xcc] sm:$0xf]
        %v5269 = vld [vmem:[%s5216 + $0xd0] sm:$0xf]
        %v5270 = vld [vmem:[%s5216 + $0xd4] sm:$0xf]
        %v5271 = vld [vmem:[%s5216 + $0xd8] sm:$0xf]
        %v5272 = vld [vmem:[%s5216 + $0xdc] sm:$0xf]
        %v5273 = vld [vmem:[%s5216 + $0xe0] sm:$0xf]
        %v5274 = vld [vmem:[%s5216 + $0xe4] sm:$0xf]
        %v5275 = vld [vmem:[%s5216 + $0xe8] sm:$0xf]
        %v5276 = vld [vmem:[%s5216 + $0xec] sm:$0xf]
        %v5277 = vld [vmem:[%s5216 + $0xf0] sm:$0xf]
        %v5278 = vld [vmem:[%s5216 + $0xf4] sm:$0xf]
        %v5279 = vld [vmem:[%s5216 + $0xf8] sm:$0xf]
        %v5280 = vld [vmem:[%s5216 + $0xfc] sm:$0xf]
        %v5281 = vld [vmem:[%s5216 + $0x100] sm:$0xf]
        %v5282 = vld [vmem:[%s5216 + $0x104] sm:$0xf]
        %v5283 = vld [vmem:[%s5216 + $0x108] sm:$0xf]
        %v5284 = vld [vmem:[%s5216 + $0x10c] sm:$0xf]
        %v5285 = vld [vmem:[%s5216 + $0x110] sm:$0xf]
        %v5286 = vld [vmem:[%s5216 + $0x114] sm:$0xf]
        %v5287 = vld [vmem:[%s5216 + $0x118] sm:$0xf]
        %v5288 = vld [vmem:[%s5216 + $0x11c] sm:$0xf]
        %v5289 = vld [vmem:[%s5216 + $0x120] sm:$0xf]
        %v5290 = vld [vmem:[%s5216 + $0x124] sm:$0xf]
        %v5291 = vld [vmem:[%s5216 + $0x128] sm:$0xf]
        %v5292 = vld [vmem:[%s5216 + $0x12c] sm:$0xf]
        %v5293 = vld [vmem:[%s5216 + $0x130] sm:$0xf]
        %v5294 = vld [vmem:[%s5216 + $0x134] sm:$0xf]
        %v5295 = vld [vmem:[%s5216 + $0x138] sm:$0xf]
        %v5296 = vld [vmem:[%s5216 + $0x13c] sm:$0xf]
        %v5297 = vld [vmem:[%s5216 + $0x140] sm:$0xf]
        %v5298 = vld [vmem:[%s5216 + $0x144] sm:$0xf]
        %v5299 = vld [vmem:[%s5216 + $0x148] sm:$0xf]
        %v5300 = vld [vmem:[%s5216 + $0x14c] sm:$0xf]
        %v5301 = vld [vmem:[%s5216 + $0x150] sm:$0xf]
        %v5302 = vld [vmem:[%s5216 + $0x154] sm:$0xf]
        %v5303 = vld [vmem:[%s5216 + $0x158] sm:$0xf]
        %v5304 = vld [vmem:[%s5216 + $0x15c] sm:$0xf]
        %v5305 = vld [vmem:[%s5216 + $0x160] sm:$0xf]
        %v5306 = vld [vmem:[%s5216 + $0x164] sm:$0xf]
        %v5307 = vld [vmem:[%s5216 + $0x168] sm:$0xf]
        %v5308 = vld [vmem:[%s5216 + $0x16c] sm:$0xf]
        %v5309 = vld [vmem:[%s5216 + $0x170] sm:$0xf]
        %v5310 = vld [vmem:[%s5216 + $0x174] sm:$0xf]
        %v5311 = vld [vmem:[%s5216 + $0x178] sm:$0xf]
        %v5312 = vld [vmem:[%s5216 + $0x17c] sm:$0xf]
        %v5313 = vld [vmem:[%s5216 + $0x180] sm:$0xf]
        %v5314 = vld [vmem:[%s5216 + $0x184] sm:$0xf]
        %v5315 = vld [vmem:[%s5216 + $0x188] sm:$0xf]
        %v5316 = vld [vmem:[%s5216 + $0x18c] sm:$0xf]
        %v5317 = vld [vmem:[%s5216 + $0x190] sm:$0xf]
        %v5318 = vld [vmem:[%s5216 + $0x194] sm:$0xf]
        %v5319 = vld [vmem:[%s5216 + $0x198] sm:$0xf]
        %v5320 = vld [vmem:[%s5216 + $0x19c] sm:$0xf]
        %v5321 = vld [vmem:[%s5216 + $0x1a0] sm:$0xf]
        %v5322 = vld [vmem:[%s5216 + $0x1a4] sm:$0xf]
        %v5323 = vld [vmem:[%s5216 + $0x1a8] sm:$0xf]
        %v5324 = vld [vmem:[%s5216 + $0x1ac] sm:$0xf]
        %v5325 = vld [vmem:[%s5216 + $0x1b0] sm:$0xf]
        %v5326 = vld [vmem:[%s5216 + $0x1b4] sm:$0xf]
        %v5327 = vld [vmem:[%s5216 + $0x1b8] sm:$0xf]
        %v5328 = vld [vmem:[%s5216 + $0x1bc] sm:$0xf]
        %v5329 = vld [vmem:[%s5216 + $0x1c0] sm:$0xf]
        %v5330 = vld [vmem:[%s5216 + $0x1c4] sm:$0xf]
        %v5331 = vld [vmem:[%s5216 + $0x1c8] sm:$0xf]
        %v5332 = vld [vmem:[%s5216 + $0x1cc] sm:$0xf]
        %v5333 = vld [vmem:[%s5216 + $0x1d0] sm:$0xf]
        %v5334 = vld [vmem:[%s5216 + $0x1d4] sm:$0xf]
        %v5335 = vld [vmem:[%s5216 + $0x1d8] sm:$0xf]
        %v5336 = vld [vmem:[%s5216 + $0x1dc] sm:$0xf]
        %v5337 = vld [vmem:[%s5216 + $0x1e0] sm:$0xf]
        %v5338 = vld [vmem:[%s5216 + $0x1e4] sm:$0xf]
        %v5339 = vld [vmem:[%s5216 + $0x1e8] sm:$0xf]
        %v5340 = vld [vmem:[%s5216 + $0x1ec] sm:$0xf]
        %v5341 = vld [vmem:[%s5216 + $0x1f0] sm:$0xf]
        %v5342 = vld [vmem:[%s5216 + $0x1f4] sm:$0xf]
        %v5343 = vld [vmem:[%s5216 + $0x1f8] sm:$0xf]
        %v5344 = vld [vmem:[%s5216 + $0x1fc] sm:$0xf]
        %v5345 = vrot.slane %v1031, 3
        %v5346 = vrot.slane %v1034, 3
        %v5347 = vrot.slane %v1037, 3
        %v5348 = vrot.slane %v1040, 3
        %v5349 = vrot.slane %v1043, 3
        %v5350 = vrot.slane %v1046, 3
        %v5351 = vrot.slane %v1049, 3
        %v5352 = vrot.slane %v1052, 3
        %v5489 = vunpack.c.l.b16 %v5217
        %v5490 = vunpack.c.l.b16 %v5218
        %v5491 = vunpack.c.l.b16 %v5219
        %v5492 = vunpack.c.l.b16 %v5220
        %v5493 = vunpack.c.l.b16 %v5221
        %v5494 = vunpack.c.l.b16 %v5222
        %v5495 = vunpack.c.l.b16 %v5223
        %v5496 = vunpack.c.l.b16 %v5224
        %v5497 = vunpack.c.l.b16 %v5225
        %v5498 = vunpack.c.l.b16 %v5226
        %v5499 = vunpack.c.l.b16 %v5227
        %v5500 = vunpack.c.l.b16 %v5228
        %v5501 = vunpack.c.l.b16 %v5229
        %v5502 = vunpack.c.l.b16 %v5230
        %v5503 = vunpack.c.l.b16 %v5231
        %v5504 = vunpack.c.l.b16 %v5232
        %v5505 = vunpack.c.l.b16 %v5233
        %v5506 = vunpack.c.l.b16 %v5234
        %v5507 = vunpack.c.l.b16 %v5235
        %v5508 = vunpack.c.l.b16 %v5236
        %v5509 = vunpack.c.l.b16 %v5237
        %v5510 = vunpack.c.l.b16 %v5238
        %v5511 = vunpack.c.l.b16 %v5239
        %v5512 = vunpack.c.l.b16 %v5240
        %v5513 = vunpack.c.l.b16 %v5241
        %v5514 = vunpack.c.l.b16 %v5242
        %v5515 = vunpack.c.l.b16 %v5243
        %v5516 = vunpack.c.l.b16 %v5244
        %v5517 = vunpack.c.l.b16 %v5245
        %v5518 = vunpack.c.l.b16 %v5246
        %v5519 = vunpack.c.l.b16 %v5247
        %v5520 = vunpack.c.l.b16 %v5248
        %v5521 = vunpack.c.l.b16 %v5249
        %v5522 = vunpack.c.l.b16 %v5250
        %v5523 = vunpack.c.l.b16 %v5251
        %v5524 = vunpack.c.l.b16 %v5252
        %v5525 = vunpack.c.l.b16 %v5253
        %v5526 = vunpack.c.l.b16 %v5254
        %v5527 = vunpack.c.l.b16 %v5255
        %v5528 = vunpack.c.l.b16 %v5256
        %v5529 = vunpack.c.l.b16 %v5257
        %v5530 = vunpack.c.l.b16 %v5258
        %v5531 = vunpack.c.l.b16 %v5259
        %v5532 = vunpack.c.l.b16 %v5260
        %v5533 = vunpack.c.l.b16 %v5261
        %v5534 = vunpack.c.l.b16 %v5262
        %v5535 = vunpack.c.l.b16 %v5263
        %v5536 = vunpack.c.l.b16 %v5264
        %v5537 = vunpack.c.l.b16 %v5265
        %v5538 = vunpack.c.l.b16 %v5266
        %v5539 = vunpack.c.l.b16 %v5267
        %v5540 = vunpack.c.l.b16 %v5268
        %v5541 = vunpack.c.l.b16 %v5269
        %v5542 = vunpack.c.l.b16 %v5270
        %v5543 = vunpack.c.l.b16 %v5271
        %v5544 = vunpack.c.l.b16 %v5272
        %v5545 = vunpack.c.l.b16 %v5273
        %v5546 = vunpack.c.l.b16 %v5274
        %v5547 = vunpack.c.l.b16 %v5275
        %v5548 = vunpack.c.l.b16 %v5276
        %v5549 = vunpack.c.l.b16 %v5277
        %v5550 = vunpack.c.l.b16 %v5278
        %v5551 = vunpack.c.l.b16 %v5279
        %v5552 = vunpack.c.l.b16 %v5280
        %v5553 = vunpack.c.l.b16 %v5281
        %v5554 = vunpack.c.l.b16 %v5282
        %v5555 = vunpack.c.l.b16 %v5283
        %v5556 = vunpack.c.l.b16 %v5284
        %v5557 = vunpack.c.l.b16 %v5285
        %v5558 = vunpack.c.l.b16 %v5286
        %v5559 = vunpack.c.l.b16 %v5287
        %v5560 = vunpack.c.l.b16 %v5288
        %v5561 = vunpack.c.l.b16 %v5289
        %v5562 = vunpack.c.l.b16 %v5290
        %v5563 = vunpack.c.l.b16 %v5291
        %v5564 = vunpack.c.l.b16 %v5292
        %v5565 = vunpack.c.l.b16 %v5293
        %v5566 = vunpack.c.l.b16 %v5294
        %v5567 = vunpack.c.l.b16 %v5295
        %v5568 = vunpack.c.l.b16 %v5296
        %v5569 = vunpack.c.l.b16 %v5297
        %v5570 = vunpack.c.l.b16 %v5298
        %v5571 = vunpack.c.l.b16 %v5299
        %v5572 = vunpack.c.l.b16 %v5300
        %v5573 = vunpack.c.l.b16 %v5301
        %v5574 = vunpack.c.l.b16 %v5302
        %v5575 = vunpack.c.l.b16 %v5303
        %v5576 = vunpack.c.l.b16 %v5304
        %v5577 = vunpack.c.l.b16 %v5305
        %v5578 = vunpack.c.l.b16 %v5306
        %v5579 = vunpack.c.l.b16 %v5307
        %v5580 = vunpack.c.l.b16 %v5308
        %v5581 = vunpack.c.l.b16 %v5309
        %v5582 = vunpack.c.l.b16 %v5310
        %v5583 = vunpack.c.l.b16 %v5311
        %v5584 = vunpack.c.l.b16 %v5312
        %v5585 = vunpack.c.l.b16 %v5313
        %v5586 = vunpack.c.l.b16 %v5314
        %v5587 = vunpack.c.l.b16 %v5315
        %v5588 = vunpack.c.l.b16 %v5316
        %v5589 = vunpack.c.l.b16 %v5317
        %v5590 = vunpack.c.l.b16 %v5318
        %v5591 = vunpack.c.l.b16 %v5319
        %v5592 = vunpack.c.l.b16 %v5320
        %v5593 = vunpack.c.l.b16 %v5321
        %v5594 = vunpack.c.l.b16 %v5322
        %v5595 = vunpack.c.l.b16 %v5323
        %v5596 = vunpack.c.l.b16 %v5324
        %v5597 = vunpack.c.l.b16 %v5325
        %v5598 = vunpack.c.l.b16 %v5326
        %v5599 = vunpack.c.l.b16 %v5327
        %v5600 = vunpack.c.l.b16 %v5328
        %v5601 = vunpack.c.l.b16 %v5329
        %v5602 = vunpack.c.l.b16 %v5330
        %v5603 = vunpack.c.l.b16 %v5331
        %v5604 = vunpack.c.l.b16 %v5332
        %v5605 = vunpack.c.l.b16 %v5333
        %v5606 = vunpack.c.l.b16 %v5334
        %v5607 = vunpack.c.l.b16 %v5335
        %v5608 = vunpack.c.l.b16 %v5336
        %v5609 = vunpack.c.l.b16 %v5337
        %v5610 = vunpack.c.l.b16 %v5338
        %v5611 = vunpack.c.l.b16 %v5339
        %v5612 = vunpack.c.l.b16 %v5340
        %v5613 = vunpack.c.l.b16 %v5341
        %v5614 = vunpack.c.l.b16 %v5342
        %v5615 = vunpack.c.l.b16 %v5343
        %v5616 = vunpack.c.l.b16 %v5344
        %v5617 = vpack.c.b16 %v5490, %v5489
        %v5618 = vpack.c.b16 %v5492, %v5491
        %v5619 = vpack.c.b16 %v5494, %v5493
        %v5620 = vpack.c.b16 %v5496, %v5495
        %v5621 = vpack.c.b16 %v5498, %v5497
        %v5622 = vpack.c.b16 %v5500, %v5499
        %v5623 = vpack.c.b16 %v5502, %v5501
        %v5624 = vpack.c.b16 %v5504, %v5503
        %v5625 = vpack.c.b16 %v5506, %v5505
        %v5626 = vpack.c.b16 %v5508, %v5507
        %v5627 = vpack.c.b16 %v5510, %v5509
        %v5628 = vpack.c.b16 %v5512, %v5511
        %v5629 = vpack.c.b16 %v5514, %v5513
        %v5630 = vpack.c.b16 %v5516, %v5515
        %v5631 = vpack.c.b16 %v5518, %v5517
        %v5632 = vpack.c.b16 %v5520, %v5519
        %v5633 = vpack.c.b16 %v5522, %v5521
        %v5634 = vpack.c.b16 %v5524, %v5523
        %v5635 = vpack.c.b16 %v5526, %v5525
        %v5636 = vpack.c.b16 %v5528, %v5527
        %v5637 = vpack.c.b16 %v5530, %v5529
        %v5638 = vpack.c.b16 %v5532, %v5531
        %v5639 = vpack.c.b16 %v5534, %v5533
        %v5640 = vpack.c.b16 %v5536, %v5535
        %v5641 = vpack.c.b16 %v5538, %v5537
        %v5642 = vpack.c.b16 %v5540, %v5539
        %v5643 = vpack.c.b16 %v5542, %v5541
        %v5644 = vpack.c.b16 %v5544, %v5543
        %v5645 = vpack.c.b16 %v5546, %v5545
        %v5646 = vpack.c.b16 %v5548, %v5547
        %v5647 = vpack.c.b16 %v5550, %v5549
        %v5648 = vpack.c.b16 %v5552, %v5551
        %v5649 = vpack.c.b16 %v5554, %v5553
        %v5650 = vpack.c.b16 %v5556, %v5555
        %v5651 = vpack.c.b16 %v5558, %v5557
        %v5652 = vpack.c.b16 %v5560, %v5559
        %v5653 = vpack.c.b16 %v5562, %v5561
        %v5654 = vpack.c.b16 %v5564, %v5563
        %v5655 = vpack.c.b16 %v5566, %v5565
        %v5656 = vpack.c.b16 %v5568, %v5567
        %v5657 = vpack.c.b16 %v5570, %v5569
        %v5658 = vpack.c.b16 %v5572, %v5571
        %v5659 = vpack.c.b16 %v5574, %v5573
        %v5660 = vpack.c.b16 %v5576, %v5575
        %v5661 = vpack.c.b16 %v5578, %v5577
        %v5662 = vpack.c.b16 %v5580, %v5579
        %v5663 = vpack.c.b16 %v5582, %v5581
        %v5664 = vpack.c.b16 %v5584, %v5583
        %v5665 = vpack.c.b16 %v5586, %v5585
        %v5666 = vpack.c.b16 %v5588, %v5587
        %v5667 = vpack.c.b16 %v5590, %v5589
        %v5668 = vpack.c.b16 %v5592, %v5591
        %v5669 = vpack.c.b16 %v5594, %v5593
        %v5670 = vpack.c.b16 %v5596, %v5595
        %v5671 = vpack.c.b16 %v5598, %v5597
        %v5672 = vpack.c.b16 %v5600, %v5599
        %v5673 = vpack.c.b16 %v5602, %v5601
        %v5674 = vpack.c.b16 %v5604, %v5603
        %v5675 = vpack.c.b16 %v5606, %v5605
        %v5676 = vpack.c.b16 %v5608, %v5607
        %v5677 = vpack.c.b16 %v5610, %v5609
        %v5678 = vpack.c.b16 %v5612, %v5611
        %v5679 = vpack.c.b16 %v5614, %v5613
        %v5680 = vpack.c.b16 %v5616, %v5615
        %5745 = vmatpush.bf16.msra.mxu0 %v5624
        %5746 = vmatpush.bf16.msra.mxu0 %v5623
        %5747 = vmatpush.bf16.msra.mxu0 %v5622
        %5748 = vmatpush.bf16.msra.mxu0 %v5621
        %5749 = vmatpush.bf16.msra.mxu0 %v5620
        %5750 = vmatpush.bf16.msra.mxu0 %v5619
        %5751 = vmatpush.bf16.msra.mxu0 %v5618
        %5752 = vmatpush.bf16.msra.mxu0 %v5617
        %5753 = vmatmul.bf16.gmra.mxu0 %v5345
        %v5754 = vpop.f32.mrf.mxu0
        %v5755 = vadd.f32 0.0, %v5754
        %v5756 = vpop.f32.mrf.mxu0
        %5757 = vdwg.mxu0
        %5758 = vmatpush.bf16.msra.mxu0 %v5632
        %5759 = vmatpush.bf16.msra.mxu0 %v5631
        %5760 = vmatpush.bf16.msra.mxu0 %v5630
        %5761 = vmatpush.bf16.msra.mxu0 %v5629
        %5762 = vmatpush.bf16.msra.mxu0 %v5628
        %5763 = vmatpush.bf16.msra.mxu0 %v5627
        %5764 = vmatpush.bf16.msra.mxu0 %v5626
        %5765 = vmatpush.bf16.msra.mxu0 %v5625
        %5766 = vmatmul.bf16.gmra.mxu0 %v5346
        %v5767 = vpop.f32.mrf.mxu0
        %v5768 = vadd.f32 %v5755, %v5767
        %v5769 = vpop.f32.mrf.mxu0
        %5770 = vdwg.mxu0
        %5771 = vmatpush.bf16.msra.mxu0 %v5640
        %5772 = vmatpush.bf16.msra.mxu0 %v5639
        %5773 = vmatpush.bf16.msra.mxu0 %v5638
        %5774 = vmatpush.bf16.msra.mxu0 %v5637
        %5775 = vmatpush.bf16.msra.mxu0 %v5636
        %5776 = vmatpush.bf16.msra.mxu0 %v5635
        %5777 = vmatpush.bf16.msra.mxu0 %v5634
        %5778 = vmatpush.bf16.msra.mxu0 %v5633
        %5779 = vmatmul.bf16.gmra.mxu0 %v5347
        %v5780 = vpop.f32.mrf.mxu0
        %v5781 = vadd.f32 %v5768, %v5780
        %v5782 = vpop.f32.mrf.mxu0
        %5783 = vdwg.mxu0
        %5784 = vmatpush.bf16.msra.mxu0 %v5648
        %5785 = vmatpush.bf16.msra.mxu0 %v5647
        %5786 = vmatpush.bf16.msra.mxu0 %v5646
        %5787 = vmatpush.bf16.msra.mxu0 %v5645
        %5788 = vmatpush.bf16.msra.mxu0 %v5644
        %5789 = vmatpush.bf16.msra.mxu0 %v5643
        %5790 = vmatpush.bf16.msra.mxu0 %v5642
        %5791 = vmatpush.bf16.msra.mxu0 %v5641
        %5792 = vmatmul.bf16.gmra.mxu0 %v5348
        %v5793 = vpop.f32.mrf.mxu0
        %v5794 = vadd.f32 %v5781, %v5793
        %v5795 = vpop.f32.mrf.mxu0
        %5796 = vdwg.mxu0
        %5797 = vmatpush.bf16.msra.mxu0 %v5656
        %5798 = vmatpush.bf16.msra.mxu0 %v5655
        %5799 = vmatpush.bf16.msra.mxu0 %v5654
        %5800 = vmatpush.bf16.msra.mxu0 %v5653
        %5801 = vmatpush.bf16.msra.mxu0 %v5652
        %5802 = vmatpush.bf16.msra.mxu0 %v5651
        %5803 = vmatpush.bf16.msra.mxu0 %v5650
        %5804 = vmatpush.bf16.msra.mxu0 %v5649
        %5805 = vmatmul.bf16.gmra.mxu0 %v5349
        %v5806 = vpop.f32.mrf.mxu0
        %v5807 = vadd.f32 %v5794, %v5806
        %v5808 = vpop.f32.mrf.mxu0
        %5809 = vdwg.mxu0
        %5810 = vmatpush.bf16.msra.mxu0 %v5664
        %5811 = vmatpush.bf16.msra.mxu0 %v5663
        %5812 = vmatpush.bf16.msra.mxu0 %v5662
        %5813 = vmatpush.bf16.msra.mxu0 %v5661
        %5814 = vmatpush.bf16.msra.mxu0 %v5660
        %5815 = vmatpush.bf16.msra.mxu0 %v5659
        %5816 = vmatpush.bf16.msra.mxu0 %v5658
        %5817 = vmatpush.bf16.msra.mxu0 %v5657
        %5818 = vmatmul.bf16.gmra.mxu0 %v5350
        %v5819 = vpop.f32.mrf.mxu0
        %v5820 = vadd.f32 %v5807, %v5819
        %v5821 = vpop.f32.mrf.mxu0
        %5822 = vdwg.mxu0
        %5823 = vmatpush.bf16.msra.mxu0 %v5672
        %5824 = vmatpush.bf16.msra.mxu0 %v5671
        %5825 = vmatpush.bf16.msra.mxu0 %v5670
        %5826 = vmatpush.bf16.msra.mxu0 %v5669
        %5827 = vmatpush.bf16.msra.mxu0 %v5668
        %5828 = vmatpush.bf16.msra.mxu0 %v5667
        %5829 = vmatpush.bf16.msra.mxu0 %v5666
        %5830 = vmatpush.bf16.msra.mxu0 %v5665
        %5831 = vmatmul.bf16.gmra.mxu0 %v5351
        %v5832 = vpop.f32.mrf.mxu0
        %v5833 = vadd.f32 %v5820, %v5832
        %v5834 = vpop.f32.mrf.mxu0
        %5835 = vdwg.mxu0
        %5836 = vmatpush.bf16.msra.mxu0 %v5680
        %5837 = vmatpush.bf16.msra.mxu0 %v5679
        %5838 = vmatpush.bf16.msra.mxu0 %v5678
        %5839 = vmatpush.bf16.msra.mxu0 %v5677
        %5840 = vmatpush.bf16.msra.mxu0 %v5676
        %5841 = vmatpush.bf16.msra.mxu0 %v5675
        %5842 = vmatpush.bf16.msra.mxu0 %v5674
        %5843 = vmatpush.bf16.msra.mxu0 %v5673
        %5844 = vmatmul.bf16.gmra.mxu0 %v5352
        %v5845 = vpop.f32.mrf.mxu0
        %v5846 = vadd.f32 %v5833, %v5845
        %v5847 = vpop.f32.mrf.mxu0
        %5848 = vdwg.mxu0
        %v5849 = vadd.f32 %v5215, %v5846
        %v5850 = vpack.c.bf16 %v757, %v757
        %v5851 = vpack.c.bf16 %v758, %v758
        %v5852 = vpack.c.bf16 %v759, %v759
        %v5853 = vpack.c.bf16 %v760, %v760
        %v5854 = vpack.c.bf16 %v761, %v761
        %v5855 = vpack.c.bf16 %v762, %v762
        %v5856 = vpack.c.bf16 %v763, %v763
        %v5857 = vpack.c.bf16 %v764, %v764
        %s5858 = scalar_lea.vmem %s3, 4096
        %v5859 = vld [vmem:[%s5858] sm:$0xf]
        %v5860 = vld [vmem:[%s5858 + $0x4] sm:$0xf]
        %v5861 = vld [vmem:[%s5858 + $0x8] sm:$0xf]
        %v5862 = vld [vmem:[%s5858 + $0xc] sm:$0xf]
        %v5863 = vld [vmem:[%s5858 + $0x10] sm:$0xf]
        %v5864 = vld [vmem:[%s5858 + $0x14] sm:$0xf]
        %v5865 = vld [vmem:[%s5858 + $0x18] sm:$0xf]
        %v5866 = vld [vmem:[%s5858 + $0x1c] sm:$0xf]
        %v5867 = vld [vmem:[%s5858 + $0x20] sm:$0xf]
        %v5868 = vld [vmem:[%s5858 + $0x24] sm:$0xf]
        %v5869 = vld [vmem:[%s5858 + $0x28] sm:$0xf]
        %v5870 = vld [vmem:[%s5858 + $0x2c] sm:$0xf]
        %v5871 = vld [vmem:[%s5858 + $0x30] sm:$0xf]
        %v5872 = vld [vmem:[%s5858 + $0x34] sm:$0xf]
        %v5873 = vld [vmem:[%s5858 + $0x38] sm:$0xf]
        %v5874 = vld [vmem:[%s5858 + $0x3c] sm:$0xf]
        %v5875 = vld [vmem:[%s5858 + $0x40] sm:$0xf]
        %v5876 = vld [vmem:[%s5858 + $0x44] sm:$0xf]
        %v5877 = vld [vmem:[%s5858 + $0x48] sm:$0xf]
        %v5878 = vld [vmem:[%s5858 + $0x4c] sm:$0xf]
        %v5879 = vld [vmem:[%s5858 + $0x50] sm:$0xf]
        %v5880 = vld [vmem:[%s5858 + $0x54] sm:$0xf]
        %v5881 = vld [vmem:[%s5858 + $0x58] sm:$0xf]
        %v5882 = vld [vmem:[%s5858 + $0x5c] sm:$0xf]
        %v5883 = vld [vmem:[%s5858 + $0x60] sm:$0xf]
        %v5884 = vld [vmem:[%s5858 + $0x64] sm:$0xf]
        %v5885 = vld [vmem:[%s5858 + $0x68] sm:$0xf]
        %v5886 = vld [vmem:[%s5858 + $0x6c] sm:$0xf]
        %v5887 = vld [vmem:[%s5858 + $0x70] sm:$0xf]
        %v5888 = vld [vmem:[%s5858 + $0x74] sm:$0xf]
        %v5889 = vld [vmem:[%s5858 + $0x78] sm:$0xf]
        %v5890 = vld [vmem:[%s5858 + $0x7c] sm:$0xf]
        %v5891 = vld [vmem:[%s5858 + $0x80] sm:$0xf]
        %v5892 = vld [vmem:[%s5858 + $0x84] sm:$0xf]
        %v5893 = vld [vmem:[%s5858 + $0x88] sm:$0xf]
        %v5894 = vld [vmem:[%s5858 + $0x8c] sm:$0xf]
        %v5895 = vld [vmem:[%s5858 + $0x90] sm:$0xf]
        %v5896 = vld [vmem:[%s5858 + $0x94] sm:$0xf]
        %v5897 = vld [vmem:[%s5858 + $0x98] sm:$0xf]
        %v5898 = vld [vmem:[%s5858 + $0x9c] sm:$0xf]
        %v5899 = vld [vmem:[%s5858 + $0xa0] sm:$0xf]
        %v5900 = vld [vmem:[%s5858 + $0xa4] sm:$0xf]
        %v5901 = vld [vmem:[%s5858 + $0xa8] sm:$0xf]
        %v5902 = vld [vmem:[%s5858 + $0xac] sm:$0xf]
        %v5903 = vld [vmem:[%s5858 + $0xb0] sm:$0xf]
        %v5904 = vld [vmem:[%s5858 + $0xb4] sm:$0xf]
        %v5905 = vld [vmem:[%s5858 + $0xb8] sm:$0xf]
        %v5906 = vld [vmem:[%s5858 + $0xbc] sm:$0xf]
        %v5907 = vld [vmem:[%s5858 + $0xc0] sm:$0xf]
        %v5908 = vld [vmem:[%s5858 + $0xc4] sm:$0xf]
        %v5909 = vld [vmem:[%s5858 + $0xc8] sm:$0xf]
        %v5910 = vld [vmem:[%s5858 + $0xcc] sm:$0xf]
        %v5911 = vld [vmem:[%s5858 + $0xd0] sm:$0xf]
        %v5912 = vld [vmem:[%s5858 + $0xd4] sm:$0xf]
        %v5913 = vld [vmem:[%s5858 + $0xd8] sm:$0xf]
        %v5914 = vld [vmem:[%s5858 + $0xdc] sm:$0xf]
        %v5915 = vld [vmem:[%s5858 + $0xe0] sm:$0xf]
        %v5916 = vld [vmem:[%s5858 + $0xe4] sm:$0xf]
        %v5917 = vld [vmem:[%s5858 + $0xe8] sm:$0xf]
        %v5918 = vld [vmem:[%s5858 + $0xec] sm:$0xf]
        %v5919 = vld [vmem:[%s5858 + $0xf0] sm:$0xf]
        %v5920 = vld [vmem:[%s5858 + $0xf4] sm:$0xf]
        %v5921 = vld [vmem:[%s5858 + $0xf8] sm:$0xf]
        %v5922 = vld [vmem:[%s5858 + $0xfc] sm:$0xf]
        %v5923 = vld [vmem:[%s5858 + $0x100] sm:$0xf]
        %v5924 = vld [vmem:[%s5858 + $0x104] sm:$0xf]
        %v5925 = vld [vmem:[%s5858 + $0x108] sm:$0xf]
        %v5926 = vld [vmem:[%s5858 + $0x10c] sm:$0xf]
        %v5927 = vld [vmem:[%s5858 + $0x110] sm:$0xf]
        %v5928 = vld [vmem:[%s5858 + $0x114] sm:$0xf]
        %v5929 = vld [vmem:[%s5858 + $0x118] sm:$0xf]
        %v5930 = vld [vmem:[%s5858 + $0x11c] sm:$0xf]
        %v5931 = vld [vmem:[%s5858 + $0x120] sm:$0xf]
        %v5932 = vld [vmem:[%s5858 + $0x124] sm:$0xf]
        %v5933 = vld [vmem:[%s5858 + $0x128] sm:$0xf]
        %v5934 = vld [vmem:[%s5858 + $0x12c] sm:$0xf]
        %v5935 = vld [vmem:[%s5858 + $0x130] sm:$0xf]
        %v5936 = vld [vmem:[%s5858 + $0x134] sm:$0xf]
        %v5937 = vld [vmem:[%s5858 + $0x138] sm:$0xf]
        %v5938 = vld [vmem:[%s5858 + $0x13c] sm:$0xf]
        %v5939 = vld [vmem:[%s5858 + $0x140] sm:$0xf]
        %v5940 = vld [vmem:[%s5858 + $0x144] sm:$0xf]
        %v5941 = vld [vmem:[%s5858 + $0x148] sm:$0xf]
        %v5942 = vld [vmem:[%s5858 + $0x14c] sm:$0xf]
        %v5943 = vld [vmem:[%s5858 + $0x150] sm:$0xf]
        %v5944 = vld [vmem:[%s5858 + $0x154] sm:$0xf]
        %v5945 = vld [vmem:[%s5858 + $0x158] sm:$0xf]
        %v5946 = vld [vmem:[%s5858 + $0x15c] sm:$0xf]
        %v5947 = vld [vmem:[%s5858 + $0x160] sm:$0xf]
        %v5948 = vld [vmem:[%s5858 + $0x164] sm:$0xf]
        %v5949 = vld [vmem:[%s5858 + $0x168] sm:$0xf]
        %v5950 = vld [vmem:[%s5858 + $0x16c] sm:$0xf]
        %v5951 = vld [vmem:[%s5858 + $0x170] sm:$0xf]
        %v5952 = vld [vmem:[%s5858 + $0x174] sm:$0xf]
        %v5953 = vld [vmem:[%s5858 + $0x178] sm:$0xf]
        %v5954 = vld [vmem:[%s5858 + $0x17c] sm:$0xf]
        %v5955 = vld [vmem:[%s5858 + $0x180] sm:$0xf]
        %v5956 = vld [vmem:[%s5858 + $0x184] sm:$0xf]
        %v5957 = vld [vmem:[%s5858 + $0x188] sm:$0xf]
        %v5958 = vld [vmem:[%s5858 + $0x18c] sm:$0xf]
        %v5959 = vld [vmem:[%s5858 + $0x190] sm:$0xf]
        %v5960 = vld [vmem:[%s5858 + $0x194] sm:$0xf]
        %v5961 = vld [vmem:[%s5858 + $0x198] sm:$0xf]
        %v5962 = vld [vmem:[%s5858 + $0x19c] sm:$0xf]
        %v5963 = vld [vmem:[%s5858 + $0x1a0] sm:$0xf]
        %v5964 = vld [vmem:[%s5858 + $0x1a4] sm:$0xf]
        %v5965 = vld [vmem:[%s5858 + $0x1a8] sm:$0xf]
        %v5966 = vld [vmem:[%s5858 + $0x1ac] sm:$0xf]
        %v5967 = vld [vmem:[%s5858 + $0x1b0] sm:$0xf]
        %v5968 = vld [vmem:[%s5858 + $0x1b4] sm:$0xf]
        %v5969 = vld [vmem:[%s5858 + $0x1b8] sm:$0xf]
        %v5970 = vld [vmem:[%s5858 + $0x1bc] sm:$0xf]
        %v5971 = vld [vmem:[%s5858 + $0x1c0] sm:$0xf]
        %v5972 = vld [vmem:[%s5858 + $0x1c4] sm:$0xf]
        %v5973 = vld [vmem:[%s5858 + $0x1c8] sm:$0xf]
        %v5974 = vld [vmem:[%s5858 + $0x1cc] sm:$0xf]
        %v5975 = vld [vmem:[%s5858 + $0x1d0] sm:$0xf]
        %v5976 = vld [vmem:[%s5858 + $0x1d4] sm:$0xf]
        %v5977 = vld [vmem:[%s5858 + $0x1d8] sm:$0xf]
        %v5978 = vld [vmem:[%s5858 + $0x1dc] sm:$0xf]
        %v5979 = vld [vmem:[%s5858 + $0x1e0] sm:$0xf]
        %v5980 = vld [vmem:[%s5858 + $0x1e4] sm:$0xf]
        %v5981 = vld [vmem:[%s5858 + $0x1e8] sm:$0xf]
        %v5982 = vld [vmem:[%s5858 + $0x1ec] sm:$0xf]
        %v5983 = vld [vmem:[%s5858 + $0x1f0] sm:$0xf]
        %v5984 = vld [vmem:[%s5858 + $0x1f4] sm:$0xf]
        %v5985 = vld [vmem:[%s5858 + $0x1f8] sm:$0xf]
        %v5986 = vld [vmem:[%s5858 + $0x1fc] sm:$0xf]
        %v6115 = vunpack.c.l.b16 %v5859
        %v6116 = vunpack.c.l.b16 %v5860
        %v6117 = vunpack.c.l.b16 %v5861
        %v6118 = vunpack.c.l.b16 %v5862
        %v6119 = vunpack.c.l.b16 %v5863
        %v6120 = vunpack.c.l.b16 %v5864
        %v6121 = vunpack.c.l.b16 %v5865
        %v6122 = vunpack.c.l.b16 %v5866
        %v6123 = vunpack.c.l.b16 %v5867
        %v6124 = vunpack.c.l.b16 %v5868
        %v6125 = vunpack.c.l.b16 %v5869
        %v6126 = vunpack.c.l.b16 %v5870
        %v6127 = vunpack.c.l.b16 %v5871
        %v6128 = vunpack.c.l.b16 %v5872
        %v6129 = vunpack.c.l.b16 %v5873
        %v6130 = vunpack.c.l.b16 %v5874
        %v6131 = vunpack.c.l.b16 %v5875
        %v6132 = vunpack.c.l.b16 %v5876
        %v6133 = vunpack.c.l.b16 %v5877
        %v6134 = vunpack.c.l.b16 %v5878
        %v6135 = vunpack.c.l.b16 %v5879
        %v6136 = vunpack.c.l.b16 %v5880
        %v6137 = vunpack.c.l.b16 %v5881
        %v6138 = vunpack.c.l.b16 %v5882
        %v6139 = vunpack.c.l.b16 %v5883
        %v6140 = vunpack.c.l.b16 %v5884
        %v6141 = vunpack.c.l.b16 %v5885
        %v6142 = vunpack.c.l.b16 %v5886
        %v6143 = vunpack.c.l.b16 %v5887
        %v6144 = vunpack.c.l.b16 %v5888
        %v6145 = vunpack.c.l.b16 %v5889
        %v6146 = vunpack.c.l.b16 %v5890
        %v6147 = vunpack.c.l.b16 %v5891
        %v6148 = vunpack.c.l.b16 %v5892
        %v6149 = vunpack.c.l.b16 %v5893
        %v6150 = vunpack.c.l.b16 %v5894
        %v6151 = vunpack.c.l.b16 %v5895
        %v6152 = vunpack.c.l.b16 %v5896
        %v6153 = vunpack.c.l.b16 %v5897
        %v6154 = vunpack.c.l.b16 %v5898
        %v6155 = vunpack.c.l.b16 %v5899
        %v6156 = vunpack.c.l.b16 %v5900
        %v6157 = vunpack.c.l.b16 %v5901
        %v6158 = vunpack.c.l.b16 %v5902
        %v6159 = vunpack.c.l.b16 %v5903
        %v6160 = vunpack.c.l.b16 %v5904
        %v6161 = vunpack.c.l.b16 %v5905
        %v6162 = vunpack.c.l.b16 %v5906
        %v6163 = vunpack.c.l.b16 %v5907
        %v6164 = vunpack.c.l.b16 %v5908
        %v6165 = vunpack.c.l.b16 %v5909
        %v6166 = vunpack.c.l.b16 %v5910
        %v6167 = vunpack.c.l.b16 %v5911
        %v6168 = vunpack.c.l.b16 %v5912
        %v6169 = vunpack.c.l.b16 %v5913
        %v6170 = vunpack.c.l.b16 %v5914
        %v6171 = vunpack.c.l.b16 %v5915
        %v6172 = vunpack.c.l.b16 %v5916
        %v6173 = vunpack.c.l.b16 %v5917
        %v6174 = vunpack.c.l.b16 %v5918
        %v6175 = vunpack.c.l.b16 %v5919
        %v6176 = vunpack.c.l.b16 %v5920
        %v6177 = vunpack.c.l.b16 %v5921
        %v6178 = vunpack.c.l.b16 %v5922
        %v6179 = vunpack.c.l.b16 %v5923
        %v6180 = vunpack.c.l.b16 %v5924
        %v6181 = vunpack.c.l.b16 %v5925
        %v6182 = vunpack.c.l.b16 %v5926
        %v6183 = vunpack.c.l.b16 %v5927
        %v6184 = vunpack.c.l.b16 %v5928
        %v6185 = vunpack.c.l.b16 %v5929
        %v6186 = vunpack.c.l.b16 %v5930
        %v6187 = vunpack.c.l.b16 %v5931
        %v6188 = vunpack.c.l.b16 %v5932
        %v6189 = vunpack.c.l.b16 %v5933
        %v6190 = vunpack.c.l.b16 %v5934
        %v6191 = vunpack.c.l.b16 %v5935
        %v6192 = vunpack.c.l.b16 %v5936
        %v6193 = vunpack.c.l.b16 %v5937
        %v6194 = vunpack.c.l.b16 %v5938
        %v6195 = vunpack.c.l.b16 %v5939
        %v6196 = vunpack.c.l.b16 %v5940
        %v6197 = vunpack.c.l.b16 %v5941
        %v6198 = vunpack.c.l.b16 %v5942
        %v6199 = vunpack.c.l.b16 %v5943
        %v6200 = vunpack.c.l.b16 %v5944
        %v6201 = vunpack.c.l.b16 %v5945
        %v6202 = vunpack.c.l.b16 %v5946
        %v6203 = vunpack.c.l.b16 %v5947
        %v6204 = vunpack.c.l.b16 %v5948
        %v6205 = vunpack.c.l.b16 %v5949
        %v6206 = vunpack.c.l.b16 %v5950
        %v6207 = vunpack.c.l.b16 %v5951
        %v6208 = vunpack.c.l.b16 %v5952
        %v6209 = vunpack.c.l.b16 %v5953
        %v6210 = vunpack.c.l.b16 %v5954
        %v6211 = vunpack.c.l.b16 %v5955
        %v6212 = vunpack.c.l.b16 %v5956
        %v6213 = vunpack.c.l.b16 %v5957
        %v6214 = vunpack.c.l.b16 %v5958
        %v6215 = vunpack.c.l.b16 %v5959
        %v6216 = vunpack.c.l.b16 %v5960
        %v6217 = vunpack.c.l.b16 %v5961
        %v6218 = vunpack.c.l.b16 %v5962
        %v6219 = vunpack.c.l.b16 %v5963
        %v6220 = vunpack.c.l.b16 %v5964
        %v6221 = vunpack.c.l.b16 %v5965
        %v6222 = vunpack.c.l.b16 %v5966
        %v6223 = vunpack.c.l.b16 %v5967
        %v6224 = vunpack.c.l.b16 %v5968
        %v6225 = vunpack.c.l.b16 %v5969
        %v6226 = vunpack.c.l.b16 %v5970
        %v6227 = vunpack.c.l.b16 %v5971
        %v6228 = vunpack.c.l.b16 %v5972
        %v6229 = vunpack.c.l.b16 %v5973
        %v6230 = vunpack.c.l.b16 %v5974
        %v6231 = vunpack.c.l.b16 %v5975
        %v6232 = vunpack.c.l.b16 %v5976
        %v6233 = vunpack.c.l.b16 %v5977
        %v6234 = vunpack.c.l.b16 %v5978
        %v6235 = vunpack.c.l.b16 %v5979
        %v6236 = vunpack.c.l.b16 %v5980
        %v6237 = vunpack.c.l.b16 %v5981
        %v6238 = vunpack.c.l.b16 %v5982
        %v6239 = vunpack.c.l.b16 %v5983
        %v6240 = vunpack.c.l.b16 %v5984
        %v6241 = vunpack.c.l.b16 %v5985
        %v6242 = vunpack.c.l.b16 %v5986
        %v6243 = vpack.c.b16 %v6116, %v6115
        %v6244 = vpack.c.b16 %v6118, %v6117
        %v6245 = vpack.c.b16 %v6120, %v6119
        %v6246 = vpack.c.b16 %v6122, %v6121
        %v6247 = vpack.c.b16 %v6124, %v6123
        %v6248 = vpack.c.b16 %v6126, %v6125
        %v6249 = vpack.c.b16 %v6128, %v6127
        %v6250 = vpack.c.b16 %v6130, %v6129
        %v6251 = vpack.c.b16 %v6132, %v6131
        %v6252 = vpack.c.b16 %v6134, %v6133
        %v6253 = vpack.c.b16 %v6136, %v6135
        %v6254 = vpack.c.b16 %v6138, %v6137
        %v6255 = vpack.c.b16 %v6140, %v6139
        %v6256 = vpack.c.b16 %v6142, %v6141
        %v6257 = vpack.c.b16 %v6144, %v6143
        %v6258 = vpack.c.b16 %v6146, %v6145
        %v6259 = vpack.c.b16 %v6148, %v6147
        %v6260 = vpack.c.b16 %v6150, %v6149
        %v6261 = vpack.c.b16 %v6152, %v6151
        %v6262 = vpack.c.b16 %v6154, %v6153
        %v6263 = vpack.c.b16 %v6156, %v6155
        %v6264 = vpack.c.b16 %v6158, %v6157
        %v6265 = vpack.c.b16 %v6160, %v6159
        %v6266 = vpack.c.b16 %v6162, %v6161
        %v6267 = vpack.c.b16 %v6164, %v6163
        %v6268 = vpack.c.b16 %v6166, %v6165
        %v6269 = vpack.c.b16 %v6168, %v6167
        %v6270 = vpack.c.b16 %v6170, %v6169
        %v6271 = vpack.c.b16 %v6172, %v6171
        %v6272 = vpack.c.b16 %v6174, %v6173
        %v6273 = vpack.c.b16 %v6176, %v6175
        %v6274 = vpack.c.b16 %v6178, %v6177
        %v6275 = vpack.c.b16 %v6180, %v6179
        %v6276 = vpack.c.b16 %v6182, %v6181
        %v6277 = vpack.c.b16 %v6184, %v6183
        %v6278 = vpack.c.b16 %v6186, %v6185
        %v6279 = vpack.c.b16 %v6188, %v6187
        %v6280 = vpack.c.b16 %v6190, %v6189
        %v6281 = vpack.c.b16 %v6192, %v6191
        %v6282 = vpack.c.b16 %v6194, %v6193
        %v6283 = vpack.c.b16 %v6196, %v6195
        %v6284 = vpack.c.b16 %v6198, %v6197
        %v6285 = vpack.c.b16 %v6200, %v6199
        %v6286 = vpack.c.b16 %v6202, %v6201
        %v6287 = vpack.c.b16 %v6204, %v6203
        %v6288 = vpack.c.b16 %v6206, %v6205
        %v6289 = vpack.c.b16 %v6208, %v6207
        %v6290 = vpack.c.b16 %v6210, %v6209
        %v6291 = vpack.c.b16 %v6212, %v6211
        %v6292 = vpack.c.b16 %v6214, %v6213
        %v6293 = vpack.c.b16 %v6216, %v6215
        %v6294 = vpack.c.b16 %v6218, %v6217
        %v6295 = vpack.c.b16 %v6220, %v6219
        %v6296 = vpack.c.b16 %v6222, %v6221
        %v6297 = vpack.c.b16 %v6224, %v6223
        %v6298 = vpack.c.b16 %v6226, %v6225
        %v6299 = vpack.c.b16 %v6228, %v6227
        %v6300 = vpack.c.b16 %v6230, %v6229
        %v6301 = vpack.c.b16 %v6232, %v6231
        %v6302 = vpack.c.b16 %v6234, %v6233
        %v6303 = vpack.c.b16 %v6236, %v6235
        %v6304 = vpack.c.b16 %v6238, %v6237
        %v6305 = vpack.c.b16 %v6240, %v6239
        %v6306 = vpack.c.b16 %v6242, %v6241
        %6371 = vmatpush.bf16.msra.mxu0 %v6250
        %6372 = vmatpush.bf16.msra.mxu0 %v6249
        %6373 = vmatpush.bf16.msra.mxu0 %v6248
        %6374 = vmatpush.bf16.msra.mxu0 %v6247
        %6375 = vmatpush.bf16.msra.mxu0 %v6246
        %6376 = vmatpush.bf16.msra.mxu0 %v6245
        %6377 = vmatpush.bf16.msra.mxu0 %v6244
        %6378 = vmatpush.bf16.msra.mxu0 %v6243
        %6379 = vmatmul.bf16.gmra.mxu0 %v5850
        %v6380 = vpop.f32.mrf.mxu0
        %v6381 = vadd.f32 0.0, %v6380
        %v6382 = vpop.f32.mrf.mxu0
        %6383 = vdwg.mxu0
        %6384 = vmatpush.bf16.msra.mxu0 %v6258
        %6385 = vmatpush.bf16.msra.mxu0 %v6257
        %6386 = vmatpush.bf16.msra.mxu0 %v6256
        %6387 = vmatpush.bf16.msra.mxu0 %v6255
        %6388 = vmatpush.bf16.msra.mxu0 %v6254
        %6389 = vmatpush.bf16.msra.mxu0 %v6253
        %6390 = vmatpush.bf16.msra.mxu0 %v6252
        %6391 = vmatpush.bf16.msra.mxu0 %v6251
        %6392 = vmatmul.bf16.gmra.mxu0 %v5851
        %v6393 = vpop.f32.mrf.mxu0
        %v6394 = vadd.f32 %v6381, %v6393
        %v6395 = vpop.f32.mrf.mxu0
        %6396 = vdwg.mxu0
        %6397 = vmatpush.bf16.msra.mxu0 %v6266
        %6398 = vmatpush.bf16.msra.mxu0 %v6265
        %6399 = vmatpush.bf16.msra.mxu0 %v6264
        %6400 = vmatpush.bf16.msra.mxu0 %v6263
        %6401 = vmatpush.bf16.msra.mxu0 %v6262
        %6402 = vmatpush.bf16.msra.mxu0 %v6261
        %6403 = vmatpush.bf16.msra.mxu0 %v6260
        %6404 = vmatpush.bf16.msra.mxu0 %v6259
        %6405 = vmatmul.bf16.gmra.mxu0 %v5852
        %v6406 = vpop.f32.mrf.mxu0
        %v6407 = vadd.f32 %v6394, %v6406
        %v6408 = vpop.f32.mrf.mxu0
        %6409 = vdwg.mxu0
        %6410 = vmatpush.bf16.msra.mxu0 %v6274
        %6411 = vmatpush.bf16.msra.mxu0 %v6273
        %6412 = vmatpush.bf16.msra.mxu0 %v6272
        %6413 = vmatpush.bf16.msra.mxu0 %v6271
        %6414 = vmatpush.bf16.msra.mxu0 %v6270
        %6415 = vmatpush.bf16.msra.mxu0 %v6269
        %6416 = vmatpush.bf16.msra.mxu0 %v6268
        %6417 = vmatpush.bf16.msra.mxu0 %v6267
        %6418 = vmatmul.bf16.gmra.mxu0 %v5853
        %v6419 = vpop.f32.mrf.mxu0
        %v6420 = vadd.f32 %v6407, %v6419
        %v6421 = vpop.f32.mrf.mxu0
        %6422 = vdwg.mxu0
        %6423 = vmatpush.bf16.msra.mxu0 %v6282
        %6424 = vmatpush.bf16.msra.mxu0 %v6281
        %6425 = vmatpush.bf16.msra.mxu0 %v6280
        %6426 = vmatpush.bf16.msra.mxu0 %v6279
        %6427 = vmatpush.bf16.msra.mxu0 %v6278
        %6428 = vmatpush.bf16.msra.mxu0 %v6277
        %6429 = vmatpush.bf16.msra.mxu0 %v6276
        %6430 = vmatpush.bf16.msra.mxu0 %v6275
        %6431 = vmatmul.bf16.gmra.mxu0 %v5854
        %v6432 = vpop.f32.mrf.mxu0
        %v6433 = vadd.f32 %v6420, %v6432
        %v6434 = vpop.f32.mrf.mxu0
        %6435 = vdwg.mxu0
        %6436 = vmatpush.bf16.msra.mxu0 %v6290
        %6437 = vmatpush.bf16.msra.mxu0 %v6289
        %6438 = vmatpush.bf16.msra.mxu0 %v6288
        %6439 = vmatpush.bf16.msra.mxu0 %v6287
        %6440 = vmatpush.bf16.msra.mxu0 %v6286
        %6441 = vmatpush.bf16.msra.mxu0 %v6285
        %6442 = vmatpush.bf16.msra.mxu0 %v6284
        %6443 = vmatpush.bf16.msra.mxu0 %v6283
        %6444 = vmatmul.bf16.gmra.mxu0 %v5855
        %v6445 = vpop.f32.mrf.mxu0
        %v6446 = vadd.f32 %v6433, %v6445
        %v6447 = vpop.f32.mrf.mxu0
        %6448 = vdwg.mxu0
        %6449 = vmatpush.bf16.msra.mxu0 %v6298
        %6450 = vmatpush.bf16.msra.mxu0 %v6297
        %6451 = vmatpush.bf16.msra.mxu0 %v6296
        %6452 = vmatpush.bf16.msra.mxu0 %v6295
        %6453 = vmatpush.bf16.msra.mxu0 %v6294
        %6454 = vmatpush.bf16.msra.mxu0 %v6293
        %6455 = vmatpush.bf16.msra.mxu0 %v6292
        %6456 = vmatpush.bf16.msra.mxu0 %v6291
        %6457 = vmatmul.bf16.gmra.mxu0 %v5856
        %v6458 = vpop.f32.mrf.mxu0
        %v6459 = vadd.f32 %v6446, %v6458
        %v6460 = vpop.f32.mrf.mxu0
        %6461 = vdwg.mxu0
        %6462 = vmatpush.bf16.msra.mxu0 %v6306
        %6463 = vmatpush.bf16.msra.mxu0 %v6305
        %6464 = vmatpush.bf16.msra.mxu0 %v6304
        %6465 = vmatpush.bf16.msra.mxu0 %v6303
        %6466 = vmatpush.bf16.msra.mxu0 %v6302
        %6467 = vmatpush.bf16.msra.mxu0 %v6301
        %6468 = vmatpush.bf16.msra.mxu0 %v6300
        %6469 = vmatpush.bf16.msra.mxu0 %v6299
        %6470 = vmatmul.bf16.gmra.mxu0 %v5857
        %v6471 = vpop.f32.mrf.mxu0
        %v6472 = vadd.f32 %v6459, %v6471
        %v6473 = vpop.f32.mrf.mxu0
        %6474 = vdwg.mxu0
        %v6475 = vadd.f32 %v5849, %v6472
        %s6476 = scalar_lea.vmem %s3, 4608
        %v6477 = vld [vmem:[%s6476] sm:$0xf]
        %v6478 = vld [vmem:[%s6476 + $0x4] sm:$0xf]
        %v6479 = vld [vmem:[%s6476 + $0x8] sm:$0xf]
        %v6480 = vld [vmem:[%s6476 + $0xc] sm:$0xf]
        %v6481 = vld [vmem:[%s6476 + $0x10] sm:$0xf]
        %v6482 = vld [vmem:[%s6476 + $0x14] sm:$0xf]
        %v6483 = vld [vmem:[%s6476 + $0x18] sm:$0xf]
        %v6484 = vld [vmem:[%s6476 + $0x1c] sm:$0xf]
        %v6485 = vld [vmem:[%s6476 + $0x20] sm:$0xf]
        %v6486 = vld [vmem:[%s6476 + $0x24] sm:$0xf]
        %v6487 = vld [vmem:[%s6476 + $0x28] sm:$0xf]
        %v6488 = vld [vmem:[%s6476 + $0x2c] sm:$0xf]
        %v6489 = vld [vmem:[%s6476 + $0x30] sm:$0xf]
        %v6490 = vld [vmem:[%s6476 + $0x34] sm:$0xf]
        %v6491 = vld [vmem:[%s6476 + $0x38] sm:$0xf]
        %v6492 = vld [vmem:[%s6476 + $0x3c] sm:$0xf]
        %v6493 = vld [vmem:[%s6476 + $0x40] sm:$0xf]
        %v6494 = vld [vmem:[%s6476 + $0x44] sm:$0xf]
        %v6495 = vld [vmem:[%s6476 + $0x48] sm:$0xf]
        %v6496 = vld [vmem:[%s6476 + $0x4c] sm:$0xf]
        %v6497 = vld [vmem:[%s6476 + $0x50] sm:$0xf]
        %v6498 = vld [vmem:[%s6476 + $0x54] sm:$0xf]
        %v6499 = vld [vmem:[%s6476 + $0x58] sm:$0xf]
        %v6500 = vld [vmem:[%s6476 + $0x5c] sm:$0xf]
        %v6501 = vld [vmem:[%s6476 + $0x60] sm:$0xf]
        %v6502 = vld [vmem:[%s6476 + $0x64] sm:$0xf]
        %v6503 = vld [vmem:[%s6476 + $0x68] sm:$0xf]
        %v6504 = vld [vmem:[%s6476 + $0x6c] sm:$0xf]
        %v6505 = vld [vmem:[%s6476 + $0x70] sm:$0xf]
        %v6506 = vld [vmem:[%s6476 + $0x74] sm:$0xf]
        %v6507 = vld [vmem:[%s6476 + $0x78] sm:$0xf]
        %v6508 = vld [vmem:[%s6476 + $0x7c] sm:$0xf]
        %v6509 = vld [vmem:[%s6476 + $0x80] sm:$0xf]
        %v6510 = vld [vmem:[%s6476 + $0x84] sm:$0xf]
        %v6511 = vld [vmem:[%s6476 + $0x88] sm:$0xf]
        %v6512 = vld [vmem:[%s6476 + $0x8c] sm:$0xf]
        %v6513 = vld [vmem:[%s6476 + $0x90] sm:$0xf]
        %v6514 = vld [vmem:[%s6476 + $0x94] sm:$0xf]
        %v6515 = vld [vmem:[%s6476 + $0x98] sm:$0xf]
        %v6516 = vld [vmem:[%s6476 + $0x9c] sm:$0xf]
        %v6517 = vld [vmem:[%s6476 + $0xa0] sm:$0xf]
        %v6518 = vld [vmem:[%s6476 + $0xa4] sm:$0xf]
        %v6519 = vld [vmem:[%s6476 + $0xa8] sm:$0xf]
        %v6520 = vld [vmem:[%s6476 + $0xac] sm:$0xf]
        %v6521 = vld [vmem:[%s6476 + $0xb0] sm:$0xf]
        %v6522 = vld [vmem:[%s6476 + $0xb4] sm:$0xf]
        %v6523 = vld [vmem:[%s6476 + $0xb8] sm:$0xf]
        %v6524 = vld [vmem:[%s6476 + $0xbc] sm:$0xf]
        %v6525 = vld [vmem:[%s6476 + $0xc0] sm:$0xf]
        %v6526 = vld [vmem:[%s6476 + $0xc4] sm:$0xf]
        %v6527 = vld [vmem:[%s6476 + $0xc8] sm:$0xf]
        %v6528 = vld [vmem:[%s6476 + $0xcc] sm:$0xf]
        %v6529 = vld [vmem:[%s6476 + $0xd0] sm:$0xf]
        %v6530 = vld [vmem:[%s6476 + $0xd4] sm:$0xf]
        %v6531 = vld [vmem:[%s6476 + $0xd8] sm:$0xf]
        %v6532 = vld [vmem:[%s6476 + $0xdc] sm:$0xf]
        %v6533 = vld [vmem:[%s6476 + $0xe0] sm:$0xf]
        %v6534 = vld [vmem:[%s6476 + $0xe4] sm:$0xf]
        %v6535 = vld [vmem:[%s6476 + $0xe8] sm:$0xf]
        %v6536 = vld [vmem:[%s6476 + $0xec] sm:$0xf]
        %v6537 = vld [vmem:[%s6476 + $0xf0] sm:$0xf]
        %v6538 = vld [vmem:[%s6476 + $0xf4] sm:$0xf]
        %v6539 = vld [vmem:[%s6476 + $0xf8] sm:$0xf]
        %v6540 = vld [vmem:[%s6476 + $0xfc] sm:$0xf]
        %v6541 = vld [vmem:[%s6476 + $0x100] sm:$0xf]
        %v6542 = vld [vmem:[%s6476 + $0x104] sm:$0xf]
        %v6543 = vld [vmem:[%s6476 + $0x108] sm:$0xf]
        %v6544 = vld [vmem:[%s6476 + $0x10c] sm:$0xf]
        %v6545 = vld [vmem:[%s6476 + $0x110] sm:$0xf]
        %v6546 = vld [vmem:[%s6476 + $0x114] sm:$0xf]
        %v6547 = vld [vmem:[%s6476 + $0x118] sm:$0xf]
        %v6548 = vld [vmem:[%s6476 + $0x11c] sm:$0xf]
        %v6549 = vld [vmem:[%s6476 + $0x120] sm:$0xf]
        %v6550 = vld [vmem:[%s6476 + $0x124] sm:$0xf]
        %v6551 = vld [vmem:[%s6476 + $0x128] sm:$0xf]
        %v6552 = vld [vmem:[%s6476 + $0x12c] sm:$0xf]
        %v6553 = vld [vmem:[%s6476 + $0x130] sm:$0xf]
        %v6554 = vld [vmem:[%s6476 + $0x134] sm:$0xf]
        %v6555 = vld [vmem:[%s6476 + $0x138] sm:$0xf]
        %v6556 = vld [vmem:[%s6476 + $0x13c] sm:$0xf]
        %v6557 = vld [vmem:[%s6476 + $0x140] sm:$0xf]
        %v6558 = vld [vmem:[%s6476 + $0x144] sm:$0xf]
        %v6559 = vld [vmem:[%s6476 + $0x148] sm:$0xf]
        %v6560 = vld [vmem:[%s6476 + $0x14c] sm:$0xf]
        %v6561 = vld [vmem:[%s6476 + $0x150] sm:$0xf]
        %v6562 = vld [vmem:[%s6476 + $0x154] sm:$0xf]
        %v6563 = vld [vmem:[%s6476 + $0x158] sm:$0xf]
        %v6564 = vld [vmem:[%s6476 + $0x15c] sm:$0xf]
        %v6565 = vld [vmem:[%s6476 + $0x160] sm:$0xf]
        %v6566 = vld [vmem:[%s6476 + $0x164] sm:$0xf]
        %v6567 = vld [vmem:[%s6476 + $0x168] sm:$0xf]
        %v6568 = vld [vmem:[%s6476 + $0x16c] sm:$0xf]
        %v6569 = vld [vmem:[%s6476 + $0x170] sm:$0xf]
        %v6570 = vld [vmem:[%s6476 + $0x174] sm:$0xf]
        %v6571 = vld [vmem:[%s6476 + $0x178] sm:$0xf]
        %v6572 = vld [vmem:[%s6476 + $0x17c] sm:$0xf]
        %v6573 = vld [vmem:[%s6476 + $0x180] sm:$0xf]
        %v6574 = vld [vmem:[%s6476 + $0x184] sm:$0xf]
        %v6575 = vld [vmem:[%s6476 + $0x188] sm:$0xf]
        %v6576 = vld [vmem:[%s6476 + $0x18c] sm:$0xf]
        %v6577 = vld [vmem:[%s6476 + $0x190] sm:$0xf]
        %v6578 = vld [vmem:[%s6476 + $0x194] sm:$0xf]
        %v6579 = vld [vmem:[%s6476 + $0x198] sm:$0xf]
        %v6580 = vld [vmem:[%s6476 + $0x19c] sm:$0xf]
        %v6581 = vld [vmem:[%s6476 + $0x1a0] sm:$0xf]
        %v6582 = vld [vmem:[%s6476 + $0x1a4] sm:$0xf]
        %v6583 = vld [vmem:[%s6476 + $0x1a8] sm:$0xf]
        %v6584 = vld [vmem:[%s6476 + $0x1ac] sm:$0xf]
        %v6585 = vld [vmem:[%s6476 + $0x1b0] sm:$0xf]
        %v6586 = vld [vmem:[%s6476 + $0x1b4] sm:$0xf]
        %v6587 = vld [vmem:[%s6476 + $0x1b8] sm:$0xf]
        %v6588 = vld [vmem:[%s6476 + $0x1bc] sm:$0xf]
        %v6589 = vld [vmem:[%s6476 + $0x1c0] sm:$0xf]
        %v6590 = vld [vmem:[%s6476 + $0x1c4] sm:$0xf]
        %v6591 = vld [vmem:[%s6476 + $0x1c8] sm:$0xf]
        %v6592 = vld [vmem:[%s6476 + $0x1cc] sm:$0xf]
        %v6593 = vld [vmem:[%s6476 + $0x1d0] sm:$0xf]
        %v6594 = vld [vmem:[%s6476 + $0x1d4] sm:$0xf]
        %v6595 = vld [vmem:[%s6476 + $0x1d8] sm:$0xf]
        %v6596 = vld [vmem:[%s6476 + $0x1dc] sm:$0xf]
        %v6597 = vld [vmem:[%s6476 + $0x1e0] sm:$0xf]
        %v6598 = vld [vmem:[%s6476 + $0x1e4] sm:$0xf]
        %v6599 = vld [vmem:[%s6476 + $0x1e8] sm:$0xf]
        %v6600 = vld [vmem:[%s6476 + $0x1ec] sm:$0xf]
        %v6601 = vld [vmem:[%s6476 + $0x1f0] sm:$0xf]
        %v6602 = vld [vmem:[%s6476 + $0x1f4] sm:$0xf]
        %v6603 = vld [vmem:[%s6476 + $0x1f8] sm:$0xf]
        %v6604 = vld [vmem:[%s6476 + $0x1fc] sm:$0xf]
        %v6606 = vshrl.u32 %v5850, 16
        %v6609 = vshrl.u32 %v5851, 16
        %v6612 = vshrl.u32 %v5852, 16
        %v6615 = vshrl.u32 %v5853, 16
        %v6618 = vshrl.u32 %v5854, 16
        %v6621 = vshrl.u32 %v5855, 16
        %v6624 = vshrl.u32 %v5856, 16
        %v6627 = vshrl.u32 %v5857, 16
        %v6765 = vunpack.c.l.b16 %v6477
        %v6766 = vunpack.c.l.b16 %v6478
        %v6767 = vunpack.c.l.b16 %v6479
        %v6768 = vunpack.c.l.b16 %v6480
        %v6769 = vunpack.c.l.b16 %v6481
        %v6770 = vunpack.c.l.b16 %v6482
        %v6771 = vunpack.c.l.b16 %v6483
        %v6772 = vunpack.c.l.b16 %v6484
        %v6773 = vunpack.c.l.b16 %v6485
        %v6774 = vunpack.c.l.b16 %v6486
        %v6775 = vunpack.c.l.b16 %v6487
        %v6776 = vunpack.c.l.b16 %v6488
        %v6777 = vunpack.c.l.b16 %v6489
        %v6778 = vunpack.c.l.b16 %v6490
        %v6779 = vunpack.c.l.b16 %v6491
        %v6780 = vunpack.c.l.b16 %v6492
        %v6781 = vunpack.c.l.b16 %v6493
        %v6782 = vunpack.c.l.b16 %v6494
        %v6783 = vunpack.c.l.b16 %v6495
        %v6784 = vunpack.c.l.b16 %v6496
        %v6785 = vunpack.c.l.b16 %v6497
        %v6786 = vunpack.c.l.b16 %v6498
        %v6787 = vunpack.c.l.b16 %v6499
        %v6788 = vunpack.c.l.b16 %v6500
        %v6789 = vunpack.c.l.b16 %v6501
        %v6790 = vunpack.c.l.b16 %v6502
        %v6791 = vunpack.c.l.b16 %v6503
        %v6792 = vunpack.c.l.b16 %v6504
        %v6793 = vunpack.c.l.b16 %v6505
        %v6794 = vunpack.c.l.b16 %v6506
        %v6795 = vunpack.c.l.b16 %v6507
        %v6796 = vunpack.c.l.b16 %v6508
        %v6797 = vunpack.c.l.b16 %v6509
        %v6798 = vunpack.c.l.b16 %v6510
        %v6799 = vunpack.c.l.b16 %v6511
        %v6800 = vunpack.c.l.b16 %v6512
        %v6801 = vunpack.c.l.b16 %v6513
        %v6802 = vunpack.c.l.b16 %v6514
        %v6803 = vunpack.c.l.b16 %v6515
        %v6804 = vunpack.c.l.b16 %v6516
        %v6805 = vunpack.c.l.b16 %v6517
        %v6806 = vunpack.c.l.b16 %v6518
        %v6807 = vunpack.c.l.b16 %v6519
        %v6808 = vunpack.c.l.b16 %v6520
        %v6809 = vunpack.c.l.b16 %v6521
        %v6810 = vunpack.c.l.b16 %v6522
        %v6811 = vunpack.c.l.b16 %v6523
        %v6812 = vunpack.c.l.b16 %v6524
        %v6813 = vunpack.c.l.b16 %v6525
        %v6814 = vunpack.c.l.b16 %v6526
        %v6815 = vunpack.c.l.b16 %v6527
        %v6816 = vunpack.c.l.b16 %v6528
        %v6817 = vunpack.c.l.b16 %v6529
        %v6818 = vunpack.c.l.b16 %v6530
        %v6819 = vunpack.c.l.b16 %v6531
        %v6820 = vunpack.c.l.b16 %v6532
        %v6821 = vunpack.c.l.b16 %v6533
        %v6822 = vunpack.c.l.b16 %v6534
        %v6823 = vunpack.c.l.b16 %v6535
        %v6824 = vunpack.c.l.b16 %v6536
        %v6825 = vunpack.c.l.b16 %v6537
        %v6826 = vunpack.c.l.b16 %v6538
        %v6827 = vunpack.c.l.b16 %v6539
        %v6828 = vunpack.c.l.b16 %v6540
        %v6829 = vunpack.c.l.b16 %v6541
        %v6830 = vunpack.c.l.b16 %v6542
        %v6831 = vunpack.c.l.b16 %v6543
        %v6832 = vunpack.c.l.b16 %v6544
        %v6833 = vunpack.c.l.b16 %v6545
        %v6834 = vunpack.c.l.b16 %v6546
        %v6835 = vunpack.c.l.b16 %v6547
        %v6836 = vunpack.c.l.b16 %v6548
        %v6837 = vunpack.c.l.b16 %v6549
        %v6838 = vunpack.c.l.b16 %v6550
        %v6839 = vunpack.c.l.b16 %v6551
        %v6840 = vunpack.c.l.b16 %v6552
        %v6841 = vunpack.c.l.b16 %v6553
        %v6842 = vunpack.c.l.b16 %v6554
        %v6843 = vunpack.c.l.b16 %v6555
        %v6844 = vunpack.c.l.b16 %v6556
        %v6845 = vunpack.c.l.b16 %v6557
        %v6846 = vunpack.c.l.b16 %v6558
        %v6847 = vunpack.c.l.b16 %v6559
        %v6848 = vunpack.c.l.b16 %v6560
        %v6849 = vunpack.c.l.b16 %v6561
        %v6850 = vunpack.c.l.b16 %v6562
        %v6851 = vunpack.c.l.b16 %v6563
        %v6852 = vunpack.c.l.b16 %v6564
        %v6853 = vunpack.c.l.b16 %v6565
        %v6854 = vunpack.c.l.b16 %v6566
        %v6855 = vunpack.c.l.b16 %v6567
        %v6856 = vunpack.c.l.b16 %v6568
        %v6857 = vunpack.c.l.b16 %v6569
        %v6858 = vunpack.c.l.b16 %v6570
        %v6859 = vunpack.c.l.b16 %v6571
        %v6860 = vunpack.c.l.b16 %v6572
        %v6861 = vunpack.c.l.b16 %v6573
        %v6862 = vunpack.c.l.b16 %v6574
        %v6863 = vunpack.c.l.b16 %v6575
        %v6864 = vunpack.c.l.b16 %v6576
        %v6865 = vunpack.c.l.b16 %v6577
        %v6866 = vunpack.c.l.b16 %v6578
        %v6867 = vunpack.c.l.b16 %v6579
        %v6868 = vunpack.c.l.b16 %v6580
        %v6869 = vunpack.c.l.b16 %v6581
        %v6870 = vunpack.c.l.b16 %v6582
        %v6871 = vunpack.c.l.b16 %v6583
        %v6872 = vunpack.c.l.b16 %v6584
        %v6873 = vunpack.c.l.b16 %v6585
        %v6874 = vunpack.c.l.b16 %v6586
        %v6875 = vunpack.c.l.b16 %v6587
        %v6876 = vunpack.c.l.b16 %v6588
        %v6877 = vunpack.c.l.b16 %v6589
        %v6878 = vunpack.c.l.b16 %v6590
        %v6879 = vunpack.c.l.b16 %v6591
        %v6880 = vunpack.c.l.b16 %v6592
        %v6881 = vunpack.c.l.b16 %v6593
        %v6882 = vunpack.c.l.b16 %v6594
        %v6883 = vunpack.c.l.b16 %v6595
        %v6884 = vunpack.c.l.b16 %v6596
        %v6885 = vunpack.c.l.b16 %v6597
        %v6886 = vunpack.c.l.b16 %v6598
        %v6887 = vunpack.c.l.b16 %v6599
        %v6888 = vunpack.c.l.b16 %v6600
        %v6889 = vunpack.c.l.b16 %v6601
        %v6890 = vunpack.c.l.b16 %v6602
        %v6891 = vunpack.c.l.b16 %v6603
        %v6892 = vunpack.c.l.b16 %v6604
        %v6893 = vpack.c.b16 %v6766, %v6765
        %v6894 = vpack.c.b16 %v6768, %v6767
        %v6895 = vpack.c.b16 %v6770, %v6769
        %v6896 = vpack.c.b16 %v6772, %v6771
        %v6897 = vpack.c.b16 %v6774, %v6773
        %v6898 = vpack.c.b16 %v6776, %v6775
        %v6899 = vpack.c.b16 %v6778, %v6777
        %v6900 = vpack.c.b16 %v6780, %v6779
        %v6901 = vpack.c.b16 %v6782, %v6781
        %v6902 = vpack.c.b16 %v6784, %v6783
        %v6903 = vpack.c.b16 %v6786, %v6785
        %v6904 = vpack.c.b16 %v6788, %v6787
        %v6905 = vpack.c.b16 %v6790, %v6789
        %v6906 = vpack.c.b16 %v6792, %v6791
        %v6907 = vpack.c.b16 %v6794, %v6793
        %v6908 = vpack.c.b16 %v6796, %v6795
        %v6909 = vpack.c.b16 %v6798, %v6797
        %v6910 = vpack.c.b16 %v6800, %v6799
        %v6911 = vpack.c.b16 %v6802, %v6801
        %v6912 = vpack.c.b16 %v6804, %v6803
        %v6913 = vpack.c.b16 %v6806, %v6805
        %v6914 = vpack.c.b16 %v6808, %v6807
        %v6915 = vpack.c.b16 %v6810, %v6809
        %v6916 = vpack.c.b16 %v6812, %v6811
        %v6917 = vpack.c.b16 %v6814, %v6813
        %v6918 = vpack.c.b16 %v6816, %v6815
        %v6919 = vpack.c.b16 %v6818, %v6817
        %v6920 = vpack.c.b16 %v6820, %v6819
        %v6921 = vpack.c.b16 %v6822, %v6821
        %v6922 = vpack.c.b16 %v6824, %v6823
        %v6923 = vpack.c.b16 %v6826, %v6825
        %v6924 = vpack.c.b16 %v6828, %v6827
        %v6925 = vpack.c.b16 %v6830, %v6829
        %v6926 = vpack.c.b16 %v6832, %v6831
        %v6927 = vpack.c.b16 %v6834, %v6833
        %v6928 = vpack.c.b16 %v6836, %v6835
        %v6929 = vpack.c.b16 %v6838, %v6837
        %v6930 = vpack.c.b16 %v6840, %v6839
        %v6931 = vpack.c.b16 %v6842, %v6841
        %v6932 = vpack.c.b16 %v6844, %v6843
        %v6933 = vpack.c.b16 %v6846, %v6845
        %v6934 = vpack.c.b16 %v6848, %v6847
        %v6935 = vpack.c.b16 %v6850, %v6849
        %v6936 = vpack.c.b16 %v6852, %v6851
        %v6937 = vpack.c.b16 %v6854, %v6853
        %v6938 = vpack.c.b16 %v6856, %v6855
        %v6939 = vpack.c.b16 %v6858, %v6857
        %v6940 = vpack.c.b16 %v6860, %v6859
        %v6941 = vpack.c.b16 %v6862, %v6861
        %v6942 = vpack.c.b16 %v6864, %v6863
        %v6943 = vpack.c.b16 %v6866, %v6865
        %v6944 = vpack.c.b16 %v6868, %v6867
        %v6945 = vpack.c.b16 %v6870, %v6869
        %v6946 = vpack.c.b16 %v6872, %v6871
        %v6947 = vpack.c.b16 %v6874, %v6873
        %v6948 = vpack.c.b16 %v6876, %v6875
        %v6949 = vpack.c.b16 %v6878, %v6877
        %v6950 = vpack.c.b16 %v6880, %v6879
        %v6951 = vpack.c.b16 %v6882, %v6881
        %v6952 = vpack.c.b16 %v6884, %v6883
        %v6953 = vpack.c.b16 %v6886, %v6885
        %v6954 = vpack.c.b16 %v6888, %v6887
        %v6955 = vpack.c.b16 %v6890, %v6889
        %v6956 = vpack.c.b16 %v6892, %v6891
        %7021 = vmatpush.bf16.msra.mxu0 %v6900
        %7022 = vmatpush.bf16.msra.mxu0 %v6899
        %7023 = vmatpush.bf16.msra.mxu0 %v6898
        %7024 = vmatpush.bf16.msra.mxu0 %v6897
        %7025 = vmatpush.bf16.msra.mxu0 %v6896
        %7026 = vmatpush.bf16.msra.mxu0 %v6895
        %7027 = vmatpush.bf16.msra.mxu0 %v6894
        %7028 = vmatpush.bf16.msra.mxu0 %v6893
        %7029 = vmatmul.bf16.gmra.mxu0 %v6606
        %v7030 = vpop.f32.mrf.mxu0
        %v7031 = vadd.f32 0.0, %v7030
        %v7032 = vpop.f32.mrf.mxu0
        %7033 = vdwg.mxu0
        %7034 = vmatpush.bf16.msra.mxu0 %v6908
        %7035 = vmatpush.bf16.msra.mxu0 %v6907
        %7036 = vmatpush.bf16.msra.mxu0 %v6906
        %7037 = vmatpush.bf16.msra.mxu0 %v6905
        %7038 = vmatpush.bf16.msra.mxu0 %v6904
        %7039 = vmatpush.bf16.msra.mxu0 %v6903
        %7040 = vmatpush.bf16.msra.mxu0 %v6902
        %7041 = vmatpush.bf16.msra.mxu0 %v6901
        %7042 = vmatmul.bf16.gmra.mxu0 %v6609
        %v7043 = vpop.f32.mrf.mxu0
        %v7044 = vadd.f32 %v7031, %v7043
        %v7045 = vpop.f32.mrf.mxu0
        %7046 = vdwg.mxu0
        %7047 = vmatpush.bf16.msra.mxu0 %v6916
        %7048 = vmatpush.bf16.msra.mxu0 %v6915
        %7049 = vmatpush.bf16.msra.mxu0 %v6914
        %7050 = vmatpush.bf16.msra.mxu0 %v6913
        %7051 = vmatpush.bf16.msra.mxu0 %v6912
        %7052 = vmatpush.bf16.msra.mxu0 %v6911
        %7053 = vmatpush.bf16.msra.mxu0 %v6910
        %7054 = vmatpush.bf16.msra.mxu0 %v6909
        %7055 = vmatmul.bf16.gmra.mxu0 %v6612
        %v7056 = vpop.f32.mrf.mxu0
        %v7057 = vadd.f32 %v7044, %v7056
        %v7058 = vpop.f32.mrf.mxu0
        %7059 = vdwg.mxu0
        %7060 = vmatpush.bf16.msra.mxu0 %v6924
        %7061 = vmatpush.bf16.msra.mxu0 %v6923
        %7062 = vmatpush.bf16.msra.mxu0 %v6922
        %7063 = vmatpush.bf16.msra.mxu0 %v6921
        %7064 = vmatpush.bf16.msra.mxu0 %v6920
        %7065 = vmatpush.bf16.msra.mxu0 %v6919
        %7066 = vmatpush.bf16.msra.mxu0 %v6918
        %7067 = vmatpush.bf16.msra.mxu0 %v6917
        %7068 = vmatmul.bf16.gmra.mxu0 %v6615
        %v7069 = vpop.f32.mrf.mxu0
        %v7070 = vadd.f32 %v7057, %v7069
        %v7071 = vpop.f32.mrf.mxu0
        %7072 = vdwg.mxu0
        %7073 = vmatpush.bf16.msra.mxu0 %v6932
        %7074 = vmatpush.bf16.msra.mxu0 %v6931
        %7075 = vmatpush.bf16.msra.mxu0 %v6930
        %7076 = vmatpush.bf16.msra.mxu0 %v6929
        %7077 = vmatpush.bf16.msra.mxu0 %v6928
        %7078 = vmatpush.bf16.msra.mxu0 %v6927
        %7079 = vmatpush.bf16.msra.mxu0 %v6926
        %7080 = vmatpush.bf16.msra.mxu0 %v6925
        %7081 = vmatmul.bf16.gmra.mxu0 %v6618
        %v7082 = vpop.f32.mrf.mxu0
        %v7083 = vadd.f32 %v7070, %v7082
        %v7084 = vpop.f32.mrf.mxu0
        %7085 = vdwg.mxu0
        %7086 = vmatpush.bf16.msra.mxu0 %v6940
        %7087 = vmatpush.bf16.msra.mxu0 %v6939
        %7088 = vmatpush.bf16.msra.mxu0 %v6938
        %7089 = vmatpush.bf16.msra.mxu0 %v6937
        %7090 = vmatpush.bf16.msra.mxu0 %v6936
        %7091 = vmatpush.bf16.msra.mxu0 %v6935
        %7092 = vmatpush.bf16.msra.mxu0 %v6934
        %7093 = vmatpush.bf16.msra.mxu0 %v6933
        %7094 = vmatmul.bf16.gmra.mxu0 %v6621
        %v7095 = vpop.f32.mrf.mxu0
        %v7096 = vadd.f32 %v7083, %v7095
        %v7097 = vpop.f32.mrf.mxu0
        %7098 = vdwg.mxu0
        %7099 = vmatpush.bf16.msra.mxu0 %v6948
        %7100 = vmatpush.bf16.msra.mxu0 %v6947
        %7101 = vmatpush.bf16.msra.mxu0 %v6946
        %7102 = vmatpush.bf16.msra.mxu0 %v6945
        %7103 = vmatpush.bf16.msra.mxu0 %v6944
        %7104 = vmatpush.bf16.msra.mxu0 %v6943
        %7105 = vmatpush.bf16.msra.mxu0 %v6942
        %7106 = vmatpush.bf16.msra.mxu0 %v6941
        %7107 = vmatmul.bf16.gmra.mxu0 %v6624
        %v7108 = vpop.f32.mrf.mxu0
        %v7109 = vadd.f32 %v7096, %v7108
        %v7110 = vpop.f32.mrf.mxu0
        %7111 = vdwg.mxu0
        %7112 = vmatpush.bf16.msra.mxu0 %v6956
        %7113 = vmatpush.bf16.msra.mxu0 %v6955
        %7114 = vmatpush.bf16.msra.mxu0 %v6954
        %7115 = vmatpush.bf16.msra.mxu0 %v6953
        %7116 = vmatpush.bf16.msra.mxu0 %v6952
        %7117 = vmatpush.bf16.msra.mxu0 %v6951
        %7118 = vmatpush.bf16.msra.mxu0 %v6950
        %7119 = vmatpush.bf16.msra.mxu0 %v6949
        %7120 = vmatmul.bf16.gmra.mxu0 %v6627
        %v7121 = vpop.f32.mrf.mxu0
        %v7122 = vadd.f32 %v7109, %v7121
        %v7123 = vpop.f32.mrf.mxu0
        %7124 = vdwg.mxu0
        %v7125 = vadd.f32 %v6475, %v7122
        %s7126 = scalar_lea.vmem %s3, 5120
        %v7127 = vld [vmem:[%s7126] sm:$0xf]
        %v7128 = vld [vmem:[%s7126 + $0x4] sm:$0xf]
        %v7129 = vld [vmem:[%s7126 + $0x8] sm:$0xf]
        %v7130 = vld [vmem:[%s7126 + $0xc] sm:$0xf]
        %v7131 = vld [vmem:[%s7126 + $0x10] sm:$0xf]
        %v7132 = vld [vmem:[%s7126 + $0x14] sm:$0xf]
        %v7133 = vld [vmem:[%s7126 + $0x18] sm:$0xf]
        %v7134 = vld [vmem:[%s7126 + $0x1c] sm:$0xf]
        %v7135 = vld [vmem:[%s7126 + $0x20] sm:$0xf]
        %v7136 = vld [vmem:[%s7126 + $0x24] sm:$0xf]
        %v7137 = vld [vmem:[%s7126 + $0x28] sm:$0xf]
        %v7138 = vld [vmem:[%s7126 + $0x2c] sm:$0xf]
        %v7139 = vld [vmem:[%s7126 + $0x30] sm:$0xf]
        %v7140 = vld [vmem:[%s7126 + $0x34] sm:$0xf]
        %v7141 = vld [vmem:[%s7126 + $0x38] sm:$0xf]
        %v7142 = vld [vmem:[%s7126 + $0x3c] sm:$0xf]
        %v7143 = vld [vmem:[%s7126 + $0x40] sm:$0xf]
        %v7144 = vld [vmem:[%s7126 + $0x44] sm:$0xf]
        %v7145 = vld [vmem:[%s7126 + $0x48] sm:$0xf]
        %v7146 = vld [vmem:[%s7126 + $0x4c] sm:$0xf]
        %v7147 = vld [vmem:[%s7126 + $0x50] sm:$0xf]
        %v7148 = vld [vmem:[%s7126 + $0x54] sm:$0xf]
        %v7149 = vld [vmem:[%s7126 + $0x58] sm:$0xf]
        %v7150 = vld [vmem:[%s7126 + $0x5c] sm:$0xf]
        %v7151 = vld [vmem:[%s7126 + $0x60] sm:$0xf]
        %v7152 = vld [vmem:[%s7126 + $0x64] sm:$0xf]
        %v7153 = vld [vmem:[%s7126 + $0x68] sm:$0xf]
        %v7154 = vld [vmem:[%s7126 + $0x6c] sm:$0xf]
        %v7155 = vld [vmem:[%s7126 + $0x70] sm:$0xf]
        %v7156 = vld [vmem:[%s7126 + $0x74] sm:$0xf]
        %v7157 = vld [vmem:[%s7126 + $0x78] sm:$0xf]
        %v7158 = vld [vmem:[%s7126 + $0x7c] sm:$0xf]
        %v7159 = vld [vmem:[%s7126 + $0x80] sm:$0xf]
        %v7160 = vld [vmem:[%s7126 + $0x84] sm:$0xf]
        %v7161 = vld [vmem:[%s7126 + $0x88] sm:$0xf]
        %v7162 = vld [vmem:[%s7126 + $0x8c] sm:$0xf]
        %v7163 = vld [vmem:[%s7126 + $0x90] sm:$0xf]
        %v7164 = vld [vmem:[%s7126 + $0x94] sm:$0xf]
        %v7165 = vld [vmem:[%s7126 + $0x98] sm:$0xf]
        %v7166 = vld [vmem:[%s7126 + $0x9c] sm:$0xf]
        %v7167 = vld [vmem:[%s7126 + $0xa0] sm:$0xf]
        %v7168 = vld [vmem:[%s7126 + $0xa4] sm:$0xf]
        %v7169 = vld [vmem:[%s7126 + $0xa8] sm:$0xf]
        %v7170 = vld [vmem:[%s7126 + $0xac] sm:$0xf]
        %v7171 = vld [vmem:[%s7126 + $0xb0] sm:$0xf]
        %v7172 = vld [vmem:[%s7126 + $0xb4] sm:$0xf]
        %v7173 = vld [vmem:[%s7126 + $0xb8] sm:$0xf]
        %v7174 = vld [vmem:[%s7126 + $0xbc] sm:$0xf]
        %v7175 = vld [vmem:[%s7126 + $0xc0] sm:$0xf]
        %v7176 = vld [vmem:[%s7126 + $0xc4] sm:$0xf]
        %v7177 = vld [vmem:[%s7126 + $0xc8] sm:$0xf]
        %v7178 = vld [vmem:[%s7126 + $0xcc] sm:$0xf]
        %v7179 = vld [vmem:[%s7126 + $0xd0] sm:$0xf]
        %v7180 = vld [vmem:[%s7126 + $0xd4] sm:$0xf]
        %v7181 = vld [vmem:[%s7126 + $0xd8] sm:$0xf]
        %v7182 = vld [vmem:[%s7126 + $0xdc] sm:$0xf]
        %v7183 = vld [vmem:[%s7126 + $0xe0] sm:$0xf]
        %v7184 = vld [vmem:[%s7126 + $0xe4] sm:$0xf]
        %v7185 = vld [vmem:[%s7126 + $0xe8] sm:$0xf]
        %v7186 = vld [vmem:[%s7126 + $0xec] sm:$0xf]
        %v7187 = vld [vmem:[%s7126 + $0xf0] sm:$0xf]
        %v7188 = vld [vmem:[%s7126 + $0xf4] sm:$0xf]
        %v7189 = vld [vmem:[%s7126 + $0xf8] sm:$0xf]
        %v7190 = vld [vmem:[%s7126 + $0xfc] sm:$0xf]
        %v7191 = vld [vmem:[%s7126 + $0x100] sm:$0xf]
        %v7192 = vld [vmem:[%s7126 + $0x104] sm:$0xf]
        %v7193 = vld [vmem:[%s7126 + $0x108] sm:$0xf]
        %v7194 = vld [vmem:[%s7126 + $0x10c] sm:$0xf]
        %v7195 = vld [vmem:[%s7126 + $0x110] sm:$0xf]
        %v7196 = vld [vmem:[%s7126 + $0x114] sm:$0xf]
        %v7197 = vld [vmem:[%s7126 + $0x118] sm:$0xf]
        %v7198 = vld [vmem:[%s7126 + $0x11c] sm:$0xf]
        %v7199 = vld [vmem:[%s7126 + $0x120] sm:$0xf]
        %v7200 = vld [vmem:[%s7126 + $0x124] sm:$0xf]
        %v7201 = vld [vmem:[%s7126 + $0x128] sm:$0xf]
        %v7202 = vld [vmem:[%s7126 + $0x12c] sm:$0xf]
        %v7203 = vld [vmem:[%s7126 + $0x130] sm:$0xf]
        %v7204 = vld [vmem:[%s7126 + $0x134] sm:$0xf]
        %v7205 = vld [vmem:[%s7126 + $0x138] sm:$0xf]
        %v7206 = vld [vmem:[%s7126 + $0x13c] sm:$0xf]
        %v7207 = vld [vmem:[%s7126 + $0x140] sm:$0xf]
        %v7208 = vld [vmem:[%s7126 + $0x144] sm:$0xf]
        %v7209 = vld [vmem:[%s7126 + $0x148] sm:$0xf]
        %v7210 = vld [vmem:[%s7126 + $0x14c] sm:$0xf]
        %v7211 = vld [vmem:[%s7126 + $0x150] sm:$0xf]
        %v7212 = vld [vmem:[%s7126 + $0x154] sm:$0xf]
        %v7213 = vld [vmem:[%s7126 + $0x158] sm:$0xf]
        %v7214 = vld [vmem:[%s7126 + $0x15c] sm:$0xf]
        %v7215 = vld [vmem:[%s7126 + $0x160] sm:$0xf]
        %v7216 = vld [vmem:[%s7126 + $0x164] sm:$0xf]
        %v7217 = vld [vmem:[%s7126 + $0x168] sm:$0xf]
        %v7218 = vld [vmem:[%s7126 + $0x16c] sm:$0xf]
        %v7219 = vld [vmem:[%s7126 + $0x170] sm:$0xf]
        %v7220 = vld [vmem:[%s7126 + $0x174] sm:$0xf]
        %v7221 = vld [vmem:[%s7126 + $0x178] sm:$0xf]
        %v7222 = vld [vmem:[%s7126 + $0x17c] sm:$0xf]
        %v7223 = vld [vmem:[%s7126 + $0x180] sm:$0xf]
        %v7224 = vld [vmem:[%s7126 + $0x184] sm:$0xf]
        %v7225 = vld [vmem:[%s7126 + $0x188] sm:$0xf]
        %v7226 = vld [vmem:[%s7126 + $0x18c] sm:$0xf]
        %v7227 = vld [vmem:[%s7126 + $0x190] sm:$0xf]
        %v7228 = vld [vmem:[%s7126 + $0x194] sm:$0xf]
        %v7229 = vld [vmem:[%s7126 + $0x198] sm:$0xf]
        %v7230 = vld [vmem:[%s7126 + $0x19c] sm:$0xf]
        %v7231 = vld [vmem:[%s7126 + $0x1a0] sm:$0xf]
        %v7232 = vld [vmem:[%s7126 + $0x1a4] sm:$0xf]
        %v7233 = vld [vmem:[%s7126 + $0x1a8] sm:$0xf]
        %v7234 = vld [vmem:[%s7126 + $0x1ac] sm:$0xf]
        %v7235 = vld [vmem:[%s7126 + $0x1b0] sm:$0xf]
        %v7236 = vld [vmem:[%s7126 + $0x1b4] sm:$0xf]
        %v7237 = vld [vmem:[%s7126 + $0x1b8] sm:$0xf]
        %v7238 = vld [vmem:[%s7126 + $0x1bc] sm:$0xf]
        %v7239 = vld [vmem:[%s7126 + $0x1c0] sm:$0xf]
        %v7240 = vld [vmem:[%s7126 + $0x1c4] sm:$0xf]
        %v7241 = vld [vmem:[%s7126 + $0x1c8] sm:$0xf]
        %v7242 = vld [vmem:[%s7126 + $0x1cc] sm:$0xf]
        %v7243 = vld [vmem:[%s7126 + $0x1d0] sm:$0xf]
        %v7244 = vld [vmem:[%s7126 + $0x1d4] sm:$0xf]
        %v7245 = vld [vmem:[%s7126 + $0x1d8] sm:$0xf]
        %v7246 = vld [vmem:[%s7126 + $0x1dc] sm:$0xf]
        %v7247 = vld [vmem:[%s7126 + $0x1e0] sm:$0xf]
        %v7248 = vld [vmem:[%s7126 + $0x1e4] sm:$0xf]
        %v7249 = vld [vmem:[%s7126 + $0x1e8] sm:$0xf]
        %v7250 = vld [vmem:[%s7126 + $0x1ec] sm:$0xf]
        %v7251 = vld [vmem:[%s7126 + $0x1f0] sm:$0xf]
        %v7252 = vld [vmem:[%s7126 + $0x1f4] sm:$0xf]
        %v7253 = vld [vmem:[%s7126 + $0x1f8] sm:$0xf]
        %v7254 = vld [vmem:[%s7126 + $0x1fc] sm:$0xf]
        %v7263 = vrot.slane %v5850, 1
        %v7264 = vrot.slane %v5851, 1
        %v7265 = vrot.slane %v5852, 1
        %v7266 = vrot.slane %v5853, 1
        %v7267 = vrot.slane %v5854, 1
        %v7268 = vrot.slane %v5855, 1
        %v7269 = vrot.slane %v5856, 1
        %v7270 = vrot.slane %v5857, 1
        %v7407 = vunpack.c.l.b16 %v7127
        %v7408 = vunpack.c.l.b16 %v7128
        %v7409 = vunpack.c.l.b16 %v7129
        %v7410 = vunpack.c.l.b16 %v7130
        %v7411 = vunpack.c.l.b16 %v7131
        %v7412 = vunpack.c.l.b16 %v7132
        %v7413 = vunpack.c.l.b16 %v7133
        %v7414 = vunpack.c.l.b16 %v7134
        %v7415 = vunpack.c.l.b16 %v7135
        %v7416 = vunpack.c.l.b16 %v7136
        %v7417 = vunpack.c.l.b16 %v7137
        %v7418 = vunpack.c.l.b16 %v7138
        %v7419 = vunpack.c.l.b16 %v7139
        %v7420 = vunpack.c.l.b16 %v7140
        %v7421 = vunpack.c.l.b16 %v7141
        %v7422 = vunpack.c.l.b16 %v7142
        %v7423 = vunpack.c.l.b16 %v7143
        %v7424 = vunpack.c.l.b16 %v7144
        %v7425 = vunpack.c.l.b16 %v7145
        %v7426 = vunpack.c.l.b16 %v7146
        %v7427 = vunpack.c.l.b16 %v7147
        %v7428 = vunpack.c.l.b16 %v7148
        %v7429 = vunpack.c.l.b16 %v7149
        %v7430 = vunpack.c.l.b16 %v7150
        %v7431 = vunpack.c.l.b16 %v7151
        %v7432 = vunpack.c.l.b16 %v7152
        %v7433 = vunpack.c.l.b16 %v7153
        %v7434 = vunpack.c.l.b16 %v7154
        %v7435 = vunpack.c.l.b16 %v7155
        %v7436 = vunpack.c.l.b16 %v7156
        %v7437 = vunpack.c.l.b16 %v7157
        %v7438 = vunpack.c.l.b16 %v7158
        %v7439 = vunpack.c.l.b16 %v7159
        %v7440 = vunpack.c.l.b16 %v7160
        %v7441 = vunpack.c.l.b16 %v7161
        %v7442 = vunpack.c.l.b16 %v7162
        %v7443 = vunpack.c.l.b16 %v7163
        %v7444 = vunpack.c.l.b16 %v7164
        %v7445 = vunpack.c.l.b16 %v7165
        %v7446 = vunpack.c.l.b16 %v7166
        %v7447 = vunpack.c.l.b16 %v7167
        %v7448 = vunpack.c.l.b16 %v7168
        %v7449 = vunpack.c.l.b16 %v7169
        %v7450 = vunpack.c.l.b16 %v7170
        %v7451 = vunpack.c.l.b16 %v7171
        %v7452 = vunpack.c.l.b16 %v7172
        %v7453 = vunpack.c.l.b16 %v7173
        %v7454 = vunpack.c.l.b16 %v7174
        %v7455 = vunpack.c.l.b16 %v7175
        %v7456 = vunpack.c.l.b16 %v7176
        %v7457 = vunpack.c.l.b16 %v7177
        %v7458 = vunpack.c.l.b16 %v7178
        %v7459 = vunpack.c.l.b16 %v7179
        %v7460 = vunpack.c.l.b16 %v7180
        %v7461 = vunpack.c.l.b16 %v7181
        %v7462 = vunpack.c.l.b16 %v7182
        %v7463 = vunpack.c.l.b16 %v7183
        %v7464 = vunpack.c.l.b16 %v7184
        %v7465 = vunpack.c.l.b16 %v7185
        %v7466 = vunpack.c.l.b16 %v7186
        %v7467 = vunpack.c.l.b16 %v7187
        %v7468 = vunpack.c.l.b16 %v7188
        %v7469 = vunpack.c.l.b16 %v7189
        %v7470 = vunpack.c.l.b16 %v7190
        %v7471 = vunpack.c.l.b16 %v7191
        %v7472 = vunpack.c.l.b16 %v7192
        %v7473 = vunpack.c.l.b16 %v7193
        %v7474 = vunpack.c.l.b16 %v7194
        %v7475 = vunpack.c.l.b16 %v7195
        %v7476 = vunpack.c.l.b16 %v7196
        %v7477 = vunpack.c.l.b16 %v7197
        %v7478 = vunpack.c.l.b16 %v7198
        %v7479 = vunpack.c.l.b16 %v7199
        %v7480 = vunpack.c.l.b16 %v7200
        %v7481 = vunpack.c.l.b16 %v7201
        %v7482 = vunpack.c.l.b16 %v7202
        %v7483 = vunpack.c.l.b16 %v7203
        %v7484 = vunpack.c.l.b16 %v7204
        %v7485 = vunpack.c.l.b16 %v7205
        %v7486 = vunpack.c.l.b16 %v7206
        %v7487 = vunpack.c.l.b16 %v7207
        %v7488 = vunpack.c.l.b16 %v7208
        %v7489 = vunpack.c.l.b16 %v7209
        %v7490 = vunpack.c.l.b16 %v7210
        %v7491 = vunpack.c.l.b16 %v7211
        %v7492 = vunpack.c.l.b16 %v7212
        %v7493 = vunpack.c.l.b16 %v7213
        %v7494 = vunpack.c.l.b16 %v7214
        %v7495 = vunpack.c.l.b16 %v7215
        %v7496 = vunpack.c.l.b16 %v7216
        %v7497 = vunpack.c.l.b16 %v7217
        %v7498 = vunpack.c.l.b16 %v7218
        %v7499 = vunpack.c.l.b16 %v7219
        %v7500 = vunpack.c.l.b16 %v7220
        %v7501 = vunpack.c.l.b16 %v7221
        %v7502 = vunpack.c.l.b16 %v7222
        %v7503 = vunpack.c.l.b16 %v7223
        %v7504 = vunpack.c.l.b16 %v7224
        %v7505 = vunpack.c.l.b16 %v7225
        %v7506 = vunpack.c.l.b16 %v7226
        %v7507 = vunpack.c.l.b16 %v7227
        %v7508 = vunpack.c.l.b16 %v7228
        %v7509 = vunpack.c.l.b16 %v7229
        %v7510 = vunpack.c.l.b16 %v7230
        %v7511 = vunpack.c.l.b16 %v7231
        %v7512 = vunpack.c.l.b16 %v7232
        %v7513 = vunpack.c.l.b16 %v7233
        %v7514 = vunpack.c.l.b16 %v7234
        %v7515 = vunpack.c.l.b16 %v7235
        %v7516 = vunpack.c.l.b16 %v7236
        %v7517 = vunpack.c.l.b16 %v7237
        %v7518 = vunpack.c.l.b16 %v7238
        %v7519 = vunpack.c.l.b16 %v7239
        %v7520 = vunpack.c.l.b16 %v7240
        %v7521 = vunpack.c.l.b16 %v7241
        %v7522 = vunpack.c.l.b16 %v7242
        %v7523 = vunpack.c.l.b16 %v7243
        %v7524 = vunpack.c.l.b16 %v7244
        %v7525 = vunpack.c.l.b16 %v7245
        %v7526 = vunpack.c.l.b16 %v7246
        %v7527 = vunpack.c.l.b16 %v7247
        %v7528 = vunpack.c.l.b16 %v7248
        %v7529 = vunpack.c.l.b16 %v7249
        %v7530 = vunpack.c.l.b16 %v7250
        %v7531 = vunpack.c.l.b16 %v7251
        %v7532 = vunpack.c.l.b16 %v7252
        %v7533 = vunpack.c.l.b16 %v7253
        %v7534 = vunpack.c.l.b16 %v7254
        %v7535 = vpack.c.b16 %v7408, %v7407
        %v7536 = vpack.c.b16 %v7410, %v7409
        %v7537 = vpack.c.b16 %v7412, %v7411
        %v7538 = vpack.c.b16 %v7414, %v7413
        %v7539 = vpack.c.b16 %v7416, %v7415
        %v7540 = vpack.c.b16 %v7418, %v7417
        %v7541 = vpack.c.b16 %v7420, %v7419
        %v7542 = vpack.c.b16 %v7422, %v7421
        %v7543 = vpack.c.b16 %v7424, %v7423
        %v7544 = vpack.c.b16 %v7426, %v7425
        %v7545 = vpack.c.b16 %v7428, %v7427
        %v7546 = vpack.c.b16 %v7430, %v7429
        %v7547 = vpack.c.b16 %v7432, %v7431
        %v7548 = vpack.c.b16 %v7434, %v7433
        %v7549 = vpack.c.b16 %v7436, %v7435
        %v7550 = vpack.c.b16 %v7438, %v7437
        %v7551 = vpack.c.b16 %v7440, %v7439
        %v7552 = vpack.c.b16 %v7442, %v7441
        %v7553 = vpack.c.b16 %v7444, %v7443
        %v7554 = vpack.c.b16 %v7446, %v7445
        %v7555 = vpack.c.b16 %v7448, %v7447
        %v7556 = vpack.c.b16 %v7450, %v7449
        %v7557 = vpack.c.b16 %v7452, %v7451
        %v7558 = vpack.c.b16 %v7454, %v7453
        %v7559 = vpack.c.b16 %v7456, %v7455
        %v7560 = vpack.c.b16 %v7458, %v7457
        %v7561 = vpack.c.b16 %v7460, %v7459
        %v7562 = vpack.c.b16 %v7462, %v7461
        %v7563 = vpack.c.b16 %v7464, %v7463
        %v7564 = vpack.c.b16 %v7466, %v7465
        %v7565 = vpack.c.b16 %v7468, %v7467
        %v7566 = vpack.c.b16 %v7470, %v7469
        %v7567 = vpack.c.b16 %v7472, %v7471
        %v7568 = vpack.c.b16 %v7474, %v7473
        %v7569 = vpack.c.b16 %v7476, %v7475
        %v7570 = vpack.c.b16 %v7478, %v7477
        %v7571 = vpack.c.b16 %v7480, %v7479
        %v7572 = vpack.c.b16 %v7482, %v7481
        %v7573 = vpack.c.b16 %v7484, %v7483
        %v7574 = vpack.c.b16 %v7486, %v7485
        %v7575 = vpack.c.b16 %v7488, %v7487
        %v7576 = vpack.c.b16 %v7490, %v7489
        %v7577 = vpack.c.b16 %v7492, %v7491
        %v7578 = vpack.c.b16 %v7494, %v7493
        %v7579 = vpack.c.b16 %v7496, %v7495
        %v7580 = vpack.c.b16 %v7498, %v7497
        %v7581 = vpack.c.b16 %v7500, %v7499
        %v7582 = vpack.c.b16 %v7502, %v7501
        %v7583 = vpack.c.b16 %v7504, %v7503
        %v7584 = vpack.c.b16 %v7506, %v7505
        %v7585 = vpack.c.b16 %v7508, %v7507
        %v7586 = vpack.c.b16 %v7510, %v7509
        %v7587 = vpack.c.b16 %v7512, %v7511
        %v7588 = vpack.c.b16 %v7514, %v7513
        %v7589 = vpack.c.b16 %v7516, %v7515
        %v7590 = vpack.c.b16 %v7518, %v7517
        %v7591 = vpack.c.b16 %v7520, %v7519
        %v7592 = vpack.c.b16 %v7522, %v7521
        %v7593 = vpack.c.b16 %v7524, %v7523
        %v7594 = vpack.c.b16 %v7526, %v7525
        %v7595 = vpack.c.b16 %v7528, %v7527
        %v7596 = vpack.c.b16 %v7530, %v7529
        %v7597 = vpack.c.b16 %v7532, %v7531
        %v7598 = vpack.c.b16 %v7534, %v7533
        %7663 = vmatpush.bf16.msra.mxu0 %v7542
        %7664 = vmatpush.bf16.msra.mxu0 %v7541
        %7665 = vmatpush.bf16.msra.mxu0 %v7540
        %7666 = vmatpush.bf16.msra.mxu0 %v7539
        %7667 = vmatpush.bf16.msra.mxu0 %v7538
        %7668 = vmatpush.bf16.msra.mxu0 %v7537
        %7669 = vmatpush.bf16.msra.mxu0 %v7536
        %7670 = vmatpush.bf16.msra.mxu0 %v7535
        %7671 = vmatmul.bf16.gmra.mxu0 %v7263
        %v7672 = vpop.f32.mrf.mxu0
        %v7673 = vadd.f32 0.0, %v7672
        %v7674 = vpop.f32.mrf.mxu0
        %7675 = vdwg.mxu0
        %7676 = vmatpush.bf16.msra.mxu0 %v7550
        %7677 = vmatpush.bf16.msra.mxu0 %v7549
        %7678 = vmatpush.bf16.msra.mxu0 %v7548
        %7679 = vmatpush.bf16.msra.mxu0 %v7547
        %7680 = vmatpush.bf16.msra.mxu0 %v7546
        %7681 = vmatpush.bf16.msra.mxu0 %v7545
        %7682 = vmatpush.bf16.msra.mxu0 %v7544
        %7683 = vmatpush.bf16.msra.mxu0 %v7543
        %7684 = vmatmul.bf16.gmra.mxu0 %v7264
        %v7685 = vpop.f32.mrf.mxu0
        %v7686 = vadd.f32 %v7673, %v7685
        %v7687 = vpop.f32.mrf.mxu0
        %7688 = vdwg.mxu0
        %7689 = vmatpush.bf16.msra.mxu0 %v7558
        %7690 = vmatpush.bf16.msra.mxu0 %v7557
        %7691 = vmatpush.bf16.msra.mxu0 %v7556
        %7692 = vmatpush.bf16.msra.mxu0 %v7555
        %7693 = vmatpush.bf16.msra.mxu0 %v7554
        %7694 = vmatpush.bf16.msra.mxu0 %v7553
        %7695 = vmatpush.bf16.msra.mxu0 %v7552
        %7696 = vmatpush.bf16.msra.mxu0 %v7551
        %7697 = vmatmul.bf16.gmra.mxu0 %v7265
        %v7698 = vpop.f32.mrf.mxu0
        %v7699 = vadd.f32 %v7686, %v7698
        %v7700 = vpop.f32.mrf.mxu0
        %7701 = vdwg.mxu0
        %7702 = vmatpush.bf16.msra.mxu0 %v7566
        %7703 = vmatpush.bf16.msra.mxu0 %v7565
        %7704 = vmatpush.bf16.msra.mxu0 %v7564
        %7705 = vmatpush.bf16.msra.mxu0 %v7563
        %7706 = vmatpush.bf16.msra.mxu0 %v7562
        %7707 = vmatpush.bf16.msra.mxu0 %v7561
        %7708 = vmatpush.bf16.msra.mxu0 %v7560
        %7709 = vmatpush.bf16.msra.mxu0 %v7559
        %7710 = vmatmul.bf16.gmra.mxu0 %v7266
        %v7711 = vpop.f32.mrf.mxu0
        %v7712 = vadd.f32 %v7699, %v7711
        %v7713 = vpop.f32.mrf.mxu0
        %7714 = vdwg.mxu0
        %7715 = vmatpush.bf16.msra.mxu0 %v7574
        %7716 = vmatpush.bf16.msra.mxu0 %v7573
        %7717 = vmatpush.bf16.msra.mxu0 %v7572
        %7718 = vmatpush.bf16.msra.mxu0 %v7571
        %7719 = vmatpush.bf16.msra.mxu0 %v7570
        %7720 = vmatpush.bf16.msra.mxu0 %v7569
        %7721 = vmatpush.bf16.msra.mxu0 %v7568
        %7722 = vmatpush.bf16.msra.mxu0 %v7567
        %7723 = vmatmul.bf16.gmra.mxu0 %v7267
        %v7724 = vpop.f32.mrf.mxu0
        %v7725 = vadd.f32 %v7712, %v7724
        %v7726 = vpop.f32.mrf.mxu0
        %7727 = vdwg.mxu0
        %7728 = vmatpush.bf16.msra.mxu0 %v7582
        %7729 = vmatpush.bf16.msra.mxu0 %v7581
        %7730 = vmatpush.bf16.msra.mxu0 %v7580
        %7731 = vmatpush.bf16.msra.mxu0 %v7579
        %7732 = vmatpush.bf16.msra.mxu0 %v7578
        %7733 = vmatpush.bf16.msra.mxu0 %v7577
        %7734 = vmatpush.bf16.msra.mxu0 %v7576
        %7735 = vmatpush.bf16.msra.mxu0 %v7575
        %7736 = vmatmul.bf16.gmra.mxu0 %v7268
        %v7737 = vpop.f32.mrf.mxu0
        %v7738 = vadd.f32 %v7725, %v7737
        %v7739 = vpop.f32.mrf.mxu0
        %7740 = vdwg.mxu0
        %7741 = vmatpush.bf16.msra.mxu0 %v7590
        %7742 = vmatpush.bf16.msra.mxu0 %v7589
        %7743 = vmatpush.bf16.msra.mxu0 %v7588
        %7744 = vmatpush.bf16.msra.mxu0 %v7587
        %7745 = vmatpush.bf16.msra.mxu0 %v7586
        %7746 = vmatpush.bf16.msra.mxu0 %v7585
        %7747 = vmatpush.bf16.msra.mxu0 %v7584
        %7748 = vmatpush.bf16.msra.mxu0 %v7583
        %7749 = vmatmul.bf16.gmra.mxu0 %v7269
        %v7750 = vpop.f32.mrf.mxu0
        %v7751 = vadd.f32 %v7738, %v7750
        %v7752 = vpop.f32.mrf.mxu0
        %7753 = vdwg.mxu0
        %7754 = vmatpush.bf16.msra.mxu0 %v7598
        %7755 = vmatpush.bf16.msra.mxu0 %v7597
        %7756 = vmatpush.bf16.msra.mxu0 %v7596
        %7757 = vmatpush.bf16.msra.mxu0 %v7595
        %7758 = vmatpush.bf16.msra.mxu0 %v7594
        %7759 = vmatpush.bf16.msra.mxu0 %v7593
        %7760 = vmatpush.bf16.msra.mxu0 %v7592
        %7761 = vmatpush.bf16.msra.mxu0 %v7591
        %7762 = vmatmul.bf16.gmra.mxu0 %v7270
        %v7763 = vpop.f32.mrf.mxu0
        %v7764 = vadd.f32 %v7751, %v7763
        %v7765 = vpop.f32.mrf.mxu0
        %7766 = vdwg.mxu0
        %v7767 = vadd.f32 %v7125, %v7764
        %s7768 = scalar_lea.vmem %s3, 5632
        %v7769 = vld [vmem:[%s7768] sm:$0xf]
        %v7770 = vld [vmem:[%s7768 + $0x4] sm:$0xf]
        %v7771 = vld [vmem:[%s7768 + $0x8] sm:$0xf]
        %v7772 = vld [vmem:[%s7768 + $0xc] sm:$0xf]
        %v7773 = vld [vmem:[%s7768 + $0x10] sm:$0xf]
        %v7774 = vld [vmem:[%s7768 + $0x14] sm:$0xf]
        %v7775 = vld [vmem:[%s7768 + $0x18] sm:$0xf]
        %v7776 = vld [vmem:[%s7768 + $0x1c] sm:$0xf]
        %v7777 = vld [vmem:[%s7768 + $0x20] sm:$0xf]
        %v7778 = vld [vmem:[%s7768 + $0x24] sm:$0xf]
        %v7779 = vld [vmem:[%s7768 + $0x28] sm:$0xf]
        %v7780 = vld [vmem:[%s7768 + $0x2c] sm:$0xf]
        %v7781 = vld [vmem:[%s7768 + $0x30] sm:$0xf]
        %v7782 = vld [vmem:[%s7768 + $0x34] sm:$0xf]
        %v7783 = vld [vmem:[%s7768 + $0x38] sm:$0xf]
        %v7784 = vld [vmem:[%s7768 + $0x3c] sm:$0xf]
        %v7785 = vld [vmem:[%s7768 + $0x40] sm:$0xf]
        %v7786 = vld [vmem:[%s7768 + $0x44] sm:$0xf]
        %v7787 = vld [vmem:[%s7768 + $0x48] sm:$0xf]
        %v7788 = vld [vmem:[%s7768 + $0x4c] sm:$0xf]
        %v7789 = vld [vmem:[%s7768 + $0x50] sm:$0xf]
        %v7790 = vld [vmem:[%s7768 + $0x54] sm:$0xf]
        %v7791 = vld [vmem:[%s7768 + $0x58] sm:$0xf]
        %v7792 = vld [vmem:[%s7768 + $0x5c] sm:$0xf]
        %v7793 = vld [vmem:[%s7768 + $0x60] sm:$0xf]
        %v7794 = vld [vmem:[%s7768 + $0x64] sm:$0xf]
        %v7795 = vld [vmem:[%s7768 + $0x68] sm:$0xf]
        %v7796 = vld [vmem:[%s7768 + $0x6c] sm:$0xf]
        %v7797 = vld [vmem:[%s7768 + $0x70] sm:$0xf]
        %v7798 = vld [vmem:[%s7768 + $0x74] sm:$0xf]
        %v7799 = vld [vmem:[%s7768 + $0x78] sm:$0xf]
        %v7800 = vld [vmem:[%s7768 + $0x7c] sm:$0xf]
        %v7801 = vld [vmem:[%s7768 + $0x80] sm:$0xf]
        %v7802 = vld [vmem:[%s7768 + $0x84] sm:$0xf]
        %v7803 = vld [vmem:[%s7768 + $0x88] sm:$0xf]
        %v7804 = vld [vmem:[%s7768 + $0x8c] sm:$0xf]
        %v7805 = vld [vmem:[%s7768 + $0x90] sm:$0xf]
        %v7806 = vld [vmem:[%s7768 + $0x94] sm:$0xf]
        %v7807 = vld [vmem:[%s7768 + $0x98] sm:$0xf]
        %v7808 = vld [vmem:[%s7768 + $0x9c] sm:$0xf]
        %v7809 = vld [vmem:[%s7768 + $0xa0] sm:$0xf]
        %v7810 = vld [vmem:[%s7768 + $0xa4] sm:$0xf]
        %v7811 = vld [vmem:[%s7768 + $0xa8] sm:$0xf]
        %v7812 = vld [vmem:[%s7768 + $0xac] sm:$0xf]
        %v7813 = vld [vmem:[%s7768 + $0xb0] sm:$0xf]
        %v7814 = vld [vmem:[%s7768 + $0xb4] sm:$0xf]
        %v7815 = vld [vmem:[%s7768 + $0xb8] sm:$0xf]
        %v7816 = vld [vmem:[%s7768 + $0xbc] sm:$0xf]
        %v7817 = vld [vmem:[%s7768 + $0xc0] sm:$0xf]
        %v7818 = vld [vmem:[%s7768 + $0xc4] sm:$0xf]
        %v7819 = vld [vmem:[%s7768 + $0xc8] sm:$0xf]
        %v7820 = vld [vmem:[%s7768 + $0xcc] sm:$0xf]
        %v7821 = vld [vmem:[%s7768 + $0xd0] sm:$0xf]
        %v7822 = vld [vmem:[%s7768 + $0xd4] sm:$0xf]
        %v7823 = vld [vmem:[%s7768 + $0xd8] sm:$0xf]
        %v7824 = vld [vmem:[%s7768 + $0xdc] sm:$0xf]
        %v7825 = vld [vmem:[%s7768 + $0xe0] sm:$0xf]
        %v7826 = vld [vmem:[%s7768 + $0xe4] sm:$0xf]
        %v7827 = vld [vmem:[%s7768 + $0xe8] sm:$0xf]
        %v7828 = vld [vmem:[%s7768 + $0xec] sm:$0xf]
        %v7829 = vld [vmem:[%s7768 + $0xf0] sm:$0xf]
        %v7830 = vld [vmem:[%s7768 + $0xf4] sm:$0xf]
        %v7831 = vld [vmem:[%s7768 + $0xf8] sm:$0xf]
        %v7832 = vld [vmem:[%s7768 + $0xfc] sm:$0xf]
        %v7833 = vld [vmem:[%s7768 + $0x100] sm:$0xf]
        %v7834 = vld [vmem:[%s7768 + $0x104] sm:$0xf]
        %v7835 = vld [vmem:[%s7768 + $0x108] sm:$0xf]
        %v7836 = vld [vmem:[%s7768 + $0x10c] sm:$0xf]
        %v7837 = vld [vmem:[%s7768 + $0x110] sm:$0xf]
        %v7838 = vld [vmem:[%s7768 + $0x114] sm:$0xf]
        %v7839 = vld [vmem:[%s7768 + $0x118] sm:$0xf]
        %v7840 = vld [vmem:[%s7768 + $0x11c] sm:$0xf]
        %v7841 = vld [vmem:[%s7768 + $0x120] sm:$0xf]
        %v7842 = vld [vmem:[%s7768 + $0x124] sm:$0xf]
        %v7843 = vld [vmem:[%s7768 + $0x128] sm:$0xf]
        %v7844 = vld [vmem:[%s7768 + $0x12c] sm:$0xf]
        %v7845 = vld [vmem:[%s7768 + $0x130] sm:$0xf]
        %v7846 = vld [vmem:[%s7768 + $0x134] sm:$0xf]
        %v7847 = vld [vmem:[%s7768 + $0x138] sm:$0xf]
        %v7848 = vld [vmem:[%s7768 + $0x13c] sm:$0xf]
        %v7849 = vld [vmem:[%s7768 + $0x140] sm:$0xf]
        %v7850 = vld [vmem:[%s7768 + $0x144] sm:$0xf]
        %v7851 = vld [vmem:[%s7768 + $0x148] sm:$0xf]
        %v7852 = vld [vmem:[%s7768 + $0x14c] sm:$0xf]
        %v7853 = vld [vmem:[%s7768 + $0x150] sm:$0xf]
        %v7854 = vld [vmem:[%s7768 + $0x154] sm:$0xf]
        %v7855 = vld [vmem:[%s7768 + $0x158] sm:$0xf]
        %v7856 = vld [vmem:[%s7768 + $0x15c] sm:$0xf]
        %v7857 = vld [vmem:[%s7768 + $0x160] sm:$0xf]
        %v7858 = vld [vmem:[%s7768 + $0x164] sm:$0xf]
        %v7859 = vld [vmem:[%s7768 + $0x168] sm:$0xf]
        %v7860 = vld [vmem:[%s7768 + $0x16c] sm:$0xf]
        %v7861 = vld [vmem:[%s7768 + $0x170] sm:$0xf]
        %v7862 = vld [vmem:[%s7768 + $0x174] sm:$0xf]
        %v7863 = vld [vmem:[%s7768 + $0x178] sm:$0xf]
        %v7864 = vld [vmem:[%s7768 + $0x17c] sm:$0xf]
        %v7865 = vld [vmem:[%s7768 + $0x180] sm:$0xf]
        %v7866 = vld [vmem:[%s7768 + $0x184] sm:$0xf]
        %v7867 = vld [vmem:[%s7768 + $0x188] sm:$0xf]
        %v7868 = vld [vmem:[%s7768 + $0x18c] sm:$0xf]
        %v7869 = vld [vmem:[%s7768 + $0x190] sm:$0xf]
        %v7870 = vld [vmem:[%s7768 + $0x194] sm:$0xf]
        %v7871 = vld [vmem:[%s7768 + $0x198] sm:$0xf]
        %v7872 = vld [vmem:[%s7768 + $0x19c] sm:$0xf]
        %v7873 = vld [vmem:[%s7768 + $0x1a0] sm:$0xf]
        %v7874 = vld [vmem:[%s7768 + $0x1a4] sm:$0xf]
        %v7875 = vld [vmem:[%s7768 + $0x1a8] sm:$0xf]
        %v7876 = vld [vmem:[%s7768 + $0x1ac] sm:$0xf]
        %v7877 = vld [vmem:[%s7768 + $0x1b0] sm:$0xf]
        %v7878 = vld [vmem:[%s7768 + $0x1b4] sm:$0xf]
        %v7879 = vld [vmem:[%s7768 + $0x1b8] sm:$0xf]
        %v7880 = vld [vmem:[%s7768 + $0x1bc] sm:$0xf]
        %v7881 = vld [vmem:[%s7768 + $0x1c0] sm:$0xf]
        %v7882 = vld [vmem:[%s7768 + $0x1c4] sm:$0xf]
        %v7883 = vld [vmem:[%s7768 + $0x1c8] sm:$0xf]
        %v7884 = vld [vmem:[%s7768 + $0x1cc] sm:$0xf]
        %v7885 = vld [vmem:[%s7768 + $0x1d0] sm:$0xf]
        %v7886 = vld [vmem:[%s7768 + $0x1d4] sm:$0xf]
        %v7887 = vld [vmem:[%s7768 + $0x1d8] sm:$0xf]
        %v7888 = vld [vmem:[%s7768 + $0x1dc] sm:$0xf]
        %v7889 = vld [vmem:[%s7768 + $0x1e0] sm:$0xf]
        %v7890 = vld [vmem:[%s7768 + $0x1e4] sm:$0xf]
        %v7891 = vld [vmem:[%s7768 + $0x1e8] sm:$0xf]
        %v7892 = vld [vmem:[%s7768 + $0x1ec] sm:$0xf]
        %v7893 = vld [vmem:[%s7768 + $0x1f0] sm:$0xf]
        %v7894 = vld [vmem:[%s7768 + $0x1f4] sm:$0xf]
        %v7895 = vld [vmem:[%s7768 + $0x1f8] sm:$0xf]
        %v7896 = vld [vmem:[%s7768 + $0x1fc] sm:$0xf]
        %v7897 = vrot.slane %v6606, 1
        %v7898 = vrot.slane %v6609, 1
        %v7899 = vrot.slane %v6612, 1
        %v7900 = vrot.slane %v6615, 1
        %v7901 = vrot.slane %v6618, 1
        %v7902 = vrot.slane %v6621, 1
        %v7903 = vrot.slane %v6624, 1
        %v7904 = vrot.slane %v6627, 1
        %v8041 = vunpack.c.l.b16 %v7769
        %v8042 = vunpack.c.l.b16 %v7770
        %v8043 = vunpack.c.l.b16 %v7771
        %v8044 = vunpack.c.l.b16 %v7772
        %v8045 = vunpack.c.l.b16 %v7773
        %v8046 = vunpack.c.l.b16 %v7774
        %v8047 = vunpack.c.l.b16 %v7775
        %v8048 = vunpack.c.l.b16 %v7776
        %v8049 = vunpack.c.l.b16 %v7777
        %v8050 = vunpack.c.l.b16 %v7778
        %v8051 = vunpack.c.l.b16 %v7779
        %v8052 = vunpack.c.l.b16 %v7780
        %v8053 = vunpack.c.l.b16 %v7781
        %v8054 = vunpack.c.l.b16 %v7782
        %v8055 = vunpack.c.l.b16 %v7783
        %v8056 = vunpack.c.l.b16 %v7784
        %v8057 = vunpack.c.l.b16 %v7785
        %v8058 = vunpack.c.l.b16 %v7786
        %v8059 = vunpack.c.l.b16 %v7787
        %v8060 = vunpack.c.l.b16 %v7788
        %v8061 = vunpack.c.l.b16 %v7789
        %v8062 = vunpack.c.l.b16 %v7790
        %v8063 = vunpack.c.l.b16 %v7791
        %v8064 = vunpack.c.l.b16 %v7792
        %v8065 = vunpack.c.l.b16 %v7793
        %v8066 = vunpack.c.l.b16 %v7794
        %v8067 = vunpack.c.l.b16 %v7795
        %v8068 = vunpack.c.l.b16 %v7796
        %v8069 = vunpack.c.l.b16 %v7797
        %v8070 = vunpack.c.l.b16 %v7798
        %v8071 = vunpack.c.l.b16 %v7799
        %v8072 = vunpack.c.l.b16 %v7800
        %v8073 = vunpack.c.l.b16 %v7801
        %v8074 = vunpack.c.l.b16 %v7802
        %v8075 = vunpack.c.l.b16 %v7803
        %v8076 = vunpack.c.l.b16 %v7804
        %v8077 = vunpack.c.l.b16 %v7805
        %v8078 = vunpack.c.l.b16 %v7806
        %v8079 = vunpack.c.l.b16 %v7807
        %v8080 = vunpack.c.l.b16 %v7808
        %v8081 = vunpack.c.l.b16 %v7809
        %v8082 = vunpack.c.l.b16 %v7810
        %v8083 = vunpack.c.l.b16 %v7811
        %v8084 = vunpack.c.l.b16 %v7812
        %v8085 = vunpack.c.l.b16 %v7813
        %v8086 = vunpack.c.l.b16 %v7814
        %v8087 = vunpack.c.l.b16 %v7815
        %v8088 = vunpack.c.l.b16 %v7816
        %v8089 = vunpack.c.l.b16 %v7817
        %v8090 = vunpack.c.l.b16 %v7818
        %v8091 = vunpack.c.l.b16 %v7819
        %v8092 = vunpack.c.l.b16 %v7820
        %v8093 = vunpack.c.l.b16 %v7821
        %v8094 = vunpack.c.l.b16 %v7822
        %v8095 = vunpack.c.l.b16 %v7823
        %v8096 = vunpack.c.l.b16 %v7824
        %v8097 = vunpack.c.l.b16 %v7825
        %v8098 = vunpack.c.l.b16 %v7826
        %v8099 = vunpack.c.l.b16 %v7827
        %v8100 = vunpack.c.l.b16 %v7828
        %v8101 = vunpack.c.l.b16 %v7829
        %v8102 = vunpack.c.l.b16 %v7830
        %v8103 = vunpack.c.l.b16 %v7831
        %v8104 = vunpack.c.l.b16 %v7832
        %v8105 = vunpack.c.l.b16 %v7833
        %v8106 = vunpack.c.l.b16 %v7834
        %v8107 = vunpack.c.l.b16 %v7835
        %v8108 = vunpack.c.l.b16 %v7836
        %v8109 = vunpack.c.l.b16 %v7837
        %v8110 = vunpack.c.l.b16 %v7838
        %v8111 = vunpack.c.l.b16 %v7839
        %v8112 = vunpack.c.l.b16 %v7840
        %v8113 = vunpack.c.l.b16 %v7841
        %v8114 = vunpack.c.l.b16 %v7842
        %v8115 = vunpack.c.l.b16 %v7843
        %v8116 = vunpack.c.l.b16 %v7844
        %v8117 = vunpack.c.l.b16 %v7845
        %v8118 = vunpack.c.l.b16 %v7846
        %v8119 = vunpack.c.l.b16 %v7847
        %v8120 = vunpack.c.l.b16 %v7848
        %v8121 = vunpack.c.l.b16 %v7849
        %v8122 = vunpack.c.l.b16 %v7850
        %v8123 = vunpack.c.l.b16 %v7851
        %v8124 = vunpack.c.l.b16 %v7852
        %v8125 = vunpack.c.l.b16 %v7853
        %v8126 = vunpack.c.l.b16 %v7854
        %v8127 = vunpack.c.l.b16 %v7855
        %v8128 = vunpack.c.l.b16 %v7856
        %v8129 = vunpack.c.l.b16 %v7857
        %v8130 = vunpack.c.l.b16 %v7858
        %v8131 = vunpack.c.l.b16 %v7859
        %v8132 = vunpack.c.l.b16 %v7860
        %v8133 = vunpack.c.l.b16 %v7861
        %v8134 = vunpack.c.l.b16 %v7862
        %v8135 = vunpack.c.l.b16 %v7863
        %v8136 = vunpack.c.l.b16 %v7864
        %v8137 = vunpack.c.l.b16 %v7865
        %v8138 = vunpack.c.l.b16 %v7866
        %v8139 = vunpack.c.l.b16 %v7867
        %v8140 = vunpack.c.l.b16 %v7868
        %v8141 = vunpack.c.l.b16 %v7869
        %v8142 = vunpack.c.l.b16 %v7870
        %v8143 = vunpack.c.l.b16 %v7871
        %v8144 = vunpack.c.l.b16 %v7872
        %v8145 = vunpack.c.l.b16 %v7873
        %v8146 = vunpack.c.l.b16 %v7874
        %v8147 = vunpack.c.l.b16 %v7875
        %v8148 = vunpack.c.l.b16 %v7876
        %v8149 = vunpack.c.l.b16 %v7877
        %v8150 = vunpack.c.l.b16 %v7878
        %v8151 = vunpack.c.l.b16 %v7879
        %v8152 = vunpack.c.l.b16 %v7880
        %v8153 = vunpack.c.l.b16 %v7881
        %v8154 = vunpack.c.l.b16 %v7882
        %v8155 = vunpack.c.l.b16 %v7883
        %v8156 = vunpack.c.l.b16 %v7884
        %v8157 = vunpack.c.l.b16 %v7885
        %v8158 = vunpack.c.l.b16 %v7886
        %v8159 = vunpack.c.l.b16 %v7887
        %v8160 = vunpack.c.l.b16 %v7888
        %v8161 = vunpack.c.l.b16 %v7889
        %v8162 = vunpack.c.l.b16 %v7890
        %v8163 = vunpack.c.l.b16 %v7891
        %v8164 = vunpack.c.l.b16 %v7892
        %v8165 = vunpack.c.l.b16 %v7893
        %v8166 = vunpack.c.l.b16 %v7894
        %v8167 = vunpack.c.l.b16 %v7895
        %v8168 = vunpack.c.l.b16 %v7896
        %v8169 = vpack.c.b16 %v8042, %v8041
        %v8170 = vpack.c.b16 %v8044, %v8043
        %v8171 = vpack.c.b16 %v8046, %v8045
        %v8172 = vpack.c.b16 %v8048, %v8047
        %v8173 = vpack.c.b16 %v8050, %v8049
        %v8174 = vpack.c.b16 %v8052, %v8051
        %v8175 = vpack.c.b16 %v8054, %v8053
        %v8176 = vpack.c.b16 %v8056, %v8055
        %v8177 = vpack.c.b16 %v8058, %v8057
        %v8178 = vpack.c.b16 %v8060, %v8059
        %v8179 = vpack.c.b16 %v8062, %v8061
        %v8180 = vpack.c.b16 %v8064, %v8063
        %v8181 = vpack.c.b16 %v8066, %v8065
        %v8182 = vpack.c.b16 %v8068, %v8067
        %v8183 = vpack.c.b16 %v8070, %v8069
        %v8184 = vpack.c.b16 %v8072, %v8071
        %v8185 = vpack.c.b16 %v8074, %v8073
        %v8186 = vpack.c.b16 %v8076, %v8075
        %v8187 = vpack.c.b16 %v8078, %v8077
        %v8188 = vpack.c.b16 %v8080, %v8079
        %v8189 = vpack.c.b16 %v8082, %v8081
        %v8190 = vpack.c.b16 %v8084, %v8083
        %v8191 = vpack.c.b16 %v8086, %v8085
        %v8192 = vpack.c.b16 %v8088, %v8087
        %v8193 = vpack.c.b16 %v8090, %v8089
        %v8194 = vpack.c.b16 %v8092, %v8091
        %v8195 = vpack.c.b16 %v8094, %v8093
        %v8196 = vpack.c.b16 %v8096, %v8095
        %v8197 = vpack.c.b16 %v8098, %v8097
        %v8198 = vpack.c.b16 %v8100, %v8099
        %v8199 = vpack.c.b16 %v8102, %v8101
        %v8200 = vpack.c.b16 %v8104, %v8103
        %v8201 = vpack.c.b16 %v8106, %v8105
        %v8202 = vpack.c.b16 %v8108, %v8107
        %v8203 = vpack.c.b16 %v8110, %v8109
        %v8204 = vpack.c.b16 %v8112, %v8111
        %v8205 = vpack.c.b16 %v8114, %v8113
        %v8206 = vpack.c.b16 %v8116, %v8115
        %v8207 = vpack.c.b16 %v8118, %v8117
        %v8208 = vpack.c.b16 %v8120, %v8119
        %v8209 = vpack.c.b16 %v8122, %v8121
        %v8210 = vpack.c.b16 %v8124, %v8123
        %v8211 = vpack.c.b16 %v8126, %v8125
        %v8212 = vpack.c.b16 %v8128, %v8127
        %v8213 = vpack.c.b16 %v8130, %v8129
        %v8214 = vpack.c.b16 %v8132, %v8131
        %v8215 = vpack.c.b16 %v8134, %v8133
        %v8216 = vpack.c.b16 %v8136, %v8135
        %v8217 = vpack.c.b16 %v8138, %v8137
        %v8218 = vpack.c.b16 %v8140, %v8139
        %v8219 = vpack.c.b16 %v8142, %v8141
        %v8220 = vpack.c.b16 %v8144, %v8143
        %v8221 = vpack.c.b16 %v8146, %v8145
        %v8222 = vpack.c.b16 %v8148, %v8147
        %v8223 = vpack.c.b16 %v8150, %v8149
        %v8224 = vpack.c.b16 %v8152, %v8151
        %v8225 = vpack.c.b16 %v8154, %v8153
        %v8226 = vpack.c.b16 %v8156, %v8155
        %v8227 = vpack.c.b16 %v8158, %v8157
        %v8228 = vpack.c.b16 %v8160, %v8159
        %v8229 = vpack.c.b16 %v8162, %v8161
        %v8230 = vpack.c.b16 %v8164, %v8163
        %v8231 = vpack.c.b16 %v8166, %v8165
        %v8232 = vpack.c.b16 %v8168, %v8167
        %8297 = vmatpush.bf16.msra.mxu0 %v8176
        %8298 = vmatpush.bf16.msra.mxu0 %v8175
        %8299 = vmatpush.bf16.msra.mxu0 %v8174
        %8300 = vmatpush.bf16.msra.mxu0 %v8173
        %8301 = vmatpush.bf16.msra.mxu0 %v8172
        %8302 = vmatpush.bf16.msra.mxu0 %v8171
        %8303 = vmatpush.bf16.msra.mxu0 %v8170
        %8304 = vmatpush.bf16.msra.mxu0 %v8169
        %8305 = vmatmul.bf16.gmra.mxu0 %v7897
        %v8306 = vpop.f32.mrf.mxu0
        %v8307 = vadd.f32 0.0, %v8306
        %v8308 = vpop.f32.mrf.mxu0
        %8309 = vdwg.mxu0
        %8310 = vmatpush.bf16.msra.mxu0 %v8184
        %8311 = vmatpush.bf16.msra.mxu0 %v8183
        %8312 = vmatpush.bf16.msra.mxu0 %v8182
        %8313 = vmatpush.bf16.msra.mxu0 %v8181
        %8314 = vmatpush.bf16.msra.mxu0 %v8180
        %8315 = vmatpush.bf16.msra.mxu0 %v8179
        %8316 = vmatpush.bf16.msra.mxu0 %v8178
        %8317 = vmatpush.bf16.msra.mxu0 %v8177
        %8318 = vmatmul.bf16.gmra.mxu0 %v7898
        %v8319 = vpop.f32.mrf.mxu0
        %v8320 = vadd.f32 %v8307, %v8319
        %v8321 = vpop.f32.mrf.mxu0
        %8322 = vdwg.mxu0
        %8323 = vmatpush.bf16.msra.mxu0 %v8192
        %8324 = vmatpush.bf16.msra.mxu0 %v8191
        %8325 = vmatpush.bf16.msra.mxu0 %v8190
        %8326 = vmatpush.bf16.msra.mxu0 %v8189
        %8327 = vmatpush.bf16.msra.mxu0 %v8188
        %8328 = vmatpush.bf16.msra.mxu0 %v8187
        %8329 = vmatpush.bf16.msra.mxu0 %v8186
        %8330 = vmatpush.bf16.msra.mxu0 %v8185
        %8331 = vmatmul.bf16.gmra.mxu0 %v7899
        %v8332 = vpop.f32.mrf.mxu0
        %v8333 = vadd.f32 %v8320, %v8332
        %v8334 = vpop.f32.mrf.mxu0
        %8335 = vdwg.mxu0
        %8336 = vmatpush.bf16.msra.mxu0 %v8200
        %8337 = vmatpush.bf16.msra.mxu0 %v8199
        %8338 = vmatpush.bf16.msra.mxu0 %v8198
        %8339 = vmatpush.bf16.msra.mxu0 %v8197
        %8340 = vmatpush.bf16.msra.mxu0 %v8196
        %8341 = vmatpush.bf16.msra.mxu0 %v8195
        %8342 = vmatpush.bf16.msra.mxu0 %v8194
        %8343 = vmatpush.bf16.msra.mxu0 %v8193
        %8344 = vmatmul.bf16.gmra.mxu0 %v7900
        %v8345 = vpop.f32.mrf.mxu0
        %v8346 = vadd.f32 %v8333, %v8345
        %v8347 = vpop.f32.mrf.mxu0
        %8348 = vdwg.mxu0
        %8349 = vmatpush.bf16.msra.mxu0 %v8208
        %8350 = vmatpush.bf16.msra.mxu0 %v8207
        %8351 = vmatpush.bf16.msra.mxu0 %v8206
        %8352 = vmatpush.bf16.msra.mxu0 %v8205
        %8353 = vmatpush.bf16.msra.mxu0 %v8204
        %8354 = vmatpush.bf16.msra.mxu0 %v8203
        %8355 = vmatpush.bf16.msra.mxu0 %v8202
        %8356 = vmatpush.bf16.msra.mxu0 %v8201
        %8357 = vmatmul.bf16.gmra.mxu0 %v7901
        %v8358 = vpop.f32.mrf.mxu0
        %v8359 = vadd.f32 %v8346, %v8358
        %v8360 = vpop.f32.mrf.mxu0
        %8361 = vdwg.mxu0
        %8362 = vmatpush.bf16.msra.mxu0 %v8216
        %8363 = vmatpush.bf16.msra.mxu0 %v8215
        %8364 = vmatpush.bf16.msra.mxu0 %v8214
        %8365 = vmatpush.bf16.msra.mxu0 %v8213
        %8366 = vmatpush.bf16.msra.mxu0 %v8212
        %8367 = vmatpush.bf16.msra.mxu0 %v8211
        %8368 = vmatpush.bf16.msra.mxu0 %v8210
        %8369 = vmatpush.bf16.msra.mxu0 %v8209
        %8370 = vmatmul.bf16.gmra.mxu0 %v7902
        %v8371 = vpop.f32.mrf.mxu0
        %v8372 = vadd.f32 %v8359, %v8371
        %v8373 = vpop.f32.mrf.mxu0
        %8374 = vdwg.mxu0
        %8375 = vmatpush.bf16.msra.mxu0 %v8224
        %8376 = vmatpush.bf16.msra.mxu0 %v8223
        %8377 = vmatpush.bf16.msra.mxu0 %v8222
        %8378 = vmatpush.bf16.msra.mxu0 %v8221
        %8379 = vmatpush.bf16.msra.mxu0 %v8220
        %8380 = vmatpush.bf16.msra.mxu0 %v8219
        %8381 = vmatpush.bf16.msra.mxu0 %v8218
        %8382 = vmatpush.bf16.msra.mxu0 %v8217
        %8383 = vmatmul.bf16.gmra.mxu0 %v7903
        %v8384 = vpop.f32.mrf.mxu0
        %v8385 = vadd.f32 %v8372, %v8384
        %v8386 = vpop.f32.mrf.mxu0
        %8387 = vdwg.mxu0
        %8388 = vmatpush.bf16.msra.mxu0 %v8232
        %8389 = vmatpush.bf16.msra.mxu0 %v8231
        %8390 = vmatpush.bf16.msra.mxu0 %v8230
        %8391 = vmatpush.bf16.msra.mxu0 %v8229
        %8392 = vmatpush.bf16.msra.mxu0 %v8228
        %8393 = vmatpush.bf16.msra.mxu0 %v8227
        %8394 = vmatpush.bf16.msra.mxu0 %v8226
        %8395 = vmatpush.bf16.msra.mxu0 %v8225
        %8396 = vmatmul.bf16.gmra.mxu0 %v7904
        %v8397 = vpop.f32.mrf.mxu0
        %v8398 = vadd.f32 %v8385, %v8397
        %v8399 = vpop.f32.mrf.mxu0
        %8400 = vdwg.mxu0
        %v8401 = vadd.f32 %v7767, %v8398
        %s8402 = scalar_lea.vmem %s3, 6144
        %v8403 = vld [vmem:[%s8402] sm:$0xf]
        %v8404 = vld [vmem:[%s8402 + $0x4] sm:$0xf]
        %v8405 = vld [vmem:[%s8402 + $0x8] sm:$0xf]
        %v8406 = vld [vmem:[%s8402 + $0xc] sm:$0xf]
        %v8407 = vld [vmem:[%s8402 + $0x10] sm:$0xf]
        %v8408 = vld [vmem:[%s8402 + $0x14] sm:$0xf]
        %v8409 = vld [vmem:[%s8402 + $0x18] sm:$0xf]
        %v8410 = vld [vmem:[%s8402 + $0x1c] sm:$0xf]
        %v8411 = vld [vmem:[%s8402 + $0x20] sm:$0xf]
        %v8412 = vld [vmem:[%s8402 + $0x24] sm:$0xf]
        %v8413 = vld [vmem:[%s8402 + $0x28] sm:$0xf]
        %v8414 = vld [vmem:[%s8402 + $0x2c] sm:$0xf]
        %v8415 = vld [vmem:[%s8402 + $0x30] sm:$0xf]
        %v8416 = vld [vmem:[%s8402 + $0x34] sm:$0xf]
        %v8417 = vld [vmem:[%s8402 + $0x38] sm:$0xf]
        %v8418 = vld [vmem:[%s8402 + $0x3c] sm:$0xf]
        %v8419 = vld [vmem:[%s8402 + $0x40] sm:$0xf]
        %v8420 = vld [vmem:[%s8402 + $0x44] sm:$0xf]
        %v8421 = vld [vmem:[%s8402 + $0x48] sm:$0xf]
        %v8422 = vld [vmem:[%s8402 + $0x4c] sm:$0xf]
        %v8423 = vld [vmem:[%s8402 + $0x50] sm:$0xf]
        %v8424 = vld [vmem:[%s8402 + $0x54] sm:$0xf]
        %v8425 = vld [vmem:[%s8402 + $0x58] sm:$0xf]
        %v8426 = vld [vmem:[%s8402 + $0x5c] sm:$0xf]
        %v8427 = vld [vmem:[%s8402 + $0x60] sm:$0xf]
        %v8428 = vld [vmem:[%s8402 + $0x64] sm:$0xf]
        %v8429 = vld [vmem:[%s8402 + $0x68] sm:$0xf]
        %v8430 = vld [vmem:[%s8402 + $0x6c] sm:$0xf]
        %v8431 = vld [vmem:[%s8402 + $0x70] sm:$0xf]
        %v8432 = vld [vmem:[%s8402 + $0x74] sm:$0xf]
        %v8433 = vld [vmem:[%s8402 + $0x78] sm:$0xf]
        %v8434 = vld [vmem:[%s8402 + $0x7c] sm:$0xf]
        %v8435 = vld [vmem:[%s8402 + $0x80] sm:$0xf]
        %v8436 = vld [vmem:[%s8402 + $0x84] sm:$0xf]
        %v8437 = vld [vmem:[%s8402 + $0x88] sm:$0xf]
        %v8438 = vld [vmem:[%s8402 + $0x8c] sm:$0xf]
        %v8439 = vld [vmem:[%s8402 + $0x90] sm:$0xf]
        %v8440 = vld [vmem:[%s8402 + $0x94] sm:$0xf]
        %v8441 = vld [vmem:[%s8402 + $0x98] sm:$0xf]
        %v8442 = vld [vmem:[%s8402 + $0x9c] sm:$0xf]
        %v8443 = vld [vmem:[%s8402 + $0xa0] sm:$0xf]
        %v8444 = vld [vmem:[%s8402 + $0xa4] sm:$0xf]
        %v8445 = vld [vmem:[%s8402 + $0xa8] sm:$0xf]
        %v8446 = vld [vmem:[%s8402 + $0xac] sm:$0xf]
        %v8447 = vld [vmem:[%s8402 + $0xb0] sm:$0xf]
        %v8448 = vld [vmem:[%s8402 + $0xb4] sm:$0xf]
        %v8449 = vld [vmem:[%s8402 + $0xb8] sm:$0xf]
        %v8450 = vld [vmem:[%s8402 + $0xbc] sm:$0xf]
        %v8451 = vld [vmem:[%s8402 + $0xc0] sm:$0xf]
        %v8452 = vld [vmem:[%s8402 + $0xc4] sm:$0xf]
        %v8453 = vld [vmem:[%s8402 + $0xc8] sm:$0xf]
        %v8454 = vld [vmem:[%s8402 + $0xcc] sm:$0xf]
        %v8455 = vld [vmem:[%s8402 + $0xd0] sm:$0xf]
        %v8456 = vld [vmem:[%s8402 + $0xd4] sm:$0xf]
        %v8457 = vld [vmem:[%s8402 + $0xd8] sm:$0xf]
        %v8458 = vld [vmem:[%s8402 + $0xdc] sm:$0xf]
        %v8459 = vld [vmem:[%s8402 + $0xe0] sm:$0xf]
        %v8460 = vld [vmem:[%s8402 + $0xe4] sm:$0xf]
        %v8461 = vld [vmem:[%s8402 + $0xe8] sm:$0xf]
        %v8462 = vld [vmem:[%s8402 + $0xec] sm:$0xf]
        %v8463 = vld [vmem:[%s8402 + $0xf0] sm:$0xf]
        %v8464 = vld [vmem:[%s8402 + $0xf4] sm:$0xf]
        %v8465 = vld [vmem:[%s8402 + $0xf8] sm:$0xf]
        %v8466 = vld [vmem:[%s8402 + $0xfc] sm:$0xf]
        %v8467 = vld [vmem:[%s8402 + $0x100] sm:$0xf]
        %v8468 = vld [vmem:[%s8402 + $0x104] sm:$0xf]
        %v8469 = vld [vmem:[%s8402 + $0x108] sm:$0xf]
        %v8470 = vld [vmem:[%s8402 + $0x10c] sm:$0xf]
        %v8471 = vld [vmem:[%s8402 + $0x110] sm:$0xf]
        %v8472 = vld [vmem:[%s8402 + $0x114] sm:$0xf]
        %v8473 = vld [vmem:[%s8402 + $0x118] sm:$0xf]
        %v8474 = vld [vmem:[%s8402 + $0x11c] sm:$0xf]
        %v8475 = vld [vmem:[%s8402 + $0x120] sm:$0xf]
        %v8476 = vld [vmem:[%s8402 + $0x124] sm:$0xf]
        %v8477 = vld [vmem:[%s8402 + $0x128] sm:$0xf]
        %v8478 = vld [vmem:[%s8402 + $0x12c] sm:$0xf]
        %v8479 = vld [vmem:[%s8402 + $0x130] sm:$0xf]
        %v8480 = vld [vmem:[%s8402 + $0x134] sm:$0xf]
        %v8481 = vld [vmem:[%s8402 + $0x138] sm:$0xf]
        %v8482 = vld [vmem:[%s8402 + $0x13c] sm:$0xf]
        %v8483 = vld [vmem:[%s8402 + $0x140] sm:$0xf]
        %v8484 = vld [vmem:[%s8402 + $0x144] sm:$0xf]
        %v8485 = vld [vmem:[%s8402 + $0x148] sm:$0xf]
        %v8486 = vld [vmem:[%s8402 + $0x14c] sm:$0xf]
        %v8487 = vld [vmem:[%s8402 + $0x150] sm:$0xf]
        %v8488 = vld [vmem:[%s8402 + $0x154] sm:$0xf]
        %v8489 = vld [vmem:[%s8402 + $0x158] sm:$0xf]
        %v8490 = vld [vmem:[%s8402 + $0x15c] sm:$0xf]
        %v8491 = vld [vmem:[%s8402 + $0x160] sm:$0xf]
        %v8492 = vld [vmem:[%s8402 + $0x164] sm:$0xf]
        %v8493 = vld [vmem:[%s8402 + $0x168] sm:$0xf]
        %v8494 = vld [vmem:[%s8402 + $0x16c] sm:$0xf]
        %v8495 = vld [vmem:[%s8402 + $0x170] sm:$0xf]
        %v8496 = vld [vmem:[%s8402 + $0x174] sm:$0xf]
        %v8497 = vld [vmem:[%s8402 + $0x178] sm:$0xf]
        %v8498 = vld [vmem:[%s8402 + $0x17c] sm:$0xf]
        %v8499 = vld [vmem:[%s8402 + $0x180] sm:$0xf]
        %v8500 = vld [vmem:[%s8402 + $0x184] sm:$0xf]
        %v8501 = vld [vmem:[%s8402 + $0x188] sm:$0xf]
        %v8502 = vld [vmem:[%s8402 + $0x18c] sm:$0xf]
        %v8503 = vld [vmem:[%s8402 + $0x190] sm:$0xf]
        %v8504 = vld [vmem:[%s8402 + $0x194] sm:$0xf]
        %v8505 = vld [vmem:[%s8402 + $0x198] sm:$0xf]
        %v8506 = vld [vmem:[%s8402 + $0x19c] sm:$0xf]
        %v8507 = vld [vmem:[%s8402 + $0x1a0] sm:$0xf]
        %v8508 = vld [vmem:[%s8402 + $0x1a4] sm:$0xf]
        %v8509 = vld [vmem:[%s8402 + $0x1a8] sm:$0xf]
        %v8510 = vld [vmem:[%s8402 + $0x1ac] sm:$0xf]
        %v8511 = vld [vmem:[%s8402 + $0x1b0] sm:$0xf]
        %v8512 = vld [vmem:[%s8402 + $0x1b4] sm:$0xf]
        %v8513 = vld [vmem:[%s8402 + $0x1b8] sm:$0xf]
        %v8514 = vld [vmem:[%s8402 + $0x1bc] sm:$0xf]
        %v8515 = vld [vmem:[%s8402 + $0x1c0] sm:$0xf]
        %v8516 = vld [vmem:[%s8402 + $0x1c4] sm:$0xf]
        %v8517 = vld [vmem:[%s8402 + $0x1c8] sm:$0xf]
        %v8518 = vld [vmem:[%s8402 + $0x1cc] sm:$0xf]
        %v8519 = vld [vmem:[%s8402 + $0x1d0] sm:$0xf]
        %v8520 = vld [vmem:[%s8402 + $0x1d4] sm:$0xf]
        %v8521 = vld [vmem:[%s8402 + $0x1d8] sm:$0xf]
        %v8522 = vld [vmem:[%s8402 + $0x1dc] sm:$0xf]
        %v8523 = vld [vmem:[%s8402 + $0x1e0] sm:$0xf]
        %v8524 = vld [vmem:[%s8402 + $0x1e4] sm:$0xf]
        %v8525 = vld [vmem:[%s8402 + $0x1e8] sm:$0xf]
        %v8526 = vld [vmem:[%s8402 + $0x1ec] sm:$0xf]
        %v8527 = vld [vmem:[%s8402 + $0x1f0] sm:$0xf]
        %v8528 = vld [vmem:[%s8402 + $0x1f4] sm:$0xf]
        %v8529 = vld [vmem:[%s8402 + $0x1f8] sm:$0xf]
        %v8530 = vld [vmem:[%s8402 + $0x1fc] sm:$0xf]
        %v8531 = vrot.slane %v5850, 2
        %v8532 = vrot.slane %v5851, 2
        %v8533 = vrot.slane %v5852, 2
        %v8534 = vrot.slane %v5853, 2
        %v8535 = vrot.slane %v5854, 2
        %v8536 = vrot.slane %v5855, 2
        %v8537 = vrot.slane %v5856, 2
        %v8538 = vrot.slane %v5857, 2
        %v8675 = vunpack.c.l.b16 %v8403
        %v8676 = vunpack.c.l.b16 %v8404
        %v8677 = vunpack.c.l.b16 %v8405
        %v8678 = vunpack.c.l.b16 %v8406
        %v8679 = vunpack.c.l.b16 %v8407
        %v8680 = vunpack.c.l.b16 %v8408
        %v8681 = vunpack.c.l.b16 %v8409
        %v8682 = vunpack.c.l.b16 %v8410
        %v8683 = vunpack.c.l.b16 %v8411
        %v8684 = vunpack.c.l.b16 %v8412
        %v8685 = vunpack.c.l.b16 %v8413
        %v8686 = vunpack.c.l.b16 %v8414
        %v8687 = vunpack.c.l.b16 %v8415
        %v8688 = vunpack.c.l.b16 %v8416
        %v8689 = vunpack.c.l.b16 %v8417
        %v8690 = vunpack.c.l.b16 %v8418
        %v8691 = vunpack.c.l.b16 %v8419
        %v8692 = vunpack.c.l.b16 %v8420
        %v8693 = vunpack.c.l.b16 %v8421
        %v8694 = vunpack.c.l.b16 %v8422
        %v8695 = vunpack.c.l.b16 %v8423
        %v8696 = vunpack.c.l.b16 %v8424
        %v8697 = vunpack.c.l.b16 %v8425
        %v8698 = vunpack.c.l.b16 %v8426
        %v8699 = vunpack.c.l.b16 %v8427
        %v8700 = vunpack.c.l.b16 %v8428
        %v8701 = vunpack.c.l.b16 %v8429
        %v8702 = vunpack.c.l.b16 %v8430
        %v8703 = vunpack.c.l.b16 %v8431
        %v8704 = vunpack.c.l.b16 %v8432
        %v8705 = vunpack.c.l.b16 %v8433
        %v8706 = vunpack.c.l.b16 %v8434
        %v8707 = vunpack.c.l.b16 %v8435
        %v8708 = vunpack.c.l.b16 %v8436
        %v8709 = vunpack.c.l.b16 %v8437
        %v8710 = vunpack.c.l.b16 %v8438
        %v8711 = vunpack.c.l.b16 %v8439
        %v8712 = vunpack.c.l.b16 %v8440
        %v8713 = vunpack.c.l.b16 %v8441
        %v8714 = vunpack.c.l.b16 %v8442
        %v8715 = vunpack.c.l.b16 %v8443
        %v8716 = vunpack.c.l.b16 %v8444
        %v8717 = vunpack.c.l.b16 %v8445
        %v8718 = vunpack.c.l.b16 %v8446
        %v8719 = vunpack.c.l.b16 %v8447
        %v8720 = vunpack.c.l.b16 %v8448
        %v8721 = vunpack.c.l.b16 %v8449
        %v8722 = vunpack.c.l.b16 %v8450
        %v8723 = vunpack.c.l.b16 %v8451
        %v8724 = vunpack.c.l.b16 %v8452
        %v8725 = vunpack.c.l.b16 %v8453
        %v8726 = vunpack.c.l.b16 %v8454
        %v8727 = vunpack.c.l.b16 %v8455
        %v8728 = vunpack.c.l.b16 %v8456
        %v8729 = vunpack.c.l.b16 %v8457
        %v8730 = vunpack.c.l.b16 %v8458
        %v8731 = vunpack.c.l.b16 %v8459
        %v8732 = vunpack.c.l.b16 %v8460
        %v8733 = vunpack.c.l.b16 %v8461
        %v8734 = vunpack.c.l.b16 %v8462
        %v8735 = vunpack.c.l.b16 %v8463
        %v8736 = vunpack.c.l.b16 %v8464
        %v8737 = vunpack.c.l.b16 %v8465
        %v8738 = vunpack.c.l.b16 %v8466
        %v8739 = vunpack.c.l.b16 %v8467
        %v8740 = vunpack.c.l.b16 %v8468
        %v8741 = vunpack.c.l.b16 %v8469
        %v8742 = vunpack.c.l.b16 %v8470
        %v8743 = vunpack.c.l.b16 %v8471
        %v8744 = vunpack.c.l.b16 %v8472
        %v8745 = vunpack.c.l.b16 %v8473
        %v8746 = vunpack.c.l.b16 %v8474
        %v8747 = vunpack.c.l.b16 %v8475
        %v8748 = vunpack.c.l.b16 %v8476
        %v8749 = vunpack.c.l.b16 %v8477
        %v8750 = vunpack.c.l.b16 %v8478
        %v8751 = vunpack.c.l.b16 %v8479
        %v8752 = vunpack.c.l.b16 %v8480
        %v8753 = vunpack.c.l.b16 %v8481
        %v8754 = vunpack.c.l.b16 %v8482
        %v8755 = vunpack.c.l.b16 %v8483
        %v8756 = vunpack.c.l.b16 %v8484
        %v8757 = vunpack.c.l.b16 %v8485
        %v8758 = vunpack.c.l.b16 %v8486
        %v8759 = vunpack.c.l.b16 %v8487
        %v8760 = vunpack.c.l.b16 %v8488
        %v8761 = vunpack.c.l.b16 %v8489
        %v8762 = vunpack.c.l.b16 %v8490
        %v8763 = vunpack.c.l.b16 %v8491
        %v8764 = vunpack.c.l.b16 %v8492
        %v8765 = vunpack.c.l.b16 %v8493
        %v8766 = vunpack.c.l.b16 %v8494
        %v8767 = vunpack.c.l.b16 %v8495
        %v8768 = vunpack.c.l.b16 %v8496
        %v8769 = vunpack.c.l.b16 %v8497
        %v8770 = vunpack.c.l.b16 %v8498
        %v8771 = vunpack.c.l.b16 %v8499
        %v8772 = vunpack.c.l.b16 %v8500
        %v8773 = vunpack.c.l.b16 %v8501
        %v8774 = vunpack.c.l.b16 %v8502
        %v8775 = vunpack.c.l.b16 %v8503
        %v8776 = vunpack.c.l.b16 %v8504
        %v8777 = vunpack.c.l.b16 %v8505
        %v8778 = vunpack.c.l.b16 %v8506
        %v8779 = vunpack.c.l.b16 %v8507
        %v8780 = vunpack.c.l.b16 %v8508
        %v8781 = vunpack.c.l.b16 %v8509
        %v8782 = vunpack.c.l.b16 %v8510
        %v8783 = vunpack.c.l.b16 %v8511
        %v8784 = vunpack.c.l.b16 %v8512
        %v8785 = vunpack.c.l.b16 %v8513
        %v8786 = vunpack.c.l.b16 %v8514
        %v8787 = vunpack.c.l.b16 %v8515
        %v8788 = vunpack.c.l.b16 %v8516
        %v8789 = vunpack.c.l.b16 %v8517
        %v8790 = vunpack.c.l.b16 %v8518
        %v8791 = vunpack.c.l.b16 %v8519
        %v8792 = vunpack.c.l.b16 %v8520
        %v8793 = vunpack.c.l.b16 %v8521
        %v8794 = vunpack.c.l.b16 %v8522
        %v8795 = vunpack.c.l.b16 %v8523
        %v8796 = vunpack.c.l.b16 %v8524
        %v8797 = vunpack.c.l.b16 %v8525
        %v8798 = vunpack.c.l.b16 %v8526
        %v8799 = vunpack.c.l.b16 %v8527
        %v8800 = vunpack.c.l.b16 %v8528
        %v8801 = vunpack.c.l.b16 %v8529
        %v8802 = vunpack.c.l.b16 %v8530
        %v8803 = vpack.c.b16 %v8676, %v8675
        %v8804 = vpack.c.b16 %v8678, %v8677
        %v8805 = vpack.c.b16 %v8680, %v8679
        %v8806 = vpack.c.b16 %v8682, %v8681
        %v8807 = vpack.c.b16 %v8684, %v8683
        %v8808 = vpack.c.b16 %v8686, %v8685
        %v8809 = vpack.c.b16 %v8688, %v8687
        %v8810 = vpack.c.b16 %v8690, %v8689
        %v8811 = vpack.c.b16 %v8692, %v8691
        %v8812 = vpack.c.b16 %v8694, %v8693
        %v8813 = vpack.c.b16 %v8696, %v8695
        %v8814 = vpack.c.b16 %v8698, %v8697
        %v8815 = vpack.c.b16 %v8700, %v8699
        %v8816 = vpack.c.b16 %v8702, %v8701
        %v8817 = vpack.c.b16 %v8704, %v8703
        %v8818 = vpack.c.b16 %v8706, %v8705
        %v8819 = vpack.c.b16 %v8708, %v8707
        %v8820 = vpack.c.b16 %v8710, %v8709
        %v8821 = vpack.c.b16 %v8712, %v8711
        %v8822 = vpack.c.b16 %v8714, %v8713
        %v8823 = vpack.c.b16 %v8716, %v8715
        %v8824 = vpack.c.b16 %v8718, %v8717
        %v8825 = vpack.c.b16 %v8720, %v8719
        %v8826 = vpack.c.b16 %v8722, %v8721
        %v8827 = vpack.c.b16 %v8724, %v8723
        %v8828 = vpack.c.b16 %v8726, %v8725
        %v8829 = vpack.c.b16 %v8728, %v8727
        %v8830 = vpack.c.b16 %v8730, %v8729
        %v8831 = vpack.c.b16 %v8732, %v8731
        %v8832 = vpack.c.b16 %v8734, %v8733
        %v8833 = vpack.c.b16 %v8736, %v8735
        %v8834 = vpack.c.b16 %v8738, %v8737
        %v8835 = vpack.c.b16 %v8740, %v8739
        %v8836 = vpack.c.b16 %v8742, %v8741
        %v8837 = vpack.c.b16 %v8744, %v8743
        %v8838 = vpack.c.b16 %v8746, %v8745
        %v8839 = vpack.c.b16 %v8748, %v8747
        %v8840 = vpack.c.b16 %v8750, %v8749
        %v8841 = vpack.c.b16 %v8752, %v8751
        %v8842 = vpack.c.b16 %v8754, %v8753
        %v8843 = vpack.c.b16 %v8756, %v8755
        %v8844 = vpack.c.b16 %v8758, %v8757
        %v8845 = vpack.c.b16 %v8760, %v8759
        %v8846 = vpack.c.b16 %v8762, %v8761
        %v8847 = vpack.c.b16 %v8764, %v8763
        %v8848 = vpack.c.b16 %v8766, %v8765
        %v8849 = vpack.c.b16 %v8768, %v8767
        %v8850 = vpack.c.b16 %v8770, %v8769
        %v8851 = vpack.c.b16 %v8772, %v8771
        %v8852 = vpack.c.b16 %v8774, %v8773
        %v8853 = vpack.c.b16 %v8776, %v8775
        %v8854 = vpack.c.b16 %v8778, %v8777
        %v8855 = vpack.c.b16 %v8780, %v8779
        %v8856 = vpack.c.b16 %v8782, %v8781
        %v8857 = vpack.c.b16 %v8784, %v8783
        %v8858 = vpack.c.b16 %v8786, %v8785
        %v8859 = vpack.c.b16 %v8788, %v8787
        %v8860 = vpack.c.b16 %v8790, %v8789
        %v8861 = vpack.c.b16 %v8792, %v8791
        %v8862 = vpack.c.b16 %v8794, %v8793
        %v8863 = vpack.c.b16 %v8796, %v8795
        %v8864 = vpack.c.b16 %v8798, %v8797
        %v8865 = vpack.c.b16 %v8800, %v8799
        %v8866 = vpack.c.b16 %v8802, %v8801
        %8931 = vmatpush.bf16.msra.mxu0 %v8810
        %8932 = vmatpush.bf16.msra.mxu0 %v8809
        %8933 = vmatpush.bf16.msra.mxu0 %v8808
        %8934 = vmatpush.bf16.msra.mxu0 %v8807
        %8935 = vmatpush.bf16.msra.mxu0 %v8806
        %8936 = vmatpush.bf16.msra.mxu0 %v8805
        %8937 = vmatpush.bf16.msra.mxu0 %v8804
        %8938 = vmatpush.bf16.msra.mxu0 %v8803
        %8939 = vmatmul.bf16.gmra.mxu0 %v8531
        %v8940 = vpop.f32.mrf.mxu0
        %v8941 = vadd.f32 0.0, %v8940
        %v8942 = vpop.f32.mrf.mxu0
        %8943 = vdwg.mxu0
        %8944 = vmatpush.bf16.msra.mxu0 %v8818
        %8945 = vmatpush.bf16.msra.mxu0 %v8817
        %8946 = vmatpush.bf16.msra.mxu0 %v8816
        %8947 = vmatpush.bf16.msra.mxu0 %v8815
        %8948 = vmatpush.bf16.msra.mxu0 %v8814
        %8949 = vmatpush.bf16.msra.mxu0 %v8813
        %8950 = vmatpush.bf16.msra.mxu0 %v8812
        %8951 = vmatpush.bf16.msra.mxu0 %v8811
        %8952 = vmatmul.bf16.gmra.mxu0 %v8532
        %v8953 = vpop.f32.mrf.mxu0
        %v8954 = vadd.f32 %v8941, %v8953
        %v8955 = vpop.f32.mrf.mxu0
        %8956 = vdwg.mxu0
        %8957 = vmatpush.bf16.msra.mxu0 %v8826
        %8958 = vmatpush.bf16.msra.mxu0 %v8825
        %8959 = vmatpush.bf16.msra.mxu0 %v8824
        %8960 = vmatpush.bf16.msra.mxu0 %v8823
        %8961 = vmatpush.bf16.msra.mxu0 %v8822
        %8962 = vmatpush.bf16.msra.mxu0 %v8821
        %8963 = vmatpush.bf16.msra.mxu0 %v8820
        %8964 = vmatpush.bf16.msra.mxu0 %v8819
        %8965 = vmatmul.bf16.gmra.mxu0 %v8533
        %v8966 = vpop.f32.mrf.mxu0
        %v8967 = vadd.f32 %v8954, %v8966
        %v8968 = vpop.f32.mrf.mxu0
        %8969 = vdwg.mxu0
        %8970 = vmatpush.bf16.msra.mxu0 %v8834
        %8971 = vmatpush.bf16.msra.mxu0 %v8833
        %8972 = vmatpush.bf16.msra.mxu0 %v8832
        %8973 = vmatpush.bf16.msra.mxu0 %v8831
        %8974 = vmatpush.bf16.msra.mxu0 %v8830
        %8975 = vmatpush.bf16.msra.mxu0 %v8829
        %8976 = vmatpush.bf16.msra.mxu0 %v8828
        %8977 = vmatpush.bf16.msra.mxu0 %v8827
        %8978 = vmatmul.bf16.gmra.mxu0 %v8534
        %v8979 = vpop.f32.mrf.mxu0
        %v8980 = vadd.f32 %v8967, %v8979
        %v8981 = vpop.f32.mrf.mxu0
        %8982 = vdwg.mxu0
        %8983 = vmatpush.bf16.msra.mxu0 %v8842
        %8984 = vmatpush.bf16.msra.mxu0 %v8841
        %8985 = vmatpush.bf16.msra.mxu0 %v8840
        %8986 = vmatpush.bf16.msra.mxu0 %v8839
        %8987 = vmatpush.bf16.msra.mxu0 %v8838
        %8988 = vmatpush.bf16.msra.mxu0 %v8837
        %8989 = vmatpush.bf16.msra.mxu0 %v8836
        %8990 = vmatpush.bf16.msra.mxu0 %v8835
        %8991 = vmatmul.bf16.gmra.mxu0 %v8535
        %v8992 = vpop.f32.mrf.mxu0
        %v8993 = vadd.f32 %v8980, %v8992
        %v8994 = vpop.f32.mrf.mxu0
        %8995 = vdwg.mxu0
        %8996 = vmatpush.bf16.msra.mxu0 %v8850
        %8997 = vmatpush.bf16.msra.mxu0 %v8849
        %8998 = vmatpush.bf16.msra.mxu0 %v8848
        %8999 = vmatpush.bf16.msra.mxu0 %v8847
        %9000 = vmatpush.bf16.msra.mxu0 %v8846
        %9001 = vmatpush.bf16.msra.mxu0 %v8845
        %9002 = vmatpush.bf16.msra.mxu0 %v8844
        %9003 = vmatpush.bf16.msra.mxu0 %v8843
        %9004 = vmatmul.bf16.gmra.mxu0 %v8536
        %v9005 = vpop.f32.mrf.mxu0
        %v9006 = vadd.f32 %v8993, %v9005
        %v9007 = vpop.f32.mrf.mxu0
        %9008 = vdwg.mxu0
        %9009 = vmatpush.bf16.msra.mxu0 %v8858
        %9010 = vmatpush.bf16.msra.mxu0 %v8857
        %9011 = vmatpush.bf16.msra.mxu0 %v8856
        %9012 = vmatpush.bf16.msra.mxu0 %v8855
        %9013 = vmatpush.bf16.msra.mxu0 %v8854
        %9014 = vmatpush.bf16.msra.mxu0 %v8853
        %9015 = vmatpush.bf16.msra.mxu0 %v8852
        %9016 = vmatpush.bf16.msra.mxu0 %v8851
        %9017 = vmatmul.bf16.gmra.mxu0 %v8537
        %v9018 = vpop.f32.mrf.mxu0
        %v9019 = vadd.f32 %v9006, %v9018
        %v9020 = vpop.f32.mrf.mxu0
        %9021 = vdwg.mxu0
        %9022 = vmatpush.bf16.msra.mxu0 %v8866
        %9023 = vmatpush.bf16.msra.mxu0 %v8865
        %9024 = vmatpush.bf16.msra.mxu0 %v8864
        %9025 = vmatpush.bf16.msra.mxu0 %v8863
        %9026 = vmatpush.bf16.msra.mxu0 %v8862
        %9027 = vmatpush.bf16.msra.mxu0 %v8861
        %9028 = vmatpush.bf16.msra.mxu0 %v8860
        %9029 = vmatpush.bf16.msra.mxu0 %v8859
        %9030 = vmatmul.bf16.gmra.mxu0 %v8538
        %v9031 = vpop.f32.mrf.mxu0
        %v9032 = vadd.f32 %v9019, %v9031
        %v9033 = vpop.f32.mrf.mxu0
        %9034 = vdwg.mxu0
        %v9035 = vadd.f32 %v8401, %v9032
        %s9036 = scalar_lea.vmem %s3, 6656
        %v9037 = vld [vmem:[%s9036] sm:$0xf]
        %v9038 = vld [vmem:[%s9036 + $0x4] sm:$0xf]
        %v9039 = vld [vmem:[%s9036 + $0x8] sm:$0xf]
        %v9040 = vld [vmem:[%s9036 + $0xc] sm:$0xf]
        %v9041 = vld [vmem:[%s9036 + $0x10] sm:$0xf]
        %v9042 = vld [vmem:[%s9036 + $0x14] sm:$0xf]
        %v9043 = vld [vmem:[%s9036 + $0x18] sm:$0xf]
        %v9044 = vld [vmem:[%s9036 + $0x1c] sm:$0xf]
        %v9045 = vld [vmem:[%s9036 + $0x20] sm:$0xf]
        %v9046 = vld [vmem:[%s9036 + $0x24] sm:$0xf]
        %v9047 = vld [vmem:[%s9036 + $0x28] sm:$0xf]
        %v9048 = vld [vmem:[%s9036 + $0x2c] sm:$0xf]
        %v9049 = vld [vmem:[%s9036 + $0x30] sm:$0xf]
        %v9050 = vld [vmem:[%s9036 + $0x34] sm:$0xf]
        %v9051 = vld [vmem:[%s9036 + $0x38] sm:$0xf]
        %v9052 = vld [vmem:[%s9036 + $0x3c] sm:$0xf]
        %v9053 = vld [vmem:[%s9036 + $0x40] sm:$0xf]
        %v9054 = vld [vmem:[%s9036 + $0x44] sm:$0xf]
        %v9055 = vld [vmem:[%s9036 + $0x48] sm:$0xf]
        %v9056 = vld [vmem:[%s9036 + $0x4c] sm:$0xf]
        %v9057 = vld [vmem:[%s9036 + $0x50] sm:$0xf]
        %v9058 = vld [vmem:[%s9036 + $0x54] sm:$0xf]
        %v9059 = vld [vmem:[%s9036 + $0x58] sm:$0xf]
        %v9060 = vld [vmem:[%s9036 + $0x5c] sm:$0xf]
        %v9061 = vld [vmem:[%s9036 + $0x60] sm:$0xf]
        %v9062 = vld [vmem:[%s9036 + $0x64] sm:$0xf]
        %v9063 = vld [vmem:[%s9036 + $0x68] sm:$0xf]
        %v9064 = vld [vmem:[%s9036 + $0x6c] sm:$0xf]
        %v9065 = vld [vmem:[%s9036 + $0x70] sm:$0xf]
        %v9066 = vld [vmem:[%s9036 + $0x74] sm:$0xf]
        %v9067 = vld [vmem:[%s9036 + $0x78] sm:$0xf]
        %v9068 = vld [vmem:[%s9036 + $0x7c] sm:$0xf]
        %v9069 = vld [vmem:[%s9036 + $0x80] sm:$0xf]
        %v9070 = vld [vmem:[%s9036 + $0x84] sm:$0xf]
        %v9071 = vld [vmem:[%s9036 + $0x88] sm:$0xf]
        %v9072 = vld [vmem:[%s9036 + $0x8c] sm:$0xf]
        %v9073 = vld [vmem:[%s9036 + $0x90] sm:$0xf]
        %v9074 = vld [vmem:[%s9036 + $0x94] sm:$0xf]
        %v9075 = vld [vmem:[%s9036 + $0x98] sm:$0xf]
        %v9076 = vld [vmem:[%s9036 + $0x9c] sm:$0xf]
        %v9077 = vld [vmem:[%s9036 + $0xa0] sm:$0xf]
        %v9078 = vld [vmem:[%s9036 + $0xa4] sm:$0xf]
        %v9079 = vld [vmem:[%s9036 + $0xa8] sm:$0xf]
        %v9080 = vld [vmem:[%s9036 + $0xac] sm:$0xf]
        %v9081 = vld [vmem:[%s9036 + $0xb0] sm:$0xf]
        %v9082 = vld [vmem:[%s9036 + $0xb4] sm:$0xf]
        %v9083 = vld [vmem:[%s9036 + $0xb8] sm:$0xf]
        %v9084 = vld [vmem:[%s9036 + $0xbc] sm:$0xf]
        %v9085 = vld [vmem:[%s9036 + $0xc0] sm:$0xf]
        %v9086 = vld [vmem:[%s9036 + $0xc4] sm:$0xf]
        %v9087 = vld [vmem:[%s9036 + $0xc8] sm:$0xf]
        %v9088 = vld [vmem:[%s9036 + $0xcc] sm:$0xf]
        %v9089 = vld [vmem:[%s9036 + $0xd0] sm:$0xf]
        %v9090 = vld [vmem:[%s9036 + $0xd4] sm:$0xf]
        %v9091 = vld [vmem:[%s9036 + $0xd8] sm:$0xf]
        %v9092 = vld [vmem:[%s9036 + $0xdc] sm:$0xf]
        %v9093 = vld [vmem:[%s9036 + $0xe0] sm:$0xf]
        %v9094 = vld [vmem:[%s9036 + $0xe4] sm:$0xf]
        %v9095 = vld [vmem:[%s9036 + $0xe8] sm:$0xf]
        %v9096 = vld [vmem:[%s9036 + $0xec] sm:$0xf]
        %v9097 = vld [vmem:[%s9036 + $0xf0] sm:$0xf]
        %v9098 = vld [vmem:[%s9036 + $0xf4] sm:$0xf]
        %v9099 = vld [vmem:[%s9036 + $0xf8] sm:$0xf]
        %v9100 = vld [vmem:[%s9036 + $0xfc] sm:$0xf]
        %v9101 = vld [vmem:[%s9036 + $0x100] sm:$0xf]
        %v9102 = vld [vmem:[%s9036 + $0x104] sm:$0xf]
        %v9103 = vld [vmem:[%s9036 + $0x108] sm:$0xf]
        %v9104 = vld [vmem:[%s9036 + $0x10c] sm:$0xf]
        %v9105 = vld [vmem:[%s9036 + $0x110] sm:$0xf]
        %v9106 = vld [vmem:[%s9036 + $0x114] sm:$0xf]
        %v9107 = vld [vmem:[%s9036 + $0x118] sm:$0xf]
        %v9108 = vld [vmem:[%s9036 + $0x11c] sm:$0xf]
        %v9109 = vld [vmem:[%s9036 + $0x120] sm:$0xf]
        %v9110 = vld [vmem:[%s9036 + $0x124] sm:$0xf]
        %v9111 = vld [vmem:[%s9036 + $0x128] sm:$0xf]
        %v9112 = vld [vmem:[%s9036 + $0x12c] sm:$0xf]
        %v9113 = vld [vmem:[%s9036 + $0x130] sm:$0xf]
        %v9114 = vld [vmem:[%s9036 + $0x134] sm:$0xf]
        %v9115 = vld [vmem:[%s9036 + $0x138] sm:$0xf]
        %v9116 = vld [vmem:[%s9036 + $0x13c] sm:$0xf]
        %v9117 = vld [vmem:[%s9036 + $0x140] sm:$0xf]
        %v9118 = vld [vmem:[%s9036 + $0x144] sm:$0xf]
        %v9119 = vld [vmem:[%s9036 + $0x148] sm:$0xf]
        %v9120 = vld [vmem:[%s9036 + $0x14c] sm:$0xf]
        %v9121 = vld [vmem:[%s9036 + $0x150] sm:$0xf]
        %v9122 = vld [vmem:[%s9036 + $0x154] sm:$0xf]
        %v9123 = vld [vmem:[%s9036 + $0x158] sm:$0xf]
        %v9124 = vld [vmem:[%s9036 + $0x15c] sm:$0xf]
        %v9125 = vld [vmem:[%s9036 + $0x160] sm:$0xf]
        %v9126 = vld [vmem:[%s9036 + $0x164] sm:$0xf]
        %v9127 = vld [vmem:[%s9036 + $0x168] sm:$0xf]
        %v9128 = vld [vmem:[%s9036 + $0x16c] sm:$0xf]
        %v9129 = vld [vmem:[%s9036 + $0x170] sm:$0xf]
        %v9130 = vld [vmem:[%s9036 + $0x174] sm:$0xf]
        %v9131 = vld [vmem:[%s9036 + $0x178] sm:$0xf]
        %v9132 = vld [vmem:[%s9036 + $0x17c] sm:$0xf]
        %v9133 = vld [vmem:[%s9036 + $0x180] sm:$0xf]
        %v9134 = vld [vmem:[%s9036 + $0x184] sm:$0xf]
        %v9135 = vld [vmem:[%s9036 + $0x188] sm:$0xf]
        %v9136 = vld [vmem:[%s9036 + $0x18c] sm:$0xf]
        %v9137 = vld [vmem:[%s9036 + $0x190] sm:$0xf]
        %v9138 = vld [vmem:[%s9036 + $0x194] sm:$0xf]
        %v9139 = vld [vmem:[%s9036 + $0x198] sm:$0xf]
        %v9140 = vld [vmem:[%s9036 + $0x19c] sm:$0xf]
        %v9141 = vld [vmem:[%s9036 + $0x1a0] sm:$0xf]
        %v9142 = vld [vmem:[%s9036 + $0x1a4] sm:$0xf]
        %v9143 = vld [vmem:[%s9036 + $0x1a8] sm:$0xf]
        %v9144 = vld [vmem:[%s9036 + $0x1ac] sm:$0xf]
        %v9145 = vld [vmem:[%s9036 + $0x1b0] sm:$0xf]
        %v9146 = vld [vmem:[%s9036 + $0x1b4] sm:$0xf]
        %v9147 = vld [vmem:[%s9036 + $0x1b8] sm:$0xf]
        %v9148 = vld [vmem:[%s9036 + $0x1bc] sm:$0xf]
        %v9149 = vld [vmem:[%s9036 + $0x1c0] sm:$0xf]
        %v9150 = vld [vmem:[%s9036 + $0x1c4] sm:$0xf]
        %v9151 = vld [vmem:[%s9036 + $0x1c8] sm:$0xf]
        %v9152 = vld [vmem:[%s9036 + $0x1cc] sm:$0xf]
        %v9153 = vld [vmem:[%s9036 + $0x1d0] sm:$0xf]
        %v9154 = vld [vmem:[%s9036 + $0x1d4] sm:$0xf]
        %v9155 = vld [vmem:[%s9036 + $0x1d8] sm:$0xf]
        %v9156 = vld [vmem:[%s9036 + $0x1dc] sm:$0xf]
        %v9157 = vld [vmem:[%s9036 + $0x1e0] sm:$0xf]
        %v9158 = vld [vmem:[%s9036 + $0x1e4] sm:$0xf]
        %v9159 = vld [vmem:[%s9036 + $0x1e8] sm:$0xf]
        %v9160 = vld [vmem:[%s9036 + $0x1ec] sm:$0xf]
        %v9161 = vld [vmem:[%s9036 + $0x1f0] sm:$0xf]
        %v9162 = vld [vmem:[%s9036 + $0x1f4] sm:$0xf]
        %v9163 = vld [vmem:[%s9036 + $0x1f8] sm:$0xf]
        %v9164 = vld [vmem:[%s9036 + $0x1fc] sm:$0xf]
        %v9165 = vrot.slane %v6606, 2
        %v9166 = vrot.slane %v6609, 2
        %v9167 = vrot.slane %v6612, 2
        %v9168 = vrot.slane %v6615, 2
        %v9169 = vrot.slane %v6618, 2
        %v9170 = vrot.slane %v6621, 2
        %v9171 = vrot.slane %v6624, 2
        %v9172 = vrot.slane %v6627, 2
        %v9309 = vunpack.c.l.b16 %v9037
        %v9310 = vunpack.c.l.b16 %v9038
        %v9311 = vunpack.c.l.b16 %v9039
        %v9312 = vunpack.c.l.b16 %v9040
        %v9313 = vunpack.c.l.b16 %v9041
        %v9314 = vunpack.c.l.b16 %v9042
        %v9315 = vunpack.c.l.b16 %v9043
        %v9316 = vunpack.c.l.b16 %v9044
        %v9317 = vunpack.c.l.b16 %v9045
        %v9318 = vunpack.c.l.b16 %v9046
        %v9319 = vunpack.c.l.b16 %v9047
        %v9320 = vunpack.c.l.b16 %v9048
        %v9321 = vunpack.c.l.b16 %v9049
        %v9322 = vunpack.c.l.b16 %v9050
        %v9323 = vunpack.c.l.b16 %v9051
        %v9324 = vunpack.c.l.b16 %v9052
        %v9325 = vunpack.c.l.b16 %v9053
        %v9326 = vunpack.c.l.b16 %v9054
        %v9327 = vunpack.c.l.b16 %v9055
        %v9328 = vunpack.c.l.b16 %v9056
        %v9329 = vunpack.c.l.b16 %v9057
        %v9330 = vunpack.c.l.b16 %v9058
        %v9331 = vunpack.c.l.b16 %v9059
        %v9332 = vunpack.c.l.b16 %v9060
        %v9333 = vunpack.c.l.b16 %v9061
        %v9334 = vunpack.c.l.b16 %v9062
        %v9335 = vunpack.c.l.b16 %v9063
        %v9336 = vunpack.c.l.b16 %v9064
        %v9337 = vunpack.c.l.b16 %v9065
        %v9338 = vunpack.c.l.b16 %v9066
        %v9339 = vunpack.c.l.b16 %v9067
        %v9340 = vunpack.c.l.b16 %v9068
        %v9341 = vunpack.c.l.b16 %v9069
        %v9342 = vunpack.c.l.b16 %v9070
        %v9343 = vunpack.c.l.b16 %v9071
        %v9344 = vunpack.c.l.b16 %v9072
        %v9345 = vunpack.c.l.b16 %v9073
        %v9346 = vunpack.c.l.b16 %v9074
        %v9347 = vunpack.c.l.b16 %v9075
        %v9348 = vunpack.c.l.b16 %v9076
        %v9349 = vunpack.c.l.b16 %v9077
        %v9350 = vunpack.c.l.b16 %v9078
        %v9351 = vunpack.c.l.b16 %v9079
        %v9352 = vunpack.c.l.b16 %v9080
        %v9353 = vunpack.c.l.b16 %v9081
        %v9354 = vunpack.c.l.b16 %v9082
        %v9355 = vunpack.c.l.b16 %v9083
        %v9356 = vunpack.c.l.b16 %v9084
        %v9357 = vunpack.c.l.b16 %v9085
        %v9358 = vunpack.c.l.b16 %v9086
        %v9359 = vunpack.c.l.b16 %v9087
        %v9360 = vunpack.c.l.b16 %v9088
        %v9361 = vunpack.c.l.b16 %v9089
        %v9362 = vunpack.c.l.b16 %v9090
        %v9363 = vunpack.c.l.b16 %v9091
        %v9364 = vunpack.c.l.b16 %v9092
        %v9365 = vunpack.c.l.b16 %v9093
        %v9366 = vunpack.c.l.b16 %v9094
        %v9367 = vunpack.c.l.b16 %v9095
        %v9368 = vunpack.c.l.b16 %v9096
        %v9369 = vunpack.c.l.b16 %v9097
        %v9370 = vunpack.c.l.b16 %v9098
        %v9371 = vunpack.c.l.b16 %v9099
        %v9372 = vunpack.c.l.b16 %v9100
        %v9373 = vunpack.c.l.b16 %v9101
        %v9374 = vunpack.c.l.b16 %v9102
        %v9375 = vunpack.c.l.b16 %v9103
        %v9376 = vunpack.c.l.b16 %v9104
        %v9377 = vunpack.c.l.b16 %v9105
        %v9378 = vunpack.c.l.b16 %v9106
        %v9379 = vunpack.c.l.b16 %v9107
        %v9380 = vunpack.c.l.b16 %v9108
        %v9381 = vunpack.c.l.b16 %v9109
        %v9382 = vunpack.c.l.b16 %v9110
        %v9383 = vunpack.c.l.b16 %v9111
        %v9384 = vunpack.c.l.b16 %v9112
        %v9385 = vunpack.c.l.b16 %v9113
        %v9386 = vunpack.c.l.b16 %v9114
        %v9387 = vunpack.c.l.b16 %v9115
        %v9388 = vunpack.c.l.b16 %v9116
        %v9389 = vunpack.c.l.b16 %v9117
        %v9390 = vunpack.c.l.b16 %v9118
        %v9391 = vunpack.c.l.b16 %v9119
        %v9392 = vunpack.c.l.b16 %v9120
        %v9393 = vunpack.c.l.b16 %v9121
        %v9394 = vunpack.c.l.b16 %v9122
        %v9395 = vunpack.c.l.b16 %v9123
        %v9396 = vunpack.c.l.b16 %v9124
        %v9397 = vunpack.c.l.b16 %v9125
        %v9398 = vunpack.c.l.b16 %v9126
        %v9399 = vunpack.c.l.b16 %v9127
        %v9400 = vunpack.c.l.b16 %v9128
        %v9401 = vunpack.c.l.b16 %v9129
        %v9402 = vunpack.c.l.b16 %v9130
        %v9403 = vunpack.c.l.b16 %v9131
        %v9404 = vunpack.c.l.b16 %v9132
        %v9405 = vunpack.c.l.b16 %v9133
        %v9406 = vunpack.c.l.b16 %v9134
        %v9407 = vunpack.c.l.b16 %v9135
        %v9408 = vunpack.c.l.b16 %v9136
        %v9409 = vunpack.c.l.b16 %v9137
        %v9410 = vunpack.c.l.b16 %v9138
        %v9411 = vunpack.c.l.b16 %v9139
        %v9412 = vunpack.c.l.b16 %v9140
        %v9413 = vunpack.c.l.b16 %v9141
        %v9414 = vunpack.c.l.b16 %v9142
        %v9415 = vunpack.c.l.b16 %v9143
        %v9416 = vunpack.c.l.b16 %v9144
        %v9417 = vunpack.c.l.b16 %v9145
        %v9418 = vunpack.c.l.b16 %v9146
        %v9419 = vunpack.c.l.b16 %v9147
        %v9420 = vunpack.c.l.b16 %v9148
        %v9421 = vunpack.c.l.b16 %v9149
        %v9422 = vunpack.c.l.b16 %v9150
        %v9423 = vunpack.c.l.b16 %v9151
        %v9424 = vunpack.c.l.b16 %v9152
        %v9425 = vunpack.c.l.b16 %v9153
        %v9426 = vunpack.c.l.b16 %v9154
        %v9427 = vunpack.c.l.b16 %v9155
        %v9428 = vunpack.c.l.b16 %v9156
        %v9429 = vunpack.c.l.b16 %v9157
        %v9430 = vunpack.c.l.b16 %v9158
        %v9431 = vunpack.c.l.b16 %v9159
        %v9432 = vunpack.c.l.b16 %v9160
        %v9433 = vunpack.c.l.b16 %v9161
        %v9434 = vunpack.c.l.b16 %v9162
        %v9435 = vunpack.c.l.b16 %v9163
        %v9436 = vunpack.c.l.b16 %v9164
        %v9437 = vpack.c.b16 %v9310, %v9309
        %v9438 = vpack.c.b16 %v9312, %v9311
        %v9439 = vpack.c.b16 %v9314, %v9313
        %v9440 = vpack.c.b16 %v9316, %v9315
        %v9441 = vpack.c.b16 %v9318, %v9317
        %v9442 = vpack.c.b16 %v9320, %v9319
        %v9443 = vpack.c.b16 %v9322, %v9321
        %v9444 = vpack.c.b16 %v9324, %v9323
        %v9445 = vpack.c.b16 %v9326, %v9325
        %v9446 = vpack.c.b16 %v9328, %v9327
        %v9447 = vpack.c.b16 %v9330, %v9329
        %v9448 = vpack.c.b16 %v9332, %v9331
        %v9449 = vpack.c.b16 %v9334, %v9333
        %v9450 = vpack.c.b16 %v9336, %v9335
        %v9451 = vpack.c.b16 %v9338, %v9337
        %v9452 = vpack.c.b16 %v9340, %v9339
        %v9453 = vpack.c.b16 %v9342, %v9341
        %v9454 = vpack.c.b16 %v9344, %v9343
        %v9455 = vpack.c.b16 %v9346, %v9345
        %v9456 = vpack.c.b16 %v9348, %v9347
        %v9457 = vpack.c.b16 %v9350, %v9349
        %v9458 = vpack.c.b16 %v9352, %v9351
        %v9459 = vpack.c.b16 %v9354, %v9353
        %v9460 = vpack.c.b16 %v9356, %v9355
        %v9461 = vpack.c.b16 %v9358, %v9357
        %v9462 = vpack.c.b16 %v9360, %v9359
        %v9463 = vpack.c.b16 %v9362, %v9361
        %v9464 = vpack.c.b16 %v9364, %v9363
        %v9465 = vpack.c.b16 %v9366, %v9365
        %v9466 = vpack.c.b16 %v9368, %v9367
        %v9467 = vpack.c.b16 %v9370, %v9369
        %v9468 = vpack.c.b16 %v9372, %v9371
        %v9469 = vpack.c.b16 %v9374, %v9373
        %v9470 = vpack.c.b16 %v9376, %v9375
        %v9471 = vpack.c.b16 %v9378, %v9377
        %v9472 = vpack.c.b16 %v9380, %v9379
        %v9473 = vpack.c.b16 %v9382, %v9381
        %v9474 = vpack.c.b16 %v9384, %v9383
        %v9475 = vpack.c.b16 %v9386, %v9385
        %v9476 = vpack.c.b16 %v9388, %v9387
        %v9477 = vpack.c.b16 %v9390, %v9389
        %v9478 = vpack.c.b16 %v9392, %v9391
        %v9479 = vpack.c.b16 %v9394, %v9393
        %v9480 = vpack.c.b16 %v9396, %v9395
        %v9481 = vpack.c.b16 %v9398, %v9397
        %v9482 = vpack.c.b16 %v9400, %v9399
        %v9483 = vpack.c.b16 %v9402, %v9401
        %v9484 = vpack.c.b16 %v9404, %v9403
        %v9485 = vpack.c.b16 %v9406, %v9405
        %v9486 = vpack.c.b16 %v9408, %v9407
        %v9487 = vpack.c.b16 %v9410, %v9409
        %v9488 = vpack.c.b16 %v9412, %v9411
        %v9489 = vpack.c.b16 %v9414, %v9413
        %v9490 = vpack.c.b16 %v9416, %v9415
        %v9491 = vpack.c.b16 %v9418, %v9417
        %v9492 = vpack.c.b16 %v9420, %v9419
        %v9493 = vpack.c.b16 %v9422, %v9421
        %v9494 = vpack.c.b16 %v9424, %v9423
        %v9495 = vpack.c.b16 %v9426, %v9425
        %v9496 = vpack.c.b16 %v9428, %v9427
        %v9497 = vpack.c.b16 %v9430, %v9429
        %v9498 = vpack.c.b16 %v9432, %v9431
        %v9499 = vpack.c.b16 %v9434, %v9433
        %v9500 = vpack.c.b16 %v9436, %v9435
        %9565 = vmatpush.bf16.msra.mxu0 %v9444
        %9566 = vmatpush.bf16.msra.mxu0 %v9443
        %9567 = vmatpush.bf16.msra.mxu0 %v9442
        %9568 = vmatpush.bf16.msra.mxu0 %v9441
        %9569 = vmatpush.bf16.msra.mxu0 %v9440
        %9570 = vmatpush.bf16.msra.mxu0 %v9439
        %9571 = vmatpush.bf16.msra.mxu0 %v9438
        %9572 = vmatpush.bf16.msra.mxu0 %v9437
        %9573 = vmatmul.bf16.gmra.mxu0 %v9165
        %v9574 = vpop.f32.mrf.mxu0
        %v9575 = vadd.f32 0.0, %v9574
        %v9576 = vpop.f32.mrf.mxu0
        %9577 = vdwg.mxu0
        %9578 = vmatpush.bf16.msra.mxu0 %v9452
        %9579 = vmatpush.bf16.msra.mxu0 %v9451
        %9580 = vmatpush.bf16.msra.mxu0 %v9450
        %9581 = vmatpush.bf16.msra.mxu0 %v9449
        %9582 = vmatpush.bf16.msra.mxu0 %v9448
        %9583 = vmatpush.bf16.msra.mxu0 %v9447
        %9584 = vmatpush.bf16.msra.mxu0 %v9446
        %9585 = vmatpush.bf16.msra.mxu0 %v9445
        %9586 = vmatmul.bf16.gmra.mxu0 %v9166
        %v9587 = vpop.f32.mrf.mxu0
        %v9588 = vadd.f32 %v9575, %v9587
        %v9589 = vpop.f32.mrf.mxu0
        %9590 = vdwg.mxu0
        %9591 = vmatpush.bf16.msra.mxu0 %v9460
        %9592 = vmatpush.bf16.msra.mxu0 %v9459
        %9593 = vmatpush.bf16.msra.mxu0 %v9458
        %9594 = vmatpush.bf16.msra.mxu0 %v9457
        %9595 = vmatpush.bf16.msra.mxu0 %v9456
        %9596 = vmatpush.bf16.msra.mxu0 %v9455
        %9597 = vmatpush.bf16.msra.mxu0 %v9454
        %9598 = vmatpush.bf16.msra.mxu0 %v9453
        %9599 = vmatmul.bf16.gmra.mxu0 %v9167
        %v9600 = vpop.f32.mrf.mxu0
        %v9601 = vadd.f32 %v9588, %v9600
        %v9602 = vpop.f32.mrf.mxu0
        %9603 = vdwg.mxu0
        %9604 = vmatpush.bf16.msra.mxu0 %v9468
        %9605 = vmatpush.bf16.msra.mxu0 %v9467
        %9606 = vmatpush.bf16.msra.mxu0 %v9466
        %9607 = vmatpush.bf16.msra.mxu0 %v9465
        %9608 = vmatpush.bf16.msra.mxu0 %v9464
        %9609 = vmatpush.bf16.msra.mxu0 %v9463
        %9610 = vmatpush.bf16.msra.mxu0 %v9462
        %9611 = vmatpush.bf16.msra.mxu0 %v9461
        %9612 = vmatmul.bf16.gmra.mxu0 %v9168
        %v9613 = vpop.f32.mrf.mxu0
        %v9614 = vadd.f32 %v9601, %v9613
        %v9615 = vpop.f32.mrf.mxu0
        %9616 = vdwg.mxu0
        %9617 = vmatpush.bf16.msra.mxu0 %v9476
        %9618 = vmatpush.bf16.msra.mxu0 %v9475
        %9619 = vmatpush.bf16.msra.mxu0 %v9474
        %9620 = vmatpush.bf16.msra.mxu0 %v9473
        %9621 = vmatpush.bf16.msra.mxu0 %v9472
        %9622 = vmatpush.bf16.msra.mxu0 %v9471
        %9623 = vmatpush.bf16.msra.mxu0 %v9470
        %9624 = vmatpush.bf16.msra.mxu0 %v9469
        %9625 = vmatmul.bf16.gmra.mxu0 %v9169
        %v9626 = vpop.f32.mrf.mxu0
        %v9627 = vadd.f32 %v9614, %v9626
        %v9628 = vpop.f32.mrf.mxu0
        %9629 = vdwg.mxu0
        %9630 = vmatpush.bf16.msra.mxu0 %v9484
        %9631 = vmatpush.bf16.msra.mxu0 %v9483
        %9632 = vmatpush.bf16.msra.mxu0 %v9482
        %9633 = vmatpush.bf16.msra.mxu0 %v9481
        %9634 = vmatpush.bf16.msra.mxu0 %v9480
        %9635 = vmatpush.bf16.msra.mxu0 %v9479
        %9636 = vmatpush.bf16.msra.mxu0 %v9478
        %9637 = vmatpush.bf16.msra.mxu0 %v9477
        %9638 = vmatmul.bf16.gmra.mxu0 %v9170
        %v9639 = vpop.f32.mrf.mxu0
        %v9640 = vadd.f32 %v9627, %v9639
        %v9641 = vpop.f32.mrf.mxu0
        %9642 = vdwg.mxu0
        %9643 = vmatpush.bf16.msra.mxu0 %v9492
        %9644 = vmatpush.bf16.msra.mxu0 %v9491
        %9645 = vmatpush.bf16.msra.mxu0 %v9490
        %9646 = vmatpush.bf16.msra.mxu0 %v9489
        %9647 = vmatpush.bf16.msra.mxu0 %v9488
        %9648 = vmatpush.bf16.msra.mxu0 %v9487
        %9649 = vmatpush.bf16.msra.mxu0 %v9486
        %9650 = vmatpush.bf16.msra.mxu0 %v9485
        %9651 = vmatmul.bf16.gmra.mxu0 %v9171
        %v9652 = vpop.f32.mrf.mxu0
        %v9653 = vadd.f32 %v9640, %v9652
        %v9654 = vpop.f32.mrf.mxu0
        %9655 = vdwg.mxu0
        %9656 = vmatpush.bf16.msra.mxu0 %v9500
        %9657 = vmatpush.bf16.msra.mxu0 %v9499
        %9658 = vmatpush.bf16.msra.mxu0 %v9498
        %9659 = vmatpush.bf16.msra.mxu0 %v9497
        %9660 = vmatpush.bf16.msra.mxu0 %v9496
        %9661 = vmatpush.bf16.msra.mxu0 %v9495
        %9662 = vmatpush.bf16.msra.mxu0 %v9494
        %9663 = vmatpush.bf16.msra.mxu0 %v9493
        %9664 = vmatmul.bf16.gmra.mxu0 %v9172
        %v9665 = vpop.f32.mrf.mxu0
        %v9666 = vadd.f32 %v9653, %v9665
        %v9667 = vpop.f32.mrf.mxu0
        %9668 = vdwg.mxu0
        %v9669 = vadd.f32 %v9035, %v9666
        %s9670 = scalar_lea.vmem %s3, 7168
        %v9671 = vld [vmem:[%s9670] sm:$0xf]
        %v9672 = vld [vmem:[%s9670 + $0x4] sm:$0xf]
        %v9673 = vld [vmem:[%s9670 + $0x8] sm:$0xf]
        %v9674 = vld [vmem:[%s9670 + $0xc] sm:$0xf]
        %v9675 = vld [vmem:[%s9670 + $0x10] sm:$0xf]
        %v9676 = vld [vmem:[%s9670 + $0x14] sm:$0xf]
        %v9677 = vld [vmem:[%s9670 + $0x18] sm:$0xf]
        %v9678 = vld [vmem:[%s9670 + $0x1c] sm:$0xf]
        %v9679 = vld [vmem:[%s9670 + $0x20] sm:$0xf]
        %v9680 = vld [vmem:[%s9670 + $0x24] sm:$0xf]
        %v9681 = vld [vmem:[%s9670 + $0x28] sm:$0xf]
        %v9682 = vld [vmem:[%s9670 + $0x2c] sm:$0xf]
        %v9683 = vld [vmem:[%s9670 + $0x30] sm:$0xf]
        %v9684 = vld [vmem:[%s9670 + $0x34] sm:$0xf]
        %v9685 = vld [vmem:[%s9670 + $0x38] sm:$0xf]
        %v9686 = vld [vmem:[%s9670 + $0x3c] sm:$0xf]
        %v9687 = vld [vmem:[%s9670 + $0x40] sm:$0xf]
        %v9688 = vld [vmem:[%s9670 + $0x44] sm:$0xf]
        %v9689 = vld [vmem:[%s9670 + $0x48] sm:$0xf]
        %v9690 = vld [vmem:[%s9670 + $0x4c] sm:$0xf]
        %v9691 = vld [vmem:[%s9670 + $0x50] sm:$0xf]
        %v9692 = vld [vmem:[%s9670 + $0x54] sm:$0xf]
        %v9693 = vld [vmem:[%s9670 + $0x58] sm:$0xf]
        %v9694 = vld [vmem:[%s9670 + $0x5c] sm:$0xf]
        %v9695 = vld [vmem:[%s9670 + $0x60] sm:$0xf]
        %v9696 = vld [vmem:[%s9670 + $0x64] sm:$0xf]
        %v9697 = vld [vmem:[%s9670 + $0x68] sm:$0xf]
        %v9698 = vld [vmem:[%s9670 + $0x6c] sm:$0xf]
        %v9699 = vld [vmem:[%s9670 + $0x70] sm:$0xf]
        %v9700 = vld [vmem:[%s9670 + $0x74] sm:$0xf]
        %v9701 = vld [vmem:[%s9670 + $0x78] sm:$0xf]
        %v9702 = vld [vmem:[%s9670 + $0x7c] sm:$0xf]
        %v9703 = vld [vmem:[%s9670 + $0x80] sm:$0xf]
        %v9704 = vld [vmem:[%s9670 + $0x84] sm:$0xf]
        %v9705 = vld [vmem:[%s9670 + $0x88] sm:$0xf]
        %v9706 = vld [vmem:[%s9670 + $0x8c] sm:$0xf]
        %v9707 = vld [vmem:[%s9670 + $0x90] sm:$0xf]
        %v9708 = vld [vmem:[%s9670 + $0x94] sm:$0xf]
        %v9709 = vld [vmem:[%s9670 + $0x98] sm:$0xf]
        %v9710 = vld [vmem:[%s9670 + $0x9c] sm:$0xf]
        %v9711 = vld [vmem:[%s9670 + $0xa0] sm:$0xf]
        %v9712 = vld [vmem:[%s9670 + $0xa4] sm:$0xf]
        %v9713 = vld [vmem:[%s9670 + $0xa8] sm:$0xf]
        %v9714 = vld [vmem:[%s9670 + $0xac] sm:$0xf]
        %v9715 = vld [vmem:[%s9670 + $0xb0] sm:$0xf]
        %v9716 = vld [vmem:[%s9670 + $0xb4] sm:$0xf]
        %v9717 = vld [vmem:[%s9670 + $0xb8] sm:$0xf]
        %v9718 = vld [vmem:[%s9670 + $0xbc] sm:$0xf]
        %v9719 = vld [vmem:[%s9670 + $0xc0] sm:$0xf]
        %v9720 = vld [vmem:[%s9670 + $0xc4] sm:$0xf]
        %v9721 = vld [vmem:[%s9670 + $0xc8] sm:$0xf]
        %v9722 = vld [vmem:[%s9670 + $0xcc] sm:$0xf]
        %v9723 = vld [vmem:[%s9670 + $0xd0] sm:$0xf]
        %v9724 = vld [vmem:[%s9670 + $0xd4] sm:$0xf]
        %v9725 = vld [vmem:[%s9670 + $0xd8] sm:$0xf]
        %v9726 = vld [vmem:[%s9670 + $0xdc] sm:$0xf]
        %v9727 = vld [vmem:[%s9670 + $0xe0] sm:$0xf]
        %v9728 = vld [vmem:[%s9670 + $0xe4] sm:$0xf]
        %v9729 = vld [vmem:[%s9670 + $0xe8] sm:$0xf]
        %v9730 = vld [vmem:[%s9670 + $0xec] sm:$0xf]
        %v9731 = vld [vmem:[%s9670 + $0xf0] sm:$0xf]
        %v9732 = vld [vmem:[%s9670 + $0xf4] sm:$0xf]
        %v9733 = vld [vmem:[%s9670 + $0xf8] sm:$0xf]
        %v9734 = vld [vmem:[%s9670 + $0xfc] sm:$0xf]
        %v9735 = vld [vmem:[%s9670 + $0x100] sm:$0xf]
        %v9736 = vld [vmem:[%s9670 + $0x104] sm:$0xf]
        %v9737 = vld [vmem:[%s9670 + $0x108] sm:$0xf]
        %v9738 = vld [vmem:[%s9670 + $0x10c] sm:$0xf]
        %v9739 = vld [vmem:[%s9670 + $0x110] sm:$0xf]
        %v9740 = vld [vmem:[%s9670 + $0x114] sm:$0xf]
        %v9741 = vld [vmem:[%s9670 + $0x118] sm:$0xf]
        %v9742 = vld [vmem:[%s9670 + $0x11c] sm:$0xf]
        %v9743 = vld [vmem:[%s9670 + $0x120] sm:$0xf]
        %v9744 = vld [vmem:[%s9670 + $0x124] sm:$0xf]
        %v9745 = vld [vmem:[%s9670 + $0x128] sm:$0xf]
        %v9746 = vld [vmem:[%s9670 + $0x12c] sm:$0xf]
        %v9747 = vld [vmem:[%s9670 + $0x130] sm:$0xf]
        %v9748 = vld [vmem:[%s9670 + $0x134] sm:$0xf]
        %v9749 = vld [vmem:[%s9670 + $0x138] sm:$0xf]
        %v9750 = vld [vmem:[%s9670 + $0x13c] sm:$0xf]
        %v9751 = vld [vmem:[%s9670 + $0x140] sm:$0xf]
        %v9752 = vld [vmem:[%s9670 + $0x144] sm:$0xf]
        %v9753 = vld [vmem:[%s9670 + $0x148] sm:$0xf]
        %v9754 = vld [vmem:[%s9670 + $0x14c] sm:$0xf]
        %v9755 = vld [vmem:[%s9670 + $0x150] sm:$0xf]
        %v9756 = vld [vmem:[%s9670 + $0x154] sm:$0xf]
        %v9757 = vld [vmem:[%s9670 + $0x158] sm:$0xf]
        %v9758 = vld [vmem:[%s9670 + $0x15c] sm:$0xf]
        %v9759 = vld [vmem:[%s9670 + $0x160] sm:$0xf]
        %v9760 = vld [vmem:[%s9670 + $0x164] sm:$0xf]
        %v9761 = vld [vmem:[%s9670 + $0x168] sm:$0xf]
        %v9762 = vld [vmem:[%s9670 + $0x16c] sm:$0xf]
        %v9763 = vld [vmem:[%s9670 + $0x170] sm:$0xf]
        %v9764 = vld [vmem:[%s9670 + $0x174] sm:$0xf]
        %v9765 = vld [vmem:[%s9670 + $0x178] sm:$0xf]
        %v9766 = vld [vmem:[%s9670 + $0x17c] sm:$0xf]
        %v9767 = vld [vmem:[%s9670 + $0x180] sm:$0xf]
        %v9768 = vld [vmem:[%s9670 + $0x184] sm:$0xf]
        %v9769 = vld [vmem:[%s9670 + $0x188] sm:$0xf]
        %v9770 = vld [vmem:[%s9670 + $0x18c] sm:$0xf]
        %v9771 = vld [vmem:[%s9670 + $0x190] sm:$0xf]
        %v9772 = vld [vmem:[%s9670 + $0x194] sm:$0xf]
        %v9773 = vld [vmem:[%s9670 + $0x198] sm:$0xf]
        %v9774 = vld [vmem:[%s9670 + $0x19c] sm:$0xf]
        %v9775 = vld [vmem:[%s9670 + $0x1a0] sm:$0xf]
        %v9776 = vld [vmem:[%s9670 + $0x1a4] sm:$0xf]
        %v9777 = vld [vmem:[%s9670 + $0x1a8] sm:$0xf]
        %v9778 = vld [vmem:[%s9670 + $0x1ac] sm:$0xf]
        %v9779 = vld [vmem:[%s9670 + $0x1b0] sm:$0xf]
        %v9780 = vld [vmem:[%s9670 + $0x1b4] sm:$0xf]
        %v9781 = vld [vmem:[%s9670 + $0x1b8] sm:$0xf]
        %v9782 = vld [vmem:[%s9670 + $0x1bc] sm:$0xf]
        %v9783 = vld [vmem:[%s9670 + $0x1c0] sm:$0xf]
        %v9784 = vld [vmem:[%s9670 + $0x1c4] sm:$0xf]
        %v9785 = vld [vmem:[%s9670 + $0x1c8] sm:$0xf]
        %v9786 = vld [vmem:[%s9670 + $0x1cc] sm:$0xf]
        %v9787 = vld [vmem:[%s9670 + $0x1d0] sm:$0xf]
        %v9788 = vld [vmem:[%s9670 + $0x1d4] sm:$0xf]
        %v9789 = vld [vmem:[%s9670 + $0x1d8] sm:$0xf]
        %v9790 = vld [vmem:[%s9670 + $0x1dc] sm:$0xf]
        %v9791 = vld [vmem:[%s9670 + $0x1e0] sm:$0xf]
        %v9792 = vld [vmem:[%s9670 + $0x1e4] sm:$0xf]
        %v9793 = vld [vmem:[%s9670 + $0x1e8] sm:$0xf]
        %v9794 = vld [vmem:[%s9670 + $0x1ec] sm:$0xf]
        %v9795 = vld [vmem:[%s9670 + $0x1f0] sm:$0xf]
        %v9796 = vld [vmem:[%s9670 + $0x1f4] sm:$0xf]
        %v9797 = vld [vmem:[%s9670 + $0x1f8] sm:$0xf]
        %v9798 = vld [vmem:[%s9670 + $0x1fc] sm:$0xf]
        %v9799 = vrot.slane %v5850, 3
        %v9800 = vrot.slane %v5851, 3
        %v9801 = vrot.slane %v5852, 3
        %v9802 = vrot.slane %v5853, 3
        %v9803 = vrot.slane %v5854, 3
        %v9804 = vrot.slane %v5855, 3
        %v9805 = vrot.slane %v5856, 3
        %v9806 = vrot.slane %v5857, 3
        %v9943 = vunpack.c.l.b16 %v9671
        %v9944 = vunpack.c.l.b16 %v9672
        %v9945 = vunpack.c.l.b16 %v9673
        %v9946 = vunpack.c.l.b16 %v9674
        %v9947 = vunpack.c.l.b16 %v9675
        %v9948 = vunpack.c.l.b16 %v9676
        %v9949 = vunpack.c.l.b16 %v9677
        %v9950 = vunpack.c.l.b16 %v9678
        %v9951 = vunpack.c.l.b16 %v9679
        %v9952 = vunpack.c.l.b16 %v9680
        %v9953 = vunpack.c.l.b16 %v9681
        %v9954 = vunpack.c.l.b16 %v9682
        %v9955 = vunpack.c.l.b16 %v9683
        %v9956 = vunpack.c.l.b16 %v9684
        %v9957 = vunpack.c.l.b16 %v9685
        %v9958 = vunpack.c.l.b16 %v9686
        %v9959 = vunpack.c.l.b16 %v9687
        %v9960 = vunpack.c.l.b16 %v9688
        %v9961 = vunpack.c.l.b16 %v9689
        %v9962 = vunpack.c.l.b16 %v9690
        %v9963 = vunpack.c.l.b16 %v9691
        %v9964 = vunpack.c.l.b16 %v9692
        %v9965 = vunpack.c.l.b16 %v9693
        %v9966 = vunpack.c.l.b16 %v9694
        %v9967 = vunpack.c.l.b16 %v9695
        %v9968 = vunpack.c.l.b16 %v9696
        %v9969 = vunpack.c.l.b16 %v9697
        %v9970 = vunpack.c.l.b16 %v9698
        %v9971 = vunpack.c.l.b16 %v9699
        %v9972 = vunpack.c.l.b16 %v9700
        %v9973 = vunpack.c.l.b16 %v9701
        %v9974 = vunpack.c.l.b16 %v9702
        %v9975 = vunpack.c.l.b16 %v9703
        %v9976 = vunpack.c.l.b16 %v9704
        %v9977 = vunpack.c.l.b16 %v9705
        %v9978 = vunpack.c.l.b16 %v9706
        %v9979 = vunpack.c.l.b16 %v9707
        %v9980 = vunpack.c.l.b16 %v9708
        %v9981 = vunpack.c.l.b16 %v9709
        %v9982 = vunpack.c.l.b16 %v9710
        %v9983 = vunpack.c.l.b16 %v9711
        %v9984 = vunpack.c.l.b16 %v9712
        %v9985 = vunpack.c.l.b16 %v9713
        %v9986 = vunpack.c.l.b16 %v9714
        %v9987 = vunpack.c.l.b16 %v9715
        %v9988 = vunpack.c.l.b16 %v9716
        %v9989 = vunpack.c.l.b16 %v9717
        %v9990 = vunpack.c.l.b16 %v9718
        %v9991 = vunpack.c.l.b16 %v9719
        %v9992 = vunpack.c.l.b16 %v9720
        %v9993 = vunpack.c.l.b16 %v9721
        %v9994 = vunpack.c.l.b16 %v9722
        %v9995 = vunpack.c.l.b16 %v9723
        %v9996 = vunpack.c.l.b16 %v9724
        %v9997 = vunpack.c.l.b16 %v9725
        %v9998 = vunpack.c.l.b16 %v9726
        %v9999 = vunpack.c.l.b16 %v9727
        %v10000 = vunpack.c.l.b16 %v9728
        %v10001 = vunpack.c.l.b16 %v9729
        %v10002 = vunpack.c.l.b16 %v9730
        %v10003 = vunpack.c.l.b16 %v9731
        %v10004 = vunpack.c.l.b16 %v9732
        %v10005 = vunpack.c.l.b16 %v9733
        %v10006 = vunpack.c.l.b16 %v9734
        %v10007 = vunpack.c.l.b16 %v9735
        %v10008 = vunpack.c.l.b16 %v9736
        %v10009 = vunpack.c.l.b16 %v9737
        %v10010 = vunpack.c.l.b16 %v9738
        %v10011 = vunpack.c.l.b16 %v9739
        %v10012 = vunpack.c.l.b16 %v9740
        %v10013 = vunpack.c.l.b16 %v9741
        %v10014 = vunpack.c.l.b16 %v9742
        %v10015 = vunpack.c.l.b16 %v9743
        %v10016 = vunpack.c.l.b16 %v9744
        %v10017 = vunpack.c.l.b16 %v9745
        %v10018 = vunpack.c.l.b16 %v9746
        %v10019 = vunpack.c.l.b16 %v9747
        %v10020 = vunpack.c.l.b16 %v9748
        %v10021 = vunpack.c.l.b16 %v9749
        %v10022 = vunpack.c.l.b16 %v9750
        %v10023 = vunpack.c.l.b16 %v9751
        %v10024 = vunpack.c.l.b16 %v9752
        %v10025 = vunpack.c.l.b16 %v9753
        %v10026 = vunpack.c.l.b16 %v9754
        %v10027 = vunpack.c.l.b16 %v9755
        %v10028 = vunpack.c.l.b16 %v9756
        %v10029 = vunpack.c.l.b16 %v9757
        %v10030 = vunpack.c.l.b16 %v9758
        %v10031 = vunpack.c.l.b16 %v9759
        %v10032 = vunpack.c.l.b16 %v9760
        %v10033 = vunpack.c.l.b16 %v9761
        %v10034 = vunpack.c.l.b16 %v9762
        %v10035 = vunpack.c.l.b16 %v9763
        %v10036 = vunpack.c.l.b16 %v9764
        %v10037 = vunpack.c.l.b16 %v9765
        %v10038 = vunpack.c.l.b16 %v9766
        %v10039 = vunpack.c.l.b16 %v9767
        %v10040 = vunpack.c.l.b16 %v9768
        %v10041 = vunpack.c.l.b16 %v9769
        %v10042 = vunpack.c.l.b16 %v9770
        %v10043 = vunpack.c.l.b16 %v9771
        %v10044 = vunpack.c.l.b16 %v9772
        %v10045 = vunpack.c.l.b16 %v9773
        %v10046 = vunpack.c.l.b16 %v9774
        %v10047 = vunpack.c.l.b16 %v9775
        %v10048 = vunpack.c.l.b16 %v9776
        %v10049 = vunpack.c.l.b16 %v9777
        %v10050 = vunpack.c.l.b16 %v9778
        %v10051 = vunpack.c.l.b16 %v9779
        %v10052 = vunpack.c.l.b16 %v9780
        %v10053 = vunpack.c.l.b16 %v9781
        %v10054 = vunpack.c.l.b16 %v9782
        %v10055 = vunpack.c.l.b16 %v9783
        %v10056 = vunpack.c.l.b16 %v9784
        %v10057 = vunpack.c.l.b16 %v9785
        %v10058 = vunpack.c.l.b16 %v9786
        %v10059 = vunpack.c.l.b16 %v9787
        %v10060 = vunpack.c.l.b16 %v9788
        %v10061 = vunpack.c.l.b16 %v9789
        %v10062 = vunpack.c.l.b16 %v9790
        %v10063 = vunpack.c.l.b16 %v9791
        %v10064 = vunpack.c.l.b16 %v9792
        %v10065 = vunpack.c.l.b16 %v9793
        %v10066 = vunpack.c.l.b16 %v9794
        %v10067 = vunpack.c.l.b16 %v9795
        %v10068 = vunpack.c.l.b16 %v9796
        %v10069 = vunpack.c.l.b16 %v9797
        %v10070 = vunpack.c.l.b16 %v9798
        %v10071 = vpack.c.b16 %v9944, %v9943
        %v10072 = vpack.c.b16 %v9946, %v9945
        %v10073 = vpack.c.b16 %v9948, %v9947
        %v10074 = vpack.c.b16 %v9950, %v9949
        %v10075 = vpack.c.b16 %v9952, %v9951
        %v10076 = vpack.c.b16 %v9954, %v9953
        %v10077 = vpack.c.b16 %v9956, %v9955
        %v10078 = vpack.c.b16 %v9958, %v9957
        %v10079 = vpack.c.b16 %v9960, %v9959
        %v10080 = vpack.c.b16 %v9962, %v9961
        %v10081 = vpack.c.b16 %v9964, %v9963
        %v10082 = vpack.c.b16 %v9966, %v9965
        %v10083 = vpack.c.b16 %v9968, %v9967
        %v10084 = vpack.c.b16 %v9970, %v9969
        %v10085 = vpack.c.b16 %v9972, %v9971
        %v10086 = vpack.c.b16 %v9974, %v9973
        %v10087 = vpack.c.b16 %v9976, %v9975
        %v10088 = vpack.c.b16 %v9978, %v9977
        %v10089 = vpack.c.b16 %v9980, %v9979
        %v10090 = vpack.c.b16 %v9982, %v9981
        %v10091 = vpack.c.b16 %v9984, %v9983
        %v10092 = vpack.c.b16 %v9986, %v9985
        %v10093 = vpack.c.b16 %v9988, %v9987
        %v10094 = vpack.c.b16 %v9990, %v9989
        %v10095 = vpack.c.b16 %v9992, %v9991
        %v10096 = vpack.c.b16 %v9994, %v9993
        %v10097 = vpack.c.b16 %v9996, %v9995
        %v10098 = vpack.c.b16 %v9998, %v9997
        %v10099 = vpack.c.b16 %v10000, %v9999
        %v10100 = vpack.c.b16 %v10002, %v10001
        %v10101 = vpack.c.b16 %v10004, %v10003
        %v10102 = vpack.c.b16 %v10006, %v10005
        %v10103 = vpack.c.b16 %v10008, %v10007
        %v10104 = vpack.c.b16 %v10010, %v10009
        %v10105 = vpack.c.b16 %v10012, %v10011
        %v10106 = vpack.c.b16 %v10014, %v10013
        %v10107 = vpack.c.b16 %v10016, %v10015
        %v10108 = vpack.c.b16 %v10018, %v10017
        %v10109 = vpack.c.b16 %v10020, %v10019
        %v10110 = vpack.c.b16 %v10022, %v10021
        %v10111 = vpack.c.b16 %v10024, %v10023
        %v10112 = vpack.c.b16 %v10026, %v10025
        %v10113 = vpack.c.b16 %v10028, %v10027
        %v10114 = vpack.c.b16 %v10030, %v10029
        %v10115 = vpack.c.b16 %v10032, %v10031
        %v10116 = vpack.c.b16 %v10034, %v10033
        %v10117 = vpack.c.b16 %v10036, %v10035
        %v10118 = vpack.c.b16 %v10038, %v10037
        %v10119 = vpack.c.b16 %v10040, %v10039
        %v10120 = vpack.c.b16 %v10042, %v10041
        %v10121 = vpack.c.b16 %v10044, %v10043
        %v10122 = vpack.c.b16 %v10046, %v10045
        %v10123 = vpack.c.b16 %v10048, %v10047
        %v10124 = vpack.c.b16 %v10050, %v10049
        %v10125 = vpack.c.b16 %v10052, %v10051
        %v10126 = vpack.c.b16 %v10054, %v10053
        %v10127 = vpack.c.b16 %v10056, %v10055
        %v10128 = vpack.c.b16 %v10058, %v10057
        %v10129 = vpack.c.b16 %v10060, %v10059
        %v10130 = vpack.c.b16 %v10062, %v10061
        %v10131 = vpack.c.b16 %v10064, %v10063
        %v10132 = vpack.c.b16 %v10066, %v10065
        %v10133 = vpack.c.b16 %v10068, %v10067
        %v10134 = vpack.c.b16 %v10070, %v10069
        %10199 = vmatpush.bf16.msra.mxu0 %v10078
        %10200 = vmatpush.bf16.msra.mxu0 %v10077
        %10201 = vmatpush.bf16.msra.mxu0 %v10076
        %10202 = vmatpush.bf16.msra.mxu0 %v10075
        %10203 = vmatpush.bf16.msra.mxu0 %v10074
        %10204 = vmatpush.bf16.msra.mxu0 %v10073
        %10205 = vmatpush.bf16.msra.mxu0 %v10072
        %10206 = vmatpush.bf16.msra.mxu0 %v10071
        %10207 = vmatmul.bf16.gmra.mxu0 %v9799
        %v10208 = vpop.f32.mrf.mxu0
        %v10209 = vadd.f32 0.0, %v10208
        %v10210 = vpop.f32.mrf.mxu0
        %10211 = vdwg.mxu0
        %10212 = vmatpush.bf16.msra.mxu0 %v10086
        %10213 = vmatpush.bf16.msra.mxu0 %v10085
        %10214 = vmatpush.bf16.msra.mxu0 %v10084
        %10215 = vmatpush.bf16.msra.mxu0 %v10083
        %10216 = vmatpush.bf16.msra.mxu0 %v10082
        %10217 = vmatpush.bf16.msra.mxu0 %v10081
        %10218 = vmatpush.bf16.msra.mxu0 %v10080
        %10219 = vmatpush.bf16.msra.mxu0 %v10079
        %10220 = vmatmul.bf16.gmra.mxu0 %v9800
        %v10221 = vpop.f32.mrf.mxu0
        %v10222 = vadd.f32 %v10209, %v10221
        %v10223 = vpop.f32.mrf.mxu0
        %10224 = vdwg.mxu0
        %10225 = vmatpush.bf16.msra.mxu0 %v10094
        %10226 = vmatpush.bf16.msra.mxu0 %v10093
        %10227 = vmatpush.bf16.msra.mxu0 %v10092
        %10228 = vmatpush.bf16.msra.mxu0 %v10091
        %10229 = vmatpush.bf16.msra.mxu0 %v10090
        %10230 = vmatpush.bf16.msra.mxu0 %v10089
        %10231 = vmatpush.bf16.msra.mxu0 %v10088
        %10232 = vmatpush.bf16.msra.mxu0 %v10087
        %10233 = vmatmul.bf16.gmra.mxu0 %v9801
        %v10234 = vpop.f32.mrf.mxu0
        %v10235 = vadd.f32 %v10222, %v10234
        %v10236 = vpop.f32.mrf.mxu0
        %10237 = vdwg.mxu0
        %10238 = vmatpush.bf16.msra.mxu0 %v10102
        %10239 = vmatpush.bf16.msra.mxu0 %v10101
        %10240 = vmatpush.bf16.msra.mxu0 %v10100
        %10241 = vmatpush.bf16.msra.mxu0 %v10099
        %10242 = vmatpush.bf16.msra.mxu0 %v10098
        %10243 = vmatpush.bf16.msra.mxu0 %v10097
        %10244 = vmatpush.bf16.msra.mxu0 %v10096
        %10245 = vmatpush.bf16.msra.mxu0 %v10095
        %10246 = vmatmul.bf16.gmra.mxu0 %v9802
        %v10247 = vpop.f32.mrf.mxu0
        %v10248 = vadd.f32 %v10235, %v10247
        %v10249 = vpop.f32.mrf.mxu0
        %10250 = vdwg.mxu0
        %10251 = vmatpush.bf16.msra.mxu0 %v10110
        %10252 = vmatpush.bf16.msra.mxu0 %v10109
        %10253 = vmatpush.bf16.msra.mxu0 %v10108
        %10254 = vmatpush.bf16.msra.mxu0 %v10107
        %10255 = vmatpush.bf16.msra.mxu0 %v10106
        %10256 = vmatpush.bf16.msra.mxu0 %v10105
        %10257 = vmatpush.bf16.msra.mxu0 %v10104
        %10258 = vmatpush.bf16.msra.mxu0 %v10103
        %10259 = vmatmul.bf16.gmra.mxu0 %v9803
        %v10260 = vpop.f32.mrf.mxu0
        %v10261 = vadd.f32 %v10248, %v10260
        %v10262 = vpop.f32.mrf.mxu0
        %10263 = vdwg.mxu0
        %10264 = vmatpush.bf16.msra.mxu0 %v10118
        %10265 = vmatpush.bf16.msra.mxu0 %v10117
        %10266 = vmatpush.bf16.msra.mxu0 %v10116
        %10267 = vmatpush.bf16.msra.mxu0 %v10115
        %10268 = vmatpush.bf16.msra.mxu0 %v10114
        %10269 = vmatpush.bf16.msra.mxu0 %v10113
        %10270 = vmatpush.bf16.msra.mxu0 %v10112
        %10271 = vmatpush.bf16.msra.mxu0 %v10111
        %10272 = vmatmul.bf16.gmra.mxu0 %v9804
        %v10273 = vpop.f32.mrf.mxu0
        %v10274 = vadd.f32 %v10261, %v10273
        %v10275 = vpop.f32.mrf.mxu0
        %10276 = vdwg.mxu0
        %10277 = vmatpush.bf16.msra.mxu0 %v10126
        %10278 = vmatpush.bf16.msra.mxu0 %v10125
        %10279 = vmatpush.bf16.msra.mxu0 %v10124
        %10280 = vmatpush.bf16.msra.mxu0 %v10123
        %10281 = vmatpush.bf16.msra.mxu0 %v10122
        %10282 = vmatpush.bf16.msra.mxu0 %v10121
        %10283 = vmatpush.bf16.msra.mxu0 %v10120
        %10284 = vmatpush.bf16.msra.mxu0 %v10119
        %10285 = vmatmul.bf16.gmra.mxu0 %v9805
        %v10286 = vpop.f32.mrf.mxu0
        %v10287 = vadd.f32 %v10274, %v10286
        %v10288 = vpop.f32.mrf.mxu0
        %10289 = vdwg.mxu0
        %10290 = vmatpush.bf16.msra.mxu0 %v10134
        %10291 = vmatpush.bf16.msra.mxu0 %v10133
        %10292 = vmatpush.bf16.msra.mxu0 %v10132
        %10293 = vmatpush.bf16.msra.mxu0 %v10131
        %10294 = vmatpush.bf16.msra.mxu0 %v10130
        %10295 = vmatpush.bf16.msra.mxu0 %v10129
        %10296 = vmatpush.bf16.msra.mxu0 %v10128
        %10297 = vmatpush.bf16.msra.mxu0 %v10127
        %10298 = vmatmul.bf16.gmra.mxu0 %v9806
        %v10299 = vpop.f32.mrf.mxu0
        %v10300 = vadd.f32 %v10287, %v10299
        %v10301 = vpop.f32.mrf.mxu0
        %10302 = vdwg.mxu0
        %v10303 = vadd.f32 %v9669, %v10300
        %s10304 = scalar_lea.vmem %s3, 7680
        %v10305 = vld [vmem:[%s10304] sm:$0xf]
        %v10306 = vld [vmem:[%s10304 + $0x4] sm:$0xf]
        %v10307 = vld [vmem:[%s10304 + $0x8] sm:$0xf]
        %v10308 = vld [vmem:[%s10304 + $0xc] sm:$0xf]
        %v10309 = vld [vmem:[%s10304 + $0x10] sm:$0xf]
        %v10310 = vld [vmem:[%s10304 + $0x14] sm:$0xf]
        %v10311 = vld [vmem:[%s10304 + $0x18] sm:$0xf]
        %v10312 = vld [vmem:[%s10304 + $0x1c] sm:$0xf]
        %v10313 = vld [vmem:[%s10304 + $0x20] sm:$0xf]
        %v10314 = vld [vmem:[%s10304 + $0x24] sm:$0xf]
        %v10315 = vld [vmem:[%s10304 + $0x28] sm:$0xf]
        %v10316 = vld [vmem:[%s10304 + $0x2c] sm:$0xf]
        %v10317 = vld [vmem:[%s10304 + $0x30] sm:$0xf]
        %v10318 = vld [vmem:[%s10304 + $0x34] sm:$0xf]
        %v10319 = vld [vmem:[%s10304 + $0x38] sm:$0xf]
        %v10320 = vld [vmem:[%s10304 + $0x3c] sm:$0xf]
        %v10321 = vld [vmem:[%s10304 + $0x40] sm:$0xf]
        %v10322 = vld [vmem:[%s10304 + $0x44] sm:$0xf]
        %v10323 = vld [vmem:[%s10304 + $0x48] sm:$0xf]
        %v10324 = vld [vmem:[%s10304 + $0x4c] sm:$0xf]
        %v10325 = vld [vmem:[%s10304 + $0x50] sm:$0xf]
        %v10326 = vld [vmem:[%s10304 + $0x54] sm:$0xf]
        %v10327 = vld [vmem:[%s10304 + $0x58] sm:$0xf]
        %v10328 = vld [vmem:[%s10304 + $0x5c] sm:$0xf]
        %v10329 = vld [vmem:[%s10304 + $0x60] sm:$0xf]
        %v10330 = vld [vmem:[%s10304 + $0x64] sm:$0xf]
        %v10331 = vld [vmem:[%s10304 + $0x68] sm:$0xf]
        %v10332 = vld [vmem:[%s10304 + $0x6c] sm:$0xf]
        %v10333 = vld [vmem:[%s10304 + $0x70] sm:$0xf]
        %v10334 = vld [vmem:[%s10304 + $0x74] sm:$0xf]
        %v10335 = vld [vmem:[%s10304 + $0x78] sm:$0xf]
        %v10336 = vld [vmem:[%s10304 + $0x7c] sm:$0xf]
        %v10337 = vld [vmem:[%s10304 + $0x80] sm:$0xf]
        %v10338 = vld [vmem:[%s10304 + $0x84] sm:$0xf]
        %v10339 = vld [vmem:[%s10304 + $0x88] sm:$0xf]
        %v10340 = vld [vmem:[%s10304 + $0x8c] sm:$0xf]
        %v10341 = vld [vmem:[%s10304 + $0x90] sm:$0xf]
        %v10342 = vld [vmem:[%s10304 + $0x94] sm:$0xf]
        %v10343 = vld [vmem:[%s10304 + $0x98] sm:$0xf]
        %v10344 = vld [vmem:[%s10304 + $0x9c] sm:$0xf]
        %v10345 = vld [vmem:[%s10304 + $0xa0] sm:$0xf]
        %v10346 = vld [vmem:[%s10304 + $0xa4] sm:$0xf]
        %v10347 = vld [vmem:[%s10304 + $0xa8] sm:$0xf]
        %v10348 = vld [vmem:[%s10304 + $0xac] sm:$0xf]
        %v10349 = vld [vmem:[%s10304 + $0xb0] sm:$0xf]
        %v10350 = vld [vmem:[%s10304 + $0xb4] sm:$0xf]
        %v10351 = vld [vmem:[%s10304 + $0xb8] sm:$0xf]
        %v10352 = vld [vmem:[%s10304 + $0xbc] sm:$0xf]
        %v10353 = vld [vmem:[%s10304 + $0xc0] sm:$0xf]
        %v10354 = vld [vmem:[%s10304 + $0xc4] sm:$0xf]
        %v10355 = vld [vmem:[%s10304 + $0xc8] sm:$0xf]
        %v10356 = vld [vmem:[%s10304 + $0xcc] sm:$0xf]
        %v10357 = vld [vmem:[%s10304 + $0xd0] sm:$0xf]
        %v10358 = vld [vmem:[%s10304 + $0xd4] sm:$0xf]
        %v10359 = vld [vmem:[%s10304 + $0xd8] sm:$0xf]
        %v10360 = vld [vmem:[%s10304 + $0xdc] sm:$0xf]
        %v10361 = vld [vmem:[%s10304 + $0xe0] sm:$0xf]
        %v10362 = vld [vmem:[%s10304 + $0xe4] sm:$0xf]
        %v10363 = vld [vmem:[%s10304 + $0xe8] sm:$0xf]
        %v10364 = vld [vmem:[%s10304 + $0xec] sm:$0xf]
        %v10365 = vld [vmem:[%s10304 + $0xf0] sm:$0xf]
        %v10366 = vld [vmem:[%s10304 + $0xf4] sm:$0xf]
        %v10367 = vld [vmem:[%s10304 + $0xf8] sm:$0xf]
        %v10368 = vld [vmem:[%s10304 + $0xfc] sm:$0xf]
        %v10369 = vld [vmem:[%s10304 + $0x100] sm:$0xf]
        %v10370 = vld [vmem:[%s10304 + $0x104] sm:$0xf]
        %v10371 = vld [vmem:[%s10304 + $0x108] sm:$0xf]
        %v10372 = vld [vmem:[%s10304 + $0x10c] sm:$0xf]
        %v10373 = vld [vmem:[%s10304 + $0x110] sm:$0xf]
        %v10374 = vld [vmem:[%s10304 + $0x114] sm:$0xf]
        %v10375 = vld [vmem:[%s10304 + $0x118] sm:$0xf]
        %v10376 = vld [vmem:[%s10304 + $0x11c] sm:$0xf]
        %v10377 = vld [vmem:[%s10304 + $0x120] sm:$0xf]
        %v10378 = vld [vmem:[%s10304 + $0x124] sm:$0xf]
        %v10379 = vld [vmem:[%s10304 + $0x128] sm:$0xf]
        %v10380 = vld [vmem:[%s10304 + $0x12c] sm:$0xf]
        %v10381 = vld [vmem:[%s10304 + $0x130] sm:$0xf]
        %v10382 = vld [vmem:[%s10304 + $0x134] sm:$0xf]
        %v10383 = vld [vmem:[%s10304 + $0x138] sm:$0xf]
        %v10384 = vld [vmem:[%s10304 + $0x13c] sm:$0xf]
        %v10385 = vld [vmem:[%s10304 + $0x140] sm:$0xf]
        %v10386 = vld [vmem:[%s10304 + $0x144] sm:$0xf]
        %v10387 = vld [vmem:[%s10304 + $0x148] sm:$0xf]
        %v10388 = vld [vmem:[%s10304 + $0x14c] sm:$0xf]
        %v10389 = vld [vmem:[%s10304 + $0x150] sm:$0xf]
        %v10390 = vld [vmem:[%s10304 + $0x154] sm:$0xf]
        %v10391 = vld [vmem:[%s10304 + $0x158] sm:$0xf]
        %v10392 = vld [vmem:[%s10304 + $0x15c] sm:$0xf]
        %v10393 = vld [vmem:[%s10304 + $0x160] sm:$0xf]
        %v10394 = vld [vmem:[%s10304 + $0x164] sm:$0xf]
        %v10395 = vld [vmem:[%s10304 + $0x168] sm:$0xf]
        %v10396 = vld [vmem:[%s10304 + $0x16c] sm:$0xf]
        %v10397 = vld [vmem:[%s10304 + $0x170] sm:$0xf]
        %v10398 = vld [vmem:[%s10304 + $0x174] sm:$0xf]
        %v10399 = vld [vmem:[%s10304 + $0x178] sm:$0xf]
        %v10400 = vld [vmem:[%s10304 + $0x17c] sm:$0xf]
        %v10401 = vld [vmem:[%s10304 + $0x180] sm:$0xf]
        %v10402 = vld [vmem:[%s10304 + $0x184] sm:$0xf]
        %v10403 = vld [vmem:[%s10304 + $0x188] sm:$0xf]
        %v10404 = vld [vmem:[%s10304 + $0x18c] sm:$0xf]
        %v10405 = vld [vmem:[%s10304 + $0x190] sm:$0xf]
        %v10406 = vld [vmem:[%s10304 + $0x194] sm:$0xf]
        %v10407 = vld [vmem:[%s10304 + $0x198] sm:$0xf]
        %v10408 = vld [vmem:[%s10304 + $0x19c] sm:$0xf]
        %v10409 = vld [vmem:[%s10304 + $0x1a0] sm:$0xf]
        %v10410 = vld [vmem:[%s10304 + $0x1a4] sm:$0xf]
        %v10411 = vld [vmem:[%s10304 + $0x1a8] sm:$0xf]
        %v10412 = vld [vmem:[%s10304 + $0x1ac] sm:$0xf]
        %v10413 = vld [vmem:[%s10304 + $0x1b0] sm:$0xf]
        %v10414 = vld [vmem:[%s10304 + $0x1b4] sm:$0xf]
        %v10415 = vld [vmem:[%s10304 + $0x1b8] sm:$0xf]
        %v10416 = vld [vmem:[%s10304 + $0x1bc] sm:$0xf]
        %v10417 = vld [vmem:[%s10304 + $0x1c0] sm:$0xf]
        %v10418 = vld [vmem:[%s10304 + $0x1c4] sm:$0xf]
        %v10419 = vld [vmem:[%s10304 + $0x1c8] sm:$0xf]
        %v10420 = vld [vmem:[%s10304 + $0x1cc] sm:$0xf]
        %v10421 = vld [vmem:[%s10304 + $0x1d0] sm:$0xf]
        %v10422 = vld [vmem:[%s10304 + $0x1d4] sm:$0xf]
        %v10423 = vld [vmem:[%s10304 + $0x1d8] sm:$0xf]
        %v10424 = vld [vmem:[%s10304 + $0x1dc] sm:$0xf]
        %v10425 = vld [vmem:[%s10304 + $0x1e0] sm:$0xf]
        %v10426 = vld [vmem:[%s10304 + $0x1e4] sm:$0xf]
        %v10427 = vld [vmem:[%s10304 + $0x1e8] sm:$0xf]
        %v10428 = vld [vmem:[%s10304 + $0x1ec] sm:$0xf]
        %v10429 = vld [vmem:[%s10304 + $0x1f0] sm:$0xf]
        %v10430 = vld [vmem:[%s10304 + $0x1f4] sm:$0xf]
        %v10431 = vld [vmem:[%s10304 + $0x1f8] sm:$0xf]
        %v10432 = vld [vmem:[%s10304 + $0x1fc] sm:$0xf]
        %v10433 = vrot.slane %v6606, 3
        %v10434 = vrot.slane %v6609, 3
        %v10435 = vrot.slane %v6612, 3
        %v10436 = vrot.slane %v6615, 3
        %v10437 = vrot.slane %v6618, 3
        %v10438 = vrot.slane %v6621, 3
        %v10439 = vrot.slane %v6624, 3
        %v10440 = vrot.slane %v6627, 3
        %v10577 = vunpack.c.l.b16 %v10305
        %v10578 = vunpack.c.l.b16 %v10306
        %v10579 = vunpack.c.l.b16 %v10307
        %v10580 = vunpack.c.l.b16 %v10308
        %v10581 = vunpack.c.l.b16 %v10309
        %v10582 = vunpack.c.l.b16 %v10310
        %v10583 = vunpack.c.l.b16 %v10311
        %v10584 = vunpack.c.l.b16 %v10312
        %v10585 = vunpack.c.l.b16 %v10313
        %v10586 = vunpack.c.l.b16 %v10314
        %v10587 = vunpack.c.l.b16 %v10315
        %v10588 = vunpack.c.l.b16 %v10316
        %v10589 = vunpack.c.l.b16 %v10317
        %v10590 = vunpack.c.l.b16 %v10318
        %v10591 = vunpack.c.l.b16 %v10319
        %v10592 = vunpack.c.l.b16 %v10320
        %v10593 = vunpack.c.l.b16 %v10321
        %v10594 = vunpack.c.l.b16 %v10322
        %v10595 = vunpack.c.l.b16 %v10323
        %v10596 = vunpack.c.l.b16 %v10324
        %v10597 = vunpack.c.l.b16 %v10325
        %v10598 = vunpack.c.l.b16 %v10326
        %v10599 = vunpack.c.l.b16 %v10327
        %v10600 = vunpack.c.l.b16 %v10328
        %v10601 = vunpack.c.l.b16 %v10329
        %v10602 = vunpack.c.l.b16 %v10330
        %v10603 = vunpack.c.l.b16 %v10331
        %v10604 = vunpack.c.l.b16 %v10332
        %v10605 = vunpack.c.l.b16 %v10333
        %v10606 = vunpack.c.l.b16 %v10334
        %v10607 = vunpack.c.l.b16 %v10335
        %v10608 = vunpack.c.l.b16 %v10336
        %v10609 = vunpack.c.l.b16 %v10337
        %v10610 = vunpack.c.l.b16 %v10338
        %v10611 = vunpack.c.l.b16 %v10339
        %v10612 = vunpack.c.l.b16 %v10340
        %v10613 = vunpack.c.l.b16 %v10341
        %v10614 = vunpack.c.l.b16 %v10342
        %v10615 = vunpack.c.l.b16 %v10343
        %v10616 = vunpack.c.l.b16 %v10344
        %v10617 = vunpack.c.l.b16 %v10345
        %v10618 = vunpack.c.l.b16 %v10346
        %v10619 = vunpack.c.l.b16 %v10347
        %v10620 = vunpack.c.l.b16 %v10348
        %v10621 = vunpack.c.l.b16 %v10349
        %v10622 = vunpack.c.l.b16 %v10350
        %v10623 = vunpack.c.l.b16 %v10351
        %v10624 = vunpack.c.l.b16 %v10352
        %v10625 = vunpack.c.l.b16 %v10353
        %v10626 = vunpack.c.l.b16 %v10354
        %v10627 = vunpack.c.l.b16 %v10355
        %v10628 = vunpack.c.l.b16 %v10356
        %v10629 = vunpack.c.l.b16 %v10357
        %v10630 = vunpack.c.l.b16 %v10358
        %v10631 = vunpack.c.l.b16 %v10359
        %v10632 = vunpack.c.l.b16 %v10360
        %v10633 = vunpack.c.l.b16 %v10361
        %v10634 = vunpack.c.l.b16 %v10362
        %v10635 = vunpack.c.l.b16 %v10363
        %v10636 = vunpack.c.l.b16 %v10364
        %v10637 = vunpack.c.l.b16 %v10365
        %v10638 = vunpack.c.l.b16 %v10366
        %v10639 = vunpack.c.l.b16 %v10367
        %v10640 = vunpack.c.l.b16 %v10368
        %v10641 = vunpack.c.l.b16 %v10369
        %v10642 = vunpack.c.l.b16 %v10370
        %v10643 = vunpack.c.l.b16 %v10371
        %v10644 = vunpack.c.l.b16 %v10372
        %v10645 = vunpack.c.l.b16 %v10373
        %v10646 = vunpack.c.l.b16 %v10374
        %v10647 = vunpack.c.l.b16 %v10375
        %v10648 = vunpack.c.l.b16 %v10376
        %v10649 = vunpack.c.l.b16 %v10377
        %v10650 = vunpack.c.l.b16 %v10378
        %v10651 = vunpack.c.l.b16 %v10379
        %v10652 = vunpack.c.l.b16 %v10380
        %v10653 = vunpack.c.l.b16 %v10381
        %v10654 = vunpack.c.l.b16 %v10382
        %v10655 = vunpack.c.l.b16 %v10383
        %v10656 = vunpack.c.l.b16 %v10384
        %v10657 = vunpack.c.l.b16 %v10385
        %v10658 = vunpack.c.l.b16 %v10386
        %v10659 = vunpack.c.l.b16 %v10387
        %v10660 = vunpack.c.l.b16 %v10388
        %v10661 = vunpack.c.l.b16 %v10389
        %v10662 = vunpack.c.l.b16 %v10390
        %v10663 = vunpack.c.l.b16 %v10391
        %v10664 = vunpack.c.l.b16 %v10392
        %v10665 = vunpack.c.l.b16 %v10393
        %v10666 = vunpack.c.l.b16 %v10394
        %v10667 = vunpack.c.l.b16 %v10395
        %v10668 = vunpack.c.l.b16 %v10396
        %v10669 = vunpack.c.l.b16 %v10397
        %v10670 = vunpack.c.l.b16 %v10398
        %v10671 = vunpack.c.l.b16 %v10399
        %v10672 = vunpack.c.l.b16 %v10400
        %v10673 = vunpack.c.l.b16 %v10401
        %v10674 = vunpack.c.l.b16 %v10402
        %v10675 = vunpack.c.l.b16 %v10403
        %v10676 = vunpack.c.l.b16 %v10404
        %v10677 = vunpack.c.l.b16 %v10405
        %v10678 = vunpack.c.l.b16 %v10406
        %v10679 = vunpack.c.l.b16 %v10407
        %v10680 = vunpack.c.l.b16 %v10408
        %v10681 = vunpack.c.l.b16 %v10409
        %v10682 = vunpack.c.l.b16 %v10410
        %v10683 = vunpack.c.l.b16 %v10411
        %v10684 = vunpack.c.l.b16 %v10412
        %v10685 = vunpack.c.l.b16 %v10413
        %v10686 = vunpack.c.l.b16 %v10414
        %v10687 = vunpack.c.l.b16 %v10415
        %v10688 = vunpack.c.l.b16 %v10416
        %v10689 = vunpack.c.l.b16 %v10417
        %v10690 = vunpack.c.l.b16 %v10418
        %v10691 = vunpack.c.l.b16 %v10419
        %v10692 = vunpack.c.l.b16 %v10420
        %v10693 = vunpack.c.l.b16 %v10421
        %v10694 = vunpack.c.l.b16 %v10422
        %v10695 = vunpack.c.l.b16 %v10423
        %v10696 = vunpack.c.l.b16 %v10424
        %v10697 = vunpack.c.l.b16 %v10425
        %v10698 = vunpack.c.l.b16 %v10426
        %v10699 = vunpack.c.l.b16 %v10427
        %v10700 = vunpack.c.l.b16 %v10428
        %v10701 = vunpack.c.l.b16 %v10429
        %v10702 = vunpack.c.l.b16 %v10430
        %v10703 = vunpack.c.l.b16 %v10431
        %v10704 = vunpack.c.l.b16 %v10432
        %v10705 = vpack.c.b16 %v10578, %v10577
        %v10706 = vpack.c.b16 %v10580, %v10579
        %v10707 = vpack.c.b16 %v10582, %v10581
        %v10708 = vpack.c.b16 %v10584, %v10583
        %v10709 = vpack.c.b16 %v10586, %v10585
        %v10710 = vpack.c.b16 %v10588, %v10587
        %v10711 = vpack.c.b16 %v10590, %v10589
        %v10712 = vpack.c.b16 %v10592, %v10591
        %v10713 = vpack.c.b16 %v10594, %v10593
        %v10714 = vpack.c.b16 %v10596, %v10595
        %v10715 = vpack.c.b16 %v10598, %v10597
        %v10716 = vpack.c.b16 %v10600, %v10599
        %v10717 = vpack.c.b16 %v10602, %v10601
        %v10718 = vpack.c.b16 %v10604, %v10603
        %v10719 = vpack.c.b16 %v10606, %v10605
        %v10720 = vpack.c.b16 %v10608, %v10607
        %v10721 = vpack.c.b16 %v10610, %v10609
        %v10722 = vpack.c.b16 %v10612, %v10611
        %v10723 = vpack.c.b16 %v10614, %v10613
        %v10724 = vpack.c.b16 %v10616, %v10615
        %v10725 = vpack.c.b16 %v10618, %v10617
        %v10726 = vpack.c.b16 %v10620, %v10619
        %v10727 = vpack.c.b16 %v10622, %v10621
        %v10728 = vpack.c.b16 %v10624, %v10623
        %v10729 = vpack.c.b16 %v10626, %v10625
        %v10730 = vpack.c.b16 %v10628, %v10627
        %v10731 = vpack.c.b16 %v10630, %v10629
        %v10732 = vpack.c.b16 %v10632, %v10631
        %v10733 = vpack.c.b16 %v10634, %v10633
        %v10734 = vpack.c.b16 %v10636, %v10635
        %v10735 = vpack.c.b16 %v10638, %v10637
        %v10736 = vpack.c.b16 %v10640, %v10639
        %v10737 = vpack.c.b16 %v10642, %v10641
        %v10738 = vpack.c.b16 %v10644, %v10643
        %v10739 = vpack.c.b16 %v10646, %v10645
        %v10740 = vpack.c.b16 %v10648, %v10647
        %v10741 = vpack.c.b16 %v10650, %v10649
        %v10742 = vpack.c.b16 %v10652, %v10651
        %v10743 = vpack.c.b16 %v10654, %v10653
        %v10744 = vpack.c.b16 %v10656, %v10655
        %v10745 = vpack.c.b16 %v10658, %v10657
        %v10746 = vpack.c.b16 %v10660, %v10659
        %v10747 = vpack.c.b16 %v10662, %v10661
        %v10748 = vpack.c.b16 %v10664, %v10663
        %v10749 = vpack.c.b16 %v10666, %v10665
        %v10750 = vpack.c.b16 %v10668, %v10667
        %v10751 = vpack.c.b16 %v10670, %v10669
        %v10752 = vpack.c.b16 %v10672, %v10671
        %v10753 = vpack.c.b16 %v10674, %v10673
        %v10754 = vpack.c.b16 %v10676, %v10675
        %v10755 = vpack.c.b16 %v10678, %v10677
        %v10756 = vpack.c.b16 %v10680, %v10679
        %v10757 = vpack.c.b16 %v10682, %v10681
        %v10758 = vpack.c.b16 %v10684, %v10683
        %v10759 = vpack.c.b16 %v10686, %v10685
        %v10760 = vpack.c.b16 %v10688, %v10687
        %v10761 = vpack.c.b16 %v10690, %v10689
        %v10762 = vpack.c.b16 %v10692, %v10691
        %v10763 = vpack.c.b16 %v10694, %v10693
        %v10764 = vpack.c.b16 %v10696, %v10695
        %v10765 = vpack.c.b16 %v10698, %v10697
        %v10766 = vpack.c.b16 %v10700, %v10699
        %v10767 = vpack.c.b16 %v10702, %v10701
        %v10768 = vpack.c.b16 %v10704, %v10703
        %10833 = vmatpush.bf16.msra.mxu0 %v10712
        %10834 = vmatpush.bf16.msra.mxu0 %v10711
        %10835 = vmatpush.bf16.msra.mxu0 %v10710
        %10836 = vmatpush.bf16.msra.mxu0 %v10709
        %10837 = vmatpush.bf16.msra.mxu0 %v10708
        %10838 = vmatpush.bf16.msra.mxu0 %v10707
        %10839 = vmatpush.bf16.msra.mxu0 %v10706
        %10840 = vmatpush.bf16.msra.mxu0 %v10705
        %10841 = vmatmul.bf16.gmra.mxu0 %v10433
        %v10842 = vpop.f32.mrf.mxu0
        %v10843 = vadd.f32 0.0, %v10842
        %v10844 = vpop.f32.mrf.mxu0
        %10845 = vdwg.mxu0
        %10846 = vmatpush.bf16.msra.mxu0 %v10720
        %10847 = vmatpush.bf16.msra.mxu0 %v10719
        %10848 = vmatpush.bf16.msra.mxu0 %v10718
        %10849 = vmatpush.bf16.msra.mxu0 %v10717
        %10850 = vmatpush.bf16.msra.mxu0 %v10716
        %10851 = vmatpush.bf16.msra.mxu0 %v10715
        %10852 = vmatpush.bf16.msra.mxu0 %v10714
        %10853 = vmatpush.bf16.msra.mxu0 %v10713
        %10854 = vmatmul.bf16.gmra.mxu0 %v10434
        %v10855 = vpop.f32.mrf.mxu0
        %v10856 = vadd.f32 %v10843, %v10855
        %v10857 = vpop.f32.mrf.mxu0
        %10858 = vdwg.mxu0
        %10859 = vmatpush.bf16.msra.mxu0 %v10728
        %10860 = vmatpush.bf16.msra.mxu0 %v10727
        %10861 = vmatpush.bf16.msra.mxu0 %v10726
        %10862 = vmatpush.bf16.msra.mxu0 %v10725
        %10863 = vmatpush.bf16.msra.mxu0 %v10724
        %10864 = vmatpush.bf16.msra.mxu0 %v10723
        %10865 = vmatpush.bf16.msra.mxu0 %v10722
        %10866 = vmatpush.bf16.msra.mxu0 %v10721
        %10867 = vmatmul.bf16.gmra.mxu0 %v10435
        %v10868 = vpop.f32.mrf.mxu0
        %v10869 = vadd.f32 %v10856, %v10868
        %v10870 = vpop.f32.mrf.mxu0
        %10871 = vdwg.mxu0
        %10872 = vmatpush.bf16.msra.mxu0 %v10736
        %10873 = vmatpush.bf16.msra.mxu0 %v10735
        %10874 = vmatpush.bf16.msra.mxu0 %v10734
        %10875 = vmatpush.bf16.msra.mxu0 %v10733
        %10876 = vmatpush.bf16.msra.mxu0 %v10732
        %10877 = vmatpush.bf16.msra.mxu0 %v10731
        %10878 = vmatpush.bf16.msra.mxu0 %v10730
        %10879 = vmatpush.bf16.msra.mxu0 %v10729
        %10880 = vmatmul.bf16.gmra.mxu0 %v10436
        %v10881 = vpop.f32.mrf.mxu0
        %v10882 = vadd.f32 %v10869, %v10881
        %v10883 = vpop.f32.mrf.mxu0
        %10884 = vdwg.mxu0
        %10885 = vmatpush.bf16.msra.mxu0 %v10744
        %10886 = vmatpush.bf16.msra.mxu0 %v10743
        %10887 = vmatpush.bf16.msra.mxu0 %v10742
        %10888 = vmatpush.bf16.msra.mxu0 %v10741
        %10889 = vmatpush.bf16.msra.mxu0 %v10740
        %10890 = vmatpush.bf16.msra.mxu0 %v10739
        %10891 = vmatpush.bf16.msra.mxu0 %v10738
        %10892 = vmatpush.bf16.msra.mxu0 %v10737
        %10893 = vmatmul.bf16.gmra.mxu0 %v10437
        %v10894 = vpop.f32.mrf.mxu0
        %v10895 = vadd.f32 %v10882, %v10894
        %v10896 = vpop.f32.mrf.mxu0
        %10897 = vdwg.mxu0
        %10898 = vmatpush.bf16.msra.mxu0 %v10752
        %10899 = vmatpush.bf16.msra.mxu0 %v10751
        %10900 = vmatpush.bf16.msra.mxu0 %v10750
        %10901 = vmatpush.bf16.msra.mxu0 %v10749
        %10902 = vmatpush.bf16.msra.mxu0 %v10748
        %10903 = vmatpush.bf16.msra.mxu0 %v10747
        %10904 = vmatpush.bf16.msra.mxu0 %v10746
        %10905 = vmatpush.bf16.msra.mxu0 %v10745
        %10906 = vmatmul.bf16.gmra.mxu0 %v10438
        %v10907 = vpop.f32.mrf.mxu0
        %v10908 = vadd.f32 %v10895, %v10907
        %v10909 = vpop.f32.mrf.mxu0
        %10910 = vdwg.mxu0
        %10911 = vmatpush.bf16.msra.mxu0 %v10760
        %10912 = vmatpush.bf16.msra.mxu0 %v10759
        %10913 = vmatpush.bf16.msra.mxu0 %v10758
        %10914 = vmatpush.bf16.msra.mxu0 %v10757
        %10915 = vmatpush.bf16.msra.mxu0 %v10756
        %10916 = vmatpush.bf16.msra.mxu0 %v10755
        %10917 = vmatpush.bf16.msra.mxu0 %v10754
        %10918 = vmatpush.bf16.msra.mxu0 %v10753
        %10919 = vmatmul.bf16.gmra.mxu0 %v10439
        %v10920 = vpop.f32.mrf.mxu0
        %v10921 = vadd.f32 %v10908, %v10920
        %v10922 = vpop.f32.mrf.mxu0
        %10923 = vdwg.mxu0
        %10924 = vmatpush.bf16.msra.mxu0 %v10768
        %10925 = vmatpush.bf16.msra.mxu0 %v10767
        %10926 = vmatpush.bf16.msra.mxu0 %v10766
        %10927 = vmatpush.bf16.msra.mxu0 %v10765
        %10928 = vmatpush.bf16.msra.mxu0 %v10764
        %10929 = vmatpush.bf16.msra.mxu0 %v10763
        %10930 = vmatpush.bf16.msra.mxu0 %v10762
        %10931 = vmatpush.bf16.msra.mxu0 %v10761
        %10932 = vmatmul.bf16.gmra.mxu0 %v10440
        %v10933 = vpop.f32.mrf.mxu0
        %v10934 = vadd.f32 %v10921, %v10933
        %v10935 = vpop.f32.mrf.mxu0
        %10936 = vdwg.mxu0
        %v10937 = vadd.f32 %v10303, %v10934
        %v10938 = vld [vmem:[%s4] sm:$0x1]
        %v10939 = vadd.f32 %v10937, %v10938
        %vm10940 = vcmp.ge.f32.partialorder %v10939, 0.0
        %v10941 = vmul.f32 %v10939, 0.01
        %v10942 = vsel %vm10940, %v10939, %v10941
        %vm10943 = vcmask 57344
        %10944 = vst.msk [vmem:[%s214] sm:$0x1] %vm10943, %v10942
        %s10945 = sand.u32 %s137, 1
        %s10946 = scalar_lea.sflag [#allocation4], %s10945
        %s10947 = sand.u32 %s137, 1
        %s10948 = scalar_lea.vmem [#allocation3], %s10947
        // Predicated region
        $region41: #{encoder_forward.1} parent=39 // pred_check
          %p10949 = pneg %p147
        $region42: #{encoder_forward.1} parent=39 // pred_check_branch
          %10951 = sbr.rel (%p10949) target = $region44
        $region43: #{encoder_forward.1} parent=39 // pred_region
          %10953 = vsyncadd %s10946, 0
          %s10954 = scalar_lea.hbm %s5, %s19
          %s10956 = sshll.u32 %s10948, 4
          %s10957 = int_to_ptr.vmem [resolvable:$true] %s10956
          %s10958 = sshll.u32 %s10954, 4
          %s10959 = int_to_ptr.hbm [resolvable:$true] %s10958
          %10961 = dma.vmem_to_hbm [thread:$0]  %s10957, 16, %s10959, %s10946
        $region44: #{encoder_forward.1} parent=39 // pred_fallthru
          _
      $region40: #{encoder_forward.1} parent=5 // pred_fallthru
        _
      %p10962 = scmp.le.s32.totalorder 2, %s14
      // Predicated region
      $region45: #{encoder_forward.1} parent=5 // pred_check
        %p10963 = pneg %p10962
      $region46: #{encoder_forward.1} parent=5 // pred_check_branch
        %10965 = sbr.rel (%p10963) target = $region48
      $region47: #{encoder_forward.1} parent=5 // pred_region
        %s10966 = ssub.s32 %s14, 2
        // Predicated region
        $region49: #{encoder_forward.1} parent=47 // pred_check
          %p10967 = pneg %p153
        $region50: #{encoder_forward.1} parent=47 // pred_check_branch
          %10969 = sbr.rel (%p10967) target = $region52
        $region51: #{encoder_forward.1} parent=47 // pred_region
          %s10970 = sand.u32 %s138, 1
          %s10971 = scalar_lea.sflag [#allocation4], %s10970
          %s10972 = sand.u32 %s138, 1
          %s10973 = scalar_lea.vmem [#allocation3], %s10972
          %10975 = dma.done %s10971, 16
        $region52: #{encoder_forward.1} parent=47 // pred_fallthru
          _
      $region48: #{encoder_forward.1} parent=5 // pred_fallthru
        _
    $region6: #{encoder_forward.1} parent=1 // loop_footer
      %s18 = sadd.s32 1, %s14
    $region7: #{encoder_forward.1} parent=1 // loop_footer_branch
      %13 = sbr.rel target = $region3
    $region8: #{encoder_forward.1} parent=1 // loop_exit
      _
    %10976 = vsyncpa [#allocation4], 1
    %s10977 = scalar_lea.sflag [#allocation4], 1
    %10978 = vsyncpa %s10977, 1

</llo_original>
